<compile_context>
chip_gen: v7x
topology: tpu7x:2x2x1
jax: 0.10.0
libtpu: 0.0.40
codegen_flags: <defaults>
</compile_context>

<pallas_src>
import functools

import jax
import jax.numpy as jnp
from jax.experimental import pallas as pl
from jax.experimental.pallas import tpu as pltpu


# -----------------------------------------------------------------------------
# Fused kernel: conv1(5x5,1->64)+relu -> conv2(3x3,64->64)+relu
#               -> conv3(3x3,64->32)+relu -> conv4(3x3,32->128 padded)
# `nb` batch elements per grid step; all intermediates stay in VMEM / vregs.
# -----------------------------------------------------------------------------
def _superres_fused_kernel(p_ref, w1_ref, b1_ref, w2_ref, b2_ref,
                           w3_ref, b3_ref, w4_ref, b4_ref, o_ref,
                           pad64_ref, pad32_ref, *, H, W, nb):
    HW = H * W
    M = nb * HW

    # ---- conv1: single im2col matmul (M, 32) @ (32, 64) on the MXU ----------
    p = p_ref[...].reshape(M, p_ref.shape[-1])                     # bf16
    a = jnp.dot(p, w1_ref[...], preferred_element_type=jnp.float32)
    a = jnp.maximum(a + b1_ref[...], 0.0)                          # (M, 64) f32

    def zero_halo(pad_ref):
        # Zero only the 1-pixel border; the interior is fully overwritten by
        # every conv, so full-buffer zeroing is redundant store traffic.
        _, hp, wp, c = pad_ref.shape
        row = jnp.zeros((nb, 1, wp, c), pad_ref.dtype)
        col = jnp.zeros((nb, hp - 2, 1, c), pad_ref.dtype)
        pad_ref[:, 0:1, :, :] = row
        pad_ref[:, hp - 1:hp, :, :] = row
        pad_ref[:, 1:hp - 1, 0:1, :] = col
        pad_ref[:, 1:hp - 1, wp - 1:wp, :] = col

    def conv3x3(a_in, cin, pad_ref, w_ref, b_ref, relu):
        # In-kernel padding: write the activation into the zero-haloed VMEM
        # scratch, then accumulate 9 per-tap bf16 MXU dots in f32.
        pad_ref[:, 1:1 + H, 1:1 + W, :] = a_in.reshape(nb, H, W, cin)
        cout = w_ref.shape[-1]
        acc = jnp.zeros((M, cout), jnp.float32)
        for kh in range(3):
            for kw in range(3):
                k = kh * 3 + kw
                tap = pad_ref[:, kh:kh + H, kw:kw + W, :]
                tap = tap.reshape(M, cin).astype(jnp.bfloat16)
                acc = acc + jnp.dot(tap, w_ref[k],
                                    preferred_element_type=jnp.float32)
        out = acc + b_ref[...]
        return jnp.maximum(out, 0.0) if relu else out

    zero_halo(pad64_ref)    # reused by conv2 AND conv3 (halo stays zero)
    zero_halo(pad32_ref)
    a = conv3x3(a, 64, pad64_ref, w2_ref, b2_ref, relu=True)       # (M, 64)
    a = conv3x3(a, 64, pad64_ref, w3_ref, b3_ref, relu=True)       # (M, 32)
    a = conv3x3(a, 32, pad32_ref, w4_ref, b4_ref, relu=False)      # (M, 128)

    # Lane-dense (128-wide) unmasked output store.
    o_ref[...] = a.reshape(nb, H, W, -1).astype(o_ref.dtype)


def _superres_pallas(x_nhwc, params, r, batch_block=1):
    """x_nhwc: (N, H, W, 1) float32 -> conv4 output (N, H, W, r*r) float32."""
    N, H, W, _ = x_nhwc.shape
    assert N % batch_block == 0
    nb = batch_block
    HW = H * W
    rr = r * r
    K1 = 32      # conv1 im2col K padded 25 -> 32 (aligned, zero taps)
    C4 = 128     # conv4 out channels padded rr -> 128 (lane-dense stores)

    w1, b1 = params["conv1"]
    w2, b2 = params["conv2"]
    w3, b3 = params["conv3"]
    w4, b4 = params["conv4"]

    # Host-side im2col for conv1 (5x5, pad=2): (N, HW, 32) bf16 patch matrix.
    xp = jnp.pad(x_nhwc[..., 0], ((0, 0), (2, 2), (2, 2)))         # (N, H+4, W+4)
    cols = [xp[:, kh:kh + H, kw:kw + W].reshape(N, HW, 1)
            for kh in range(5) for kw in range(5)]
    patches = jnp.concatenate(cols, axis=-1)                       # (N, HW, 25)
    patches = jnp.pad(patches, ((0, 0), (0, 0), (0, K1 - 25))).astype(jnp.bfloat16)

    # Per-tap weights in bf16 (MXU operands); biases stay f32.
    w1m = jnp.pad(w1.reshape(25, 64), ((0, K1 - 25), (0, 0))).astype(jnp.bfloat16)
    w2m = w2.reshape(9, 64, 64).astype(jnp.bfloat16)
    w3m = w3.reshape(9, 64, 32).astype(jnp.bfloat16)
    w4m = jnp.pad(w4.reshape(9, 32, rr),
                  ((0, 0), (0, 0), (0, C4 - rr))).astype(jnp.bfloat16)
    b1m = b1.reshape(1, 64).astype(jnp.float32)
    b2m = b2.reshape(1, 64).astype(jnp.float32)
    b3m = b3.reshape(1, 32).astype(jnp.float32)
    b4m = jnp.pad(b4, (0, C4 - rr)).reshape(1, C4).astype(jnp.float32)

    kernel = functools.partial(_superres_fused_kernel, H=H, W=W, nb=nb)

    flops = 2 * N * HW * (K1 * 64 + 9 * 64 * 64 + 9 * 64 * 32 + 9 * 32 * C4)
    bytes_accessed = (patches.size * 2
                      + (w1m.size + w2m.size + w3m.size + w4m.size) * 2
                      + (b1m.size + b2m.size + b3m.size + b4m.size) * 4
                      + N * HW * C4 * 4)

    c2 = lambda n: (0, 0)          # constant index maps: weights DMA'd once
    c3 = lambda n: (0, 0, 0)
    # TODO(synk): weights could also use pipeline_mode=pl.Buffered(1) to drop
    # the dead second pipeline buffer; left at default for robust lowering.
    y = pl.pallas_call(
        kernel,
        out_shape=jax.ShapeDtypeStruct((N, H, W, C4), jnp.float32),
        grid=(N // nb,),
        in_specs=[
            pl.BlockSpec((nb, HW, K1), lambda n: (n, 0, 0)),
            pl.BlockSpec(w1m.shape, c2), pl.BlockSpec(b1m.shape, c2),
            pl.BlockSpec(w2m.shape, c3), pl.BlockSpec(b2m.shape, c2),
            pl.BlockSpec(w3m.shape, c3), pl.BlockSpec(b3m.shape, c2),
            pl.BlockSpec(w4m.shape, c3), pl.BlockSpec(b4m.shape, c2),
        ],
        out_specs=pl.BlockSpec((nb, H, W, C4), lambda n: (n, 0, 0, 0)),
        scratch_shapes=[
            # TODO(synk): at large H*W on v7x (64 MiB VMEM) switch these to
            # bf16 to halve the footprint; kept f32 here so the sublane-offset
            # interior writes keep the proven 32-bit store path.
            pltpu.VMEM((nb, H + 2, W + 2, 64), jnp.float32),   # conv2 & conv3
            pltpu.VMEM((nb, H + 2, W + 2, 32), jnp.float32),   # conv4
        ],
        compiler_params=pltpu.CompilerParams(
            dimension_semantics=("parallel",)),                # batch across v7x cores
        cost_estimate=pl.CostEstimate(flops=flops, transcendentals=0,
                                      bytes_accessed=bytes_accessed),
    )(patches, w1m, b1m, w2m, b2m, w3m, b3m, w4m, b4m)

    return y[..., :rr]


def _pixel_shuffle_to_nchw(y_nhwc, r):
    # PyTorch PixelShuffle: channel c = i*r + j -> output pixel (h*r+i, w*r+j).
    # TODO(synk): kept as an XLA reshape/transpose on the tiny (N,H,W,r^2)
    # conv4 output; folding it into the kernel isn't worth the lowering risk.
    N, H, W, C = y_nhwc.shape
    assert C == r * r
    y = y_nhwc.reshape(N, H, W, r, r)
    y = jnp.transpose(y, (0, 1, 3, 2, 4))        # (N, H, i, W, j)
    return y.reshape(N, 1, H * r, W * r)         # NCHW with 1 channel


@functools.partial(jax.jit, static_argnames=("upscale_factor", "batch_block"))
def super_resolution_forward(x_nchw, params, upscale_factor, batch_block=1):
    # batch_block: images per grid step.  Keep 1 on v7x (megacore-parallel
    # batch grid); set to the full batch on single-TC v5e/v6e so the matmul
    # M axis becomes N*H*W and per-step overhead is paid once.
    x = jnp.transpose(x_nchw.astype(jnp.float32), (0, 2, 3, 1))   # NCHW -> NHWC
    y = _superres_pallas(x, params, upscale_factor, batch_block)  # (N, H, W, r^2)
    return _pixel_shuffle_to_nchw(y, upscale_factor)              # (N, 1, H*r, W*r)


def init_params(key, upscale_factor):
    """Deterministic synthetic weights (scaled normal; shapes match the PyTorch
    module). NOTE: not init.orthogonal_, so no checkpoint parity is intended."""
    def conv_params(k, kh, kw, cin, cout, gain):
        wk, _ = jax.random.split(k)
        fan_in = cin * kh * kw
        w = jax.random.normal(wk, (kh, kw, cin, cout), jnp.float32)
        w = w * (gain / jnp.sqrt(jnp.float32(fan_in)))
        b = jnp.zeros((cout,), jnp.float32)
        return w, b

    relu_gain = jnp.sqrt(2.0)
    k1, k2, k3, k4 = jax.random.split(key, 4)
    rr = upscale_factor ** 2
    return {
        "conv1": conv_params(k1, 5, 5, 1, 64, relu_gain),
        "conv2": conv_params(k2, 3, 3, 64, 64, relu_gain),
        "conv3": conv_params(k3, 3, 3, 64, 32, relu_gain),
        "conv4": conv_params(k4, 3, 3, 32, rr, 1.0),
    }


def _reference_forward(x_nchw, params, r):
    """Pure-JAX (XLA) reference of the same module, f32 end to end."""
    def conv(x, w, b, pad):
        y = jax.lax.conv_general_dilated(
            x, w.astype(jnp.float32), (1, 1), [(pad, pad), (pad, pad)],
            dimension_numbers=("NHWC", "HWIO", "NHWC"))
        return y + b.reshape(1, 1, 1, -1)

    x = jnp.transpose(x_nchw.astype(jnp.float32), (0, 2, 3, 1))
    w1, b1 = params["conv1"]
    w2, b2 = params["conv2"]
    w3, b3 = params["conv3"]
    w4, b4 = params["conv4"]
    x = jax.nn.relu(conv(x, w1, b1, 2))
    x = jax.nn.relu(conv(x, w2, b2, 1))
    x = jax.nn.relu(conv(x, w3, b3, 1))
    x = conv(x, w4, b4, 1)
    return _pixel_shuffle_to_nchw(x, r)


if __name__ == "__main__":
    upscale_factor = 3
    key = jax.random.PRNGKey(0)
    pkey, xkey = jax.random.split(key)

    params = init_params(pkey, upscale_factor)
    # Small input consistent with the module: (batch, 1 channel, 16, 16) NCHW
    x = jax.random.normal(xkey, (2, 1, 16, 16), jnp.float32)

    out = super_resolution_forward(x, params, upscale_factor)
    out = jax.block_until_ready(out)

    assert out.shape == (2, 1, 16 * upscale_factor, 16 * upscale_factor), out.shape
    assert bool(jnp.isfinite(out).all())

    # Numerical check vs. pure-JAX f32 reference (kernel uses bf16 MXU inputs
    # with f32 accumulation) — tightened tolerance per review.
    ref = _reference_forward(x, params, upscale_factor)
    rel_err = float(jnp.linalg.norm(out - ref) / (jnp.linalg.norm(ref) + 1e-12))
    assert rel_err < 3e-2, rel_err

    print("KERNEL_OK")
</pallas_src>

<mosaic_0001>
module attributes {stable_mosaic.version = 11 : i64} {
  func.func @_superres_fused_kernel(%arg0: i32, %arg1: memref<1x256x32xbf16, #tpu.memory_space<vmem>>, %arg2: memref<32x64xbf16, #tpu.memory_space<vmem>>, %arg3: memref<1x64xf32, #tpu.memory_space<vmem>>, %arg4: memref<9x64x64xbf16, #tpu.memory_space<vmem>>, %arg5: memref<1x64xf32, #tpu.memory_space<vmem>>, %arg6: memref<9x64x32xbf16, #tpu.memory_space<vmem>>, %arg7: memref<1x32xf32, #tpu.memory_space<vmem>>, %arg8: memref<9x32x128xbf16, #tpu.memory_space<vmem>>, %arg9: memref<1x128xf32, #tpu.memory_space<vmem>>, %arg10: memref<1x16x16x128xf32, #tpu.memory_space<vmem>>, %arg11: memref<1x18x18x64xf32, #tpu.memory_space<vmem>>, %arg12: memref<1x18x18x32xf32, #tpu.memory_space<vmem>>) attributes {dimension_semantics = [#tpu.dimension_semantics<parallel>], iteration_bounds = array<i64: 2>, scalar_prefetch = 0 : i64, scratch_operands = 2 : i64, tpu.core_type = #tpu.core_type<tc>, window_params = [{transform_indices = @transform_0, window_bounds = array<i64: 1, 256, 32>}, {pipeline_mode = #tpu.pipeline_mode<synchronous>, transform_indices = @transform_1, window_bounds = array<i64: 32, 64>}, {pipeline_mode = #tpu.pipeline_mode<synchronous>, transform_indices = @transform_2, window_bounds = array<i64: 1, 64>}, {pipeline_mode = #tpu.pipeline_mode<synchronous>, transform_indices = @transform_3, window_bounds = array<i64: 9, 64, 64>}, {pipeline_mode = #tpu.pipeline_mode<synchronous>, transform_indices = @transform_4, window_bounds = array<i64: 1, 64>}, {pipeline_mode = #tpu.pipeline_mode<synchronous>, transform_indices = @transform_5, window_bounds = array<i64: 9, 64, 32>}, {pipeline_mode = #tpu.pipeline_mode<synchronous>, transform_indices = @transform_6, window_bounds = array<i64: 1, 32>}, {pipeline_mode = #tpu.pipeline_mode<synchronous>, transform_indices = @transform_7, window_bounds = array<i64: 9, 32, 128>}, {pipeline_mode = #tpu.pipeline_mode<synchronous>, transform_indices = @transform_8, window_bounds = array<i64: 1, 128>}, {transform_indices = @transform_9, window_bounds = array<i64: 1, 16, 16, 128>}]} {
    %c0 = arith.constant 0 : index
    %c0_0 = arith.constant 0 : index
    %c0_1 = arith.constant 0 : index
    %0 = vector.load %arg1[%c0, %c0_0, %c0_1] : memref<1x256x32xbf16, #tpu.memory_space<vmem>>, vector<1x256x32xbf16>
    %1 = vector.shape_cast %0 : vector<1x256x32xbf16> to vector<256x32xbf16>
    %c0_2 = arith.constant 0 : index
    %c0_3 = arith.constant 0 : index
    %2 = vector.load %arg2[%c0_2, %c0_3] : memref<32x64xbf16, #tpu.memory_space<vmem>>, vector<32x64xbf16>
    %cst = arith.constant dense<0.000000e+00> : vector<256x64xf32>
    %3 = tpu.matmul %1, %2, %cst {dimension_numbers = #tpu.dot_dimension_numbers<[1], [0], [0], [1], [0, 0, 1, 1], [], []>} : vector<256x32xbf16>, vector<32x64xbf16>, vector<256x64xf32> -> vector<256x64xf32>
    %c0_4 = arith.constant 0 : index
    %c0_5 = arith.constant 0 : index
    %4 = vector.load %arg3[%c0_4, %c0_5] : memref<1x64xf32, #tpu.memory_space<vmem>>, vector<1x64xf32>
    %5 = vector.broadcast %4 : vector<1x64xf32> to vector<256x64xf32>
    %6 = arith.addf %3, %5 : vector<256x64xf32>
    %cst_6 = arith.constant 0.000000e+00 : f32
    %7 = vector.broadcast %cst_6 : f32 to vector<256x64xf32>
    %8 = arith.maximumf %6, %7 : vector<256x64xf32>
    %cst_7 = arith.constant 0.000000e+00 : f32
    %9 = vector.broadcast %cst_7 : f32 to vector<1x1x18x64xf32>
    %cst_8 = arith.constant 0.000000e+00 : f32
    %10 = vector.broadcast %cst_8 : f32 to vector<1x16x1x64xf32>
    %c0_9 = arith.constant 0 : index
    %c0_10 = arith.constant 0 : index
    %c0_11 = arith.constant 0 : index
    %c0_12 = arith.constant 0 : index
    %11 = vector.load %arg11[%c0_9, %c0_10, %c0_11, %c0_12] : memref<1x18x18x64xf32, #tpu.memory_space<vmem>>, vector<1x1x18x64xf32>
    tpu.vector_store %arg11[%c0_9, %c0_10, %c0_11, %c0_12], %9 {strides = array<i32>} : memref<1x18x18x64xf32, #tpu.memory_space<vmem>>, vector<1x1x18x64xf32>,
    %c0_13 = arith.constant 0 : index
    %c17 = arith.constant 17 : index
    %c0_14 = arith.constant 0 : index
    %c0_15 = arith.constant 0 : index
    %12 = vector.load %arg11[%c0_13, %c17, %c0_14, %c0_15] : memref<1x18x18x64xf32, #tpu.memory_space<vmem>>, vector<1x1x18x64xf32>
    tpu.vector_store %arg11[%c0_13, %c17, %c0_14, %c0_15], %9 {strides = array<i32>} : memref<1x18x18x64xf32, #tpu.memory_space<vmem>>, vector<1x1x18x64xf32>,
    %c0_16 = arith.constant 0 : index
    %c1 = arith.constant 1 : index
    %c0_17 = arith.constant 0 : index
    %c0_18 = arith.constant 0 : index
    %13 = vector.load %arg11[%c0_16, %c1, %c0_17, %c0_18] : memref<1x18x18x64xf32, #tpu.memory_space<vmem>>, vector<1x16x1x64xf32>
    tpu.vector_store %arg11[%c0_16, %c1, %c0_17, %c0_18], %10 {strides = array<i32>} : memref<1x18x18x64xf32, #tpu.memory_space<vmem>>, vector<1x16x1x64xf32>,
    %c0_19 = arith.constant 0 : index
    %c1_20 = arith.constant 1 : index
    %c17_21 = arith.constant 17 : index
    %c0_22 = arith.constant 0 : index
    %14 = vector.load %arg11[%c0_19, %c1_20, %c17_21, %c0_22] : memref<1x18x18x64xf32, #tpu.memory_space<vmem>>, vector<1x16x1x64xf32>
    tpu.vector_store %arg11[%c0_19, %c1_20, %c17_21, %c0_22], %10 {strides = array<i32>} : memref<1x18x18x64xf32, #tpu.memory_space<vmem>>, vector<1x16x1x64xf32>,
    %cst_23 = arith.constant 0.000000e+00 : f32
    %15 = vector.broadcast %cst_23 : f32 to vector<1x1x18x32xf32>
    %cst_24 = arith.constant 0.000000e+00 : f32
    %16 = vector.broadcast %cst_24 : f32 to vector<1x16x1x32xf32>
    %c0_25 = arith.constant 0 : index
    %c0_26 = arith.constant 0 : index
    %c0_27 = arith.constant 0 : index
    %c0_28 = arith.constant 0 : index
    %17 = vector.load %arg12[%c0_25, %c0_26, %c0_27, %c0_28] : memref<1x18x18x32xf32, #tpu.memory_space<vmem>>, vector<1x1x18x32xf32>
    tpu.vector_store %arg12[%c0_25, %c0_26, %c0_27, %c0_28], %15 {strides = array<i32>} : memref<1x18x18x32xf32, #tpu.memory_space<vmem>>, vector<1x1x18x32xf32>,
    %c0_29 = arith.constant 0 : index
    %c17_30 = arith.constant 17 : index
    %c0_31 = arith.constant 0 : index
    %c0_32 = arith.constant 0 : index
    %18 = vector.load %arg12[%c0_29, %c17_30, %c0_31, %c0_32] : memref<1x18x18x32xf32, #tpu.memory_space<vmem>>, vector<1x1x18x32xf32>
    tpu.vector_store %arg12[%c0_29, %c17_30, %c0_31, %c0_32], %15 {strides = array<i32>} : memref<1x18x18x32xf32, #tpu.memory_space<vmem>>, vector<1x1x18x32xf32>,
    %c0_33 = arith.constant 0 : index
    %c1_34 = arith.constant 1 : index
    %c0_35 = arith.constant 0 : index
    %c0_36 = arith.constant 0 : index
    %19 = vector.load %arg12[%c0_33, %c1_34, %c0_35, %c0_36] : memref<1x18x18x32xf32, #tpu.memory_space<vmem>>, vector<1x16x1x32xf32>
    tpu.vector_store %arg12[%c0_33, %c1_34, %c0_35, %c0_36], %16 {strides = array<i32>} : memref<1x18x18x32xf32, #tpu.memory_space<vmem>>, vector<1x16x1x32xf32>,
    %c0_37 = arith.constant 0 : index
    %c1_38 = arith.constant 1 : index
    %c17_39 = arith.constant 17 : index
    %c0_40 = arith.constant 0 : index
    %20 = vector.load %arg12[%c0_37, %c1_38, %c17_39, %c0_40] : memref<1x18x18x32xf32, #tpu.memory_space<vmem>>, vector<1x16x1x32xf32>
    tpu.vector_store %arg12[%c0_37, %c1_38, %c17_39, %c0_40], %16 {strides = array<i32>} : memref<1x18x18x32xf32, #tpu.memory_space<vmem>>, vector<1x16x1x32xf32>,
    %21 = vector.shape_cast %8 : vector<256x64xf32> to vector<1x16x16x64xf32>
    %c0_41 = arith.constant 0 : index
    %c1_42 = arith.constant 1 : index
    %c1_43 = arith.constant 1 : index
    %c0_44 = arith.constant 0 : index
    %22 = vector.load %arg11[%c0_41, %c1_42, %c1_43, %c0_44] : memref<1x18x18x64xf32, #tpu.memory_space<vmem>>, vector<1x16x16x64xf32>
    tpu.vector_store %arg11[%c0_41, %c1_42, %c1_43, %c0_44], %21 {strides = array<i32>} : memref<1x18x18x64xf32, #tpu.memory_space<vmem>>, vector<1x16x16x64xf32>,
    %cst_45 = arith.constant 0.000000e+00 : f32
    %23 = vector.broadcast %cst_45 : f32 to vector<256x64xf32>
    %c0_46 = arith.constant 0 : index
    %c0_47 = arith.constant 0 : index
    %c0_48 = arith.constant 0 : index
    %c0_49 = arith.constant 0 : index
    %24 = vector.load %arg11[%c0_46, %c0_47, %c0_48, %c0_49] : memref<1x18x18x64xf32, #tpu.memory_space<vmem>>, vector<1x16x16x64xf32>
    %25 = vector.shape_cast %24 : vector<1x16x16x64xf32> to vector<256x64xf32>
    %26 = arith.truncf %25 : vector<256x64xf32> to vector<256x64xbf16>
    %c0_50 = arith.constant 0 : index
    %c0_51 = arith.constant 0 : index
    %c0_52 = arith.constant 0 : index
    %27 = vector.load %arg4[%c0_50, %c0_51, %c0_52] : memref<9x64x64xbf16, #tpu.memory_space<vmem>>, vector<1x64x64xbf16>
    %28 = vector.shape_cast %27 : vector<1x64x64xbf16> to vector<64x64xbf16>
    %cst_53 = arith.constant dense<0.000000e+00> : vector<256x64xf32>
    %29 = tpu.matmul %26, %28, %cst_53 {dimension_numbers = #tpu.dot_dimension_numbers<[1], [0], [0], [1], [0, 0, 1, 1], [], []>} : vector<256x64xbf16>, vector<64x64xbf16>, vector<256x64xf32> -> vector<256x64xf32>
    %30 = arith.addf %23, %29 : vector<256x64xf32>
    %c0_54 = arith.constant 0 : index
    %c0_55 = arith.constant 0 : index
    %c1_56 = arith.constant 1 : index
    %c0_57 = arith.constant 0 : index
    %31 = vector.load %arg11[%c0_54, %c0_55, %c1_56, %c0_57] : memref<1x18x18x64xf32, #tpu.memory_space<vmem>>, vector<1x16x16x64xf32>
    %32 = vector.shape_cast %31 : vector<1x16x16x64xf32> to vector<256x64xf32>
    %33 = arith.truncf %32 : vector<256x64xf32> to vector<256x64xbf16>
    %c1_58 = arith.constant 1 : index
    %c0_59 = arith.constant 0 : index
    %c0_60 = arith.constant 0 : index
    %34 = vector.load %arg4[%c1_58, %c0_59, %c0_60] : memref<9x64x64xbf16, #tpu.memory_space<vmem>>, vector<1x64x64xbf16>
    %35 = vector.shape_cast %34 : vector<1x64x64xbf16> to vector<64x64xbf16>
    %cst_61 = arith.constant dense<0.000000e+00> : vector<256x64xf32>
    %36 = tpu.matmul %33, %35, %cst_61 {dimension_numbers = #tpu.dot_dimension_numbers<[1], [0], [0], [1], [0, 0, 1, 1], [], []>} : vector<256x64xbf16>, vector<64x64xbf16>, vector<256x64xf32> -> vector<256x64xf32>
    %37 = arith.addf %30, %36 : vector<256x64xf32>
    %c0_62 = arith.constant 0 : index
    %c0_63 = arith.constant 0 : index
    %c2 = arith.constant 2 : index
    %c0_64 = arith.constant 0 : index
    %38 = vector.load %arg11[%c0_62, %c0_63, %c2, %c0_64] : memref<1x18x18x64xf32, #tpu.memory_space<vmem>>, vector<1x16x16x64xf32>
    %39 = vector.shape_cast %38 : vector<1x16x16x64xf32> to vector<256x64xf32>
    %40 = arith.truncf %39 : vector<256x64xf32> to vector<256x64xbf16>
    %c2_65 = arith.constant 2 : index
    %c0_66 = arith.constant 0 : index
    %c0_67 = arith.constant 0 : index
    %41 = vector.load %arg4[%c2_65, %c0_66, %c0_67] : memref<9x64x64xbf16, #tpu.memory_space<vmem>>, vector<1x64x64xbf16>
    %42 = vector.shape_cast %41 : vector<1x64x64xbf16> to vector<64x64xbf16>
    %cst_68 = arith.constant dense<0.000000e+00> : vector<256x64xf32>
    %43 = tpu.matmul %40, %42, %cst_68 {dimension_numbers = #tpu.dot_dimension_numbers<[1], [0], [0], [1], [0, 0, 1, 1], [], []>} : vector<256x64xbf16>, vector<64x64xbf16>, vector<256x64xf32> -> vector<256x64xf32>
    %44 = arith.addf %37, %43 : vector<256x64xf32>
    %c0_69 = arith.constant 0 : index
    %c1_70 = arith.constant 1 : index
    %c0_71 = arith.constant 0 : index
    %c0_72 = arith.constant 0 : index
    %45 = vector.load %arg11[%c0_69, %c1_70, %c0_71, %c0_72] : memref<1x18x18x64xf32, #tpu.memory_space<vmem>>, vector<1x16x16x64xf32>
    %46 = vector.shape_cast %45 : vector<1x16x16x64xf32> to vector<256x64xf32>
    %47 = arith.truncf %46 : vector<256x64xf32> to vector<256x64xbf16>
    %c3 = arith.constant 3 : index
    %c0_73 = arith.constant 0 : index
    %c0_74 = arith.constant 0 : index
    %48 = vector.load %arg4[%c3, %c0_73, %c0_74] : memref<9x64x64xbf16, #tpu.memory_space<vmem>>, vector<1x64x64xbf16>
    %49 = vector.shape_cast %48 : vector<1x64x64xbf16> to vector<64x64xbf16>
    %cst_75 = arith.constant dense<0.000000e+00> : vector<256x64xf32>
    %50 = tpu.matmul %47, %49, %cst_75 {dimension_numbers = #tpu.dot_dimension_numbers<[1], [0], [0], [1], [0, 0, 1, 1], [], []>} : vector<256x64xbf16>, vector<64x64xbf16>, vector<256x64xf32> -> vector<256x64xf32>
    %51 = arith.addf %44, %50 : vector<256x64xf32>
    %c0_76 = arith.constant 0 : index
    %c1_77 = arith.constant 1 : index
    %c1_78 = arith.constant 1 : index
    %c0_79 = arith.constant 0 : index
    %52 = vector.load %arg11[%c0_76, %c1_77, %c1_78, %c0_79] : memref<1x18x18x64xf32, #tpu.memory_space<vmem>>, vector<1x16x16x64xf32>
    %53 = vector.shape_cast %52 : vector<1x16x16x64xf32> to vector<256x64xf32>
    %54 = arith.truncf %53 : vector<256x64xf32> to vector<256x64xbf16>
    %c4 = arith.constant 4 : index
    %c0_80 = arith.constant 0 : index
    %c0_81 = arith.constant 0 : index
    %55 = vector.load %arg4[%c4, %c0_80, %c0_81] : memref<9x64x64xbf16, #tpu.memory_space<vmem>>, vector<1x64x64xbf16>
    %56 = vector.shape_cast %55 : vector<1x64x64xbf16> to vector<64x64xbf16>
    %cst_82 = arith.constant dense<0.000000e+00> : vector<256x64xf32>
    %57 = tpu.matmul %54, %56, %cst_82 {dimension_numbers = #tpu.dot_dimension_numbers<[1], [0], [0], [1], [0, 0, 1, 1], [], []>} : vector<256x64xbf16>, vector<64x64xbf16>, vector<256x64xf32> -> vector<256x64xf32>
    %58 = arith.addf %51, %57 : vector<256x64xf32>
    %c0_83 = arith.constant 0 : index
    %c1_84 = arith.constant 1 : index
    %c2_85 = arith.constant 2 : index
    %c0_86 = arith.constant 0 : index
    %59 = vector.load %arg11[%c0_83, %c1_84, %c2_85, %c0_86] : memref<1x18x18x64xf32, #tpu.memory_space<vmem>>, vector<1x16x16x64xf32>
    %60 = vector.shape_cast %59 : vector<1x16x16x64xf32> to vector<256x64xf32>
    %61 = arith.truncf %60 : vector<256x64xf32> to vector<256x64xbf16>
    %c5 = arith.constant 5 : index
    %c0_87 = arith.constant 0 : index
    %c0_88 = arith.constant 0 : index
    %62 = vector.load %arg4[%c5, %c0_87, %c0_88] : memref<9x64x64xbf16, #tpu.memory_space<vmem>>, vector<1x64x64xbf16>
    %63 = vector.shape_cast %62 : vector<1x64x64xbf16> to vector<64x64xbf16>
    %cst_89 = arith.constant dense<0.000000e+00> : vector<256x64xf32>
    %64 = tpu.matmul %61, %63, %cst_89 {dimension_numbers = #tpu.dot_dimension_numbers<[1], [0], [0], [1], [0, 0, 1, 1], [], []>} : vector<256x64xbf16>, vector<64x64xbf16>, vector<256x64xf32> -> vector<256x64xf32>
    %65 = arith.addf %58, %64 : vector<256x64xf32>
    %c0_90 = arith.constant 0 : index
    %c2_91 = arith.constant 2 : index
    %c0_92 = arith.constant 0 : index
    %c0_93 = arith.constant 0 : index
    %66 = vector.load %arg11[%c0_90, %c2_91, %c0_92, %c0_93] : memref<1x18x18x64xf32, #tpu.memory_space<vmem>>, vector<1x16x16x64xf32>
    %67 = vector.shape_cast %66 : vector<1x16x16x64xf32> to vector<256x64xf32>
    %68 = arith.truncf %67 : vector<256x64xf32> to vector<256x64xbf16>
    %c6 = arith.constant 6 : index
    %c0_94 = arith.constant 0 : index
    %c0_95 = arith.constant 0 : index
    %69 = vector.load %arg4[%c6, %c0_94, %c0_95] : memref<9x64x64xbf16, #tpu.memory_space<vmem>>, vector<1x64x64xbf16>
    %70 = vector.shape_cast %69 : vector<1x64x64xbf16> to vector<64x64xbf16>
    %cst_96 = arith.constant dense<0.000000e+00> : vector<256x64xf32>
    %71 = tpu.matmul %68, %70, %cst_96 {dimension_numbers = #tpu.dot_dimension_numbers<[1], [0], [0], [1], [0, 0, 1, 1], [], []>} : vector<256x64xbf16>, vector<64x64xbf16>, vector<256x64xf32> -> vector<256x64xf32>
    %72 = arith.addf %65, %71 : vector<256x64xf32>
    %c0_97 = arith.constant 0 : index
    %c2_98 = arith.constant 2 : index
    %c1_99 = arith.constant 1 : index
    %c0_100 = arith.constant 0 : index
    %73 = vector.load %arg11[%c0_97, %c2_98, %c1_99, %c0_100] : memref<1x18x18x64xf32, #tpu.memory_space<vmem>>, vector<1x16x16x64xf32>
    %74 = vector.shape_cast %73 : vector<1x16x16x64xf32> to vector<256x64xf32>
    %75 = arith.truncf %74 : vector<256x64xf32> to vector<256x64xbf16>
    %c7 = arith.constant 7 : index
    %c0_101 = arith.constant 0 : index
    %c0_102 = arith.constant 0 : index
    %76 = vector.load %arg4[%c7, %c0_101, %c0_102] : memref<9x64x64xbf16, #tpu.memory_space<vmem>>, vector<1x64x64xbf16>
    %77 = vector.shape_cast %76 : vector<1x64x64xbf16> to vector<64x64xbf16>
    %cst_103 = arith.constant dense<0.000000e+00> : vector<256x64xf32>
    %78 = tpu.matmul %75, %77, %cst_103 {dimension_numbers = #tpu.dot_dimension_numbers<[1], [0], [0], [1], [0, 0, 1, 1], [], []>} : vector<256x64xbf16>, vector<64x64xbf16>, vector<256x64xf32> -> vector<256x64xf32>
    %79 = arith.addf %72, %78 : vector<256x64xf32>
    %c0_104 = arith.constant 0 : index
    %c2_105 = arith.constant 2 : index
    %c2_106 = arith.constant 2 : index
    %c0_107 = arith.constant 0 : index
    %80 = vector.load %arg11[%c0_104, %c2_105, %c2_106, %c0_107] : memref<1x18x18x64xf32, #tpu.memory_space<vmem>>, vector<1x16x16x64xf32>
    %81 = vector.shape_cast %80 : vector<1x16x16x64xf32> to vector<256x64xf32>
    %82 = arith.truncf %81 : vector<256x64xf32> to vector<256x64xbf16>
    %c8 = arith.constant 8 : index
    %c0_108 = arith.constant 0 : index
    %c0_109 = arith.constant 0 : index
    %83 = vector.load %arg4[%c8, %c0_108, %c0_109] : memref<9x64x64xbf16, #tpu.memory_space<vmem>>, vector<1x64x64xbf16>
    %84 = vector.shape_cast %83 : vector<1x64x64xbf16> to vector<64x64xbf16>
    %cst_110 = arith.constant dense<0.000000e+00> : vector<256x64xf32>
    %85 = tpu.matmul %82, %84, %cst_110 {dimension_numbers = #tpu.dot_dimension_numbers<[1], [0], [0], [1], [0, 0, 1, 1], [], []>} : vector<256x64xbf16>, vector<64x64xbf16>, vector<256x64xf32> -> vector<256x64xf32>
    %86 = arith.addf %79, %85 : vector<256x64xf32>
    %c0_111 = arith.constant 0 : index
    %c0_112 = arith.constant 0 : index
    %87 = vector.load %arg5[%c0_111, %c0_112] : memref<1x64xf32, #tpu.memory_space<vmem>>, vector<1x64xf32>
    %88 = vector.broadcast %87 : vector<1x64xf32> to vector<256x64xf32>
    %89 = arith.addf %86, %88 : vector<256x64xf32>
    %cst_113 = arith.constant 0.000000e+00 : f32
    %90 = vector.broadcast %cst_113 : f32 to vector<256x64xf32>
    %91 = arith.maximumf %89, %90 : vector<256x64xf32>
    %92 = vector.shape_cast %91 : vector<256x64xf32> to vector<1x16x16x64xf32>
    %c0_114 = arith.constant 0 : index
    %c1_115 = arith.constant 1 : index
    %c1_116 = arith.constant 1 : index
    %c0_117 = arith.constant 0 : index
    %93 = vector.load %arg11[%c0_114, %c1_115, %c1_116, %c0_117] : memref<1x18x18x64xf32, #tpu.memory_space<vmem>>, vector<1x16x16x64xf32>
    tpu.vector_store %arg11[%c0_114, %c1_115, %c1_116, %c0_117], %92 {strides = array<i32>} : memref<1x18x18x64xf32, #tpu.memory_space<vmem>>, vector<1x16x16x64xf32>,
    %cst_118 = arith.constant 0.000000e+00 : f32
    %94 = vector.broadcast %cst_118 : f32 to vector<256x32xf32>
    %c0_119 = arith.constant 0 : index
    %c0_120 = arith.constant 0 : index
    %c0_121 = arith.constant 0 : index
    %c0_122 = arith.constant 0 : index
    %95 = vector.load %arg11[%c0_119, %c0_120, %c0_121, %c0_122] : memref<1x18x18x64xf32, #tpu.memory_space<vmem>>, vector<1x16x16x64xf32>
    %96 = vector.shape_cast %95 : vector<1x16x16x64xf32> to vector<256x64xf32>
    %97 = arith.truncf %96 : vector<256x64xf32> to vector<256x64xbf16>
    %c0_123 = arith.constant 0 : index
    %c0_124 = arith.constant 0 : index
    %c0_125 = arith.constant 0 : index
    %98 = vector.load %arg6[%c0_123, %c0_124, %c0_125] : memref<9x64x32xbf16, #tpu.memory_space<vmem>>, vector<1x64x32xbf16>
    %99 = vector.shape_cast %98 : vector<1x64x32xbf16> to vector<64x32xbf16>
    %cst_126 = arith.constant dense<0.000000e+00> : vector<256x32xf32>
    %100 = tpu.matmul %97, %99, %cst_126 {dimension_numbers = #tpu.dot_dimension_numbers<[1], [0], [0], [1], [0, 0, 1, 1], [], []>} : vector<256x64xbf16>, vector<64x32xbf16>, vector<256x32xf32> -> vector<256x32xf32>
    %101 = arith.addf %94, %100 : vector<256x32xf32>
    %c0_127 = arith.constant 0 : index
    %c0_128 = arith.constant 0 : index
    %c1_129 = arith.constant 1 : index
    %c0_130 = arith.constant 0 : index
    %102 = vector.load %arg11[%c0_127, %c0_128, %c1_129, %c0_130] : memref<1x18x18x64xf32, #tpu.memory_space<vmem>>, vector<1x16x16x64xf32>
    %103 = vector.shape_cast %102 : vector<1x16x16x64xf32> to vector<256x64xf32>
    %104 = arith.truncf %103 : vector<256x64xf32> to vector<256x64xbf16>
    %c1_131 = arith.constant 1 : index
    %c0_132 = arith.constant 0 : index
    %c0_133 = arith.constant 0 : index
    %105 = vector.load %arg6[%c1_131, %c0_132, %c0_133] : memref<9x64x32xbf16, #tpu.memory_space<vmem>>, vector<1x64x32xbf16>
    %106 = vector.shape_cast %105 : vector<1x64x32xbf16> to vector<64x32xbf16>
    %cst_134 = arith.constant dense<0.000000e+00> : vector<256x32xf32>
    %107 = tpu.matmul %104, %106, %cst_134 {dimension_numbers = #tpu.dot_dimension_numbers<[1], [0], [0], [1], [0, 0, 1, 1], [], []>} : vector<256x64xbf16>, vector<64x32xbf16>, vector<256x32xf32> -> vector<256x32xf32>
    %108 = arith.addf %101, %107 : vector<256x32xf32>
    %c0_135 = arith.constant 0 : index
    %c0_136 = arith.constant 0 : index
    %c2_137 = arith.constant 2 : index
    %c0_138 = arith.constant 0 : index
    %109 = vector.load %arg11[%c0_135, %c0_136, %c2_137, %c0_138] : memref<1x18x18x64xf32, #tpu.memory_space<vmem>>, vector<1x16x16x64xf32>
    %110 = vector.shape_cast %109 : vector<1x16x16x64xf32> to vector<256x64xf32>
    %111 = arith.truncf %110 : vector<256x64xf32> to vector<256x64xbf16>
    %c2_139 = arith.constant 2 : index
    %c0_140 = arith.constant 0 : index
    %c0_141 = arith.constant 0 : index
    %112 = vector.load %arg6[%c2_139, %c0_140, %c0_141] : memref<9x64x32xbf16, #tpu.memory_space<vmem>>, vector<1x64x32xbf16>
    %113 = vector.shape_cast %112 : vector<1x64x32xbf16> to vector<64x32xbf16>
    %cst_142 = arith.constant dense<0.000000e+00> : vector<256x32xf32>
    %114 = tpu.matmul %111, %113, %cst_142 {dimension_numbers = #tpu.dot_dimension_numbers<[1], [0], [0], [1], [0, 0, 1, 1], [], []>} : vector<256x64xbf16>, vector<64x32xbf16>, vector<256x32xf32> -> vector<256x32xf32>
    %115 = arith.addf %108, %114 : vector<256x32xf32>
    %c0_143 = arith.constant 0 : index
    %c1_144 = arith.constant 1 : index
    %c0_145 = arith.constant 0 : index
    %c0_146 = arith.constant 0 : index
    %116 = vector.load %arg11[%c0_143, %c1_144, %c0_145, %c0_146] : memref<1x18x18x64xf32, #tpu.memory_space<vmem>>, vector<1x16x16x64xf32>
    %117 = vector.shape_cast %116 : vector<1x16x16x64xf32> to vector<256x64xf32>
    %118 = arith.truncf %117 : vector<256x64xf32> to vector<256x64xbf16>
    %c3_147 = arith.constant 3 : index
    %c0_148 = arith.constant 0 : index
    %c0_149 = arith.constant 0 : index
    %119 = vector.load %arg6[%c3_147, %c0_148, %c0_149] : memref<9x64x32xbf16, #tpu.memory_space<vmem>>, vector<1x64x32xbf16>
    %120 = vector.shape_cast %119 : vector<1x64x32xbf16> to vector<64x32xbf16>
    %cst_150 = arith.constant dense<0.000000e+00> : vector<256x32xf32>
    %121 = tpu.matmul %118, %120, %cst_150 {dimension_numbers = #tpu.dot_dimension_numbers<[1], [0], [0], [1], [0, 0, 1, 1], [], []>} : vector<256x64xbf16>, vector<64x32xbf16>, vector<256x32xf32> -> vector<256x32xf32>
    %122 = arith.addf %115, %121 : vector<256x32xf32>
    %c0_151 = arith.constant 0 : index
    %c1_152 = arith.constant 1 : index
    %c1_153 = arith.constant 1 : index
    %c0_154 = arith.constant 0 : index
    %123 = vector.load %arg11[%c0_151, %c1_152, %c1_153, %c0_154] : memref<1x18x18x64xf32, #tpu.memory_space<vmem>>, vector<1x16x16x64xf32>
    %124 = vector.shape_cast %123 : vector<1x16x16x64xf32> to vector<256x64xf32>
    %125 = arith.truncf %124 : vector<256x64xf32> to vector<256x64xbf16>
    %c4_155 = arith.constant 4 : index
    %c0_156 = arith.constant 0 : index
    %c0_157 = arith.constant 0 : index
    %126 = vector.load %arg6[%c4_155, %c0_156, %c0_157] : memref<9x64x32xbf16, #tpu.memory_space<vmem>>, vector<1x64x32xbf16>
    %127 = vector.shape_cast %126 : vector<1x64x32xbf16> to vector<64x32xbf16>
    %cst_158 = arith.constant dense<0.000000e+00> : vector<256x32xf32>
    %128 = tpu.matmul %125, %127, %cst_158 {dimension_numbers = #tpu.dot_dimension_numbers<[1], [0], [0], [1], [0, 0, 1, 1], [], []>} : vector<256x64xbf16>, vector<64x32xbf16>, vector<256x32xf32> -> vector<256x32xf32>
    %129 = arith.addf %122, %128 : vector<256x32xf32>
    %c0_159 = arith.constant 0 : index
    %c1_160 = arith.constant 1 : index
    %c2_161 = arith.constant 2 : index
    %c0_162 = arith.constant 0 : index
    %130 = vector.load %arg11[%c0_159, %c1_160, %c2_161, %c0_162] : memref<1x18x18x64xf32, #tpu.memory_space<vmem>>, vector<1x16x16x64xf32>
    %131 = vector.shape_cast %130 : vector<1x16x16x64xf32> to vector<256x64xf32>
    %132 = arith.truncf %131 : vector<256x64xf32> to vector<256x64xbf16>
    %c5_163 = arith.constant 5 : index
    %c0_164 = arith.constant 0 : index
    %c0_165 = arith.constant 0 : index
    %133 = vector.load %arg6[%c5_163, %c0_164, %c0_165] : memref<9x64x32xbf16, #tpu.memory_space<vmem>>, vector<1x64x32xbf16>
    %134 = vector.shape_cast %133 : vector<1x64x32xbf16> to vector<64x32xbf16>
    %cst_166 = arith.constant dense<0.000000e+00> : vector<256x32xf32>
    %135 = tpu.matmul %132, %134, %cst_166 {dimension_numbers = #tpu.dot_dimension_numbers<[1], [0], [0], [1], [0, 0, 1, 1], [], []>} : vector<256x64xbf16>, vector<64x32xbf16>, vector<256x32xf32> -> vector<256x32xf32>
    %136 = arith.addf %129, %135 : vector<256x32xf32>
    %c0_167 = arith.constant 0 : index
    %c2_168 = arith.constant 2 : index
    %c0_169 = arith.constant 0 : index
    %c0_170 = arith.constant 0 : index
    %137 = vector.load %arg11[%c0_167, %c2_168, %c0_169, %c0_170] : memref<1x18x18x64xf32, #tpu.memory_space<vmem>>, vector<1x16x16x64xf32>
    %138 = vector.shape_cast %137 : vector<1x16x16x64xf32> to vector<256x64xf32>
    %139 = arith.truncf %138 : vector<256x64xf32> to vector<256x64xbf16>
    %c6_171 = arith.constant 6 : index
    %c0_172 = arith.constant 0 : index
    %c0_173 = arith.constant 0 : index
    %140 = vector.load %arg6[%c6_171, %c0_172, %c0_173] : memref<9x64x32xbf16, #tpu.memory_space<vmem>>, vector<1x64x32xbf16>
    %141 = vector.shape_cast %140 : vector<1x64x32xbf16> to vector<64x32xbf16>
    %cst_174 = arith.constant dense<0.000000e+00> : vector<256x32xf32>
    %142 = tpu.matmul %139, %141, %cst_174 {dimension_numbers = #tpu.dot_dimension_numbers<[1], [0], [0], [1], [0, 0, 1, 1], [], []>} : vector<256x64xbf16>, vector<64x32xbf16>, vector<256x32xf32> -> vector<256x32xf32>
    %143 = arith.addf %136, %142 : vector<256x32xf32>
    %c0_175 = arith.constant 0 : index
    %c2_176 = arith.constant 2 : index
    %c1_177 = arith.constant 1 : index
    %c0_178 = arith.constant 0 : index
    %144 = vector.load %arg11[%c0_175, %c2_176, %c1_177, %c0_178] : memref<1x18x18x64xf32, #tpu.memory_space<vmem>>, vector<1x16x16x64xf32>
    %145 = vector.shape_cast %144 : vector<1x16x16x64xf32> to vector<256x64xf32>
    %146 = arith.truncf %145 : vector<256x64xf32> to vector<256x64xbf16>
    %c7_179 = arith.constant 7 : index
    %c0_180 = arith.constant 0 : index
    %c0_181 = arith.constant 0 : index
    %147 = vector.load %arg6[%c7_179, %c0_180, %c0_181] : memref<9x64x32xbf16, #tpu.memory_space<vmem>>, vector<1x64x32xbf16>
    %148 = vector.shape_cast %147 : vector<1x64x32xbf16> to vector<64x32xbf16>
    %cst_182 = arith.constant dense<0.000000e+00> : vector<256x32xf32>
    %149 = tpu.matmul %146, %148, %cst_182 {dimension_numbers = #tpu.dot_dimension_numbers<[1], [0], [0], [1], [0, 0, 1, 1], [], []>} : vector<256x64xbf16>, vector<64x32xbf16>, vector<256x32xf32> -> vector<256x32xf32>
    %150 = arith.addf %143, %149 : vector<256x32xf32>
    %c0_183 = arith.constant 0 : index
    %c2_184 = arith.constant 2 : index
    %c2_185 = arith.constant 2 : index
    %c0_186 = arith.constant 0 : index
    %151 = vector.load %arg11[%c0_183, %c2_184, %c2_185, %c0_186] : memref<1x18x18x64xf32, #tpu.memory_space<vmem>>, vector<1x16x16x64xf32>
    %152 = vector.shape_cast %151 : vector<1x16x16x64xf32> to vector<256x64xf32>
    %153 = arith.truncf %152 : vector<256x64xf32> to vector<256x64xbf16>
    %c8_187 = arith.constant 8 : index
    %c0_188 = arith.constant 0 : index
    %c0_189 = arith.constant 0 : index
    %154 = vector.load %arg6[%c8_187, %c0_188, %c0_189] : memref<9x64x32xbf16, #tpu.memory_space<vmem>>, vector<1x64x32xbf16>
    %155 = vector.shape_cast %154 : vector<1x64x32xbf16> to vector<64x32xbf16>
    %cst_190 = arith.constant dense<0.000000e+00> : vector<256x32xf32>
    %156 = tpu.matmul %153, %155, %cst_190 {dimension_numbers = #tpu.dot_dimension_numbers<[1], [0], [0], [1], [0, 0, 1, 1], [], []>} : vector<256x64xbf16>, vector<64x32xbf16>, vector<256x32xf32> -> vector<256x32xf32>
    %157 = arith.addf %150, %156 : vector<256x32xf32>
    %c0_191 = arith.constant 0 : index
    %c0_192 = arith.constant 0 : index
    %158 = vector.load %arg7[%c0_191, %c0_192] : memref<1x32xf32, #tpu.memory_space<vmem>>, vector<1x32xf32>
    %159 = vector.broadcast %158 : vector<1x32xf32> to vector<256x32xf32>
    %160 = arith.addf %157, %159 : vector<256x32xf32>
    %cst_193 = arith.constant 0.000000e+00 : f32
    %161 = vector.broadcast %cst_193 : f32 to vector<256x32xf32>
    %162 = arith.maximumf %160, %161 : vector<256x32xf32>
    %163 = vector.shape_cast %162 : vector<256x32xf32> to vector<1x16x16x32xf32>
    %c0_194 = arith.constant 0 : index
    %c1_195 = arith.constant 1 : index
    %c1_196 = arith.constant 1 : index
    %c0_197 = arith.constant 0 : index
    %164 = vector.load %arg12[%c0_194, %c1_195, %c1_196, %c0_197] : memref<1x18x18x32xf32, #tpu.memory_space<vmem>>, vector<1x16x16x32xf32>
    tpu.vector_store %arg12[%c0_194, %c1_195, %c1_196, %c0_197], %163 {strides = array<i32>} : memref<1x18x18x32xf32, #tpu.memory_space<vmem>>, vector<1x16x16x32xf32>,
    %cst_198 = arith.constant 0.000000e+00 : f32
    %165 = vector.broadcast %cst_198 : f32 to vector<256x128xf32>
    %c0_199 = arith.constant 0 : index
    %c0_200 = arith.constant 0 : index
    %c0_201 = arith.constant 0 : index
    %c0_202 = arith.constant 0 : index
    %166 = vector.load %arg12[%c0_199, %c0_200, %c0_201, %c0_202] : memref<1x18x18x32xf32, #tpu.memory_space<vmem>>, vector<1x16x16x32xf32>
    %167 = vector.shape_cast %166 : vector<1x16x16x32xf32> to vector<256x32xf32>
    %168 = arith.truncf %167 : vector<256x32xf32> to vector<256x32xbf16>
    %c0_203 = arith.constant 0 : index
    %c0_204 = arith.constant 0 : index
    %c0_205 = arith.constant 0 : index
    %169 = vector.load %arg8[%c0_203, %c0_204, %c0_205] : memref<9x32x128xbf16, #tpu.memory_space<vmem>>, vector<1x32x128xbf16>
    %170 = vector.shape_cast %169 : vector<1x32x128xbf16> to vector<32x128xbf16>
    %cst_206 = arith.constant dense<0.000000e+00> : vector<256x128xf32>
    %171 = tpu.matmul %168, %170, %cst_206 {dimension_numbers = #tpu.dot_dimension_numbers<[1], [0], [0], [1], [0, 0, 1, 1], [], []>} : vector<256x32xbf16>, vector<32x128xbf16>, vector<256x128xf32> -> vector<256x128xf32>
    %172 = arith.addf %165, %171 : vector<256x128xf32>
    %c0_207 = arith.constant 0 : index
    %c0_208 = arith.constant 0 : index
    %c1_209 = arith.constant 1 : index
    %c0_210 = arith.constant 0 : index
    %173 = vector.load %arg12[%c0_207, %c0_208, %c1_209, %c0_210] : memref<1x18x18x32xf32, #tpu.memory_space<vmem>>, vector<1x16x16x32xf32>
    %174 = vector.shape_cast %173 : vector<1x16x16x32xf32> to vector<256x32xf32>
    %175 = arith.truncf %174 : vector<256x32xf32> to vector<256x32xbf16>
    %c1_211 = arith.constant 1 : index
    %c0_212 = arith.constant 0 : index
    %c0_213 = arith.constant 0 : index
    %176 = vector.load %arg8[%c1_211, %c0_212, %c0_213] : memref<9x32x128xbf16, #tpu.memory_space<vmem>>, vector<1x32x128xbf16>
    %177 = vector.shape_cast %176 : vector<1x32x128xbf16> to vector<32x128xbf16>
    %cst_214 = arith.constant dense<0.000000e+00> : vector<256x128xf32>
    %178 = tpu.matmul %175, %177, %cst_214 {dimension_numbers = #tpu.dot_dimension_numbers<[1], [0], [0], [1], [0, 0, 1, 1], [], []>} : vector<256x32xbf16>, vector<32x128xbf16>, vector<256x128xf32> -> vector<256x128xf32>
    %179 = arith.addf %172, %178 : vector<256x128xf32>
    %c0_215 = arith.constant 0 : index
    %c0_216 = arith.constant 0 : index
    %c2_217 = arith.constant 2 : index
    %c0_218 = arith.constant 0 : index
    %180 = vector.load %arg12[%c0_215, %c0_216, %c2_217, %c0_218] : memref<1x18x18x32xf32, #tpu.memory_space<vmem>>, vector<1x16x16x32xf32>
    %181 = vector.shape_cast %180 : vector<1x16x16x32xf32> to vector<256x32xf32>
    %182 = arith.truncf %181 : vector<256x32xf32> to vector<256x32xbf16>
    %c2_219 = arith.constant 2 : index
    %c0_220 = arith.constant 0 : index
    %c0_221 = arith.constant 0 : index
    %183 = vector.load %arg8[%c2_219, %c0_220, %c0_221] : memref<9x32x128xbf16, #tpu.memory_space<vmem>>, vector<1x32x128xbf16>
    %184 = vector.shape_cast %183 : vector<1x32x128xbf16> to vector<32x128xbf16>
    %cst_222 = arith.constant dense<0.000000e+00> : vector<256x128xf32>
    %185 = tpu.matmul %182, %184, %cst_222 {dimension_numbers = #tpu.dot_dimension_numbers<[1], [0], [0], [1], [0, 0, 1, 1], [], []>} : vector<256x32xbf16>, vector<32x128xbf16>, vector<256x128xf32> -> vector<256x128xf32>
    %186 = arith.addf %179, %185 : vector<256x128xf32>
    %c0_223 = arith.constant 0 : index
    %c1_224 = arith.constant 1 : index
    %c0_225 = arith.constant 0 : index
    %c0_226 = arith.constant 0 : index
    %187 = vector.load %arg12[%c0_223, %c1_224, %c0_225, %c0_226] : memref<1x18x18x32xf32, #tpu.memory_space<vmem>>, vector<1x16x16x32xf32>
    %188 = vector.shape_cast %187 : vector<1x16x16x32xf32> to vector<256x32xf32>
    %189 = arith.truncf %188 : vector<256x32xf32> to vector<256x32xbf16>
    %c3_227 = arith.constant 3 : index
    %c0_228 = arith.constant 0 : index
    %c0_229 = arith.constant 0 : index
    %190 = vector.load %arg8[%c3_227, %c0_228, %c0_229] : memref<9x32x128xbf16, #tpu.memory_space<vmem>>, vector<1x32x128xbf16>
    %191 = vector.shape_cast %190 : vector<1x32x128xbf16> to vector<32x128xbf16>
    %cst_230 = arith.constant dense<0.000000e+00> : vector<256x128xf32>
    %192 = tpu.matmul %189, %191, %cst_230 {dimension_numbers = #tpu.dot_dimension_numbers<[1], [0], [0], [1], [0, 0, 1, 1], [], []>} : vector<256x32xbf16>, vector<32x128xbf16>, vector<256x128xf32> -> vector<256x128xf32>
    %193 = arith.addf %186, %192 : vector<256x128xf32>
    %c0_231 = arith.constant 0 : index
    %c1_232 = arith.constant 1 : index
    %c1_233 = arith.constant 1 : index
    %c0_234 = arith.constant 0 : index
    %194 = vector.load %arg12[%c0_231, %c1_232, %c1_233, %c0_234] : memref<1x18x18x32xf32, #tpu.memory_space<vmem>>, vector<1x16x16x32xf32>
    %195 = vector.shape_cast %194 : vector<1x16x16x32xf32> to vector<256x32xf32>
    %196 = arith.truncf %195 : vector<256x32xf32> to vector<256x32xbf16>
    %c4_235 = arith.constant 4 : index
    %c0_236 = arith.constant 0 : index
    %c0_237 = arith.constant 0 : index
    %197 = vector.load %arg8[%c4_235, %c0_236, %c0_237] : memref<9x32x128xbf16, #tpu.memory_space<vmem>>, vector<1x32x128xbf16>
    %198 = vector.shape_cast %197 : vector<1x32x128xbf16> to vector<32x128xbf16>
    %cst_238 = arith.constant dense<0.000000e+00> : vector<256x128xf32>
    %199 = tpu.matmul %196, %198, %cst_238 {dimension_numbers = #tpu.dot_dimension_numbers<[1], [0], [0], [1], [0, 0, 1, 1], [], []>} : vector<256x32xbf16>, vector<32x128xbf16>, vector<256x128xf32> -> vector<256x128xf32>
    %200 = arith.addf %193, %199 : vector<256x128xf32>
    %c0_239 = arith.constant 0 : index
    %c1_240 = arith.constant 1 : index
    %c2_241 = arith.constant 2 : index
    %c0_242 = arith.constant 0 : index
    %201 = vector.load %arg12[%c0_239, %c1_240, %c2_241, %c0_242] : memref<1x18x18x32xf32, #tpu.memory_space<vmem>>, vector<1x16x16x32xf32>
    %202 = vector.shape_cast %201 : vector<1x16x16x32xf32> to vector<256x32xf32>
    %203 = arith.truncf %202 : vector<256x32xf32> to vector<256x32xbf16>
    %c5_243 = arith.constant 5 : index
    %c0_244 = arith.constant 0 : index
    %c0_245 = arith.constant 0 : index
    %204 = vector.load %arg8[%c5_243, %c0_244, %c0_245] : memref<9x32x128xbf16, #tpu.memory_space<vmem>>, vector<1x32x128xbf16>
    %205 = vector.shape_cast %204 : vector<1x32x128xbf16> to vector<32x128xbf16>
    %cst_246 = arith.constant dense<0.000000e+00> : vector<256x128xf32>
    %206 = tpu.matmul %203, %205, %cst_246 {dimension_numbers = #tpu.dot_dimension_numbers<[1], [0], [0], [1], [0, 0, 1, 1], [], []>} : vector<256x32xbf16>, vector<32x128xbf16>, vector<256x128xf32> -> vector<256x128xf32>
    %207 = arith.addf %200, %206 : vector<256x128xf32>
    %c0_247 = arith.constant 0 : index
    %c2_248 = arith.constant 2 : index
    %c0_249 = arith.constant 0 : index
    %c0_250 = arith.constant 0 : index
    %208 = vector.load %arg12[%c0_247, %c2_248, %c0_249, %c0_250] : memref<1x18x18x32xf32, #tpu.memory_space<vmem>>, vector<1x16x16x32xf32>
    %209 = vector.shape_cast %208 : vector<1x16x16x32xf32> to vector<256x32xf32>
    %210 = arith.truncf %209 : vector<256x32xf32> to vector<256x32xbf16>
    %c6_251 = arith.constant 6 : index
    %c0_252 = arith.constant 0 : index
    %c0_253 = arith.constant 0 : index
    %211 = vector.load %arg8[%c6_251, %c0_252, %c0_253] : memref<9x32x128xbf16, #tpu.memory_space<vmem>>, vector<1x32x128xbf16>
    %212 = vector.shape_cast %211 : vector<1x32x128xbf16> to vector<32x128xbf16>
    %cst_254 = arith.constant dense<0.000000e+00> : vector<256x128xf32>
    %213 = tpu.matmul %210, %212, %cst_254 {dimension_numbers = #tpu.dot_dimension_numbers<[1], [0], [0], [1], [0, 0, 1, 1], [], []>} : vector<256x32xbf16>, vector<32x128xbf16>, vector<256x128xf32> -> vector<256x128xf32>
    %214 = arith.addf %207, %213 : vector<256x128xf32>
    %c0_255 = arith.constant 0 : index
    %c2_256 = arith.constant 2 : index
    %c1_257 = arith.constant 1 : index
    %c0_258 = arith.constant 0 : index
    %215 = vector.load %arg12[%c0_255, %c2_256, %c1_257, %c0_258] : memref<1x18x18x32xf32, #tpu.memory_space<vmem>>, vector<1x16x16x32xf32>
    %216 = vector.shape_cast %215 : vector<1x16x16x32xf32> to vector<256x32xf32>
    %217 = arith.truncf %216 : vector<256x32xf32> to vector<256x32xbf16>
    %c7_259 = arith.constant 7 : index
    %c0_260 = arith.constant 0 : index
    %c0_261 = arith.constant 0 : index
    %218 = vector.load %arg8[%c7_259, %c0_260, %c0_261] : memref<9x32x128xbf16, #tpu.memory_space<vmem>>, vector<1x32x128xbf16>
    %219 = vector.shape_cast %218 : vector<1x32x128xbf16> to vector<32x128xbf16>
    %cst_262 = arith.constant dense<0.000000e+00> : vector<256x128xf32>
    %220 = tpu.matmul %217, %219, %cst_262 {dimension_numbers = #tpu.dot_dimension_numbers<[1], [0], [0], [1], [0, 0, 1, 1], [], []>} : vector<256x32xbf16>, vector<32x128xbf16>, vector<256x128xf32> -> vector<256x128xf32>
    %221 = arith.addf %214, %220 : vector<256x128xf32>
    %c0_263 = arith.constant 0 : index
    %c2_264 = arith.constant 2 : index
    %c2_265 = arith.constant 2 : index
    %c0_266 = arith.constant 0 : index
    %222 = vector.load %arg12[%c0_263, %c2_264, %c2_265, %c0_266] : memref<1x18x18x32xf32, #tpu.memory_space<vmem>>, vector<1x16x16x32xf32>
    %223 = vector.shape_cast %222 : vector<1x16x16x32xf32> to vector<256x32xf32>
    %224 = arith.truncf %223 : vector<256x32xf32> to vector<256x32xbf16>
    %c8_267 = arith.constant 8 : index
    %c0_268 = arith.constant 0 : index
    %c0_269 = arith.constant 0 : index
    %225 = vector.load %arg8[%c8_267, %c0_268, %c0_269] : memref<9x32x128xbf16, #tpu.memory_space<vmem>>, vector<1x32x128xbf16>
    %226 = vector.shape_cast %225 : vector<1x32x128xbf16> to vector<32x128xbf16>
    %cst_270 = arith.constant dense<0.000000e+00> : vector<256x128xf32>
    %227 = tpu.matmul %224, %226, %cst_270 {dimension_numbers = #tpu.dot_dimension_numbers<[1], [0], [0], [1], [0, 0, 1, 1], [], []>} : vector<256x32xbf16>, vector<32x128xbf16>, vector<256x128xf32> -> vector<256x128xf32>
    %228 = arith.addf %221, %227 : vector<256x128xf32>
    %c0_271 = arith.constant 0 : index
    %c0_272 = arith.constant 0 : index
    %229 = vector.load %arg9[%c0_271, %c0_272] : memref<1x128xf32, #tpu.memory_space<vmem>>, vector<1x128xf32>
    %230 = vector.broadcast %229 : vector<1x128xf32> to vector<256x128xf32>
    %231 = arith.addf %228, %230 : vector<256x128xf32>
    %232 = vector.shape_cast %231 : vector<256x128xf32> to vector<1x16x16x128xf32>
    %c0_273 = arith.constant 0 : index
    %c0_274 = arith.constant 0 : index
    %c0_275 = arith.constant 0 : index
    %c0_276 = arith.constant 0 : index
    %233 = vector.load %arg10[%c0_273, %c0_274, %c0_275, %c0_276] : memref<1x16x16x128xf32, #tpu.memory_space<vmem>>, vector<1x16x16x128xf32>
    tpu.vector_store %arg10[%c0_273, %c0_274, %c0_275, %c0_276], %232 {strides = array<i32>} : memref<1x16x16x128xf32, #tpu.memory_space<vmem>>, vector<1x16x16x128xf32>,
    return
  }
  func.func @transform_0(%arg0: i32) -> (i32, i32, i32) {
    %c0_i32 = arith.constant 0 : i32
    %c0_i32_0 = arith.constant 0 : i32
    %c0_i32_1 = arith.constant 0 : i32
    return %arg0, %c0_i32, %c0_i32_0 : i32, i32, i32
  }
  func.func @transform_1(%arg0: i32) -> (i32, i32) {
    %c0_i32 = arith.constant 0 : i32
    %c0_i32_0 = arith.constant 0 : i32
    %c0_i32_1 = arith.constant 0 : i32
    return %c0_i32, %c0_i32_0 : i32, i32
  }
  func.func @transform_2(%arg0: i32) -> (i32, i32) {
    %c0_i32 = arith.constant 0 : i32
    %c0_i32_0 = arith.constant 0 : i32
    %c0_i32_1 = arith.constant 0 : i32
    return %c0_i32, %c0_i32_0 : i32, i32
  }
  func.func @transform_3(%arg0: i32) -> (i32, i32, i32) {
    %c0_i32 = arith.constant 0 : i32
    %c0_i32_0 = arith.constant 0 : i32
    %c0_i32_1 = arith.constant 0 : i32
    %c0_i32_2 = arith.constant 0 : i32
    return %c0_i32, %c0_i32_0, %c0_i32_1 : i32, i32, i32
  }
  func.func @transform_4(%arg0: i32) -> (i32, i32) {
    %c0_i32 = arith.constant 0 : i32
    %c0_i32_0 = arith.constant 0 : i32
    %c0_i32_1 = arith.constant 0 : i32
    return %c0_i32, %c0_i32_0 : i32, i32
  }
  func.func @transform_5(%arg0: i32) -> (i32, i32, i32) {
    %c0_i32 = arith.constant 0 : i32
    %c0_i32_0 = arith.constant 0 : i32
    %c0_i32_1 = arith.constant 0 : i32
    %c0_i32_2 = arith.constant 0 : i32
    return %c0_i32, %c0_i32_0, %c0_i32_1 : i32, i32, i32
  }
  func.func @transform_6(%arg0: i32) -> (i32, i32) {
    %c0_i32 = arith.constant 0 : i32
    %c0_i32_0 = arith.constant 0 : i32
    %c0_i32_1 = arith.constant 0 : i32
    return %c0_i32, %c0_i32_0 : i32, i32
  }
  func.func @transform_7(%arg0: i32) -> (i32, i32, i32) {
    %c0_i32 = arith.constant 0 : i32
    %c0_i32_0 = arith.constant 0 : i32
    %c0_i32_1 = arith.constant 0 : i32
    %c0_i32_2 = arith.constant 0 : i32
    return %c0_i32, %c0_i32_0, %c0_i32_1 : i32, i32, i32
  }
  func.func @transform_8(%arg0: i32) -> (i32, i32) {
    %c0_i32 = arith.constant 0 : i32
    %c0_i32_0 = arith.constant 0 : i32
    %c0_i32_1 = arith.constant 0 : i32
    return %c0_i32, %c0_i32_0 : i32, i32
  }
  func.func @transform_9(%arg0: i32) -> (i32, i32, i32, i32) {
    %c0_i32 = arith.constant 0 : i32
    %c0_i32_0 = arith.constant 0 : i32
    %c0_i32_1 = arith.constant 0 : i32
    %c0_i32_2 = arith.constant 0 : i32
    return %arg0, %c0_i32, %c0_i32_0, %c0_i32_1 : i32, i32, i32, i32
  }
}

</mosaic_0001>

<llo_original>
// kernel: super_resolution_forward.1
$region0: #{super_resolution_forward.1}
  #allocation0 [shape = 'u32[]', space=smem, size = 0x4, offset = 0x4, fixed_abs, tag = 'smem constant byte address 0x4 - core index']
  #allocation1 [shape = 'u32[144,128]{1,0:T(1,128)}', space=vmem, size = 0x12000, scoped, tag = 'internal scratch']
  #allocation2 [shape = 'f32[1,18,18,64]{3,2,1,0:T(8,128)}', space=vmem, size = 0x36000, scoped, tag = 'scratch operand']
  #allocation3 [shape = 'f32[1,18,18,32]{3,2,1,0:T(8,128)}', space=vmem, size = 0x36000, scoped, tag = 'scratch operand']
  %s0 = inlined_call_operand.vmem [shape: bf16[2,256,32], index: 0, kind: input, shape index: {}]
  %s1 = inlined_call_operand.vmem [shape: bf16[32,64], index: 1, kind: input, shape index: {}]
  %s2 = inlined_call_operand.vmem [shape: f32[1,64], index: 2, kind: input, shape index: {}]
  %s3 = inlined_call_operand.vmem [shape: bf16[9,64,64], index: 3, kind: input, shape index: {}]
  %s4 = inlined_call_operand.vmem [shape: f32[1,64], index: 4, kind: input, shape index: {}]
  %s5 = inlined_call_operand.vmem [shape: bf16[9,64,32], index: 5, kind: input, shape index: {}]
  %s6 = inlined_call_operand.vmem [shape: f32[1,32], index: 6, kind: input, shape index: {}]
  %s7 = inlined_call_operand.vmem [shape: bf16[9,32,128], index: 7, kind: input, shape index: {}]
  %s8 = inlined_call_operand.vmem [shape: f32[1,128], index: 8, kind: input, shape index: {}]
  %s9 = inlined_call_operand.vmem [shape: f32[2,16,16,128], index: 9, kind: output, shape index: {}]
  %s10 = sld [smem:[#allocation0]]
  $region69: #{super_resolution_forward.1} parent=0
    _
  %s12 = ssub.s32 1, %s10
  %s13 = scalar_select 0, %s12, %s10
  loop: start=0, step=1, limit=4
  $region2: #{super_resolution_forward.1} parent=0 // loop_pre_header
    _
  $region3: #{super_resolution_forward.1} parent=0 // loop_header
    %s15 = sphi 0, %s19
    %p16 = scmp.ge.s32.totalorder %s15, 4
    %s25 = sphi 0, %s27
    %s28 = sphi 0, %s25
    %s29 = sphi 0, %s28
    %s45 = sphi 0, %s29
    %s49 = sphi 0, %s49
    %s51 = sphi 0, %s49
    %s52 = sphi 0, %s51
    %s66 = sphi 0, %s52
    %s70 = sphi 0, %s70
    %s72 = sphi 0, %s70
    %s73 = sphi 0, %s72
    %s87 = sphi 0, %s73
    %s91 = sphi 0, %s91
    %s93 = sphi 0, %s91
    %s94 = sphi 0, %s93
    %s108 = sphi 0, %s94
    %s112 = sphi 0, %s112
    %s114 = sphi 0, %s112
    %s115 = sphi 0, %s114
    %s129 = sphi 0, %s115
    %s133 = sphi 0, %s133
    %s135 = sphi 0, %s133
    %s136 = sphi 0, %s135
    %s150 = sphi 0, %s136
    %s154 = sphi 0, %s154
    %s156 = sphi 0, %s154
    %s157 = sphi 0, %s156
    %s171 = sphi 0, %s157
    %s175 = sphi 0, %s175
    %s177 = sphi 0, %s175
    %s178 = sphi 0, %s177
    %s192 = sphi 0, %s178
    %s196 = sphi 0, %s196
    %s198 = sphi 0, %s196
    %s199 = sphi 0, %s198
    %s213 = sphi 0, %s199
    %s219 = sphi 0, %s221
    %s222 = sphi 0, %s219
    %s223 = sphi 0, %s222
    %s239 = sphi 0, %s223
  $region4: #{super_resolution_forward.1} parent=0 // loop_header_branch
    %18 = sbr.rel (%p16) target = $region8
  $region5: #{super_resolution_forward.1} parent=0 // loop_body
    %s20 = ssub.s32 %s15, 1
    %s21 = ssub.s32 %s15, 2
    %s22 = sadd.s32 %s15, 1
    %s23 = ssub.s32 %s15, %s22
    %p24 = scmp.eq.s32.totalorder %s23, 0
    %s26 = sadd.s32 %s25, 1
    %s27 = scalar_select %p24, %s25, %s26
    %p30 = pneg %p24
    %p31 = scmp.eq.s32.totalorder %s15, 1
    %p32 = por %p30, %p31
    %p33 = scmp.ne.s32.totalorder %s25, %s28
    %p34 = scmp.eq.s32.totalorder %s15, 0
    %p35 = por %p33, %p34
    %p36 = scmp.ne.s32.totalorder %s25, %s28
    %p37 = scmp.eq.s32.totalorder %s20, 1
    %p38 = por %p36, %p37
    %p39 = scmp.ne.s32.totalorder %s28, %s29
    %p40 = scmp.eq.s32.totalorder %s20, 0
    %p41 = por %p39, %p40
    %p42 = scmp.ne.s32.totalorder %s28, %s29
    %p43 = scmp.eq.s32.totalorder %s21, 1
    %p44 = por %p42, %p43
    %p46 = scmp.ne.s32.totalorder %s29, %s45
    %p47 = scmp.eq.s32.totalorder %s21, 0
    %p48 = por %p46, %p47
    %s50 = sadd.s32 %s49, 1
    %p53 = scmp.eq.s32.totalorder %s15, 1
    %p54 = scmp.ne.s32.totalorder %s49, %s51
    %p55 = scmp.eq.s32.totalorder %s15, 0
    %p56 = por %p54, %p55
    %p57 = scmp.ne.s32.totalorder %s49, %s51
    %p58 = scmp.eq.s32.totalorder %s20, 1
    %p59 = por %p57, %p58
    %p60 = scmp.ne.s32.totalorder %s51, %s52
    %p61 = scmp.eq.s32.totalorder %s20, 0
    %p62 = por %p60, %p61
    %p63 = scmp.ne.s32.totalorder %s51, %s52
    %p64 = scmp.eq.s32.totalorder %s21, 1
    %p65 = por %p63, %p64
    %p67 = scmp.ne.s32.totalorder %s52, %s66
    %p68 = scmp.eq.s32.totalorder %s21, 0
    %p69 = por %p67, %p68
    %s71 = sadd.s32 %s70, 1
    %p74 = scmp.eq.s32.totalorder %s15, 1
    %p75 = scmp.ne.s32.totalorder %s70, %s72
    %p76 = scmp.eq.s32.totalorder %s15, 0
    %p77 = por %p75, %p76
    %p78 = scmp.ne.s32.totalorder %s70, %s72
    %p79 = scmp.eq.s32.totalorder %s20, 1
    %p80 = por %p78, %p79
    %p81 = scmp.ne.s32.totalorder %s72, %s73
    %p82 = scmp.eq.s32.totalorder %s20, 0
    %p83 = por %p81, %p82
    %p84 = scmp.ne.s32.totalorder %s72, %s73
    %p85 = scmp.eq.s32.totalorder %s21, 1
    %p86 = por %p84, %p85
    %p88 = scmp.ne.s32.totalorder %s73, %s87
    %p89 = scmp.eq.s32.totalorder %s21, 0
    %p90 = por %p88, %p89
    %s92 = sadd.s32 %s91, 1
    %p95 = scmp.eq.s32.totalorder %s15, 1
    %p96 = scmp.ne.s32.totalorder %s91, %s93
    %p97 = scmp.eq.s32.totalorder %s15, 0
    %p98 = por %p96, %p97
    %p99 = scmp.ne.s32.totalorder %s91, %s93
    %p100 = scmp.eq.s32.totalorder %s20, 1
    %p101 = por %p99, %p100
    %p102 = scmp.ne.s32.totalorder %s93, %s94
    %p103 = scmp.eq.s32.totalorder %s20, 0
    %p104 = por %p102, %p103
    %p105 = scmp.ne.s32.totalorder %s93, %s94
    %p106 = scmp.eq.s32.totalorder %s21, 1
    %p107 = por %p105, %p106
    %p109 = scmp.ne.s32.totalorder %s94, %s108
    %p110 = scmp.eq.s32.totalorder %s21, 0
    %p111 = por %p109, %p110
    %s113 = sadd.s32 %s112, 1
    %p116 = scmp.eq.s32.totalorder %s15, 1
    %p117 = scmp.ne.s32.totalorder %s112, %s114
    %p118 = scmp.eq.s32.totalorder %s15, 0
    %p119 = por %p117, %p118
    %p120 = scmp.ne.s32.totalorder %s112, %s114
    %p121 = scmp.eq.s32.totalorder %s20, 1
    %p122 = por %p120, %p121
    %p123 = scmp.ne.s32.totalorder %s114, %s115
    %p124 = scmp.eq.s32.totalorder %s20, 0
    %p125 = por %p123, %p124
    %p126 = scmp.ne.s32.totalorder %s114, %s115
    %p127 = scmp.eq.s32.totalorder %s21, 1
    %p128 = por %p126, %p127
    %p130 = scmp.ne.s32.totalorder %s115, %s129
    %p131 = scmp.eq.s32.totalorder %s21, 0
    %p132 = por %p130, %p131
    %s134 = sadd.s32 %s133, 1
    %p137 = scmp.eq.s32.totalorder %s15, 1
    %p138 = scmp.ne.s32.totalorder %s133, %s135
    %p139 = scmp.eq.s32.totalorder %s15, 0
    %p140 = por %p138, %p139
    %p141 = scmp.ne.s32.totalorder %s133, %s135
    %p142 = scmp.eq.s32.totalorder %s20, 1
    %p143 = por %p141, %p142
    %p144 = scmp.ne.s32.totalorder %s135, %s136
    %p145 = scmp.eq.s32.totalorder %s20, 0
    %p146 = por %p144, %p145
    %p147 = scmp.ne.s32.totalorder %s135, %s136
    %p148 = scmp.eq.s32.totalorder %s21, 1
    %p149 = por %p147, %p148
    %p151 = scmp.ne.s32.totalorder %s136, %s150
    %p152 = scmp.eq.s32.totalorder %s21, 0
    %p153 = por %p151, %p152
    %s155 = sadd.s32 %s154, 1
    %p158 = scmp.eq.s32.totalorder %s15, 1
    %p159 = scmp.ne.s32.totalorder %s154, %s156
    %p160 = scmp.eq.s32.totalorder %s15, 0
    %p161 = por %p159, %p160
    %p162 = scmp.ne.s32.totalorder %s154, %s156
    %p163 = scmp.eq.s32.totalorder %s20, 1
    %p164 = por %p162, %p163
    %p165 = scmp.ne.s32.totalorder %s156, %s157
    %p166 = scmp.eq.s32.totalorder %s20, 0
    %p167 = por %p165, %p166
    %p168 = scmp.ne.s32.totalorder %s156, %s157
    %p169 = scmp.eq.s32.totalorder %s21, 1
    %p170 = por %p168, %p169
    %p172 = scmp.ne.s32.totalorder %s157, %s171
    %p173 = scmp.eq.s32.totalorder %s21, 0
    %p174 = por %p172, %p173
    %s176 = sadd.s32 %s175, 1
    %p179 = scmp.eq.s32.totalorder %s15, 1
    %p180 = scmp.ne.s32.totalorder %s175, %s177
    %p181 = scmp.eq.s32.totalorder %s15, 0
    %p182 = por %p180, %p181
    %p183 = scmp.ne.s32.totalorder %s175, %s177
    %p184 = scmp.eq.s32.totalorder %s20, 1
    %p185 = por %p183, %p184
    %p186 = scmp.ne.s32.totalorder %s177, %s178
    %p187 = scmp.eq.s32.totalorder %s20, 0
    %p188 = por %p186, %p187
    %p189 = scmp.ne.s32.totalorder %s177, %s178
    %p190 = scmp.eq.s32.totalorder %s21, 1
    %p191 = por %p189, %p190
    %p193 = scmp.ne.s32.totalorder %s178, %s192
    %p194 = scmp.eq.s32.totalorder %s21, 0
    %p195 = por %p193, %p194
    %s197 = sadd.s32 %s196, 1
    %p200 = scmp.eq.s32.totalorder %s15, 1
    %p201 = scmp.ne.s32.totalorder %s196, %s198
    %p202 = scmp.eq.s32.totalorder %s15, 0
    %p203 = por %p201, %p202
    %p204 = scmp.ne.s32.totalorder %s196, %s198
    %p205 = scmp.eq.s32.totalorder %s20, 1
    %p206 = por %p204, %p205
    %p207 = scmp.ne.s32.totalorder %s198, %s199
    %p208 = scmp.eq.s32.totalorder %s20, 0
    %p209 = por %p207, %p208
    %p210 = scmp.ne.s32.totalorder %s198, %s199
    %p211 = scmp.eq.s32.totalorder %s21, 1
    %p212 = por %p210, %p211
    %p214 = scmp.ne.s32.totalorder %s199, %s213
    %p215 = scmp.eq.s32.totalorder %s21, 0
    %p216 = por %p214, %p215
    %s217 = ssub.s32 %s15, %s22
    %p218 = scmp.eq.s32.totalorder %s217, 0
    %s220 = sadd.s32 %s219, 1
    %s221 = scalar_select %p218, %s219, %s220
    %p224 = pneg %p218
    %p225 = scmp.eq.s32.totalorder %s15, 1
    %p226 = por %p224, %p225
    %p227 = scmp.ne.s32.totalorder %s219, %s222
    %p228 = scmp.eq.s32.totalorder %s15, 0
    %p229 = por %p227, %p228
    %p230 = scmp.ne.s32.totalorder %s219, %s222
    %p231 = scmp.eq.s32.totalorder %s20, 1
    %p232 = por %p230, %p231
    %p233 = scmp.ne.s32.totalorder %s222, %s223
    %p234 = scmp.eq.s32.totalorder %s20, 0
    %p235 = por %p233, %p234
    %p236 = scmp.ne.s32.totalorder %s222, %s223
    %p237 = scmp.eq.s32.totalorder %s21, 1
    %p238 = por %p236, %p237
    %p240 = scmp.ne.s32.totalorder %s223, %s239
    %p241 = scmp.eq.s32.totalorder %s21, 0
    %p242 = por %p240, %p241
    %p243 = scmp.le.s32.totalorder 1, %s15
    %p244 = scmp.lt.s32.totalorder %s15, 3
    %p245 = pnand %p243, %p244
    %p246 = pneg %p245
    // Predicated region
    $region9: #{super_resolution_forward.1} parent=5 // pred_check
      _
    $region10: #{super_resolution_forward.1} parent=5 // pred_check_branch
      %248 = sbr.rel (%p245) target = $region12
    $region11: #{super_resolution_forward.1} parent=5 // pred_region
      %s249 = ssub.s32 %s15, 1
      // Predicated region
      $region13: #{super_resolution_forward.1} parent=11 // pred_check
        %p250 = pneg %p62
      $region14: #{super_resolution_forward.1} parent=11 // pred_check_branch
        %252 = sbr.rel (%p250) target = $region16
      $region15: #{super_resolution_forward.1} parent=11 // pred_region
        _
      $region16: #{super_resolution_forward.1} parent=11 // pred_fallthru
        _
      // Predicated region
      $region17: #{super_resolution_forward.1} parent=11 // pred_check
        %p253 = pneg %p83
      $region18: #{super_resolution_forward.1} parent=11 // pred_check_branch
        %255 = sbr.rel (%p253) target = $region20
      $region19: #{super_resolution_forward.1} parent=11 // pred_region
        _
      $region20: #{super_resolution_forward.1} parent=11 // pred_fallthru
        _
      // Predicated region
      $region21: #{super_resolution_forward.1} parent=11 // pred_check
        %p256 = pneg %p104
      $region22: #{super_resolution_forward.1} parent=11 // pred_check_branch
        %258 = sbr.rel (%p256) target = $region24
      $region23: #{super_resolution_forward.1} parent=11 // pred_region
        _
      $region24: #{super_resolution_forward.1} parent=11 // pred_fallthru
        _
      // Predicated region
      $region25: #{super_resolution_forward.1} parent=11 // pred_check
        %p259 = pneg %p125
      $region26: #{super_resolution_forward.1} parent=11 // pred_check_branch
        %261 = sbr.rel (%p259) target = $region28
      $region27: #{super_resolution_forward.1} parent=11 // pred_region
        _
      $region28: #{super_resolution_forward.1} parent=11 // pred_fallthru
        _
      // Predicated region
      $region29: #{super_resolution_forward.1} parent=11 // pred_check
        %p262 = pneg %p146
      $region30: #{super_resolution_forward.1} parent=11 // pred_check_branch
        %264 = sbr.rel (%p262) target = $region32
      $region31: #{super_resolution_forward.1} parent=11 // pred_region
        _
      $region32: #{super_resolution_forward.1} parent=11 // pred_fallthru
        _
      // Predicated region
      $region33: #{super_resolution_forward.1} parent=11 // pred_check
        %p265 = pneg %p167
      $region34: #{super_resolution_forward.1} parent=11 // pred_check_branch
        %267 = sbr.rel (%p265) target = $region36
      $region35: #{super_resolution_forward.1} parent=11 // pred_region
        _
      $region36: #{super_resolution_forward.1} parent=11 // pred_fallthru
        _
      // Predicated region
      $region37: #{super_resolution_forward.1} parent=11 // pred_check
        %p268 = pneg %p188
      $region38: #{super_resolution_forward.1} parent=11 // pred_check_branch
        %270 = sbr.rel (%p268) target = $region40
      $region39: #{super_resolution_forward.1} parent=11 // pred_region
        _
      $region40: #{super_resolution_forward.1} parent=11 // pred_fallthru
        _
      // Predicated region
      $region41: #{super_resolution_forward.1} parent=11 // pred_check
        %p271 = pneg %p209
      $region42: #{super_resolution_forward.1} parent=11 // pred_check_branch
        %273 = sbr.rel (%p271) target = $region44
      $region43: #{super_resolution_forward.1} parent=11 // pred_region
        _
      $region44: #{super_resolution_forward.1} parent=11 // pred_fallthru
        _
    $region12: #{super_resolution_forward.1} parent=5 // pred_fallthru
      _
    %p274 = scmp.lt.s32.totalorder %s15, 2
    // Predicated region
    $region45: #{super_resolution_forward.1} parent=5 // pred_check
      %p275 = pneg %p274
    $region46: #{super_resolution_forward.1} parent=5 // pred_check_branch
      %277 = sbr.rel (%p275) target = $region48
    $region47: #{super_resolution_forward.1} parent=5 // pred_region
      // Predicated region
      $region49: #{super_resolution_forward.1} parent=47 // pred_check
        %p278 = pneg %p35
      $region50: #{super_resolution_forward.1} parent=47 // pred_check_branch
        %280 = sbr.rel (%p278) target = $region52
      $region51: #{super_resolution_forward.1} parent=47 // pred_region
        %p281 = scmp.lt.s32.totalorder %s15, 1
        %s282 = scalar_select %p281, %s15, 1
        %s283 = smul.addr %s282, 32
        %s284 = smul.addr %s283, 4
        %s285 = scalar_lea.vmem %s0, %s284
      $region52: #{super_resolution_forward.1} parent=47 // pred_fallthru
        _
    $region48: #{super_resolution_forward.1} parent=5 // pred_fallthru
      _
    %p286 = scmp.le.s32.totalorder 1, %s15
    %p287 = scmp.lt.s32.totalorder %s15, 3
    %p288 = pnand %p286, %p287
    %p289 = pneg %p288
    // Predicated region
    $region53: #{super_resolution_forward.1} parent=5 // pred_check
      _
    $region54: #{super_resolution_forward.1} parent=5 // pred_check_branch
      %291 = sbr.rel (%p288) target = $region56
    $region55: #{super_resolution_forward.1} parent=5 // pred_region
      %s292 = ssub.s32 %s15, 1
      %p293 = scmp.lt.s32.totalorder %s20, 1
      %s294 = scalar_select %p293, %s20, 1
      %s295 = smul.addr %s294, 32
      %s296 = smul.addr %s295, 4
      %s297 = scalar_lea.vmem %s0, %s296
      %p298 = pneg %p41
      %p299 = pneg %p38
      %p300 = pneg %p62
      %p301 = pneg %p59
      %p302 = pneg %p83
      %p303 = pneg %p80
      %p304 = pneg %p104
      %p305 = pneg %p101
      %p306 = pneg %p125
      %p307 = pneg %p122
      %p308 = pneg %p146
      %p309 = pneg %p143
      %p310 = pneg %p167
      %p311 = pneg %p164
      %p312 = pneg %p188
      %p313 = pneg %p185
      %p314 = pneg %p209
      %p315 = pneg %p206
      %p316 = pneg %p235
      %p317 = pneg %p232
      %p318 = scmp.lt.s32.totalorder %s20, 1
      %s319 = scalar_select %p318, %s20, 1
      %s320 = smul.addr %s319, 32
      %s321 = smul.addr %s320, 8
      %s322 = scalar_lea.vmem %s9, %s321
      %p323 = scmp.lt.s32.totalorder %s20, 1
      %s324 = scalar_select %p323, %s20, 1
      %s325 = smul.addr %s324, 32
      %s326 = smul.addr %s325, 4
      %s327 = scalar_lea.vmem %s0, %s326
      %p328 = scmp.lt.s32.totalorder %s20, 1
      %s329 = scalar_select %p328, %s20, 1
      %s330 = smul.addr %s329, 32
      %s331 = smul.addr %s330, 8
      %s332 = scalar_lea.vmem %s9, %s331
      %v334 = vld [vmem:[%s327] sm:$0xf]
      %v335 = vld [vmem:[%s327 + $0x4] sm:$0xf]
      %v336 = vld [vmem:[%s327 + $0x8] sm:$0xf]
      %v337 = vld [vmem:[%s327 + $0xc] sm:$0xf]
      %v338 = vld [vmem:[%s327 + $0x10] sm:$0xf]
      %v339 = vld [vmem:[%s327 + $0x14] sm:$0xf]
      %v340 = vld [vmem:[%s327 + $0x18] sm:$0xf]
      %v341 = vld [vmem:[%s327 + $0x1c] sm:$0xf]
      %v342 = vld [vmem:[%s327 + $0x20] sm:$0xf]
      %v343 = vld [vmem:[%s327 + $0x24] sm:$0xf]
      %v344 = vld [vmem:[%s327 + $0x28] sm:$0xf]
      %v345 = vld [vmem:[%s327 + $0x2c] sm:$0xf]
      %v346 = vld [vmem:[%s327 + $0x30] sm:$0xf]
      %v347 = vld [vmem:[%s327 + $0x34] sm:$0xf]
      %v348 = vld [vmem:[%s327 + $0x38] sm:$0xf]
      %v349 = vld [vmem:[%s327 + $0x3c] sm:$0xf]
      %v350 = vld [vmem:[%s327 + $0x40] sm:$0xf]
      %v351 = vld [vmem:[%s327 + $0x44] sm:$0xf]
      %v352 = vld [vmem:[%s327 + $0x48] sm:$0xf]
      %v353 = vld [vmem:[%s327 + $0x4c] sm:$0xf]
      %v354 = vld [vmem:[%s327 + $0x50] sm:$0xf]
      %v355 = vld [vmem:[%s327 + $0x54] sm:$0xf]
      %v356 = vld [vmem:[%s327 + $0x58] sm:$0xf]
      %v357 = vld [vmem:[%s327 + $0x5c] sm:$0xf]
      %v358 = vld [vmem:[%s327 + $0x60] sm:$0xf]
      %v359 = vld [vmem:[%s327 + $0x64] sm:$0xf]
      %v360 = vld [vmem:[%s327 + $0x68] sm:$0xf]
      %v361 = vld [vmem:[%s327 + $0x6c] sm:$0xf]
      %v362 = vld [vmem:[%s327 + $0x70] sm:$0xf]
      %v363 = vld [vmem:[%s327 + $0x74] sm:$0xf]
      %v364 = vld [vmem:[%s327 + $0x78] sm:$0xf]
      %v365 = vld [vmem:[%s327 + $0x7c] sm:$0xf]
      %v366 = vld [vmem:[%s1] sm:$0xf]
      %v367 = vld [vmem:[%s1 + $0x4] sm:$0xf]
      %v368 = vld [vmem:[%s1 + $0x8] sm:$0xf]
      %v369 = vld [vmem:[%s1 + $0xc] sm:$0xf]
      %v370 = vld [vmem:[%s2] sm:$0x1]
      %v372 = vlaneseq
      %v373 = vshrl.u32 %v372, 7
      %v374 = vsub.s32 0, %v373
      %v375 = vrot.slane %v370, %v374
      %v409 = vunpack.c.l.b16 %v334
      %v410 = vunpack.c.l.b16 %v335
      %v411 = vunpack.c.l.b16 %v336
      %v412 = vunpack.c.l.b16 %v337
      %v413 = vunpack.c.l.b16 %v338
      %v414 = vunpack.c.l.b16 %v339
      %v415 = vunpack.c.l.b16 %v340
      %v416 = vunpack.c.l.b16 %v341
      %v417 = vunpack.c.l.b16 %v342
      %v418 = vunpack.c.l.b16 %v343
      %v419 = vunpack.c.l.b16 %v344
      %v420 = vunpack.c.l.b16 %v345
      %v421 = vunpack.c.l.b16 %v346
      %v422 = vunpack.c.l.b16 %v347
      %v423 = vunpack.c.l.b16 %v348
      %v424 = vunpack.c.l.b16 %v349
      %v425 = vunpack.c.l.b16 %v350
      %v426 = vunpack.c.l.b16 %v351
      %v427 = vunpack.c.l.b16 %v352
      %v428 = vunpack.c.l.b16 %v353
      %v429 = vunpack.c.l.b16 %v354
      %v430 = vunpack.c.l.b16 %v355
      %v431 = vunpack.c.l.b16 %v356
      %v432 = vunpack.c.l.b16 %v357
      %v433 = vunpack.c.l.b16 %v358
      %v434 = vunpack.c.l.b16 %v359
      %v435 = vunpack.c.l.b16 %v360
      %v436 = vunpack.c.l.b16 %v361
      %v437 = vunpack.c.l.b16 %v362
      %v438 = vunpack.c.l.b16 %v363
      %v439 = vunpack.c.l.b16 %v364
      %v440 = vunpack.c.l.b16 %v365
      %v441 = vpack.c.b16 %v410, %v409
      %v442 = vpack.c.b16 %v412, %v411
      %v443 = vpack.c.b16 %v414, %v413
      %v444 = vpack.c.b16 %v416, %v415
      %v445 = vpack.c.b16 %v418, %v417
      %v446 = vpack.c.b16 %v420, %v419
      %v447 = vpack.c.b16 %v422, %v421
      %v448 = vpack.c.b16 %v424, %v423
      %v449 = vpack.c.b16 %v426, %v425
      %v450 = vpack.c.b16 %v428, %v427
      %v451 = vpack.c.b16 %v430, %v429
      %v452 = vpack.c.b16 %v432, %v431
      %v453 = vpack.c.b16 %v434, %v433
      %v454 = vpack.c.b16 %v436, %v435
      %v455 = vpack.c.b16 %v438, %v437
      %v456 = vpack.c.b16 %v440, %v439
      %v461 = vunpack.c.l.b16 %v366
      %v462 = vunpack.c.l.b16 %v367
      %v463 = vunpack.c.l.b16 %v368
      %v464 = vunpack.c.l.b16 %v369
      %v465 = vpack.c.b16 %v462, %v461
      %v466 = vpack.c.b16 %v464, %v463
      %vm469 = vcmask 261120
      %v471 = vsel %vm469, %v441, 0
      %v474 = vsel %vm469, %v442, 0
      %v477 = vsel %vm469, %v443, 0
      %v480 = vsel %vm469, %v444, 0
      %v483 = vsel %vm469, %v445, 0
      %v486 = vsel %vm469, %v446, 0
      %v489 = vsel %vm469, %v447, 0
      %v492 = vsel %vm469, %v448, 0
      %v495 = vsel %vm469, %v449, 0
      %v498 = vsel %vm469, %v450, 0
      %v501 = vsel %vm469, %v451, 0
      %v504 = vsel %vm469, %v452, 0
      %v507 = vsel %vm469, %v453, 0
      %v510 = vsel %vm469, %v454, 0
      %v513 = vsel %vm469, %v455, 0
      %v516 = vsel %vm469, %v456, 0
      %518 = vmatprep.subr.bf16.mxu0 0
      %519 = vmatpush1.bf16.msra.mxu0 %v465
      %520 = vmatprep.subr.bf16.mxu0 0
      %521 = vmatpush1.bf16.msra.mxu0 %v466
      %522 = vmatprep.subr.bf16.mxu0 0
      %523 = vmatpush1.bf16.msra.mxu0 0
      %524 = vmatprep.subr.bf16.mxu0 0
      %525 = vmatpush1.bf16.msra.mxu0 0
      %526 = vmatprep.subr.bf16.mxu0 0
      %527 = vmatpush1.bf16.msra.mxu0 0
      %528 = vmatprep.subr.bf16.mxu0 0
      %529 = vmatpush1.bf16.msra.mxu0 0
      %530 = vmatprep.subr.bf16.mxu0 0
      %531 = vmatpush1.bf16.msra.mxu0 0
      %532 = vmatprep.subr.bf16.mxu0 0
      %533 = vmatpush1.bf16.msra.mxu0 0
      %534 = vmatprep.subr.bf16.mxu0 0
      %535 = vmatpush1.bf16.msra.mxu0 0
      %536 = vmatprep.subr.bf16.mxu0 0
      %537 = vmatpush1.bf16.msra.mxu0 0
      %538 = vmatprep.subr.bf16.mxu0 0
      %539 = vmatpush1.bf16.msra.mxu0 0
      %540 = vmatprep.subr.bf16.mxu0 0
      %541 = vmatpush1.bf16.msra.mxu0 0
      %542 = vmatprep.subr.bf16.mxu0 0
      %543 = vmatpush1.bf16.msra.mxu0 0
      %544 = vmatprep.subr.bf16.mxu0 0
      %545 = vmatpush1.bf16.msra.mxu0 0
      %546 = vmatprep.subr.bf16.mxu0 0
      %547 = vmatpush1.bf16.msra.mxu0 0
      %548 = vmatprep.subr.bf16.mxu0 0
      %549 = vmatpush1.bf16.msra.mxu0 0
      %550 = vmatprep.mubr.bf16.mxu0 0
      %551 = vmatmul.mubr.bf16.gmra.mrb[0].mxu0 %v471
      %v552 = vpop.f32.mrb[0].mxu0
      %v553 = vadd.f32 %v375, %v552
      %v554 = vpop.f32.mrb[0].mxu0
      %v555 = vpop.f32.mrb[0].mxu0
      %v556 = vadd.f32 %v375, %v555
      %v557 = vpop.f32.mrb[0].mxu0
      %558 = vmatprep.mubr.bf16.mxu0 0
      %559 = vmatmul.mubr.bf16.gmra.mrb[0].mxu0 %v474
      %v560 = vpop.f32.mrb[0].mxu0
      %v561 = vadd.f32 %v375, %v560
      %v562 = vpop.f32.mrb[0].mxu0
      %v563 = vpop.f32.mrb[0].mxu0
      %v564 = vadd.f32 %v375, %v563
      %v565 = vpop.f32.mrb[0].mxu0
      %566 = vmatprep.mubr.bf16.mxu0 0
      %567 = vmatmul.mubr.bf16.gmra.mrb[0].mxu0 %v477
      %v568 = vpop.f32.mrb[0].mxu0
      %v569 = vadd.f32 %v375, %v568
      %v570 = vpop.f32.mrb[0].mxu0
      %v571 = vpop.f32.mrb[0].mxu0
      %v572 = vadd.f32 %v375, %v571
      %v573 = vpop.f32.mrb[0].mxu0
      %574 = vmatprep.mubr.bf16.mxu0 0
      %575 = vmatmul.mubr.bf16.gmra.mrb[0].mxu0 %v480
      %v576 = vpop.f32.mrb[0].mxu0
      %v577 = vadd.f32 %v375, %v576
      %v578 = vpop.f32.mrb[0].mxu0
      %v579 = vpop.f32.mrb[0].mxu0
      %v580 = vadd.f32 %v375, %v579
      %v581 = vpop.f32.mrb[0].mxu0
      %582 = vmatprep.mubr.bf16.mxu0 0
      %583 = vmatmul.mubr.bf16.gmra.mrb[0].mxu0 %v483
      %v584 = vpop.f32.mrb[0].mxu0
      %v585 = vadd.f32 %v375, %v584
      %v586 = vpop.f32.mrb[0].mxu0
      %v587 = vpop.f32.mrb[0].mxu0
      %v588 = vadd.f32 %v375, %v587
      %v589 = vpop.f32.mrb[0].mxu0
      %590 = vmatprep.mubr.bf16.mxu0 0
      %591 = vmatmul.mubr.bf16.gmra.mrb[0].mxu0 %v486
      %v592 = vpop.f32.mrb[0].mxu0
      %v593 = vadd.f32 %v375, %v592
      %v594 = vpop.f32.mrb[0].mxu0
      %v595 = vpop.f32.mrb[0].mxu0
      %v596 = vadd.f32 %v375, %v595
      %v597 = vpop.f32.mrb[0].mxu0
      %598 = vmatprep.mubr.bf16.mxu0 0
      %599 = vmatmul.mubr.bf16.gmra.mrb[0].mxu0 %v489
      %v600 = vpop.f32.mrb[0].mxu0
      %v601 = vadd.f32 %v375, %v600
      %v602 = vpop.f32.mrb[0].mxu0
      %v603 = vpop.f32.mrb[0].mxu0
      %v604 = vadd.f32 %v375, %v603
      %v605 = vpop.f32.mrb[0].mxu0
      %606 = vmatprep.mubr.bf16.mxu0 0
      %607 = vmatmul.mubr.bf16.gmra.mrb[0].mxu0 %v492
      %v608 = vpop.f32.mrb[0].mxu0
      %v609 = vadd.f32 %v375, %v608
      %v610 = vpop.f32.mrb[0].mxu0
      %v611 = vpop.f32.mrb[0].mxu0
      %v612 = vadd.f32 %v375, %v611
      %v613 = vpop.f32.mrb[0].mxu0
      %614 = vmatprep.mubr.bf16.mxu0 0
      %615 = vmatmul.mubr.bf16.gmra.mrb[0].mxu0 %v495
      %v616 = vpop.f32.mrb[0].mxu0
      %v617 = vadd.f32 %v375, %v616
      %v618 = vpop.f32.mrb[0].mxu0
      %v619 = vpop.f32.mrb[0].mxu0
      %v620 = vadd.f32 %v375, %v619
      %v621 = vpop.f32.mrb[0].mxu0
      %622 = vmatprep.mubr.bf16.mxu0 0
      %623 = vmatmul.mubr.bf16.gmra.mrb[0].mxu0 %v498
      %v624 = vpop.f32.mrb[0].mxu0
      %v625 = vadd.f32 %v375, %v624
      %v626 = vpop.f32.mrb[0].mxu0
      %v627 = vpop.f32.mrb[0].mxu0
      %v628 = vadd.f32 %v375, %v627
      %v629 = vpop.f32.mrb[0].mxu0
      %630 = vmatprep.mubr.bf16.mxu0 0
      %631 = vmatmul.mubr.bf16.gmra.mrb[0].mxu0 %v501
      %v632 = vpop.f32.mrb[0].mxu0
      %v633 = vadd.f32 %v375, %v632
      %v634 = vpop.f32.mrb[0].mxu0
      %v635 = vpop.f32.mrb[0].mxu0
      %v636 = vadd.f32 %v375, %v635
      %v637 = vpop.f32.mrb[0].mxu0
      %638 = vmatprep.mubr.bf16.mxu0 0
      %639 = vmatmul.mubr.bf16.gmra.mrb[0].mxu0 %v504
      %v640 = vpop.f32.mrb[0].mxu0
      %v641 = vadd.f32 %v375, %v640
      %v642 = vpop.f32.mrb[0].mxu0
      %v643 = vpop.f32.mrb[0].mxu0
      %v644 = vadd.f32 %v375, %v643
      %v645 = vpop.f32.mrb[0].mxu0
      %646 = vmatprep.mubr.bf16.mxu0 0
      %647 = vmatmul.mubr.bf16.gmra.mrb[0].mxu0 %v507
      %v648 = vpop.f32.mrb[0].mxu0
      %v649 = vadd.f32 %v375, %v648
      %v650 = vpop.f32.mrb[0].mxu0
      %v651 = vpop.f32.mrb[0].mxu0
      %v652 = vadd.f32 %v375, %v651
      %v653 = vpop.f32.mrb[0].mxu0
      %654 = vmatprep.mubr.bf16.mxu0 0
      %655 = vmatmul.mubr.bf16.gmra.mrb[0].mxu0 %v510
      %v656 = vpop.f32.mrb[0].mxu0
      %v657 = vadd.f32 %v375, %v656
      %v658 = vpop.f32.mrb[0].mxu0
      %v659 = vpop.f32.mrb[0].mxu0
      %v660 = vadd.f32 %v375, %v659
      %v661 = vpop.f32.mrb[0].mxu0
      %662 = vmatprep.mubr.bf16.mxu0 0
      %663 = vmatmul.mubr.bf16.gmra.mrb[0].mxu0 %v513
      %v664 = vpop.f32.mrb[0].mxu0
      %v665 = vadd.f32 %v375, %v664
      %v666 = vpop.f32.mrb[0].mxu0
      %v667 = vpop.f32.mrb[0].mxu0
      %v668 = vadd.f32 %v375, %v667
      %v669 = vpop.f32.mrb[0].mxu0
      %670 = vmatprep.mubr.bf16.mxu0 0
      %671 = vmatmul.mubr.bf16.gmra.mrb[0].mxu0 %v516
      %v672 = vpop.f32.mrb[0].mxu0
      %v673 = vadd.f32 %v375, %v672
      %v674 = vpop.f32.mrb[0].mxu0
      %v675 = vpop.f32.mrb[0].mxu0
      %v676 = vadd.f32 %v375, %v675
      %v677 = vpop.f32.mrb[0].mxu0
      %678 = vdwg.mxu0
      %v679 = vmax.f32 %v553, 0.0
      %v680 = vmax.f32 %v556, 0.0
      %v681 = vmax.f32 %v561, 0.0
      %v682 = vmax.f32 %v564, 0.0
      %v683 = vmax.f32 %v569, 0.0
      %v684 = vmax.f32 %v572, 0.0
      %v685 = vmax.f32 %v577, 0.0
      %v686 = vmax.f32 %v580, 0.0
      %v687 = vmax.f32 %v585, 0.0
      %v688 = vmax.f32 %v588, 0.0
      %v689 = vmax.f32 %v593, 0.0
      %v690 = vmax.f32 %v596, 0.0
      %v691 = vmax.f32 %v601, 0.0
      %v692 = vmax.f32 %v604, 0.0
      %v693 = vmax.f32 %v609, 0.0
      %v694 = vmax.f32 %v612, 0.0
      %v695 = vmax.f32 %v617, 0.0
      %v696 = vmax.f32 %v620, 0.0
      %v697 = vmax.f32 %v625, 0.0
      %v698 = vmax.f32 %v628, 0.0
      %v699 = vmax.f32 %v633, 0.0
      %v700 = vmax.f32 %v636, 0.0
      %v701 = vmax.f32 %v641, 0.0
      %v702 = vmax.f32 %v644, 0.0
      %v703 = vmax.f32 %v649, 0.0
      %v704 = vmax.f32 %v652, 0.0
      %v705 = vmax.f32 %v657, 0.0
      %v706 = vmax.f32 %v660, 0.0
      %v707 = vmax.f32 %v665, 0.0
      %v708 = vmax.f32 %v668, 0.0
      %v709 = vmax.f32 %v673, 0.0
      %v710 = vmax.f32 %v676, 0.0
      %vm711 = vcmask 523264
      %712 = vst.msk [vmem:[#allocation2] sm:$0xff] %vm711, 0.0
      %713 = vst.msk [vmem:[#allocation2 + $0x8] sm:$0xff] %vm711, 0.0
      %vm714 = vcmask 517120
      %715 = vst.msk [vmem:[#allocation2 + $0x10] sm:$0x3] %vm714, 0.0
      %s716 = scalar_lea.vmem [#allocation2], 408
      %717 = vst.msk [vmem:[%s716] sm:$0xff] %vm711, 0.0
      %718 = vst.msk [vmem:[%s716 + $0x8] sm:$0xff] %vm711, 0.0
      %719 = vst.msk [vmem:[%s716 + $0x10] sm:$0x3] %vm714, 0.0
      %s720 = scalar_lea.vmem [#allocation2], 24
      %vm721 = vcmask 516096
      %722 = vst.msk [vmem:[%s720] sm:$0x1] %vm721, 0.0
      %723 = vst.msk [vmem:[%s720 + $0x18] sm:$0x1] %vm721, 0.0
      %724 = vst.msk [vmem:[%s720 + $0x30] sm:$0x1] %vm721, 0.0
      %725 = vst.msk [vmem:[%s720 + $0x48] sm:$0x1] %vm721, 0.0
      %726 = vst.msk [vmem:[%s720 + $0x60] sm:$0x1] %vm721, 0.0
      %727 = vst.msk [vmem:[%s720 + $0x78] sm:$0x1] %vm721, 0.0
      %728 = vst.msk [vmem:[%s720 + $0x90] sm:$0x1] %vm721, 0.0
      %729 = vst.msk [vmem:[%s720 + $0xa8] sm:$0x1] %vm721, 0.0
      %730 = vst.msk [vmem:[%s720 + $0xc0] sm:$0x1] %vm721, 0.0
      %731 = vst.msk [vmem:[%s720 + $0xd8] sm:$0x1] %vm721, 0.0
      %732 = vst.msk [vmem:[%s720 + $0xf0] sm:$0x1] %vm721, 0.0
      %733 = vst.msk [vmem:[%s720 + $0x108] sm:$0x1] %vm721, 0.0
      %734 = vst.msk [vmem:[%s720 + $0x120] sm:$0x1] %vm721, 0.0
      %735 = vst.msk [vmem:[%s720 + $0x138] sm:$0x1] %vm721, 0.0
      %736 = vst.msk [vmem:[%s720 + $0x150] sm:$0x1] %vm721, 0.0
      %737 = vst.msk [vmem:[%s720 + $0x168] sm:$0x1] %vm721, 0.0
      %738 = vst.msk [vmem:[%s720 + $0x11] sm:$0x1] %vm721, 0.0
      %739 = vst.msk [vmem:[%s720 + $0x29] sm:$0x1] %vm721, 0.0
      %740 = vst.msk [vmem:[%s720 + $0x41] sm:$0x1] %vm721, 0.0
      %741 = vst.msk [vmem:[%s720 + $0x59] sm:$0x1] %vm721, 0.0
      %742 = vst.msk [vmem:[%s720 + $0x71] sm:$0x1] %vm721, 0.0
      %743 = vst.msk [vmem:[%s720 + $0x89] sm:$0x1] %vm721, 0.0
      %744 = vst.msk [vmem:[%s720 + $0xa1] sm:$0x1] %vm721, 0.0
      %745 = vst.msk [vmem:[%s720 + $0xb9] sm:$0x1] %vm721, 0.0
      %746 = vst.msk [vmem:[%s720 + $0xd1] sm:$0x1] %vm721, 0.0
      %747 = vst.msk [vmem:[%s720 + $0xe9] sm:$0x1] %vm721, 0.0
      %748 = vst.msk [vmem:[%s720 + $0x101] sm:$0x1] %vm721, 0.0
      %749 = vst.msk [vmem:[%s720 + $0x119] sm:$0x1] %vm721, 0.0
      %750 = vst.msk [vmem:[%s720 + $0x131] sm:$0x1] %vm721, 0.0
      %751 = vst.msk [vmem:[%s720 + $0x149] sm:$0x1] %vm721, 0.0
      %752 = vst.msk [vmem:[%s720 + $0x161] sm:$0x1] %vm721, 0.0
      %753 = vst.msk [vmem:[%s720 + $0x179] sm:$0x1] %vm721, 0.0
      %754 = vst.msk [vmem:[#allocation3] sm:$0xff] %vm469, 0.0
      %755 = vst.msk [vmem:[#allocation3 + $0x8] sm:$0xff] %vm469, 0.0
      %vm756 = vcmask 254976
      %757 = vst.msk [vmem:[#allocation3 + $0x10] sm:$0x3] %vm756, 0.0
      %s758 = scalar_lea.vmem [#allocation3], 408
      %759 = vst.msk [vmem:[%s758] sm:$0xff] %vm469, 0.0
      %760 = vst.msk [vmem:[%s758 + $0x8] sm:$0xff] %vm469, 0.0
      %761 = vst.msk [vmem:[%s758 + $0x10] sm:$0x3] %vm756, 0.0
      %s762 = scalar_lea.vmem [#allocation3], 24
      %vm763 = vcmask 253952
      %764 = vst.msk [vmem:[%s762] sm:$0x1] %vm763, 0.0
      %765 = vst.msk [vmem:[%s762 + $0x18] sm:$0x1] %vm763, 0.0
      %766 = vst.msk [vmem:[%s762 + $0x30] sm:$0x1] %vm763, 0.0
      %767 = vst.msk [vmem:[%s762 + $0x48] sm:$0x1] %vm763, 0.0
      %768 = vst.msk [vmem:[%s762 + $0x60] sm:$0x1] %vm763, 0.0
      %769 = vst.msk [vmem:[%s762 + $0x78] sm:$0x1] %vm763, 0.0
      %770 = vst.msk [vmem:[%s762 + $0x90] sm:$0x1] %vm763, 0.0
      %771 = vst.msk [vmem:[%s762 + $0xa8] sm:$0x1] %vm763, 0.0
      %772 = vst.msk [vmem:[%s762 + $0xc0] sm:$0x1] %vm763, 0.0
      %773 = vst.msk [vmem:[%s762 + $0xd8] sm:$0x1] %vm763, 0.0
      %774 = vst.msk [vmem:[%s762 + $0xf0] sm:$0x1] %vm763, 0.0
      %775 = vst.msk [vmem:[%s762 + $0x108] sm:$0x1] %vm763, 0.0
      %776 = vst.msk [vmem:[%s762 + $0x120] sm:$0x1] %vm763, 0.0
      %777 = vst.msk [vmem:[%s762 + $0x138] sm:$0x1] %vm763, 0.0
      %778 = vst.msk [vmem:[%s762 + $0x150] sm:$0x1] %vm763, 0.0
      %779 = vst.msk [vmem:[%s762 + $0x168] sm:$0x1] %vm763, 0.0
      %780 = vst.msk [vmem:[%s762 + $0x11] sm:$0x1] %vm763, 0.0
      %781 = vst.msk [vmem:[%s762 + $0x29] sm:$0x1] %vm763, 0.0
      %782 = vst.msk [vmem:[%s762 + $0x41] sm:$0x1] %vm763, 0.0
      %783 = vst.msk [vmem:[%s762 + $0x59] sm:$0x1] %vm763, 0.0
      %784 = vst.msk [vmem:[%s762 + $0x71] sm:$0x1] %vm763, 0.0
      %785 = vst.msk [vmem:[%s762 + $0x89] sm:$0x1] %vm763, 0.0
      %786 = vst.msk [vmem:[%s762 + $0xa1] sm:$0x1] %vm763, 0.0
      %787 = vst.msk [vmem:[%s762 + $0xb9] sm:$0x1] %vm763, 0.0
      %788 = vst.msk [vmem:[%s762 + $0xd1] sm:$0x1] %vm763, 0.0
      %789 = vst.msk [vmem:[%s762 + $0xe9] sm:$0x1] %vm763, 0.0
      %790 = vst.msk [vmem:[%s762 + $0x101] sm:$0x1] %vm763, 0.0
      %791 = vst.msk [vmem:[%s762 + $0x119] sm:$0x1] %vm763, 0.0
      %792 = vst.msk [vmem:[%s762 + $0x131] sm:$0x1] %vm763, 0.0
      %793 = vst.msk [vmem:[%s762 + $0x149] sm:$0x1] %vm763, 0.0
      %794 = vst.msk [vmem:[%s762 + $0x161] sm:$0x1] %vm763, 0.0
      %795 = vst.msk [vmem:[%s762 + $0x179] sm:$0x1] %vm763, 0.0
      %796 = vst.msk [vmem:[%s720 + $0x1] sm:$0xff] %vm711, %v679
      %797 = vst.msk [vmem:[%s720 + $0x9] sm:$0xff] %vm711, %v680
      %798 = vst.msk [vmem:[%s720 + $0x19] sm:$0xff] %vm711, %v681
      %799 = vst.msk [vmem:[%s720 + $0x21] sm:$0xff] %vm711, %v682
      %800 = vst.msk [vmem:[%s720 + $0x31] sm:$0xff] %vm711, %v683
      %801 = vst.msk [vmem:[%s720 + $0x39] sm:$0xff] %vm711, %v684
      %802 = vst.msk [vmem:[%s720 + $0x49] sm:$0xff] %vm711, %v685
      %803 = vst.msk [vmem:[%s720 + $0x51] sm:$0xff] %vm711, %v686
      %804 = vst.msk [vmem:[%s720 + $0x61] sm:$0xff] %vm711, %v687
      %805 = vst.msk [vmem:[%s720 + $0x69] sm:$0xff] %vm711, %v688
      %806 = vst.msk [vmem:[%s720 + $0x79] sm:$0xff] %vm711, %v689
      %807 = vst.msk [vmem:[%s720 + $0x81] sm:$0xff] %vm711, %v690
      %808 = vst.msk [vmem:[%s720 + $0x91] sm:$0xff] %vm711, %v691
      %809 = vst.msk [vmem:[%s720 + $0x99] sm:$0xff] %vm711, %v692
      %810 = vst.msk [vmem:[%s720 + $0xa9] sm:$0xff] %vm711, %v693
      %811 = vst.msk [vmem:[%s720 + $0xb1] sm:$0xff] %vm711, %v694
      %812 = vst.msk [vmem:[%s720 + $0xc1] sm:$0xff] %vm711, %v695
      %813 = vst.msk [vmem:[%s720 + $0xc9] sm:$0xff] %vm711, %v696
      %814 = vst.msk [vmem:[%s720 + $0xd9] sm:$0xff] %vm711, %v697
      %815 = vst.msk [vmem:[%s720 + $0xe1] sm:$0xff] %vm711, %v698
      %816 = vst.msk [vmem:[%s720 + $0xf1] sm:$0xff] %vm711, %v699
      %817 = vst.msk [vmem:[%s720 + $0xf9] sm:$0xff] %vm711, %v700
      %818 = vst.msk [vmem:[%s720 + $0x109] sm:$0xff] %vm711, %v701
      %819 = vst.msk [vmem:[%s720 + $0x111] sm:$0xff] %vm711, %v702
      %820 = vst.msk [vmem:[%s720 + $0x121] sm:$0xff] %vm711, %v703
      %821 = vst.msk [vmem:[%s720 + $0x129] sm:$0xff] %vm711, %v704
      %822 = vst.msk [vmem:[%s720 + $0x139] sm:$0xff] %vm711, %v705
      %823 = vst.msk [vmem:[%s720 + $0x141] sm:$0xff] %vm711, %v706
      %824 = vst.msk [vmem:[%s720 + $0x151] sm:$0xff] %vm711, %v707
      %825 = vst.msk [vmem:[%s720 + $0x159] sm:$0xff] %vm711, %v708
      %826 = vst.msk [vmem:[%s720 + $0x169] sm:$0xff] %vm711, %v709
      %827 = vst.msk [vmem:[%s720 + $0x171] sm:$0xff] %vm711, %v710
      %v828 = vld [vmem:[#allocation2] sm:$0xff]
      %v829 = vld [vmem:[#allocation2 + $0x8] sm:$0xff]
      %v830 = vld [vmem:[#allocation2 + $0x18] sm:$0xff]
      %v831 = vld [vmem:[#allocation2 + $0x20] sm:$0xff]
      %v832 = vld [vmem:[#allocation2 + $0x30] sm:$0xff]
      %v833 = vld [vmem:[#allocation2 + $0x38] sm:$0xff]
      %v834 = vld [vmem:[#allocation2 + $0x48] sm:$0xff]
      %v835 = vld [vmem:[#allocation2 + $0x50] sm:$0xff]
      %v836 = vld [vmem:[#allocation2 + $0x60] sm:$0xff]
      %v837 = vld [vmem:[#allocation2 + $0x68] sm:$0xff]
      %v838 = vld [vmem:[#allocation2 + $0x78] sm:$0xff]
      %v839 = vld [vmem:[#allocation2 + $0x80] sm:$0xff]
      %v840 = vld [vmem:[#allocation2 + $0x90] sm:$0xff]
      %v841 = vld [vmem:[#allocation2 + $0x98] sm:$0xff]
      %v842 = vld [vmem:[#allocation2 + $0xa8] sm:$0xff]
      %v843 = vld [vmem:[#allocation2 + $0xb0] sm:$0xff]
      %v844 = vld [vmem:[#allocation2 + $0xc0] sm:$0xff]
      %v845 = vld [vmem:[#allocation2 + $0xc8] sm:$0xff]
      %v846 = vld [vmem:[#allocation2 + $0xd8] sm:$0xff]
      %v847 = vld [vmem:[#allocation2 + $0xe0] sm:$0xff]
      %v848 = vld [vmem:[#allocation2 + $0xf0] sm:$0xff]
      %v849 = vld [vmem:[#allocation2 + $0xf8] sm:$0xff]
      %v850 = vld [vmem:[#allocation2 + $0x108] sm:$0xff]
      %v851 = vld [vmem:[#allocation2 + $0x110] sm:$0xff]
      %v852 = vld [vmem:[#allocation2 + $0x120] sm:$0xff]
      %v853 = vld [vmem:[#allocation2 + $0x128] sm:$0xff]
      %v854 = vld [vmem:[#allocation2 + $0x138] sm:$0xff]
      %v855 = vld [vmem:[#allocation2 + $0x140] sm:$0xff]
      %v856 = vld [vmem:[#allocation2 + $0x150] sm:$0xff]
      %v857 = vld [vmem:[#allocation2 + $0x158] sm:$0xff]
      %v858 = vld [vmem:[#allocation2 + $0x168] sm:$0xff]
      %v859 = vld [vmem:[#allocation2 + $0x170] sm:$0xff]
      %v860 = vpack.c.bf16 %v829, %v828
      %v861 = vpack.c.bf16 %v831, %v830
      %v862 = vpack.c.bf16 %v833, %v832
      %v863 = vpack.c.bf16 %v835, %v834
      %v864 = vpack.c.bf16 %v837, %v836
      %v865 = vpack.c.bf16 %v839, %v838
      %v866 = vpack.c.bf16 %v841, %v840
      %v867 = vpack.c.bf16 %v843, %v842
      %v868 = vpack.c.bf16 %v845, %v844
      %v869 = vpack.c.bf16 %v847, %v846
      %v870 = vpack.c.bf16 %v849, %v848
      %v871 = vpack.c.bf16 %v851, %v850
      %v872 = vpack.c.bf16 %v853, %v852
      %v873 = vpack.c.bf16 %v855, %v854
      %v874 = vpack.c.bf16 %v857, %v856
      %v875 = vpack.c.bf16 %v859, %v858
      %v876 = vld [vmem:[%s3] sm:$0xf]
      %v877 = vld [vmem:[%s3 + $0x4] sm:$0xf]
      %v878 = vld [vmem:[%s3 + $0x8] sm:$0xf]
      %v879 = vld [vmem:[%s3 + $0xc] sm:$0xf]
      %v880 = vld [vmem:[%s3 + $0x10] sm:$0xf]
      %v881 = vld [vmem:[%s3 + $0x14] sm:$0xf]
      %v882 = vld [vmem:[%s3 + $0x18] sm:$0xf]
      %v883 = vld [vmem:[%s3 + $0x1c] sm:$0xf]
      %v884 = vld [vmem:[#allocation2 + $0x1] sm:$0xff]
      %v885 = vld [vmem:[#allocation2 + $0x9] sm:$0xff]
      %v886 = vld [vmem:[#allocation2 + $0x19] sm:$0xff]
      %v887 = vld [vmem:[#allocation2 + $0x21] sm:$0xff]
      %v888 = vld [vmem:[#allocation2 + $0x31] sm:$0xff]
      %v889 = vld [vmem:[#allocation2 + $0x39] sm:$0xff]
      %v890 = vld [vmem:[#allocation2 + $0x49] sm:$0xff]
      %v891 = vld [vmem:[#allocation2 + $0x51] sm:$0xff]
      %v892 = vld [vmem:[#allocation2 + $0x61] sm:$0xff]
      %v893 = vld [vmem:[#allocation2 + $0x69] sm:$0xff]
      %v894 = vld [vmem:[#allocation2 + $0x79] sm:$0xff]
      %v895 = vld [vmem:[#allocation2 + $0x81] sm:$0xff]
      %v896 = vld [vmem:[#allocation2 + $0x91] sm:$0xff]
      %v897 = vld [vmem:[#allocation2 + $0x99] sm:$0xff]
      %v898 = vld [vmem:[#allocation2 + $0xa9] sm:$0xff]
      %v899 = vld [vmem:[#allocation2 + $0xb1] sm:$0xff]
      %v900 = vld [vmem:[#allocation2 + $0xc1] sm:$0xff]
      %v901 = vld [vmem:[#allocation2 + $0xc9] sm:$0xff]
      %v902 = vld [vmem:[#allocation2 + $0xd9] sm:$0xff]
      %v903 = vld [vmem:[#allocation2 + $0xe1] sm:$0xff]
      %v904 = vld [vmem:[#allocation2 + $0xf1] sm:$0xff]
      %v905 = vld [vmem:[#allocation2 + $0xf9] sm:$0xff]
      %v906 = vld [vmem:[#allocation2 + $0x109] sm:$0xff]
      %v907 = vld [vmem:[#allocation2 + $0x111] sm:$0xff]
      %v908 = vld [vmem:[#allocation2 + $0x121] sm:$0xff]
      %v909 = vld [vmem:[#allocation2 + $0x129] sm:$0xff]
      %v910 = vld [vmem:[#allocation2 + $0x139] sm:$0xff]
      %v911 = vld [vmem:[#allocation2 + $0x141] sm:$0xff]
      %v912 = vld [vmem:[#allocation2 + $0x151] sm:$0xff]
      %v913 = vld [vmem:[#allocation2 + $0x159] sm:$0xff]
      %v914 = vld [vmem:[#allocation2 + $0x169] sm:$0xff]
      %v915 = vld [vmem:[#allocation2 + $0x171] sm:$0xff]
      %v916 = vpack.c.bf16 %v885, %v884
      %v917 = vpack.c.bf16 %v887, %v886
      %v918 = vpack.c.bf16 %v889, %v888
      %v919 = vpack.c.bf16 %v891, %v890
      %v920 = vpack.c.bf16 %v893, %v892
      %v921 = vpack.c.bf16 %v895, %v894
      %v922 = vpack.c.bf16 %v897, %v896
      %v923 = vpack.c.bf16 %v899, %v898
      %v924 = vpack.c.bf16 %v901, %v900
      %v925 = vpack.c.bf16 %v903, %v902
      %v926 = vpack.c.bf16 %v905, %v904
      %v927 = vpack.c.bf16 %v907, %v906
      %v928 = vpack.c.bf16 %v909, %v908
      %v929 = vpack.c.bf16 %v911, %v910
      %v930 = vpack.c.bf16 %v913, %v912
      %v931 = vpack.c.bf16 %v915, %v914
      %s932 = scalar_lea.vmem %s3, 32
      %v933 = vld [vmem:[%s932] sm:$0xf]
      %v934 = vld [vmem:[%s932 + $0x4] sm:$0xf]
      %v935 = vld [vmem:[%s932 + $0x8] sm:$0xf]
      %v936 = vld [vmem:[%s932 + $0xc] sm:$0xf]
      %v937 = vld [vmem:[%s932 + $0x10] sm:$0xf]
      %v938 = vld [vmem:[%s932 + $0x14] sm:$0xf]
      %v939 = vld [vmem:[%s932 + $0x18] sm:$0xf]
      %v940 = vld [vmem:[%s932 + $0x1c] sm:$0xf]
      %v949 = vunpack.c.l.b16 %v933
      %v950 = vunpack.c.l.b16 %v934
      %v951 = vunpack.c.l.b16 %v935
      %v952 = vunpack.c.l.b16 %v936
      %v953 = vunpack.c.l.b16 %v937
      %v954 = vunpack.c.l.b16 %v938
      %v955 = vunpack.c.l.b16 %v939
      %v956 = vunpack.c.l.b16 %v940
      %v957 = vpack.c.b16 %v950, %v949
      %v958 = vpack.c.b16 %v952, %v951
      %v959 = vpack.c.b16 %v954, %v953
      %v960 = vpack.c.b16 %v956, %v955
      %v966 = vsel %vm711, %v916, 0
      %v969 = vsel %vm711, %v917, 0
      %v972 = vsel %vm711, %v918, 0
      %v975 = vsel %vm711, %v919, 0
      %v978 = vsel %vm711, %v920, 0
      %v981 = vsel %vm711, %v921, 0
      %v984 = vsel %vm711, %v922, 0
      %v987 = vsel %vm711, %v923, 0
      %v990 = vsel %vm711, %v924, 0
      %v993 = vsel %vm711, %v925, 0
      %v996 = vsel %vm711, %v926, 0
      %v999 = vsel %vm711, %v927, 0
      %v1002 = vsel %vm711, %v928, 0
      %v1005 = vsel %vm711, %v929, 0
      %v1008 = vsel %vm711, %v930, 0
      %v1011 = vsel %vm711, %v931, 0
      %1013 = vmatprep.subr.bf16.mxu0 0
      %1014 = vmatpush1.bf16.msra.mxu0 %v957
      %1015 = vmatprep.subr.bf16.mxu0 0
      %1016 = vmatpush1.bf16.msra.mxu0 %v958
      %1017 = vmatprep.subr.bf16.mxu0 0
      %1018 = vmatpush1.bf16.msra.mxu0 %v959
      %1019 = vmatprep.subr.bf16.mxu0 0
      %1020 = vmatpush1.bf16.msra.mxu0 %v960
      %1021 = vmatprep.subr.bf16.mxu0 0
      %1022 = vmatpush1.bf16.msra.mxu0 0
      %1023 = vmatprep.subr.bf16.mxu0 0
      %1024 = vmatpush1.bf16.msra.mxu0 0
      %1025 = vmatprep.subr.bf16.mxu0 0
      %1026 = vmatpush1.bf16.msra.mxu0 0
      %1027 = vmatprep.subr.bf16.mxu0 0
      %1028 = vmatpush1.bf16.msra.mxu0 0
      %1029 = vmatprep.subr.bf16.mxu0 0
      %1030 = vmatpush1.bf16.msra.mxu0 0
      %1031 = vmatprep.subr.bf16.mxu0 0
      %1032 = vmatpush1.bf16.msra.mxu0 0
      %1033 = vmatprep.subr.bf16.mxu0 0
      %1034 = vmatpush1.bf16.msra.mxu0 0
      %1035 = vmatprep.subr.bf16.mxu0 0
      %1036 = vmatpush1.bf16.msra.mxu0 0
      %1037 = vmatprep.subr.bf16.mxu0 0
      %1038 = vmatpush1.bf16.msra.mxu0 0
      %1039 = vmatprep.subr.bf16.mxu0 0
      %1040 = vmatpush1.bf16.msra.mxu0 0
      %1041 = vmatprep.subr.bf16.mxu0 0
      %1042 = vmatpush1.bf16.msra.mxu0 0
      %1043 = vmatprep.subr.bf16.mxu0 0
      %1044 = vmatpush1.bf16.msra.mxu0 0
      %1045 = vmatprep.mubr.bf16.mxu0 0
      %1046 = vmatmul.mubr.bf16.gmra.mrb[0].mxu0 %v966
      %v1047 = vpop.f32.mrb[0].mxu0
      %v1048 = vadd.f32 0.0, %v1047
      %v1049 = vpop.f32.mrb[0].mxu0
      %v1050 = vpop.f32.mrb[0].mxu0
      %v1051 = vadd.f32 0.0, %v1050
      %v1052 = vpop.f32.mrb[0].mxu0
      %1053 = vmatprep.mubr.bf16.mxu0 0
      %1054 = vmatmul.mubr.bf16.gmra.mrb[0].mxu0 %v969
      %v1055 = vpop.f32.mrb[0].mxu0
      %v1056 = vadd.f32 0.0, %v1055
      %v1057 = vpop.f32.mrb[0].mxu0
      %v1058 = vpop.f32.mrb[0].mxu0
      %v1059 = vadd.f32 0.0, %v1058
      %v1060 = vpop.f32.mrb[0].mxu0
      %1061 = vmatprep.mubr.bf16.mxu0 0
      %1062 = vmatmul.mubr.bf16.gmra.mrb[0].mxu0 %v972
      %v1063 = vpop.f32.mrb[0].mxu0
      %v1064 = vadd.f32 0.0, %v1063
      %v1065 = vpop.f32.mrb[0].mxu0
      %v1066 = vpop.f32.mrb[0].mxu0
      %v1067 = vadd.f32 0.0, %v1066
      %v1068 = vpop.f32.mrb[0].mxu0
      %1069 = vmatprep.mubr.bf16.mxu0 0
      %1070 = vmatmul.mubr.bf16.gmra.mrb[0].mxu0 %v975
      %v1071 = vpop.f32.mrb[0].mxu0
      %v1072 = vadd.f32 0.0, %v1071
      %v1073 = vpop.f32.mrb[0].mxu0
      %v1074 = vpop.f32.mrb[0].mxu0
      %v1075 = vadd.f32 0.0, %v1074
      %v1076 = vpop.f32.mrb[0].mxu0
      %1077 = vmatprep.mubr.bf16.mxu0 0
      %1078 = vmatmul.mubr.bf16.gmra.mrb[0].mxu0 %v978
      %v1079 = vpop.f32.mrb[0].mxu0
      %v1080 = vadd.f32 0.0, %v1079
      %v1081 = vpop.f32.mrb[0].mxu0
      %v1082 = vpop.f32.mrb[0].mxu0
      %v1083 = vadd.f32 0.0, %v1082
      %v1084 = vpop.f32.mrb[0].mxu0
      %1085 = vmatprep.mubr.bf16.mxu0 0
      %1086 = vmatmul.mubr.bf16.gmra.mrb[0].mxu0 %v981
      %v1087 = vpop.f32.mrb[0].mxu0
      %v1088 = vadd.f32 0.0, %v1087
      %v1089 = vpop.f32.mrb[0].mxu0
      %v1090 = vpop.f32.mrb[0].mxu0
      %v1091 = vadd.f32 0.0, %v1090
      %v1092 = vpop.f32.mrb[0].mxu0
      %1093 = vmatprep.mubr.bf16.mxu0 0
      %1094 = vmatmul.mubr.bf16.gmra.mrb[0].mxu0 %v984
      %v1095 = vpop.f32.mrb[0].mxu0
      %v1096 = vadd.f32 0.0, %v1095
      %v1097 = vpop.f32.mrb[0].mxu0
      %v1098 = vpop.f32.mrb[0].mxu0
      %v1099 = vadd.f32 0.0, %v1098
      %v1100 = vpop.f32.mrb[0].mxu0
      %1101 = vmatprep.mubr.bf16.mxu0 0
      %1102 = vmatmul.mubr.bf16.gmra.mrb[0].mxu0 %v987
      %v1103 = vpop.f32.mrb[0].mxu0
      %v1104 = vadd.f32 0.0, %v1103
      %v1105 = vpop.f32.mrb[0].mxu0
      %v1106 = vpop.f32.mrb[0].mxu0
      %v1107 = vadd.f32 0.0, %v1106
      %v1108 = vpop.f32.mrb[0].mxu0
      %1109 = vmatprep.mubr.bf16.mxu0 0
      %1110 = vmatmul.mubr.bf16.gmra.mrb[0].mxu0 %v990
      %v1111 = vpop.f32.mrb[0].mxu0
      %v1112 = vadd.f32 0.0, %v1111
      %v1113 = vpop.f32.mrb[0].mxu0
      %v1114 = vpop.f32.mrb[0].mxu0
      %v1115 = vadd.f32 0.0, %v1114
      %v1116 = vpop.f32.mrb[0].mxu0
      %1117 = vmatprep.mubr.bf16.mxu0 0
      %1118 = vmatmul.mubr.bf16.gmra.mrb[0].mxu0 %v993
      %v1119 = vpop.f32.mrb[0].mxu0
      %v1120 = vadd.f32 0.0, %v1119
      %v1121 = vpop.f32.mrb[0].mxu0
      %v1122 = vpop.f32.mrb[0].mxu0
      %v1123 = vadd.f32 0.0, %v1122
      %v1124 = vpop.f32.mrb[0].mxu0
      %1125 = vmatprep.mubr.bf16.mxu0 0
      %1126 = vmatmul.mubr.bf16.gmra.mrb[0].mxu0 %v996
      %v1127 = vpop.f32.mrb[0].mxu0
      %v1128 = vadd.f32 0.0, %v1127
      %v1129 = vpop.f32.mrb[0].mxu0
      %v1130 = vpop.f32.mrb[0].mxu0
      %v1131 = vadd.f32 0.0, %v1130
      %v1132 = vpop.f32.mrb[0].mxu0
      %1133 = vmatprep.mubr.bf16.mxu0 0
      %1134 = vmatmul.mubr.bf16.gmra.mrb[0].mxu0 %v999
      %v1135 = vpop.f32.mrb[0].mxu0
      %v1136 = vadd.f32 0.0, %v1135
      %v1137 = vpop.f32.mrb[0].mxu0
      %v1138 = vpop.f32.mrb[0].mxu0
      %v1139 = vadd.f32 0.0, %v1138
      %v1140 = vpop.f32.mrb[0].mxu0
      %1141 = vmatprep.mubr.bf16.mxu0 0
      %1142 = vmatmul.mubr.bf16.gmra.mrb[0].mxu0 %v1002
      %v1143 = vpop.f32.mrb[0].mxu0
      %v1144 = vadd.f32 0.0, %v1143
      %v1145 = vpop.f32.mrb[0].mxu0
      %v1146 = vpop.f32.mrb[0].mxu0
      %v1147 = vadd.f32 0.0, %v1146
      %v1148 = vpop.f32.mrb[0].mxu0
      %1149 = vmatprep.mubr.bf16.mxu0 0
      %1150 = vmatmul.mubr.bf16.gmra.mrb[0].mxu0 %v1005
      %v1151 = vpop.f32.mrb[0].mxu0
      %v1152 = vadd.f32 0.0, %v1151
      %v1153 = vpop.f32.mrb[0].mxu0
      %v1154 = vpop.f32.mrb[0].mxu0
      %v1155 = vadd.f32 0.0, %v1154
      %v1156 = vpop.f32.mrb[0].mxu0
      %1157 = vmatprep.mubr.bf16.mxu0 0
      %1158 = vmatmul.mubr.bf16.gmra.mrb[0].mxu0 %v1008
      %v1159 = vpop.f32.mrb[0].mxu0
      %v1160 = vadd.f32 0.0, %v1159
      %v1161 = vpop.f32.mrb[0].mxu0
      %v1162 = vpop.f32.mrb[0].mxu0
      %v1163 = vadd.f32 0.0, %v1162
      %v1164 = vpop.f32.mrb[0].mxu0
      %1165 = vmatprep.mubr.bf16.mxu0 0
      %1166 = vmatmul.mubr.bf16.gmra.mrb[0].mxu0 %v1011
      %v1167 = vpop.f32.mrb[0].mxu0
      %v1168 = vadd.f32 0.0, %v1167
      %v1169 = vpop.f32.mrb[0].mxu0
      %v1170 = vpop.f32.mrb[0].mxu0
      %v1171 = vadd.f32 0.0, %v1170
      %v1172 = vpop.f32.mrb[0].mxu0
      %1173 = vdwg.mxu0
      %v1182 = vunpack.c.l.b16 %v876
      %v1183 = vunpack.c.l.b16 %v877
      %v1184 = vunpack.c.l.b16 %v878
      %v1185 = vunpack.c.l.b16 %v879
      %v1186 = vunpack.c.l.b16 %v880
      %v1187 = vunpack.c.l.b16 %v881
      %v1188 = vunpack.c.l.b16 %v882
      %v1189 = vunpack.c.l.b16 %v883
      %v1190 = vpack.c.b16 %v1183, %v1182
      %v1191 = vpack.c.b16 %v1185, %v1184
      %v1192 = vpack.c.b16 %v1187, %v1186
      %v1193 = vpack.c.b16 %v1189, %v1188
      %v1199 = vsel %vm711, %v860, 0
      %v1202 = vsel %vm711, %v861, 0
      %v1205 = vsel %vm711, %v862, 0
      %v1208 = vsel %vm711, %v863, 0
      %v1211 = vsel %vm711, %v864, 0
      %v1214 = vsel %vm711, %v865, 0
      %v1217 = vsel %vm711, %v866, 0
      %v1220 = vsel %vm711, %v867, 0
      %v1223 = vsel %vm711, %v868, 0
      %v1226 = vsel %vm711, %v869, 0
      %v1229 = vsel %vm711, %v870, 0
      %v1232 = vsel %vm711, %v871, 0
      %v1235 = vsel %vm711, %v872, 0
      %v1238 = vsel %vm711, %v873, 0
      %v1241 = vsel %vm711, %v874, 0
      %v1244 = vsel %vm711, %v875, 0
      %1246 = vmatprep.subr.bf16.mxu0 0
      %1247 = vmatpush1.bf16.msra.mxu0 %v1190
      %1248 = vmatprep.subr.bf16.mxu0 0
      %1249 = vmatpush1.bf16.msra.mxu0 %v1191
      %1250 = vmatprep.subr.bf16.mxu0 0
      %1251 = vmatpush1.bf16.msra.mxu0 %v1192
      %1252 = vmatprep.subr.bf16.mxu0 0
      %1253 = vmatpush1.bf16.msra.mxu0 %v1193
      %1254 = vmatprep.subr.bf16.mxu0 0
      %1255 = vmatpush1.bf16.msra.mxu0 0
      %1256 = vmatprep.subr.bf16.mxu0 0
      %1257 = vmatpush1.bf16.msra.mxu0 0
      %1258 = vmatprep.subr.bf16.mxu0 0
      %1259 = vmatpush1.bf16.msra.mxu0 0
      %1260 = vmatprep.subr.bf16.mxu0 0
      %1261 = vmatpush1.bf16.msra.mxu0 0
      %1262 = vmatprep.subr.bf16.mxu0 0
      %1263 = vmatpush1.bf16.msra.mxu0 0
      %1264 = vmatprep.subr.bf16.mxu0 0
      %1265 = vmatpush1.bf16.msra.mxu0 0
      %1266 = vmatprep.subr.bf16.mxu0 0
      %1267 = vmatpush1.bf16.msra.mxu0 0
      %1268 = vmatprep.subr.bf16.mxu0 0
      %1269 = vmatpush1.bf16.msra.mxu0 0
      %1270 = vmatprep.subr.bf16.mxu0 0
      %1271 = vmatpush1.bf16.msra.mxu0 0
      %1272 = vmatprep.subr.bf16.mxu0 0
      %1273 = vmatpush1.bf16.msra.mxu0 0
      %1274 = vmatprep.subr.bf16.mxu0 0
      %1275 = vmatpush1.bf16.msra.mxu0 0
      %1276 = vmatprep.subr.bf16.mxu0 0
      %1277 = vmatpush1.bf16.msra.mxu0 0
      %1278 = vmatprep.mubr.bf16.mxu0 0
      %1279 = vmatmul.mubr.bf16.gmra.mrb[0].mxu0 %v1199
      %v1280 = vpop.f32.mrb[0].mxu0
      %v1281 = vadd.f32 %v1048, %v1280
      %v1282 = vpop.f32.mrb[0].mxu0
      %v1283 = vpop.f32.mrb[0].mxu0
      %v1284 = vadd.f32 %v1051, %v1283
      %v1285 = vpop.f32.mrb[0].mxu0
      %1286 = vmatprep.mubr.bf16.mxu0 0
      %1287 = vmatmul.mubr.bf16.gmra.mrb[0].mxu0 %v1202
      %v1288 = vpop.f32.mrb[0].mxu0
      %v1289 = vadd.f32 %v1056, %v1288
      %v1290 = vpop.f32.mrb[0].mxu0
      %v1291 = vpop.f32.mrb[0].mxu0
      %v1292 = vadd.f32 %v1059, %v1291
      %v1293 = vpop.f32.mrb[0].mxu0
      %1294 = vmatprep.mubr.bf16.mxu0 0
      %1295 = vmatmul.mubr.bf16.gmra.mrb[0].mxu0 %v1205
      %v1296 = vpop.f32.mrb[0].mxu0
      %v1297 = vadd.f32 %v1064, %v1296
      %v1298 = vpop.f32.mrb[0].mxu0
      %v1299 = vpop.f32.mrb[0].mxu0
      %v1300 = vadd.f32 %v1067, %v1299
      %v1301 = vpop.f32.mrb[0].mxu0
      %1302 = vmatprep.mubr.bf16.mxu0 0
      %1303 = vmatmul.mubr.bf16.gmra.mrb[0].mxu0 %v1208
      %v1304 = vpop.f32.mrb[0].mxu0
      %v1305 = vadd.f32 %v1072, %v1304
      %v1306 = vpop.f32.mrb[0].mxu0
      %v1307 = vpop.f32.mrb[0].mxu0
      %v1308 = vadd.f32 %v1075, %v1307
      %v1309 = vpop.f32.mrb[0].mxu0
      %1310 = vmatprep.mubr.bf16.mxu0 0
      %1311 = vmatmul.mubr.bf16.gmra.mrb[0].mxu0 %v1211
      %v1312 = vpop.f32.mrb[0].mxu0
      %v1313 = vadd.f32 %v1080, %v1312
      %v1314 = vpop.f32.mrb[0].mxu0
      %v1315 = vpop.f32.mrb[0].mxu0
      %v1316 = vadd.f32 %v1083, %v1315
      %v1317 = vpop.f32.mrb[0].mxu0
      %1318 = vmatprep.mubr.bf16.mxu0 0
      %1319 = vmatmul.mubr.bf16.gmra.mrb[0].mxu0 %v1214
      %v1320 = vpop.f32.mrb[0].mxu0
      %v1321 = vadd.f32 %v1088, %v1320
      %v1322 = vpop.f32.mrb[0].mxu0
      %v1323 = vpop.f32.mrb[0].mxu0
      %v1324 = vadd.f32 %v1091, %v1323
      %v1325 = vpop.f32.mrb[0].mxu0
      %1326 = vmatprep.mubr.bf16.mxu0 0
      %1327 = vmatmul.mubr.bf16.gmra.mrb[0].mxu0 %v1217
      %v1328 = vpop.f32.mrb[0].mxu0
      %v1329 = vadd.f32 %v1096, %v1328
      %v1330 = vpop.f32.mrb[0].mxu0
      %v1331 = vpop.f32.mrb[0].mxu0
      %v1332 = vadd.f32 %v1099, %v1331
      %v1333 = vpop.f32.mrb[0].mxu0
      %1334 = vmatprep.mubr.bf16.mxu0 0
      %1335 = vmatmul.mubr.bf16.gmra.mrb[0].mxu0 %v1220
      %v1336 = vpop.f32.mrb[0].mxu0
      %v1337 = vadd.f32 %v1104, %v1336
      %v1338 = vpop.f32.mrb[0].mxu0
      %v1339 = vpop.f32.mrb[0].mxu0
      %v1340 = vadd.f32 %v1107, %v1339
      %v1341 = vpop.f32.mrb[0].mxu0
      %1342 = vmatprep.mubr.bf16.mxu0 0
      %1343 = vmatmul.mubr.bf16.gmra.mrb[0].mxu0 %v1223
      %v1344 = vpop.f32.mrb[0].mxu0
      %v1345 = vadd.f32 %v1112, %v1344
      %v1346 = vpop.f32.mrb[0].mxu0
      %v1347 = vpop.f32.mrb[0].mxu0
      %v1348 = vadd.f32 %v1115, %v1347
      %v1349 = vpop.f32.mrb[0].mxu0
      %1350 = vmatprep.mubr.bf16.mxu0 0
      %1351 = vmatmul.mubr.bf16.gmra.mrb[0].mxu0 %v1226
      %v1352 = vpop.f32.mrb[0].mxu0
      %v1353 = vadd.f32 %v1120, %v1352
      %v1354 = vpop.f32.mrb[0].mxu0
      %v1355 = vpop.f32.mrb[0].mxu0
      %v1356 = vadd.f32 %v1123, %v1355
      %v1357 = vpop.f32.mrb[0].mxu0
      %1358 = vmatprep.mubr.bf16.mxu0 0
      %1359 = vmatmul.mubr.bf16.gmra.mrb[0].mxu0 %v1229
      %v1360 = vpop.f32.mrb[0].mxu0
      %v1361 = vadd.f32 %v1128, %v1360
      %v1362 = vpop.f32.mrb[0].mxu0
      %v1363 = vpop.f32.mrb[0].mxu0
      %v1364 = vadd.f32 %v1131, %v1363
      %v1365 = vpop.f32.mrb[0].mxu0
      %1366 = vmatprep.mubr.bf16.mxu0 0
      %1367 = vmatmul.mubr.bf16.gmra.mrb[0].mxu0 %v1232
      %v1368 = vpop.f32.mrb[0].mxu0
      %v1369 = vadd.f32 %v1136, %v1368
      %v1370 = vpop.f32.mrb[0].mxu0
      %v1371 = vpop.f32.mrb[0].mxu0
      %v1372 = vadd.f32 %v1139, %v1371
      %v1373 = vpop.f32.mrb[0].mxu0
      %1374 = vmatprep.mubr.bf16.mxu0 0
      %1375 = vmatmul.mubr.bf16.gmra.mrb[0].mxu0 %v1235
      %v1376 = vpop.f32.mrb[0].mxu0
      %v1377 = vadd.f32 %v1144, %v1376
      %v1378 = vpop.f32.mrb[0].mxu0
      %v1379 = vpop.f32.mrb[0].mxu0
      %v1380 = vadd.f32 %v1147, %v1379
      %v1381 = vpop.f32.mrb[0].mxu0
      %1382 = vmatprep.mubr.bf16.mxu0 0
      %1383 = vmatmul.mubr.bf16.gmra.mrb[0].mxu0 %v1238
      %v1384 = vpop.f32.mrb[0].mxu0
      %v1385 = vadd.f32 %v1152, %v1384
      %v1386 = vpop.f32.mrb[0].mxu0
      %v1387 = vpop.f32.mrb[0].mxu0
      %v1388 = vadd.f32 %v1155, %v1387
      %v1389 = vpop.f32.mrb[0].mxu0
      %1390 = vmatprep.mubr.bf16.mxu0 0
      %1391 = vmatmul.mubr.bf16.gmra.mrb[0].mxu0 %v1241
      %v1392 = vpop.f32.mrb[0].mxu0
      %v1393 = vadd.f32 %v1160, %v1392
      %v1394 = vpop.f32.mrb[0].mxu0
      %v1395 = vpop.f32.mrb[0].mxu0
      %v1396 = vadd.f32 %v1163, %v1395
      %v1397 = vpop.f32.mrb[0].mxu0
      %1398 = vmatprep.mubr.bf16.mxu0 0
      %1399 = vmatmul.mubr.bf16.gmra.mrb[0].mxu0 %v1244
      %v1400 = vpop.f32.mrb[0].mxu0
      %v1401 = vadd.f32 %v1168, %v1400
      %v1402 = vpop.f32.mrb[0].mxu0
      %v1403 = vpop.f32.mrb[0].mxu0
      %v1404 = vadd.f32 %v1171, %v1403
      %v1405 = vpop.f32.mrb[0].mxu0
      %1406 = vdwg.mxu0
      %v1407 = vld [vmem:[#allocation2 + $0x2] sm:$0xff]
      %v1408 = vld [vmem:[#allocation2 + $0xa] sm:$0xff]
      %v1409 = vld [vmem:[#allocation2 + $0x1a] sm:$0xff]
      %v1410 = vld [vmem:[#allocation2 + $0x22] sm:$0xff]
      %v1411 = vld [vmem:[#allocation2 + $0x32] sm:$0xff]
      %v1412 = vld [vmem:[#allocation2 + $0x3a] sm:$0xff]
      %v1413 = vld [vmem:[#allocation2 + $0x4a] sm:$0xff]
      %v1414 = vld [vmem:[#allocation2 + $0x52] sm:$0xff]
      %v1415 = vld [vmem:[#allocation2 + $0x62] sm:$0xff]
      %v1416 = vld [vmem:[#allocation2 + $0x6a] sm:$0xff]
      %v1417 = vld [vmem:[#allocation2 + $0x7a] sm:$0xff]
      %v1418 = vld [vmem:[#allocation2 + $0x82] sm:$0xff]
      %v1419 = vld [vmem:[#allocation2 + $0x92] sm:$0xff]
      %v1420 = vld [vmem:[#allocation2 + $0x9a] sm:$0xff]
      %v1421 = vld [vmem:[#allocation2 + $0xaa] sm:$0xff]
      %v1422 = vld [vmem:[#allocation2 + $0xb2] sm:$0xff]
      %v1423 = vld [vmem:[#allocation2 + $0xc2] sm:$0xff]
      %v1424 = vld [vmem:[#allocation2 + $0xca] sm:$0xff]
      %v1425 = vld [vmem:[#allocation2 + $0xda] sm:$0xff]
      %v1426 = vld [vmem:[#allocation2 + $0xe2] sm:$0xff]
      %v1427 = vld [vmem:[#allocation2 + $0xf2] sm:$0xff]
      %v1428 = vld [vmem:[#allocation2 + $0xfa] sm:$0xff]
      %v1429 = vld [vmem:[#allocation2 + $0x10a] sm:$0xff]
      %v1430 = vld [vmem:[#allocation2 + $0x112] sm:$0xff]
      %v1431 = vld [vmem:[#allocation2 + $0x122] sm:$0xff]
      %v1432 = vld [vmem:[#allocation2 + $0x12a] sm:$0xff]
      %v1433 = vld [vmem:[#allocation2 + $0x13a] sm:$0xff]
      %v1434 = vld [vmem:[#allocation2 + $0x142] sm:$0xff]
      %v1435 = vld [vmem:[#allocation2 + $0x152] sm:$0xff]
      %v1436 = vld [vmem:[#allocation2 + $0x15a] sm:$0xff]
      %v1437 = vld [vmem:[#allocation2 + $0x16a] sm:$0xff]
      %v1438 = vld [vmem:[#allocation2 + $0x172] sm:$0xff]
      %v1439 = vpack.c.bf16 %v1408, %v1407
      %v1440 = vpack.c.bf16 %v1410, %v1409
      %v1441 = vpack.c.bf16 %v1412, %v1411
      %v1442 = vpack.c.bf16 %v1414, %v1413
      %v1443 = vpack.c.bf16 %v1416, %v1415
      %v1444 = vpack.c.bf16 %v1418, %v1417
      %v1445 = vpack.c.bf16 %v1420, %v1419
      %v1446 = vpack.c.bf16 %v1422, %v1421
      %v1447 = vpack.c.bf16 %v1424, %v1423
      %v1448 = vpack.c.bf16 %v1426, %v1425
      %v1449 = vpack.c.bf16 %v1428, %v1427
      %v1450 = vpack.c.bf16 %v1430, %v1429
      %v1451 = vpack.c.bf16 %v1432, %v1431
      %v1452 = vpack.c.bf16 %v1434, %v1433
      %v1453 = vpack.c.bf16 %v1436, %v1435
      %v1454 = vpack.c.bf16 %v1438, %v1437
      %s1455 = scalar_lea.vmem %s3, 64
      %v1456 = vld [vmem:[%s1455] sm:$0xf]
      %v1457 = vld [vmem:[%s1455 + $0x4] sm:$0xf]
      %v1458 = vld [vmem:[%s1455 + $0x8] sm:$0xf]
      %v1459 = vld [vmem:[%s1455 + $0xc] sm:$0xf]
      %v1460 = vld [vmem:[%s1455 + $0x10] sm:$0xf]
      %v1461 = vld [vmem:[%s1455 + $0x14] sm:$0xf]
      %v1462 = vld [vmem:[%s1455 + $0x18] sm:$0xf]
      %v1463 = vld [vmem:[%s1455 + $0x1c] sm:$0xf]
      %v1472 = vunpack.c.l.b16 %v1456
      %v1473 = vunpack.c.l.b16 %v1457
      %v1474 = vunpack.c.l.b16 %v1458
      %v1475 = vunpack.c.l.b16 %v1459
      %v1476 = vunpack.c.l.b16 %v1460
      %v1477 = vunpack.c.l.b16 %v1461
      %v1478 = vunpack.c.l.b16 %v1462
      %v1479 = vunpack.c.l.b16 %v1463
      %v1480 = vpack.c.b16 %v1473, %v1472
      %v1481 = vpack.c.b16 %v1475, %v1474
      %v1482 = vpack.c.b16 %v1477, %v1476
      %v1483 = vpack.c.b16 %v1479, %v1478
      %v1489 = vsel %vm711, %v1439, 0
      %v1492 = vsel %vm711, %v1440, 0
      %v1495 = vsel %vm711, %v1441, 0
      %v1498 = vsel %vm711, %v1442, 0
      %v1501 = vsel %vm711, %v1443, 0
      %v1504 = vsel %vm711, %v1444, 0
      %v1507 = vsel %vm711, %v1445, 0
      %v1510 = vsel %vm711, %v1446, 0
      %v1513 = vsel %vm711, %v1447, 0
      %v1516 = vsel %vm711, %v1448, 0
      %v1519 = vsel %vm711, %v1449, 0
      %v1522 = vsel %vm711, %v1450, 0
      %v1525 = vsel %vm711, %v1451, 0
      %v1528 = vsel %vm711, %v1452, 0
      %v1531 = vsel %vm711, %v1453, 0
      %v1534 = vsel %vm711, %v1454, 0
      %1536 = vmatprep.subr.bf16.mxu0 0
      %1537 = vmatpush1.bf16.msra.mxu0 %v1480
      %1538 = vmatprep.subr.bf16.mxu0 0
      %1539 = vmatpush1.bf16.msra.mxu0 %v1481
      %1540 = vmatprep.subr.bf16.mxu0 0
      %1541 = vmatpush1.bf16.msra.mxu0 %v1482
      %1542 = vmatprep.subr.bf16.mxu0 0
      %1543 = vmatpush1.bf16.msra.mxu0 %v1483
      %1544 = vmatprep.subr.bf16.mxu0 0
      %1545 = vmatpush1.bf16.msra.mxu0 0
      %1546 = vmatprep.subr.bf16.mxu0 0
      %1547 = vmatpush1.bf16.msra.mxu0 0
      %1548 = vmatprep.subr.bf16.mxu0 0
      %1549 = vmatpush1.bf16.msra.mxu0 0
      %1550 = vmatprep.subr.bf16.mxu0 0
      %1551 = vmatpush1.bf16.msra.mxu0 0
      %1552 = vmatprep.subr.bf16.mxu0 0
      %1553 = vmatpush1.bf16.msra.mxu0 0
      %1554 = vmatprep.subr.bf16.mxu0 0
      %1555 = vmatpush1.bf16.msra.mxu0 0
      %1556 = vmatprep.subr.bf16.mxu0 0
      %1557 = vmatpush1.bf16.msra.mxu0 0
      %1558 = vmatprep.subr.bf16.mxu0 0
      %1559 = vmatpush1.bf16.msra.mxu0 0
      %1560 = vmatprep.subr.bf16.mxu0 0
      %1561 = vmatpush1.bf16.msra.mxu0 0
      %1562 = vmatprep.subr.bf16.mxu0 0
      %1563 = vmatpush1.bf16.msra.mxu0 0
      %1564 = vmatprep.subr.bf16.mxu0 0
      %1565 = vmatpush1.bf16.msra.mxu0 0
      %1566 = vmatprep.subr.bf16.mxu0 0
      %1567 = vmatpush1.bf16.msra.mxu0 0
      %1568 = vmatprep.mubr.bf16.mxu0 0
      %1569 = vmatmul.mubr.bf16.gmra.mrb[0].mxu0 %v1489
      %v1570 = vpop.f32.mrb[0].mxu0
      %v1571 = vadd.f32 0.0, %v1570
      %v1572 = vpop.f32.mrb[0].mxu0
      %v1573 = vpop.f32.mrb[0].mxu0
      %v1574 = vadd.f32 0.0, %v1573
      %v1575 = vpop.f32.mrb[0].mxu0
      %1576 = vmatprep.mubr.bf16.mxu0 0
      %1577 = vmatmul.mubr.bf16.gmra.mrb[0].mxu0 %v1492
      %v1578 = vpop.f32.mrb[0].mxu0
      %v1579 = vadd.f32 0.0, %v1578
      %v1580 = vpop.f32.mrb[0].mxu0
      %v1581 = vpop.f32.mrb[0].mxu0
      %v1582 = vadd.f32 0.0, %v1581
      %v1583 = vpop.f32.mrb[0].mxu0
      %1584 = vmatprep.mubr.bf16.mxu0 0
      %1585 = vmatmul.mubr.bf16.gmra.mrb[0].mxu0 %v1495
      %v1586 = vpop.f32.mrb[0].mxu0
      %v1587 = vadd.f32 0.0, %v1586
      %v1588 = vpop.f32.mrb[0].mxu0
      %v1589 = vpop.f32.mrb[0].mxu0
      %v1590 = vadd.f32 0.0, %v1589
      %v1591 = vpop.f32.mrb[0].mxu0
      %1592 = vmatprep.mubr.bf16.mxu0 0
      %1593 = vmatmul.mubr.bf16.gmra.mrb[0].mxu0 %v1498
      %v1594 = vpop.f32.mrb[0].mxu0
      %v1595 = vadd.f32 0.0, %v1594
      %v1596 = vpop.f32.mrb[0].mxu0
      %v1597 = vpop.f32.mrb[0].mxu0
      %v1598 = vadd.f32 0.0, %v1597
      %v1599 = vpop.f32.mrb[0].mxu0
      %1600 = vmatprep.mubr.bf16.mxu0 0
      %1601 = vmatmul.mubr.bf16.gmra.mrb[0].mxu0 %v1501
      %v1602 = vpop.f32.mrb[0].mxu0
      %v1603 = vadd.f32 0.0, %v1602
      %v1604 = vpop.f32.mrb[0].mxu0
      %v1605 = vpop.f32.mrb[0].mxu0
      %v1606 = vadd.f32 0.0, %v1605
      %v1607 = vpop.f32.mrb[0].mxu0
      %1608 = vmatprep.mubr.bf16.mxu0 0
      %1609 = vmatmul.mubr.bf16.gmra.mrb[0].mxu0 %v1504
      %v1610 = vpop.f32.mrb[0].mxu0
      %v1611 = vadd.f32 0.0, %v1610
      %v1612 = vpop.f32.mrb[0].mxu0
      %v1613 = vpop.f32.mrb[0].mxu0
      %v1614 = vadd.f32 0.0, %v1613
      %v1615 = vpop.f32.mrb[0].mxu0
      %1616 = vmatprep.mubr.bf16.mxu0 0
      %1617 = vmatmul.mubr.bf16.gmra.mrb[0].mxu0 %v1507
      %v1618 = vpop.f32.mrb[0].mxu0
      %v1619 = vadd.f32 0.0, %v1618
      %v1620 = vpop.f32.mrb[0].mxu0
      %v1621 = vpop.f32.mrb[0].mxu0
      %v1622 = vadd.f32 0.0, %v1621
      %v1623 = vpop.f32.mrb[0].mxu0
      %1624 = vmatprep.mubr.bf16.mxu0 0
      %1625 = vmatmul.mubr.bf16.gmra.mrb[0].mxu0 %v1510
      %v1626 = vpop.f32.mrb[0].mxu0
      %v1627 = vadd.f32 0.0, %v1626
      %v1628 = vpop.f32.mrb[0].mxu0
      %v1629 = vpop.f32.mrb[0].mxu0
      %v1630 = vadd.f32 0.0, %v1629
      %v1631 = vpop.f32.mrb[0].mxu0
      %1632 = vmatprep.mubr.bf16.mxu0 0
      %1633 = vmatmul.mubr.bf16.gmra.mrb[0].mxu0 %v1513
      %v1634 = vpop.f32.mrb[0].mxu0
      %v1635 = vadd.f32 0.0, %v1634
      %v1636 = vpop.f32.mrb[0].mxu0
      %v1637 = vpop.f32.mrb[0].mxu0
      %v1638 = vadd.f32 0.0, %v1637
      %v1639 = vpop.f32.mrb[0].mxu0
      %1640 = vmatprep.mubr.bf16.mxu0 0
      %1641 = vmatmul.mubr.bf16.gmra.mrb[0].mxu0 %v1516
      %v1642 = vpop.f32.mrb[0].mxu0
      %v1643 = vadd.f32 0.0, %v1642
      %v1644 = vpop.f32.mrb[0].mxu0
      %v1645 = vpop.f32.mrb[0].mxu0
      %v1646 = vadd.f32 0.0, %v1645
      %v1647 = vpop.f32.mrb[0].mxu0
      %1648 = vmatprep.mubr.bf16.mxu0 0
      %1649 = vmatmul.mubr.bf16.gmra.mrb[0].mxu0 %v1519
      %v1650 = vpop.f32.mrb[0].mxu0
      %v1651 = vadd.f32 0.0, %v1650
      %v1652 = vpop.f32.mrb[0].mxu0
      %v1653 = vpop.f32.mrb[0].mxu0
      %v1654 = vadd.f32 0.0, %v1653
      %v1655 = vpop.f32.mrb[0].mxu0
      %1656 = vmatprep.mubr.bf16.mxu0 0
      %1657 = vmatmul.mubr.bf16.gmra.mrb[0].mxu0 %v1522
      %v1658 = vpop.f32.mrb[0].mxu0
      %v1659 = vadd.f32 0.0, %v1658
      %v1660 = vpop.f32.mrb[0].mxu0
      %v1661 = vpop.f32.mrb[0].mxu0
      %v1662 = vadd.f32 0.0, %v1661
      %v1663 = vpop.f32.mrb[0].mxu0
      %1664 = vmatprep.mubr.bf16.mxu0 0
      %1665 = vmatmul.mubr.bf16.gmra.mrb[0].mxu0 %v1525
      %v1666 = vpop.f32.mrb[0].mxu0
      %v1667 = vadd.f32 0.0, %v1666
      %v1668 = vpop.f32.mrb[0].mxu0
      %v1669 = vpop.f32.mrb[0].mxu0
      %v1670 = vadd.f32 0.0, %v1669
      %v1671 = vpop.f32.mrb[0].mxu0
      %1672 = vmatprep.mubr.bf16.mxu0 0
      %1673 = vmatmul.mubr.bf16.gmra.mrb[0].mxu0 %v1528
      %v1674 = vpop.f32.mrb[0].mxu0
      %v1675 = vadd.f32 0.0, %v1674
      %v1676 = vpop.f32.mrb[0].mxu0
      %v1677 = vpop.f32.mrb[0].mxu0
      %v1678 = vadd.f32 0.0, %v1677
      %v1679 = vpop.f32.mrb[0].mxu0
      %1680 = vmatprep.mubr.bf16.mxu0 0
      %1681 = vmatmul.mubr.bf16.gmra.mrb[0].mxu0 %v1531
      %v1682 = vpop.f32.mrb[0].mxu0
      %v1683 = vadd.f32 0.0, %v1682
      %v1684 = vpop.f32.mrb[0].mxu0
      %v1685 = vpop.f32.mrb[0].mxu0
      %v1686 = vadd.f32 0.0, %v1685
      %v1687 = vpop.f32.mrb[0].mxu0
      %1688 = vmatprep.mubr.bf16.mxu0 0
      %1689 = vmatmul.mubr.bf16.gmra.mrb[0].mxu0 %v1534
      %v1690 = vpop.f32.mrb[0].mxu0
      %v1691 = vadd.f32 0.0, %v1690
      %v1692 = vpop.f32.mrb[0].mxu0
      %v1693 = vpop.f32.mrb[0].mxu0
      %v1694 = vadd.f32 0.0, %v1693
      %v1695 = vpop.f32.mrb[0].mxu0
      %1696 = vdwg.mxu0
      %v1697 = vadd.f32 %v1281, %v1571
      %v1698 = vadd.f32 %v1284, %v1574
      %v1699 = vadd.f32 %v1289, %v1579
      %v1700 = vadd.f32 %v1292, %v1582
      %v1701 = vadd.f32 %v1297, %v1587
      %v1702 = vadd.f32 %v1300, %v1590
      %v1703 = vadd.f32 %v1305, %v1595
      %v1704 = vadd.f32 %v1308, %v1598
      %v1705 = vadd.f32 %v1313, %v1603
      %v1706 = vadd.f32 %v1316, %v1606
      %v1707 = vadd.f32 %v1321, %v1611
      %v1708 = vadd.f32 %v1324, %v1614
      %v1709 = vadd.f32 %v1329, %v1619
      %v1710 = vadd.f32 %v1332, %v1622
      %v1711 = vadd.f32 %v1337, %v1627
      %v1712 = vadd.f32 %v1340, %v1630
      %v1713 = vadd.f32 %v1345, %v1635
      %v1714 = vadd.f32 %v1348, %v1638
      %v1715 = vadd.f32 %v1353, %v1643
      %v1716 = vadd.f32 %v1356, %v1646
      %v1717 = vadd.f32 %v1361, %v1651
      %v1718 = vadd.f32 %v1364, %v1654
      %v1719 = vadd.f32 %v1369, %v1659
      %v1720 = vadd.f32 %v1372, %v1662
      %v1721 = vadd.f32 %v1377, %v1667
      %v1722 = vadd.f32 %v1380, %v1670
      %v1723 = vadd.f32 %v1385, %v1675
      %v1724 = vadd.f32 %v1388, %v1678
      %v1725 = vadd.f32 %v1393, %v1683
      %v1726 = vadd.f32 %v1396, %v1686
      %v1727 = vadd.f32 %v1401, %v1691
      %v1728 = vadd.f32 %v1404, %v1694
      %v1729 = vld [vmem:[%s720] sm:$0xff]
      %v1730 = vld [vmem:[%s720 + $0x8] sm:$0xff]
      %v1731 = vld [vmem:[%s720 + $0x18] sm:$0xff]
      %v1732 = vld [vmem:[%s720 + $0x20] sm:$0xff]
      %v1733 = vld [vmem:[%s720 + $0x30] sm:$0xff]
      %v1734 = vld [vmem:[%s720 + $0x38] sm:$0xff]
      %v1735 = vld [vmem:[%s720 + $0x48] sm:$0xff]
      %v1736 = vld [vmem:[%s720 + $0x50] sm:$0xff]
      %v1737 = vld [vmem:[%s720 + $0x60] sm:$0xff]
      %v1738 = vld [vmem:[%s720 + $0x68] sm:$0xff]
      %v1739 = vld [vmem:[%s720 + $0x78] sm:$0xff]
      %v1740 = vld [vmem:[%s720 + $0x80] sm:$0xff]
      %v1741 = vld [vmem:[%s720 + $0x90] sm:$0xff]
      %v1742 = vld [vmem:[%s720 + $0x98] sm:$0xff]
      %v1743 = vld [vmem:[%s720 + $0xa8] sm:$0xff]
      %v1744 = vld [vmem:[%s720 + $0xb0] sm:$0xff]
      %v1745 = vld [vmem:[%s720 + $0xc0] sm:$0xff]
      %v1746 = vld [vmem:[%s720 + $0xc8] sm:$0xff]
      %v1747 = vld [vmem:[%s720 + $0xd8] sm:$0xff]
      %v1748 = vld [vmem:[%s720 + $0xe0] sm:$0xff]
      %v1749 = vld [vmem:[%s720 + $0xf0] sm:$0xff]
      %v1750 = vld [vmem:[%s720 + $0xf8] sm:$0xff]
      %v1751 = vld [vmem:[%s720 + $0x108] sm:$0xff]
      %v1752 = vld [vmem:[%s720 + $0x110] sm:$0xff]
      %v1753 = vld [vmem:[%s720 + $0x120] sm:$0xff]
      %v1754 = vld [vmem:[%s720 + $0x128] sm:$0xff]
      %v1755 = vld [vmem:[%s720 + $0x138] sm:$0xff]
      %v1756 = vld [vmem:[%s720 + $0x140] sm:$0xff]
      %v1757 = vld [vmem:[%s720 + $0x150] sm:$0xff]
      %v1758 = vld [vmem:[%s720 + $0x158] sm:$0xff]
      %v1759 = vld [vmem:[%s720 + $0x168] sm:$0xff]
      %v1760 = vld [vmem:[%s720 + $0x170] sm:$0xff]
      %v1761 = vpack.c.bf16 %v1730, %v1729
      %v1762 = vpack.c.bf16 %v1732, %v1731
      %v1763 = vpack.c.bf16 %v1734, %v1733
      %v1764 = vpack.c.bf16 %v1736, %v1735
      %v1765 = vpack.c.bf16 %v1738, %v1737
      %v1766 = vpack.c.bf16 %v1740, %v1739
      %v1767 = vpack.c.bf16 %v1742, %v1741
      %v1768 = vpack.c.bf16 %v1744, %v1743
      %v1769 = vpack.c.bf16 %v1746, %v1745
      %v1770 = vpack.c.bf16 %v1748, %v1747
      %v1771 = vpack.c.bf16 %v1750, %v1749
      %v1772 = vpack.c.bf16 %v1752, %v1751
      %v1773 = vpack.c.bf16 %v1754, %v1753
      %v1774 = vpack.c.bf16 %v1756, %v1755
      %v1775 = vpack.c.bf16 %v1758, %v1757
      %v1776 = vpack.c.bf16 %v1760, %v1759
      %s1777 = scalar_lea.vmem %s3, 96
      %v1778 = vld [vmem:[%s1777] sm:$0xf]
      %v1779 = vld [vmem:[%s1777 + $0x4] sm:$0xf]
      %v1780 = vld [vmem:[%s1777 + $0x8] sm:$0xf]
      %v1781 = vld [vmem:[%s1777 + $0xc] sm:$0xf]
      %v1782 = vld [vmem:[%s1777 + $0x10] sm:$0xf]
      %v1783 = vld [vmem:[%s1777 + $0x14] sm:$0xf]
      %v1784 = vld [vmem:[%s1777 + $0x18] sm:$0xf]
      %v1785 = vld [vmem:[%s1777 + $0x1c] sm:$0xf]
      %v1794 = vunpack.c.l.b16 %v1778
      %v1795 = vunpack.c.l.b16 %v1779
      %v1796 = vunpack.c.l.b16 %v1780
      %v1797 = vunpack.c.l.b16 %v1781
      %v1798 = vunpack.c.l.b16 %v1782
      %v1799 = vunpack.c.l.b16 %v1783
      %v1800 = vunpack.c.l.b16 %v1784
      %v1801 = vunpack.c.l.b16 %v1785
      %v1802 = vpack.c.b16 %v1795, %v1794
      %v1803 = vpack.c.b16 %v1797, %v1796
      %v1804 = vpack.c.b16 %v1799, %v1798
      %v1805 = vpack.c.b16 %v1801, %v1800
      %v1811 = vsel %vm711, %v1761, 0
      %v1814 = vsel %vm711, %v1762, 0
      %v1817 = vsel %vm711, %v1763, 0
      %v1820 = vsel %vm711, %v1764, 0
      %v1823 = vsel %vm711, %v1765, 0
      %v1826 = vsel %vm711, %v1766, 0
      %v1829 = vsel %vm711, %v1767, 0
      %v1832 = vsel %vm711, %v1768, 0
      %v1835 = vsel %vm711, %v1769, 0
      %v1838 = vsel %vm711, %v1770, 0
      %v1841 = vsel %vm711, %v1771, 0
      %v1844 = vsel %vm711, %v1772, 0
      %v1847 = vsel %vm711, %v1773, 0
      %v1850 = vsel %vm711, %v1774, 0
      %v1853 = vsel %vm711, %v1775, 0
      %v1856 = vsel %vm711, %v1776, 0
      %1858 = vmatprep.subr.bf16.mxu0 0
      %1859 = vmatpush1.bf16.msra.mxu0 %v1802
      %1860 = vmatprep.subr.bf16.mxu0 0
      %1861 = vmatpush1.bf16.msra.mxu0 %v1803
      %1862 = vmatprep.subr.bf16.mxu0 0
      %1863 = vmatpush1.bf16.msra.mxu0 %v1804
      %1864 = vmatprep.subr.bf16.mxu0 0
      %1865 = vmatpush1.bf16.msra.mxu0 %v1805
      %1866 = vmatprep.subr.bf16.mxu0 0
      %1867 = vmatpush1.bf16.msra.mxu0 0
      %1868 = vmatprep.subr.bf16.mxu0 0
      %1869 = vmatpush1.bf16.msra.mxu0 0
      %1870 = vmatprep.subr.bf16.mxu0 0
      %1871 = vmatpush1.bf16.msra.mxu0 0
      %1872 = vmatprep.subr.bf16.mxu0 0
      %1873 = vmatpush1.bf16.msra.mxu0 0
      %1874 = vmatprep.subr.bf16.mxu0 0
      %1875 = vmatpush1.bf16.msra.mxu0 0
      %1876 = vmatprep.subr.bf16.mxu0 0
      %1877 = vmatpush1.bf16.msra.mxu0 0
      %1878 = vmatprep.subr.bf16.mxu0 0
      %1879 = vmatpush1.bf16.msra.mxu0 0
      %1880 = vmatprep.subr.bf16.mxu0 0
      %1881 = vmatpush1.bf16.msra.mxu0 0
      %1882 = vmatprep.subr.bf16.mxu0 0
      %1883 = vmatpush1.bf16.msra.mxu0 0
      %1884 = vmatprep.subr.bf16.mxu0 0
      %1885 = vmatpush1.bf16.msra.mxu0 0
      %1886 = vmatprep.subr.bf16.mxu0 0
      %1887 = vmatpush1.bf16.msra.mxu0 0
      %1888 = vmatprep.subr.bf16.mxu0 0
      %1889 = vmatpush1.bf16.msra.mxu0 0
      %1890 = vmatprep.mubr.bf16.mxu0 0
      %1891 = vmatmul.mubr.bf16.gmra.mrb[0].mxu0 %v1811
      %v1892 = vpop.f32.mrb[0].mxu0
      %v1893 = vadd.f32 0.0, %v1892
      %v1894 = vpop.f32.mrb[0].mxu0
      %v1895 = vpop.f32.mrb[0].mxu0
      %v1896 = vadd.f32 0.0, %v1895
      %v1897 = vpop.f32.mrb[0].mxu0
      %1898 = vmatprep.mubr.bf16.mxu0 0
      %1899 = vmatmul.mubr.bf16.gmra.mrb[0].mxu0 %v1814
      %v1900 = vpop.f32.mrb[0].mxu0
      %v1901 = vadd.f32 0.0, %v1900
      %v1902 = vpop.f32.mrb[0].mxu0
      %v1903 = vpop.f32.mrb[0].mxu0
      %v1904 = vadd.f32 0.0, %v1903
      %v1905 = vpop.f32.mrb[0].mxu0
      %1906 = vmatprep.mubr.bf16.mxu0 0
      %1907 = vmatmul.mubr.bf16.gmra.mrb[0].mxu0 %v1817
      %v1908 = vpop.f32.mrb[0].mxu0
      %v1909 = vadd.f32 0.0, %v1908
      %v1910 = vpop.f32.mrb[0].mxu0
      %v1911 = vpop.f32.mrb[0].mxu0
      %v1912 = vadd.f32 0.0, %v1911
      %v1913 = vpop.f32.mrb[0].mxu0
      %1914 = vmatprep.mubr.bf16.mxu0 0
      %1915 = vmatmul.mubr.bf16.gmra.mrb[0].mxu0 %v1820
      %v1916 = vpop.f32.mrb[0].mxu0
      %v1917 = vadd.f32 0.0, %v1916
      %v1918 = vpop.f32.mrb[0].mxu0
      %v1919 = vpop.f32.mrb[0].mxu0
      %v1920 = vadd.f32 0.0, %v1919
      %v1921 = vpop.f32.mrb[0].mxu0
      %1922 = vmatprep.mubr.bf16.mxu0 0
      %1923 = vmatmul.mubr.bf16.gmra.mrb[0].mxu0 %v1823
      %v1924 = vpop.f32.mrb[0].mxu0
      %v1925 = vadd.f32 0.0, %v1924
      %v1926 = vpop.f32.mrb[0].mxu0
      %v1927 = vpop.f32.mrb[0].mxu0
      %v1928 = vadd.f32 0.0, %v1927
      %v1929 = vpop.f32.mrb[0].mxu0
      %1930 = vmatprep.mubr.bf16.mxu0 0
      %1931 = vmatmul.mubr.bf16.gmra.mrb[0].mxu0 %v1826
      %v1932 = vpop.f32.mrb[0].mxu0
      %v1933 = vadd.f32 0.0, %v1932
      %v1934 = vpop.f32.mrb[0].mxu0
      %v1935 = vpop.f32.mrb[0].mxu0
      %v1936 = vadd.f32 0.0, %v1935
      %v1937 = vpop.f32.mrb[0].mxu0
      %1938 = vmatprep.mubr.bf16.mxu0 0
      %1939 = vmatmul.mubr.bf16.gmra.mrb[0].mxu0 %v1829
      %v1940 = vpop.f32.mrb[0].mxu0
      %v1941 = vadd.f32 0.0, %v1940
      %v1942 = vpop.f32.mrb[0].mxu0
      %v1943 = vpop.f32.mrb[0].mxu0
      %v1944 = vadd.f32 0.0, %v1943
      %v1945 = vpop.f32.mrb[0].mxu0
      %1946 = vmatprep.mubr.bf16.mxu0 0
      %1947 = vmatmul.mubr.bf16.gmra.mrb[0].mxu0 %v1832
      %v1948 = vpop.f32.mrb[0].mxu0
      %v1949 = vadd.f32 0.0, %v1948
      %v1950 = vpop.f32.mrb[0].mxu0
      %v1951 = vpop.f32.mrb[0].mxu0
      %v1952 = vadd.f32 0.0, %v1951
      %v1953 = vpop.f32.mrb[0].mxu0
      %1954 = vmatprep.mubr.bf16.mxu0 0
      %1955 = vmatmul.mubr.bf16.gmra.mrb[0].mxu0 %v1835
      %v1956 = vpop.f32.mrb[0].mxu0
      %v1957 = vadd.f32 0.0, %v1956
      %v1958 = vpop.f32.mrb[0].mxu0
      %v1959 = vpop.f32.mrb[0].mxu0
      %v1960 = vadd.f32 0.0, %v1959
      %v1961 = vpop.f32.mrb[0].mxu0
      %1962 = vmatprep.mubr.bf16.mxu0 0
      %1963 = vmatmul.mubr.bf16.gmra.mrb[0].mxu0 %v1838
      %v1964 = vpop.f32.mrb[0].mxu0
      %v1965 = vadd.f32 0.0, %v1964
      %v1966 = vpop.f32.mrb[0].mxu0
      %v1967 = vpop.f32.mrb[0].mxu0
      %v1968 = vadd.f32 0.0, %v1967
      %v1969 = vpop.f32.mrb[0].mxu0
      %1970 = vmatprep.mubr.bf16.mxu0 0
      %1971 = vmatmul.mubr.bf16.gmra.mrb[0].mxu0 %v1841
      %v1972 = vpop.f32.mrb[0].mxu0
      %v1973 = vadd.f32 0.0, %v1972
      %v1974 = vpop.f32.mrb[0].mxu0
      %v1975 = vpop.f32.mrb[0].mxu0
      %v1976 = vadd.f32 0.0, %v1975
      %v1977 = vpop.f32.mrb[0].mxu0
      %1978 = vmatprep.mubr.bf16.mxu0 0
      %1979 = vmatmul.mubr.bf16.gmra.mrb[0].mxu0 %v1844
      %v1980 = vpop.f32.mrb[0].mxu0
      %v1981 = vadd.f32 0.0, %v1980
      %v1982 = vpop.f32.mrb[0].mxu0
      %v1983 = vpop.f32.mrb[0].mxu0
      %v1984 = vadd.f32 0.0, %v1983
      %v1985 = vpop.f32.mrb[0].mxu0
      %1986 = vmatprep.mubr.bf16.mxu0 0
      %1987 = vmatmul.mubr.bf16.gmra.mrb[0].mxu0 %v1847
      %v1988 = vpop.f32.mrb[0].mxu0
      %v1989 = vadd.f32 0.0, %v1988
      %v1990 = vpop.f32.mrb[0].mxu0
      %v1991 = vpop.f32.mrb[0].mxu0
      %v1992 = vadd.f32 0.0, %v1991
      %v1993 = vpop.f32.mrb[0].mxu0
      %1994 = vmatprep.mubr.bf16.mxu0 0
      %1995 = vmatmul.mubr.bf16.gmra.mrb[0].mxu0 %v1850
      %v1996 = vpop.f32.mrb[0].mxu0
      %v1997 = vadd.f32 0.0, %v1996
      %v1998 = vpop.f32.mrb[0].mxu0
      %v1999 = vpop.f32.mrb[0].mxu0
      %v2000 = vadd.f32 0.0, %v1999
      %v2001 = vpop.f32.mrb[0].mxu0
      %2002 = vmatprep.mubr.bf16.mxu0 0
      %2003 = vmatmul.mubr.bf16.gmra.mrb[0].mxu0 %v1853
      %v2004 = vpop.f32.mrb[0].mxu0
      %v2005 = vadd.f32 0.0, %v2004
      %v2006 = vpop.f32.mrb[0].mxu0
      %v2007 = vpop.f32.mrb[0].mxu0
      %v2008 = vadd.f32 0.0, %v2007
      %v2009 = vpop.f32.mrb[0].mxu0
      %2010 = vmatprep.mubr.bf16.mxu0 0
      %2011 = vmatmul.mubr.bf16.gmra.mrb[0].mxu0 %v1856
      %v2012 = vpop.f32.mrb[0].mxu0
      %v2013 = vadd.f32 0.0, %v2012
      %v2014 = vpop.f32.mrb[0].mxu0
      %v2015 = vpop.f32.mrb[0].mxu0
      %v2016 = vadd.f32 0.0, %v2015
      %v2017 = vpop.f32.mrb[0].mxu0
      %2018 = vdwg.mxu0
      %v2019 = vadd.f32 %v1697, %v1893
      %v2020 = vadd.f32 %v1698, %v1896
      %v2021 = vadd.f32 %v1699, %v1901
      %v2022 = vadd.f32 %v1700, %v1904
      %v2023 = vadd.f32 %v1701, %v1909
      %v2024 = vadd.f32 %v1702, %v1912
      %v2025 = vadd.f32 %v1703, %v1917
      %v2026 = vadd.f32 %v1704, %v1920
      %v2027 = vadd.f32 %v1705, %v1925
      %v2028 = vadd.f32 %v1706, %v1928
      %v2029 = vadd.f32 %v1707, %v1933
      %v2030 = vadd.f32 %v1708, %v1936
      %v2031 = vadd.f32 %v1709, %v1941
      %v2032 = vadd.f32 %v1710, %v1944
      %v2033 = vadd.f32 %v1711, %v1949
      %v2034 = vadd.f32 %v1712, %v1952
      %v2035 = vadd.f32 %v1713, %v1957
      %v2036 = vadd.f32 %v1714, %v1960
      %v2037 = vadd.f32 %v1715, %v1965
      %v2038 = vadd.f32 %v1716, %v1968
      %v2039 = vadd.f32 %v1717, %v1973
      %v2040 = vadd.f32 %v1718, %v1976
      %v2041 = vadd.f32 %v1719, %v1981
      %v2042 = vadd.f32 %v1720, %v1984
      %v2043 = vadd.f32 %v1721, %v1989
      %v2044 = vadd.f32 %v1722, %v1992
      %v2045 = vadd.f32 %v1723, %v1997
      %v2046 = vadd.f32 %v1724, %v2000
      %v2047 = vadd.f32 %v1725, %v2005
      %v2048 = vadd.f32 %v1726, %v2008
      %v2049 = vadd.f32 %v1727, %v2013
      %v2050 = vadd.f32 %v1728, %v2016
      %v2051 = vld [vmem:[%s720 + $0x1] sm:$0xff]
      %v2052 = vld [vmem:[%s720 + $0x9] sm:$0xff]
      %v2053 = vld [vmem:[%s720 + $0x19] sm:$0xff]
      %v2054 = vld [vmem:[%s720 + $0x21] sm:$0xff]
      %v2055 = vld [vmem:[%s720 + $0x31] sm:$0xff]
      %v2056 = vld [vmem:[%s720 + $0x39] sm:$0xff]
      %v2057 = vld [vmem:[%s720 + $0x49] sm:$0xff]
      %v2058 = vld [vmem:[%s720 + $0x51] sm:$0xff]
      %v2059 = vld [vmem:[%s720 + $0x61] sm:$0xff]
      %v2060 = vld [vmem:[%s720 + $0x69] sm:$0xff]
      %v2061 = vld [vmem:[%s720 + $0x79] sm:$0xff]
      %v2062 = vld [vmem:[%s720 + $0x81] sm:$0xff]
      %v2063 = vld [vmem:[%s720 + $0x91] sm:$0xff]
      %v2064 = vld [vmem:[%s720 + $0x99] sm:$0xff]
      %v2065 = vld [vmem:[%s720 + $0xa9] sm:$0xff]
      %v2066 = vld [vmem:[%s720 + $0xb1] sm:$0xff]
      %v2067 = vld [vmem:[%s720 + $0xc1] sm:$0xff]
      %v2068 = vld [vmem:[%s720 + $0xc9] sm:$0xff]
      %v2069 = vld [vmem:[%s720 + $0xd9] sm:$0xff]
      %v2070 = vld [vmem:[%s720 + $0xe1] sm:$0xff]
      %v2071 = vld [vmem:[%s720 + $0xf1] sm:$0xff]
      %v2072 = vld [vmem:[%s720 + $0xf9] sm:$0xff]
      %v2073 = vld [vmem:[%s720 + $0x109] sm:$0xff]
      %v2074 = vld [vmem:[%s720 + $0x111] sm:$0xff]
      %v2075 = vld [vmem:[%s720 + $0x121] sm:$0xff]
      %v2076 = vld [vmem:[%s720 + $0x129] sm:$0xff]
      %v2077 = vld [vmem:[%s720 + $0x139] sm:$0xff]
      %v2078 = vld [vmem:[%s720 + $0x141] sm:$0xff]
      %v2079 = vld [vmem:[%s720 + $0x151] sm:$0xff]
      %v2080 = vld [vmem:[%s720 + $0x159] sm:$0xff]
      %v2081 = vld [vmem:[%s720 + $0x169] sm:$0xff]
      %v2082 = vld [vmem:[%s720 + $0x171] sm:$0xff]
      %v2083 = vpack.c.bf16 %v2052, %v2051
      %v2084 = vpack.c.bf16 %v2054, %v2053
      %v2085 = vpack.c.bf16 %v2056, %v2055
      %v2086 = vpack.c.bf16 %v2058, %v2057
      %v2087 = vpack.c.bf16 %v2060, %v2059
      %v2088 = vpack.c.bf16 %v2062, %v2061
      %v2089 = vpack.c.bf16 %v2064, %v2063
      %v2090 = vpack.c.bf16 %v2066, %v2065
      %v2091 = vpack.c.bf16 %v2068, %v2067
      %v2092 = vpack.c.bf16 %v2070, %v2069
      %v2093 = vpack.c.bf16 %v2072, %v2071
      %v2094 = vpack.c.bf16 %v2074, %v2073
      %v2095 = vpack.c.bf16 %v2076, %v2075
      %v2096 = vpack.c.bf16 %v2078, %v2077
      %v2097 = vpack.c.bf16 %v2080, %v2079
      %v2098 = vpack.c.bf16 %v2082, %v2081
      %s2099 = scalar_lea.vmem %s3, 128
      %v2100 = vld [vmem:[%s2099] sm:$0xf]
      %v2101 = vld [vmem:[%s2099 + $0x4] sm:$0xf]
      %v2102 = vld [vmem:[%s2099 + $0x8] sm:$0xf]
      %v2103 = vld [vmem:[%s2099 + $0xc] sm:$0xf]
      %v2104 = vld [vmem:[%s2099 + $0x10] sm:$0xf]
      %v2105 = vld [vmem:[%s2099 + $0x14] sm:$0xf]
      %v2106 = vld [vmem:[%s2099 + $0x18] sm:$0xf]
      %v2107 = vld [vmem:[%s2099 + $0x1c] sm:$0xf]
      %v2116 = vunpack.c.l.b16 %v2100
      %v2117 = vunpack.c.l.b16 %v2101
      %v2118 = vunpack.c.l.b16 %v2102
      %v2119 = vunpack.c.l.b16 %v2103
      %v2120 = vunpack.c.l.b16 %v2104
      %v2121 = vunpack.c.l.b16 %v2105
      %v2122 = vunpack.c.l.b16 %v2106
      %v2123 = vunpack.c.l.b16 %v2107
      %v2124 = vpack.c.b16 %v2117, %v2116
      %v2125 = vpack.c.b16 %v2119, %v2118
      %v2126 = vpack.c.b16 %v2121, %v2120
      %v2127 = vpack.c.b16 %v2123, %v2122
      %v2133 = vsel %vm711, %v2083, 0
      %v2136 = vsel %vm711, %v2084, 0
      %v2139 = vsel %vm711, %v2085, 0
      %v2142 = vsel %vm711, %v2086, 0
      %v2145 = vsel %vm711, %v2087, 0
      %v2148 = vsel %vm711, %v2088, 0
      %v2151 = vsel %vm711, %v2089, 0
      %v2154 = vsel %vm711, %v2090, 0
      %v2157 = vsel %vm711, %v2091, 0
      %v2160 = vsel %vm711, %v2092, 0
      %v2163 = vsel %vm711, %v2093, 0
      %v2166 = vsel %vm711, %v2094, 0
      %v2169 = vsel %vm711, %v2095, 0
      %v2172 = vsel %vm711, %v2096, 0
      %v2175 = vsel %vm711, %v2097, 0
      %v2178 = vsel %vm711, %v2098, 0
      %2180 = vmatprep.subr.bf16.mxu0 0
      %2181 = vmatpush1.bf16.msra.mxu0 %v2124
      %2182 = vmatprep.subr.bf16.mxu0 0
      %2183 = vmatpush1.bf16.msra.mxu0 %v2125
      %2184 = vmatprep.subr.bf16.mxu0 0
      %2185 = vmatpush1.bf16.msra.mxu0 %v2126
      %2186 = vmatprep.subr.bf16.mxu0 0
      %2187 = vmatpush1.bf16.msra.mxu0 %v2127
      %2188 = vmatprep.subr.bf16.mxu0 0
      %2189 = vmatpush1.bf16.msra.mxu0 0
      %2190 = vmatprep.subr.bf16.mxu0 0
      %2191 = vmatpush1.bf16.msra.mxu0 0
      %2192 = vmatprep.subr.bf16.mxu0 0
      %2193 = vmatpush1.bf16.msra.mxu0 0
      %2194 = vmatprep.subr.bf16.mxu0 0
      %2195 = vmatpush1.bf16.msra.mxu0 0
      %2196 = vmatprep.subr.bf16.mxu0 0
      %2197 = vmatpush1.bf16.msra.mxu0 0
      %2198 = vmatprep.subr.bf16.mxu0 0
      %2199 = vmatpush1.bf16.msra.mxu0 0
      %2200 = vmatprep.subr.bf16.mxu0 0
      %2201 = vmatpush1.bf16.msra.mxu0 0
      %2202 = vmatprep.subr.bf16.mxu0 0
      %2203 = vmatpush1.bf16.msra.mxu0 0
      %2204 = vmatprep.subr.bf16.mxu0 0
      %2205 = vmatpush1.bf16.msra.mxu0 0
      %2206 = vmatprep.subr.bf16.mxu0 0
      %2207 = vmatpush1.bf16.msra.mxu0 0
      %2208 = vmatprep.subr.bf16.mxu0 0
      %2209 = vmatpush1.bf16.msra.mxu0 0
      %2210 = vmatprep.subr.bf16.mxu0 0
      %2211 = vmatpush1.bf16.msra.mxu0 0
      %2212 = vmatprep.mubr.bf16.mxu0 0
      %2213 = vmatmul.mubr.bf16.gmra.mrb[0].mxu0 %v2133
      %v2214 = vpop.f32.mrb[0].mxu0
      %v2215 = vadd.f32 0.0, %v2214
      %v2216 = vpop.f32.mrb[0].mxu0
      %v2217 = vpop.f32.mrb[0].mxu0
      %v2218 = vadd.f32 0.0, %v2217
      %v2219 = vpop.f32.mrb[0].mxu0
      %2220 = vmatprep.mubr.bf16.mxu0 0
      %2221 = vmatmul.mubr.bf16.gmra.mrb[0].mxu0 %v2136
      %v2222 = vpop.f32.mrb[0].mxu0
      %v2223 = vadd.f32 0.0, %v2222
      %v2224 = vpop.f32.mrb[0].mxu0
      %v2225 = vpop.f32.mrb[0].mxu0
      %v2226 = vadd.f32 0.0, %v2225
      %v2227 = vpop.f32.mrb[0].mxu0
      %2228 = vmatprep.mubr.bf16.mxu0 0
      %2229 = vmatmul.mubr.bf16.gmra.mrb[0].mxu0 %v2139
      %v2230 = vpop.f32.mrb[0].mxu0
      %v2231 = vadd.f32 0.0, %v2230
      %v2232 = vpop.f32.mrb[0].mxu0
      %v2233 = vpop.f32.mrb[0].mxu0
      %v2234 = vadd.f32 0.0, %v2233
      %v2235 = vpop.f32.mrb[0].mxu0
      %2236 = vmatprep.mubr.bf16.mxu0 0
      %2237 = vmatmul.mubr.bf16.gmra.mrb[0].mxu0 %v2142
      %v2238 = vpop.f32.mrb[0].mxu0
      %v2239 = vadd.f32 0.0, %v2238
      %v2240 = vpop.f32.mrb[0].mxu0
      %v2241 = vpop.f32.mrb[0].mxu0
      %v2242 = vadd.f32 0.0, %v2241
      %v2243 = vpop.f32.mrb[0].mxu0
      %2244 = vmatprep.mubr.bf16.mxu0 0
      %2245 = vmatmul.mubr.bf16.gmra.mrb[0].mxu0 %v2145
      %v2246 = vpop.f32.mrb[0].mxu0
      %v2247 = vadd.f32 0.0, %v2246
      %v2248 = vpop.f32.mrb[0].mxu0
      %v2249 = vpop.f32.mrb[0].mxu0
      %v2250 = vadd.f32 0.0, %v2249
      %v2251 = vpop.f32.mrb[0].mxu0
      %2252 = vmatprep.mubr.bf16.mxu0 0
      %2253 = vmatmul.mubr.bf16.gmra.mrb[0].mxu0 %v2148
      %v2254 = vpop.f32.mrb[0].mxu0
      %v2255 = vadd.f32 0.0, %v2254
      %v2256 = vpop.f32.mrb[0].mxu0
      %v2257 = vpop.f32.mrb[0].mxu0
      %v2258 = vadd.f32 0.0, %v2257
      %v2259 = vpop.f32.mrb[0].mxu0
      %2260 = vmatprep.mubr.bf16.mxu0 0
      %2261 = vmatmul.mubr.bf16.gmra.mrb[0].mxu0 %v2151
      %v2262 = vpop.f32.mrb[0].mxu0
      %v2263 = vadd.f32 0.0, %v2262
      %v2264 = vpop.f32.mrb[0].mxu0
      %v2265 = vpop.f32.mrb[0].mxu0
      %v2266 = vadd.f32 0.0, %v2265
      %v2267 = vpop.f32.mrb[0].mxu0
      %2268 = vmatprep.mubr.bf16.mxu0 0
      %2269 = vmatmul.mubr.bf16.gmra.mrb[0].mxu0 %v2154
      %v2270 = vpop.f32.mrb[0].mxu0
      %v2271 = vadd.f32 0.0, %v2270
      %v2272 = vpop.f32.mrb[0].mxu0
      %v2273 = vpop.f32.mrb[0].mxu0
      %v2274 = vadd.f32 0.0, %v2273
      %v2275 = vpop.f32.mrb[0].mxu0
      %2276 = vmatprep.mubr.bf16.mxu0 0
      %2277 = vmatmul.mubr.bf16.gmra.mrb[0].mxu0 %v2157
      %v2278 = vpop.f32.mrb[0].mxu0
      %v2279 = vadd.f32 0.0, %v2278
      %v2280 = vpop.f32.mrb[0].mxu0
      %v2281 = vpop.f32.mrb[0].mxu0
      %v2282 = vadd.f32 0.0, %v2281
      %v2283 = vpop.f32.mrb[0].mxu0
      %2284 = vmatprep.mubr.bf16.mxu0 0
      %2285 = vmatmul.mubr.bf16.gmra.mrb[0].mxu0 %v2160
      %v2286 = vpop.f32.mrb[0].mxu0
      %v2287 = vadd.f32 0.0, %v2286
      %v2288 = vpop.f32.mrb[0].mxu0
      %v2289 = vpop.f32.mrb[0].mxu0
      %v2290 = vadd.f32 0.0, %v2289
      %v2291 = vpop.f32.mrb[0].mxu0
      %2292 = vmatprep.mubr.bf16.mxu0 0
      %2293 = vmatmul.mubr.bf16.gmra.mrb[0].mxu0 %v2163
      %v2294 = vpop.f32.mrb[0].mxu0
      %v2295 = vadd.f32 0.0, %v2294
      %v2296 = vpop.f32.mrb[0].mxu0
      %v2297 = vpop.f32.mrb[0].mxu0
      %v2298 = vadd.f32 0.0, %v2297
      %v2299 = vpop.f32.mrb[0].mxu0
      %2300 = vmatprep.mubr.bf16.mxu0 0
      %2301 = vmatmul.mubr.bf16.gmra.mrb[0].mxu0 %v2166
      %v2302 = vpop.f32.mrb[0].mxu0
      %v2303 = vadd.f32 0.0, %v2302
      %v2304 = vpop.f32.mrb[0].mxu0
      %v2305 = vpop.f32.mrb[0].mxu0
      %v2306 = vadd.f32 0.0, %v2305
      %v2307 = vpop.f32.mrb[0].mxu0
      %2308 = vmatprep.mubr.bf16.mxu0 0
      %2309 = vmatmul.mubr.bf16.gmra.mrb[0].mxu0 %v2169
      %v2310 = vpop.f32.mrb[0].mxu0
      %v2311 = vadd.f32 0.0, %v2310
      %v2312 = vpop.f32.mrb[0].mxu0
      %v2313 = vpop.f32.mrb[0].mxu0
      %v2314 = vadd.f32 0.0, %v2313
      %v2315 = vpop.f32.mrb[0].mxu0
      %2316 = vmatprep.mubr.bf16.mxu0 0
      %2317 = vmatmul.mubr.bf16.gmra.mrb[0].mxu0 %v2172
      %v2318 = vpop.f32.mrb[0].mxu0
      %v2319 = vadd.f32 0.0, %v2318
      %v2320 = vpop.f32.mrb[0].mxu0
      %v2321 = vpop.f32.mrb[0].mxu0
      %v2322 = vadd.f32 0.0, %v2321
      %v2323 = vpop.f32.mrb[0].mxu0
      %2324 = vmatprep.mubr.bf16.mxu0 0
      %2325 = vmatmul.mubr.bf16.gmra.mrb[0].mxu0 %v2175
      %v2326 = vpop.f32.mrb[0].mxu0
      %v2327 = vadd.f32 0.0, %v2326
      %v2328 = vpop.f32.mrb[0].mxu0
      %v2329 = vpop.f32.mrb[0].mxu0
      %v2330 = vadd.f32 0.0, %v2329
      %v2331 = vpop.f32.mrb[0].mxu0
      %2332 = vmatprep.mubr.bf16.mxu0 0
      %2333 = vmatmul.mubr.bf16.gmra.mrb[0].mxu0 %v2178
      %v2334 = vpop.f32.mrb[0].mxu0
      %v2335 = vadd.f32 0.0, %v2334
      %v2336 = vpop.f32.mrb[0].mxu0
      %v2337 = vpop.f32.mrb[0].mxu0
      %v2338 = vadd.f32 0.0, %v2337
      %v2339 = vpop.f32.mrb[0].mxu0
      %2340 = vdwg.mxu0
      %v2341 = vadd.f32 %v2019, %v2215
      %v2342 = vadd.f32 %v2020, %v2218
      %v2343 = vadd.f32 %v2021, %v2223
      %v2344 = vadd.f32 %v2022, %v2226
      %v2345 = vadd.f32 %v2023, %v2231
      %v2346 = vadd.f32 %v2024, %v2234
      %v2347 = vadd.f32 %v2025, %v2239
      %v2348 = vadd.f32 %v2026, %v2242
      %v2349 = vadd.f32 %v2027, %v2247
      %v2350 = vadd.f32 %v2028, %v2250
      %v2351 = vadd.f32 %v2029, %v2255
      %v2352 = vadd.f32 %v2030, %v2258
      %v2353 = vadd.f32 %v2031, %v2263
      %v2354 = vadd.f32 %v2032, %v2266
      %v2355 = vadd.f32 %v2033, %v2271
      %v2356 = vadd.f32 %v2034, %v2274
      %v2357 = vadd.f32 %v2035, %v2279
      %v2358 = vadd.f32 %v2036, %v2282
      %v2359 = vadd.f32 %v2037, %v2287
      %v2360 = vadd.f32 %v2038, %v2290
      %v2361 = vadd.f32 %v2039, %v2295
      %v2362 = vadd.f32 %v2040, %v2298
      %v2363 = vadd.f32 %v2041, %v2303
      %v2364 = vadd.f32 %v2042, %v2306
      %v2365 = vadd.f32 %v2043, %v2311
      %v2366 = vadd.f32 %v2044, %v2314
      %v2367 = vadd.f32 %v2045, %v2319
      %v2368 = vadd.f32 %v2046, %v2322
      %v2369 = vadd.f32 %v2047, %v2327
      %v2370 = vadd.f32 %v2048, %v2330
      %v2371 = vadd.f32 %v2049, %v2335
      %v2372 = vadd.f32 %v2050, %v2338
      %v2373 = vld [vmem:[%s720 + $0x2] sm:$0xff]
      %v2374 = vld [vmem:[%s720 + $0xa] sm:$0xff]
      %v2375 = vld [vmem:[%s720 + $0x1a] sm:$0xff]
      %v2376 = vld [vmem:[%s720 + $0x22] sm:$0xff]
      %v2377 = vld [vmem:[%s720 + $0x32] sm:$0xff]
      %v2378 = vld [vmem:[%s720 + $0x3a] sm:$0xff]
      %v2379 = vld [vmem:[%s720 + $0x4a] sm:$0xff]
      %v2380 = vld [vmem:[%s720 + $0x52] sm:$0xff]
      %v2381 = vld [vmem:[%s720 + $0x62] sm:$0xff]
      %v2382 = vld [vmem:[%s720 + $0x6a] sm:$0xff]
      %v2383 = vld [vmem:[%s720 + $0x7a] sm:$0xff]
      %v2384 = vld [vmem:[%s720 + $0x82] sm:$0xff]
      %v2385 = vld [vmem:[%s720 + $0x92] sm:$0xff]
      %v2386 = vld [vmem:[%s720 + $0x9a] sm:$0xff]
      %v2387 = vld [vmem:[%s720 + $0xaa] sm:$0xff]
      %v2388 = vld [vmem:[%s720 + $0xb2] sm:$0xff]
      %v2389 = vld [vmem:[%s720 + $0xc2] sm:$0xff]
      %v2390 = vld [vmem:[%s720 + $0xca] sm:$0xff]
      %v2391 = vld [vmem:[%s720 + $0xda] sm:$0xff]
      %v2392 = vld [vmem:[%s720 + $0xe2] sm:$0xff]
      %v2393 = vld [vmem:[%s720 + $0xf2] sm:$0xff]
      %v2394 = vld [vmem:[%s720 + $0xfa] sm:$0xff]
      %v2395 = vld [vmem:[%s720 + $0x10a] sm:$0xff]
      %v2396 = vld [vmem:[%s720 + $0x112] sm:$0xff]
      %v2397 = vld [vmem:[%s720 + $0x122] sm:$0xff]
      %v2398 = vld [vmem:[%s720 + $0x12a] sm:$0xff]
      %v2399 = vld [vmem:[%s720 + $0x13a] sm:$0xff]
      %v2400 = vld [vmem:[%s720 + $0x142] sm:$0xff]
      %v2401 = vld [vmem:[%s720 + $0x152] sm:$0xff]
      %v2402 = vld [vmem:[%s720 + $0x15a] sm:$0xff]
      %v2403 = vld [vmem:[%s720 + $0x16a] sm:$0xff]
      %v2404 = vld [vmem:[%s720 + $0x172] sm:$0xff]
      %v2405 = vpack.c.bf16 %v2374, %v2373
      %v2406 = vpack.c.bf16 %v2376, %v2375
      %v2407 = vpack.c.bf16 %v2378, %v2377
      %v2408 = vpack.c.bf16 %v2380, %v2379
      %v2409 = vpack.c.bf16 %v2382, %v2381
      %v2410 = vpack.c.bf16 %v2384, %v2383
      %v2411 = vpack.c.bf16 %v2386, %v2385
      %v2412 = vpack.c.bf16 %v2388, %v2387
      %v2413 = vpack.c.bf16 %v2390, %v2389
      %v2414 = vpack.c.bf16 %v2392, %v2391
      %v2415 = vpack.c.bf16 %v2394, %v2393
      %v2416 = vpack.c.bf16 %v2396, %v2395
      %v2417 = vpack.c.bf16 %v2398, %v2397
      %v2418 = vpack.c.bf16 %v2400, %v2399
      %v2419 = vpack.c.bf16 %v2402, %v2401
      %v2420 = vpack.c.bf16 %v2404, %v2403
      %s2421 = scalar_lea.vmem %s3, 160
      %v2422 = vld [vmem:[%s2421] sm:$0xf]
      %v2423 = vld [vmem:[%s2421 + $0x4] sm:$0xf]
      %v2424 = vld [vmem:[%s2421 + $0x8] sm:$0xf]
      %v2425 = vld [vmem:[%s2421 + $0xc] sm:$0xf]
      %v2426 = vld [vmem:[%s2421 + $0x10] sm:$0xf]
      %v2427 = vld [vmem:[%s2421 + $0x14] sm:$0xf]
      %v2428 = vld [vmem:[%s2421 + $0x18] sm:$0xf]
      %v2429 = vld [vmem:[%s2421 + $0x1c] sm:$0xf]
      %v2438 = vunpack.c.l.b16 %v2422
      %v2439 = vunpack.c.l.b16 %v2423
      %v2440 = vunpack.c.l.b16 %v2424
      %v2441 = vunpack.c.l.b16 %v2425
      %v2442 = vunpack.c.l.b16 %v2426
      %v2443 = vunpack.c.l.b16 %v2427
      %v2444 = vunpack.c.l.b16 %v2428
      %v2445 = vunpack.c.l.b16 %v2429
      %v2446 = vpack.c.b16 %v2439, %v2438
      %v2447 = vpack.c.b16 %v2441, %v2440
      %v2448 = vpack.c.b16 %v2443, %v2442
      %v2449 = vpack.c.b16 %v2445, %v2444
      %v2455 = vsel %vm711, %v2405, 0
      %v2458 = vsel %vm711, %v2406, 0
      %v2461 = vsel %vm711, %v2407, 0
      %v2464 = vsel %vm711, %v2408, 0
      %v2467 = vsel %vm711, %v2409, 0
      %v2470 = vsel %vm711, %v2410, 0
      %v2473 = vsel %vm711, %v2411, 0
      %v2476 = vsel %vm711, %v2412, 0
      %v2479 = vsel %vm711, %v2413, 0
      %v2482 = vsel %vm711, %v2414, 0
      %v2485 = vsel %vm711, %v2415, 0
      %v2488 = vsel %vm711, %v2416, 0
      %v2491 = vsel %vm711, %v2417, 0
      %v2494 = vsel %vm711, %v2418, 0
      %v2497 = vsel %vm711, %v2419, 0
      %v2500 = vsel %vm711, %v2420, 0
      %2502 = vmatprep.subr.bf16.mxu0 0
      %2503 = vmatpush1.bf16.msra.mxu0 %v2446
      %2504 = vmatprep.subr.bf16.mxu0 0
      %2505 = vmatpush1.bf16.msra.mxu0 %v2447
      %2506 = vmatprep.subr.bf16.mxu0 0
      %2507 = vmatpush1.bf16.msra.mxu0 %v2448
      %2508 = vmatprep.subr.bf16.mxu0 0
      %2509 = vmatpush1.bf16.msra.mxu0 %v2449
      %2510 = vmatprep.subr.bf16.mxu0 0
      %2511 = vmatpush1.bf16.msra.mxu0 0
      %2512 = vmatprep.subr.bf16.mxu0 0
      %2513 = vmatpush1.bf16.msra.mxu0 0
      %2514 = vmatprep.subr.bf16.mxu0 0
      %2515 = vmatpush1.bf16.msra.mxu0 0
      %2516 = vmatprep.subr.bf16.mxu0 0
      %2517 = vmatpush1.bf16.msra.mxu0 0
      %2518 = vmatprep.subr.bf16.mxu0 0
      %2519 = vmatpush1.bf16.msra.mxu0 0
      %2520 = vmatprep.subr.bf16.mxu0 0
      %2521 = vmatpush1.bf16.msra.mxu0 0
      %2522 = vmatprep.subr.bf16.mxu0 0
      %2523 = vmatpush1.bf16.msra.mxu0 0
      %2524 = vmatprep.subr.bf16.mxu0 0
      %2525 = vmatpush1.bf16.msra.mxu0 0
      %2526 = vmatprep.subr.bf16.mxu0 0
      %2527 = vmatpush1.bf16.msra.mxu0 0
      %2528 = vmatprep.subr.bf16.mxu0 0
      %2529 = vmatpush1.bf16.msra.mxu0 0
      %2530 = vmatprep.subr.bf16.mxu0 0
      %2531 = vmatpush1.bf16.msra.mxu0 0
      %2532 = vmatprep.subr.bf16.mxu0 0
      %2533 = vmatpush1.bf16.msra.mxu0 0
      %2534 = vmatprep.mubr.bf16.mxu0 0
      %2535 = vmatmul.mubr.bf16.gmra.mrb[0].mxu0 %v2455
      %v2536 = vpop.f32.mrb[0].mxu0
      %v2537 = vadd.f32 0.0, %v2536
      %v2538 = vpop.f32.mrb[0].mxu0
      %v2539 = vpop.f32.mrb[0].mxu0
      %v2540 = vadd.f32 0.0, %v2539
      %v2541 = vpop.f32.mrb[0].mxu0
      %2542 = vmatprep.mubr.bf16.mxu0 0
      %2543 = vmatmul.mubr.bf16.gmra.mrb[0].mxu0 %v2458
      %v2544 = vpop.f32.mrb[0].mxu0
      %v2545 = vadd.f32 0.0, %v2544
      %v2546 = vpop.f32.mrb[0].mxu0
      %v2547 = vpop.f32.mrb[0].mxu0
      %v2548 = vadd.f32 0.0, %v2547
      %v2549 = vpop.f32.mrb[0].mxu0
      %2550 = vmatprep.mubr.bf16.mxu0 0
      %2551 = vmatmul.mubr.bf16.gmra.mrb[0].mxu0 %v2461
      %v2552 = vpop.f32.mrb[0].mxu0
      %v2553 = vadd.f32 0.0, %v2552
      %v2554 = vpop.f32.mrb[0].mxu0
      %v2555 = vpop.f32.mrb[0].mxu0
      %v2556 = vadd.f32 0.0, %v2555
      %v2557 = vpop.f32.mrb[0].mxu0
      %2558 = vmatprep.mubr.bf16.mxu0 0
      %2559 = vmatmul.mubr.bf16.gmra.mrb[0].mxu0 %v2464
      %v2560 = vpop.f32.mrb[0].mxu0
      %v2561 = vadd.f32 0.0, %v2560
      %v2562 = vpop.f32.mrb[0].mxu0
      %v2563 = vpop.f32.mrb[0].mxu0
      %v2564 = vadd.f32 0.0, %v2563
      %v2565 = vpop.f32.mrb[0].mxu0
      %2566 = vmatprep.mubr.bf16.mxu0 0
      %2567 = vmatmul.mubr.bf16.gmra.mrb[0].mxu0 %v2467
      %v2568 = vpop.f32.mrb[0].mxu0
      %v2569 = vadd.f32 0.0, %v2568
      %v2570 = vpop.f32.mrb[0].mxu0
      %v2571 = vpop.f32.mrb[0].mxu0
      %v2572 = vadd.f32 0.0, %v2571
      %v2573 = vpop.f32.mrb[0].mxu0
      %2574 = vmatprep.mubr.bf16.mxu0 0
      %2575 = vmatmul.mubr.bf16.gmra.mrb[0].mxu0 %v2470
      %v2576 = vpop.f32.mrb[0].mxu0
      %v2577 = vadd.f32 0.0, %v2576
      %v2578 = vpop.f32.mrb[0].mxu0
      %v2579 = vpop.f32.mrb[0].mxu0
      %v2580 = vadd.f32 0.0, %v2579
      %v2581 = vpop.f32.mrb[0].mxu0
      %2582 = vmatprep.mubr.bf16.mxu0 0
      %2583 = vmatmul.mubr.bf16.gmra.mrb[0].mxu0 %v2473
      %v2584 = vpop.f32.mrb[0].mxu0
      %v2585 = vadd.f32 0.0, %v2584
      %v2586 = vpop.f32.mrb[0].mxu0
      %v2587 = vpop.f32.mrb[0].mxu0
      %v2588 = vadd.f32 0.0, %v2587
      %v2589 = vpop.f32.mrb[0].mxu0
      %2590 = vmatprep.mubr.bf16.mxu0 0
      %2591 = vmatmul.mubr.bf16.gmra.mrb[0].mxu0 %v2476
      %v2592 = vpop.f32.mrb[0].mxu0
      %v2593 = vadd.f32 0.0, %v2592
      %v2594 = vpop.f32.mrb[0].mxu0
      %v2595 = vpop.f32.mrb[0].mxu0
      %v2596 = vadd.f32 0.0, %v2595
      %v2597 = vpop.f32.mrb[0].mxu0
      %2598 = vmatprep.mubr.bf16.mxu0 0
      %2599 = vmatmul.mubr.bf16.gmra.mrb[0].mxu0 %v2479
      %v2600 = vpop.f32.mrb[0].mxu0
      %v2601 = vadd.f32 0.0, %v2600
      %v2602 = vpop.f32.mrb[0].mxu0
      %v2603 = vpop.f32.mrb[0].mxu0
      %v2604 = vadd.f32 0.0, %v2603
      %v2605 = vpop.f32.mrb[0].mxu0
      %2606 = vmatprep.mubr.bf16.mxu0 0
      %2607 = vmatmul.mubr.bf16.gmra.mrb[0].mxu0 %v2482
      %v2608 = vpop.f32.mrb[0].mxu0
      %v2609 = vadd.f32 0.0, %v2608
      %v2610 = vpop.f32.mrb[0].mxu0
      %v2611 = vpop.f32.mrb[0].mxu0
      %v2612 = vadd.f32 0.0, %v2611
      %v2613 = vpop.f32.mrb[0].mxu0
      %2614 = vmatprep.mubr.bf16.mxu0 0
      %2615 = vmatmul.mubr.bf16.gmra.mrb[0].mxu0 %v2485
      %v2616 = vpop.f32.mrb[0].mxu0
      %v2617 = vadd.f32 0.0, %v2616
      %v2618 = vpop.f32.mrb[0].mxu0
      %v2619 = vpop.f32.mrb[0].mxu0
      %v2620 = vadd.f32 0.0, %v2619
      %v2621 = vpop.f32.mrb[0].mxu0
      %2622 = vmatprep.mubr.bf16.mxu0 0
      %2623 = vmatmul.mubr.bf16.gmra.mrb[0].mxu0 %v2488
      %v2624 = vpop.f32.mrb[0].mxu0
      %v2625 = vadd.f32 0.0, %v2624
      %v2626 = vpop.f32.mrb[0].mxu0
      %v2627 = vpop.f32.mrb[0].mxu0
      %v2628 = vadd.f32 0.0, %v2627
      %v2629 = vpop.f32.mrb[0].mxu0
      %2630 = vmatprep.mubr.bf16.mxu0 0
      %2631 = vmatmul.mubr.bf16.gmra.mrb[0].mxu0 %v2491
      %v2632 = vpop.f32.mrb[0].mxu0
      %v2633 = vadd.f32 0.0, %v2632
      %v2634 = vpop.f32.mrb[0].mxu0
      %v2635 = vpop.f32.mrb[0].mxu0
      %v2636 = vadd.f32 0.0, %v2635
      %v2637 = vpop.f32.mrb[0].mxu0
      %2638 = vmatprep.mubr.bf16.mxu0 0
      %2639 = vmatmul.mubr.bf16.gmra.mrb[0].mxu0 %v2494
      %v2640 = vpop.f32.mrb[0].mxu0
      %v2641 = vadd.f32 0.0, %v2640
      %v2642 = vpop.f32.mrb[0].mxu0
      %v2643 = vpop.f32.mrb[0].mxu0
      %v2644 = vadd.f32 0.0, %v2643
      %v2645 = vpop.f32.mrb[0].mxu0
      %2646 = vmatprep.mubr.bf16.mxu0 0
      %2647 = vmatmul.mubr.bf16.gmra.mrb[0].mxu0 %v2497
      %v2648 = vpop.f32.mrb[0].mxu0
      %v2649 = vadd.f32 0.0, %v2648
      %v2650 = vpop.f32.mrb[0].mxu0
      %v2651 = vpop.f32.mrb[0].mxu0
      %v2652 = vadd.f32 0.0, %v2651
      %v2653 = vpop.f32.mrb[0].mxu0
      %2654 = vmatprep.mubr.bf16.mxu0 0
      %2655 = vmatmul.mubr.bf16.gmra.mrb[0].mxu0 %v2500
      %v2656 = vpop.f32.mrb[0].mxu0
      %v2657 = vadd.f32 0.0, %v2656
      %v2658 = vpop.f32.mrb[0].mxu0
      %v2659 = vpop.f32.mrb[0].mxu0
      %v2660 = vadd.f32 0.0, %v2659
      %v2661 = vpop.f32.mrb[0].mxu0
      %2662 = vdwg.mxu0
      %v2663 = vadd.f32 %v2341, %v2537
      %v2664 = vadd.f32 %v2342, %v2540
      %v2665 = vadd.f32 %v2343, %v2545
      %v2666 = vadd.f32 %v2344, %v2548
      %v2667 = vadd.f32 %v2345, %v2553
      %v2668 = vadd.f32 %v2346, %v2556
      %v2669 = vadd.f32 %v2347, %v2561
      %v2670 = vadd.f32 %v2348, %v2564
      %v2671 = vadd.f32 %v2349, %v2569
      %v2672 = vadd.f32 %v2350, %v2572
      %v2673 = vadd.f32 %v2351, %v2577
      %v2674 = vadd.f32 %v2352, %v2580
      %v2675 = vadd.f32 %v2353, %v2585
      %v2676 = vadd.f32 %v2354, %v2588
      %v2677 = vadd.f32 %v2355, %v2593
      %v2678 = vadd.f32 %v2356, %v2596
      %v2679 = vadd.f32 %v2357, %v2601
      %v2680 = vadd.f32 %v2358, %v2604
      %v2681 = vadd.f32 %v2359, %v2609
      %v2682 = vadd.f32 %v2360, %v2612
      %v2683 = vadd.f32 %v2361, %v2617
      %v2684 = vadd.f32 %v2362, %v2620
      %v2685 = vadd.f32 %v2363, %v2625
      %v2686 = vadd.f32 %v2364, %v2628
      %v2687 = vadd.f32 %v2365, %v2633
      %v2688 = vadd.f32 %v2366, %v2636
      %v2689 = vadd.f32 %v2367, %v2641
      %v2690 = vadd.f32 %v2368, %v2644
      %v2691 = vadd.f32 %v2369, %v2649
      %v2692 = vadd.f32 %v2370, %v2652
      %v2693 = vadd.f32 %v2371, %v2657
      %v2694 = vadd.f32 %v2372, %v2660
      %s2695 = scalar_lea.vmem [#allocation2], 48
      %v2696 = vld [vmem:[%s2695] sm:$0xff]
      %v2697 = vld [vmem:[%s2695 + $0x8] sm:$0xff]
      %v2698 = vld [vmem:[%s2695 + $0x18] sm:$0xff]
      %v2699 = vld [vmem:[%s2695 + $0x20] sm:$0xff]
      %v2700 = vld [vmem:[%s2695 + $0x30] sm:$0xff]
      %v2701 = vld [vmem:[%s2695 + $0x38] sm:$0xff]
      %v2702 = vld [vmem:[%s2695 + $0x48] sm:$0xff]
      %v2703 = vld [vmem:[%s2695 + $0x50] sm:$0xff]
      %v2704 = vld [vmem:[%s2695 + $0x60] sm:$0xff]
      %v2705 = vld [vmem:[%s2695 + $0x68] sm:$0xff]
      %v2706 = vld [vmem:[%s2695 + $0x78] sm:$0xff]
      %v2707 = vld [vmem:[%s2695 + $0x80] sm:$0xff]
      %v2708 = vld [vmem:[%s2695 + $0x90] sm:$0xff]
      %v2709 = vld [vmem:[%s2695 + $0x98] sm:$0xff]
      %v2710 = vld [vmem:[%s2695 + $0xa8] sm:$0xff]
      %v2711 = vld [vmem:[%s2695 + $0xb0] sm:$0xff]
      %v2712 = vld [vmem:[%s2695 + $0xc0] sm:$0xff]
      %v2713 = vld [vmem:[%s2695 + $0xc8] sm:$0xff]
      %v2714 = vld [vmem:[%s2695 + $0xd8] sm:$0xff]
      %v2715 = vld [vmem:[%s2695 + $0xe0] sm:$0xff]
      %v2716 = vld [vmem:[%s2695 + $0xf0] sm:$0xff]
      %v2717 = vld [vmem:[%s2695 + $0xf8] sm:$0xff]
      %v2718 = vld [vmem:[%s2695 + $0x108] sm:$0xff]
      %v2719 = vld [vmem:[%s2695 + $0x110] sm:$0xff]
      %v2720 = vld [vmem:[%s2695 + $0x120] sm:$0xff]
      %v2721 = vld [vmem:[%s2695 + $0x128] sm:$0xff]
      %v2722 = vld [vmem:[%s2695 + $0x138] sm:$0xff]
      %v2723 = vld [vmem:[%s2695 + $0x140] sm:$0xff]
      %v2724 = vld [vmem:[%s2695 + $0x150] sm:$0xff]
      %v2725 = vld [vmem:[%s2695 + $0x158] sm:$0xff]
      %v2726 = vld [vmem:[%s2695 + $0x168] sm:$0xff]
      %v2727 = vld [vmem:[%s2695 + $0x170] sm:$0xff]
      %v2728 = vpack.c.bf16 %v2697, %v2696
      %v2729 = vpack.c.bf16 %v2699, %v2698
      %v2730 = vpack.c.bf16 %v2701, %v2700
      %v2731 = vpack.c.bf16 %v2703, %v2702
      %v2732 = vpack.c.bf16 %v2705, %v2704
      %v2733 = vpack.c.bf16 %v2707, %v2706
      %v2734 = vpack.c.bf16 %v2709, %v2708
      %v2735 = vpack.c.bf16 %v2711, %v2710
      %v2736 = vpack.c.bf16 %v2713, %v2712
      %v2737 = vpack.c.bf16 %v2715, %v2714
      %v2738 = vpack.c.bf16 %v2717, %v2716
      %v2739 = vpack.c.bf16 %v2719, %v2718
      %v2740 = vpack.c.bf16 %v2721, %v2720
      %v2741 = vpack.c.bf16 %v2723, %v2722
      %v2742 = vpack.c.bf16 %v2725, %v2724
      %v2743 = vpack.c.bf16 %v2727, %v2726
      %s2744 = scalar_lea.vmem %s3, 192
      %v2745 = vld [vmem:[%s2744] sm:$0xf]
      %v2746 = vld [vmem:[%s2744 + $0x4] sm:$0xf]
      %v2747 = vld [vmem:[%s2744 + $0x8] sm:$0xf]
      %v2748 = vld [vmem:[%s2744 + $0xc] sm:$0xf]
      %v2749 = vld [vmem:[%s2744 + $0x10] sm:$0xf]
      %v2750 = vld [vmem:[%s2744 + $0x14] sm:$0xf]
      %v2751 = vld [vmem:[%s2744 + $0x18] sm:$0xf]
      %v2752 = vld [vmem:[%s2744 + $0x1c] sm:$0xf]
      %v2761 = vunpack.c.l.b16 %v2745
      %v2762 = vunpack.c.l.b16 %v2746
      %v2763 = vunpack.c.l.b16 %v2747
      %v2764 = vunpack.c.l.b16 %v2748
      %v2765 = vunpack.c.l.b16 %v2749
      %v2766 = vunpack.c.l.b16 %v2750
      %v2767 = vunpack.c.l.b16 %v2751
      %v2768 = vunpack.c.l.b16 %v2752
      %v2769 = vpack.c.b16 %v2762, %v2761
      %v2770 = vpack.c.b16 %v2764, %v2763
      %v2771 = vpack.c.b16 %v2766, %v2765
      %v2772 = vpack.c.b16 %v2768, %v2767
      %v2778 = vsel %vm711, %v2728, 0
      %v2781 = vsel %vm711, %v2729, 0
      %v2784 = vsel %vm711, %v2730, 0
      %v2787 = vsel %vm711, %v2731, 0
      %v2790 = vsel %vm711, %v2732, 0
      %v2793 = vsel %vm711, %v2733, 0
      %v2796 = vsel %vm711, %v2734, 0
      %v2799 = vsel %vm711, %v2735, 0
      %v2802 = vsel %vm711, %v2736, 0
      %v2805 = vsel %vm711, %v2737, 0
      %v2808 = vsel %vm711, %v2738, 0
      %v2811 = vsel %vm711, %v2739, 0
      %v2814 = vsel %vm711, %v2740, 0
      %v2817 = vsel %vm711, %v2741, 0
      %v2820 = vsel %vm711, %v2742, 0
      %v2823 = vsel %vm711, %v2743, 0
      %2825 = vmatprep.subr.bf16.mxu0 0
      %2826 = vmatpush1.bf16.msra.mxu0 %v2769
      %2827 = vmatprep.subr.bf16.mxu0 0
      %2828 = vmatpush1.bf16.msra.mxu0 %v2770
      %2829 = vmatprep.subr.bf16.mxu0 0
      %2830 = vmatpush1.bf16.msra.mxu0 %v2771
      %2831 = vmatprep.subr.bf16.mxu0 0
      %2832 = vmatpush1.bf16.msra.mxu0 %v2772
      %2833 = vmatprep.subr.bf16.mxu0 0
      %2834 = vmatpush1.bf16.msra.mxu0 0
      %2835 = vmatprep.subr.bf16.mxu0 0
      %2836 = vmatpush1.bf16.msra.mxu0 0
      %2837 = vmatprep.subr.bf16.mxu0 0
      %2838 = vmatpush1.bf16.msra.mxu0 0
      %2839 = vmatprep.subr.bf16.mxu0 0
      %2840 = vmatpush1.bf16.msra.mxu0 0
      %2841 = vmatprep.subr.bf16.mxu0 0
      %2842 = vmatpush1.bf16.msra.mxu0 0
      %2843 = vmatprep.subr.bf16.mxu0 0
      %2844 = vmatpush1.bf16.msra.mxu0 0
      %2845 = vmatprep.subr.bf16.mxu0 0
      %2846 = vmatpush1.bf16.msra.mxu0 0
      %2847 = vmatprep.subr.bf16.mxu0 0
      %2848 = vmatpush1.bf16.msra.mxu0 0
      %2849 = vmatprep.subr.bf16.mxu0 0
      %2850 = vmatpush1.bf16.msra.mxu0 0
      %2851 = vmatprep.subr.bf16.mxu0 0
      %2852 = vmatpush1.bf16.msra.mxu0 0
      %2853 = vmatprep.subr.bf16.mxu0 0
      %2854 = vmatpush1.bf16.msra.mxu0 0
      %2855 = vmatprep.subr.bf16.mxu0 0
      %2856 = vmatpush1.bf16.msra.mxu0 0
      %2857 = vmatprep.mubr.bf16.mxu0 0
      %2858 = vmatmul.mubr.bf16.gmra.mrb[0].mxu0 %v2778
      %v2859 = vpop.f32.mrb[0].mxu0
      %v2860 = vadd.f32 0.0, %v2859
      %v2861 = vpop.f32.mrb[0].mxu0
      %v2862 = vpop.f32.mrb[0].mxu0
      %v2863 = vadd.f32 0.0, %v2862
      %v2864 = vpop.f32.mrb[0].mxu0
      %2865 = vmatprep.mubr.bf16.mxu0 0
      %2866 = vmatmul.mubr.bf16.gmra.mrb[0].mxu0 %v2781
      %v2867 = vpop.f32.mrb[0].mxu0
      %v2868 = vadd.f32 0.0, %v2867
      %v2869 = vpop.f32.mrb[0].mxu0
      %v2870 = vpop.f32.mrb[0].mxu0
      %v2871 = vadd.f32 0.0, %v2870
      %v2872 = vpop.f32.mrb[0].mxu0
      %2873 = vmatprep.mubr.bf16.mxu0 0
      %2874 = vmatmul.mubr.bf16.gmra.mrb[0].mxu0 %v2784
      %v2875 = vpop.f32.mrb[0].mxu0
      %v2876 = vadd.f32 0.0, %v2875
      %v2877 = vpop.f32.mrb[0].mxu0
      %v2878 = vpop.f32.mrb[0].mxu0
      %v2879 = vadd.f32 0.0, %v2878
      %v2880 = vpop.f32.mrb[0].mxu0
      %2881 = vmatprep.mubr.bf16.mxu0 0
      %2882 = vmatmul.mubr.bf16.gmra.mrb[0].mxu0 %v2787
      %v2883 = vpop.f32.mrb[0].mxu0
      %v2884 = vadd.f32 0.0, %v2883
      %v2885 = vpop.f32.mrb[0].mxu0
      %v2886 = vpop.f32.mrb[0].mxu0
      %v2887 = vadd.f32 0.0, %v2886
      %v2888 = vpop.f32.mrb[0].mxu0
      %2889 = vmatprep.mubr.bf16.mxu0 0
      %2890 = vmatmul.mubr.bf16.gmra.mrb[0].mxu0 %v2790
      %v2891 = vpop.f32.mrb[0].mxu0
      %v2892 = vadd.f32 0.0, %v2891
      %v2893 = vpop.f32.mrb[0].mxu0
      %v2894 = vpop.f32.mrb[0].mxu0
      %v2895 = vadd.f32 0.0, %v2894
      %v2896 = vpop.f32.mrb[0].mxu0
      %2897 = vmatprep.mubr.bf16.mxu0 0
      %2898 = vmatmul.mubr.bf16.gmra.mrb[0].mxu0 %v2793
      %v2899 = vpop.f32.mrb[0].mxu0
      %v2900 = vadd.f32 0.0, %v2899
      %v2901 = vpop.f32.mrb[0].mxu0
      %v2902 = vpop.f32.mrb[0].mxu0
      %v2903 = vadd.f32 0.0, %v2902
      %v2904 = vpop.f32.mrb[0].mxu0
      %2905 = vmatprep.mubr.bf16.mxu0 0
      %2906 = vmatmul.mubr.bf16.gmra.mrb[0].mxu0 %v2796
      %v2907 = vpop.f32.mrb[0].mxu0
      %v2908 = vadd.f32 0.0, %v2907
      %v2909 = vpop.f32.mrb[0].mxu0
      %v2910 = vpop.f32.mrb[0].mxu0
      %v2911 = vadd.f32 0.0, %v2910
      %v2912 = vpop.f32.mrb[0].mxu0
      %2913 = vmatprep.mubr.bf16.mxu0 0
      %2914 = vmatmul.mubr.bf16.gmra.mrb[0].mxu0 %v2799
      %v2915 = vpop.f32.mrb[0].mxu0
      %v2916 = vadd.f32 0.0, %v2915
      %v2917 = vpop.f32.mrb[0].mxu0
      %v2918 = vpop.f32.mrb[0].mxu0
      %v2919 = vadd.f32 0.0, %v2918
      %v2920 = vpop.f32.mrb[0].mxu0
      %2921 = vmatprep.mubr.bf16.mxu0 0
      %2922 = vmatmul.mubr.bf16.gmra.mrb[0].mxu0 %v2802
      %v2923 = vpop.f32.mrb[0].mxu0
      %v2924 = vadd.f32 0.0, %v2923
      %v2925 = vpop.f32.mrb[0].mxu0
      %v2926 = vpop.f32.mrb[0].mxu0
      %v2927 = vadd.f32 0.0, %v2926
      %v2928 = vpop.f32.mrb[0].mxu0
      %2929 = vmatprep.mubr.bf16.mxu0 0
      %2930 = vmatmul.mubr.bf16.gmra.mrb[0].mxu0 %v2805
      %v2931 = vpop.f32.mrb[0].mxu0
      %v2932 = vadd.f32 0.0, %v2931
      %v2933 = vpop.f32.mrb[0].mxu0
      %v2934 = vpop.f32.mrb[0].mxu0
      %v2935 = vadd.f32 0.0, %v2934
      %v2936 = vpop.f32.mrb[0].mxu0
      %2937 = vmatprep.mubr.bf16.mxu0 0
      %2938 = vmatmul.mubr.bf16.gmra.mrb[0].mxu0 %v2808
      %v2939 = vpop.f32.mrb[0].mxu0
      %v2940 = vadd.f32 0.0, %v2939
      %v2941 = vpop.f32.mrb[0].mxu0
      %v2942 = vpop.f32.mrb[0].mxu0
      %v2943 = vadd.f32 0.0, %v2942
      %v2944 = vpop.f32.mrb[0].mxu0
      %2945 = vmatprep.mubr.bf16.mxu0 0
      %2946 = vmatmul.mubr.bf16.gmra.mrb[0].mxu0 %v2811
      %v2947 = vpop.f32.mrb[0].mxu0
      %v2948 = vadd.f32 0.0, %v2947
      %v2949 = vpop.f32.mrb[0].mxu0
      %v2950 = vpop.f32.mrb[0].mxu0
      %v2951 = vadd.f32 0.0, %v2950
      %v2952 = vpop.f32.mrb[0].mxu0
      %2953 = vmatprep.mubr.bf16.mxu0 0
      %2954 = vmatmul.mubr.bf16.gmra.mrb[0].mxu0 %v2814
      %v2955 = vpop.f32.mrb[0].mxu0
      %v2956 = vadd.f32 0.0, %v2955
      %v2957 = vpop.f32.mrb[0].mxu0
      %v2958 = vpop.f32.mrb[0].mxu0
      %v2959 = vadd.f32 0.0, %v2958
      %v2960 = vpop.f32.mrb[0].mxu0
      %2961 = vmatprep.mubr.bf16.mxu0 0
      %2962 = vmatmul.mubr.bf16.gmra.mrb[0].mxu0 %v2817
      %v2963 = vpop.f32.mrb[0].mxu0
      %v2964 = vadd.f32 0.0, %v2963
      %v2965 = vpop.f32.mrb[0].mxu0
      %v2966 = vpop.f32.mrb[0].mxu0
      %v2967 = vadd.f32 0.0, %v2966
      %v2968 = vpop.f32.mrb[0].mxu0
      %2969 = vmatprep.mubr.bf16.mxu0 0
      %2970 = vmatmul.mubr.bf16.gmra.mrb[0].mxu0 %v2820
      %v2971 = vpop.f32.mrb[0].mxu0
      %v2972 = vadd.f32 0.0, %v2971
      %v2973 = vpop.f32.mrb[0].mxu0
      %v2974 = vpop.f32.mrb[0].mxu0
      %v2975 = vadd.f32 0.0, %v2974
      %v2976 = vpop.f32.mrb[0].mxu0
      %2977 = vmatprep.mubr.bf16.mxu0 0
      %2978 = vmatmul.mubr.bf16.gmra.mrb[0].mxu0 %v2823
      %v2979 = vpop.f32.mrb[0].mxu0
      %v2980 = vadd.f32 0.0, %v2979
      %v2981 = vpop.f32.mrb[0].mxu0
      %v2982 = vpop.f32.mrb[0].mxu0
      %v2983 = vadd.f32 0.0, %v2982
      %v2984 = vpop.f32.mrb[0].mxu0
      %2985 = vdwg.mxu0
      %v2986 = vadd.f32 %v2663, %v2860
      %v2987 = vadd.f32 %v2664, %v2863
      %v2988 = vadd.f32 %v2665, %v2868
      %v2989 = vadd.f32 %v2666, %v2871
      %v2990 = vadd.f32 %v2667, %v2876
      %v2991 = vadd.f32 %v2668, %v2879
      %v2992 = vadd.f32 %v2669, %v2884
      %v2993 = vadd.f32 %v2670, %v2887
      %v2994 = vadd.f32 %v2671, %v2892
      %v2995 = vadd.f32 %v2672, %v2895
      %v2996 = vadd.f32 %v2673, %v2900
      %v2997 = vadd.f32 %v2674, %v2903
      %v2998 = vadd.f32 %v2675, %v2908
      %v2999 = vadd.f32 %v2676, %v2911
      %v3000 = vadd.f32 %v2677, %v2916
      %v3001 = vadd.f32 %v2678, %v2919
      %v3002 = vadd.f32 %v2679, %v2924
      %v3003 = vadd.f32 %v2680, %v2927
      %v3004 = vadd.f32 %v2681, %v2932
      %v3005 = vadd.f32 %v2682, %v2935
      %v3006 = vadd.f32 %v2683, %v2940
      %v3007 = vadd.f32 %v2684, %v2943
      %v3008 = vadd.f32 %v2685, %v2948
      %v3009 = vadd.f32 %v2686, %v2951
      %v3010 = vadd.f32 %v2687, %v2956
      %v3011 = vadd.f32 %v2688, %v2959
      %v3012 = vadd.f32 %v2689, %v2964
      %v3013 = vadd.f32 %v2690, %v2967
      %v3014 = vadd.f32 %v2691, %v2972
      %v3015 = vadd.f32 %v2692, %v2975
      %v3016 = vadd.f32 %v2693, %v2980
      %v3017 = vadd.f32 %v2694, %v2983
      %v3018 = vld [vmem:[%s2695 + $0x1] sm:$0xff]
      %v3019 = vld [vmem:[%s2695 + $0x9] sm:$0xff]
      %v3020 = vld [vmem:[%s2695 + $0x19] sm:$0xff]
      %v3021 = vld [vmem:[%s2695 + $0x21] sm:$0xff]
      %v3022 = vld [vmem:[%s2695 + $0x31] sm:$0xff]
      %v3023 = vld [vmem:[%s2695 + $0x39] sm:$0xff]
      %v3024 = vld [vmem:[%s2695 + $0x49] sm:$0xff]
      %v3025 = vld [vmem:[%s2695 + $0x51] sm:$0xff]
      %v3026 = vld [vmem:[%s2695 + $0x61] sm:$0xff]
      %v3027 = vld [vmem:[%s2695 + $0x69] sm:$0xff]
      %v3028 = vld [vmem:[%s2695 + $0x79] sm:$0xff]
      %v3029 = vld [vmem:[%s2695 + $0x81] sm:$0xff]
      %v3030 = vld [vmem:[%s2695 + $0x91] sm:$0xff]
      %v3031 = vld [vmem:[%s2695 + $0x99] sm:$0xff]
      %v3032 = vld [vmem:[%s2695 + $0xa9] sm:$0xff]
      %v3033 = vld [vmem:[%s2695 + $0xb1] sm:$0xff]
      %v3034 = vld [vmem:[%s2695 + $0xc1] sm:$0xff]
      %v3035 = vld [vmem:[%s2695 + $0xc9] sm:$0xff]
      %v3036 = vld [vmem:[%s2695 + $0xd9] sm:$0xff]
      %v3037 = vld [vmem:[%s2695 + $0xe1] sm:$0xff]
      %v3038 = vld [vmem:[%s2695 + $0xf1] sm:$0xff]
      %v3039 = vld [vmem:[%s2695 + $0xf9] sm:$0xff]
      %v3040 = vld [vmem:[%s2695 + $0x109] sm:$0xff]
      %v3041 = vld [vmem:[%s2695 + $0x111] sm:$0xff]
      %v3042 = vld [vmem:[%s2695 + $0x121] sm:$0xff]
      %v3043 = vld [vmem:[%s2695 + $0x129] sm:$0xff]
      %v3044 = vld [vmem:[%s2695 + $0x139] sm:$0xff]
      %v3045 = vld [vmem:[%s2695 + $0x141] sm:$0xff]
      %v3046 = vld [vmem:[%s2695 + $0x151] sm:$0xff]
      %v3047 = vld [vmem:[%s2695 + $0x159] sm:$0xff]
      %v3048 = vld [vmem:[%s2695 + $0x169] sm:$0xff]
      %v3049 = vld [vmem:[%s2695 + $0x171] sm:$0xff]
      %v3050 = vpack.c.bf16 %v3019, %v3018
      %v3051 = vpack.c.bf16 %v3021, %v3020
      %v3052 = vpack.c.bf16 %v3023, %v3022
      %v3053 = vpack.c.bf16 %v3025, %v3024
      %v3054 = vpack.c.bf16 %v3027, %v3026
      %v3055 = vpack.c.bf16 %v3029, %v3028
      %v3056 = vpack.c.bf16 %v3031, %v3030
      %v3057 = vpack.c.bf16 %v3033, %v3032
      %v3058 = vpack.c.bf16 %v3035, %v3034
      %v3059 = vpack.c.bf16 %v3037, %v3036
      %v3060 = vpack.c.bf16 %v3039, %v3038
      %v3061 = vpack.c.bf16 %v3041, %v3040
      %v3062 = vpack.c.bf16 %v3043, %v3042
      %v3063 = vpack.c.bf16 %v3045, %v3044
      %v3064 = vpack.c.bf16 %v3047, %v3046
      %v3065 = vpack.c.bf16 %v3049, %v3048
      %s3066 = scalar_lea.vmem %s3, 224
      %v3067 = vld [vmem:[%s3066] sm:$0xf]
      %v3068 = vld [vmem:[%s3066 + $0x4] sm:$0xf]
      %v3069 = vld [vmem:[%s3066 + $0x8] sm:$0xf]
      %v3070 = vld [vmem:[%s3066 + $0xc] sm:$0xf]
      %v3071 = vld [vmem:[%s3066 + $0x10] sm:$0xf]
      %v3072 = vld [vmem:[%s3066 + $0x14] sm:$0xf]
      %v3073 = vld [vmem:[%s3066 + $0x18] sm:$0xf]
      %v3074 = vld [vmem:[%s3066 + $0x1c] sm:$0xf]
      %v3083 = vunpack.c.l.b16 %v3067
      %v3084 = vunpack.c.l.b16 %v3068
      %v3085 = vunpack.c.l.b16 %v3069
      %v3086 = vunpack.c.l.b16 %v3070
      %v3087 = vunpack.c.l.b16 %v3071
      %v3088 = vunpack.c.l.b16 %v3072
      %v3089 = vunpack.c.l.b16 %v3073
      %v3090 = vunpack.c.l.b16 %v3074
      %v3091 = vpack.c.b16 %v3084, %v3083
      %v3092 = vpack.c.b16 %v3086, %v3085
      %v3093 = vpack.c.b16 %v3088, %v3087
      %v3094 = vpack.c.b16 %v3090, %v3089
      %v3100 = vsel %vm711, %v3050, 0
      %v3103 = vsel %vm711, %v3051, 0
      %v3106 = vsel %vm711, %v3052, 0
      %v3109 = vsel %vm711, %v3053, 0
      %v3112 = vsel %vm711, %v3054, 0
      %v3115 = vsel %vm711, %v3055, 0
      %v3118 = vsel %vm711, %v3056, 0
      %v3121 = vsel %vm711, %v3057, 0
      %v3124 = vsel %vm711, %v3058, 0
      %v3127 = vsel %vm711, %v3059, 0
      %v3130 = vsel %vm711, %v3060, 0
      %v3133 = vsel %vm711, %v3061, 0
      %v3136 = vsel %vm711, %v3062, 0
      %v3139 = vsel %vm711, %v3063, 0
      %v3142 = vsel %vm711, %v3064, 0
      %v3145 = vsel %vm711, %v3065, 0
      %3147 = vmatprep.subr.bf16.mxu0 0
      %3148 = vmatpush1.bf16.msra.mxu0 %v3091
      %3149 = vmatprep.subr.bf16.mxu0 0
      %3150 = vmatpush1.bf16.msra.mxu0 %v3092
      %3151 = vmatprep.subr.bf16.mxu0 0
      %3152 = vmatpush1.bf16.msra.mxu0 %v3093
      %3153 = vmatprep.subr.bf16.mxu0 0
      %3154 = vmatpush1.bf16.msra.mxu0 %v3094
      %3155 = vmatprep.subr.bf16.mxu0 0
      %3156 = vmatpush1.bf16.msra.mxu0 0
      %3157 = vmatprep.subr.bf16.mxu0 0
      %3158 = vmatpush1.bf16.msra.mxu0 0
      %3159 = vmatprep.subr.bf16.mxu0 0
      %3160 = vmatpush1.bf16.msra.mxu0 0
      %3161 = vmatprep.subr.bf16.mxu0 0
      %3162 = vmatpush1.bf16.msra.mxu0 0
      %3163 = vmatprep.subr.bf16.mxu0 0
      %3164 = vmatpush1.bf16.msra.mxu0 0
      %3165 = vmatprep.subr.bf16.mxu0 0
      %3166 = vmatpush1.bf16.msra.mxu0 0
      %3167 = vmatprep.subr.bf16.mxu0 0
      %3168 = vmatpush1.bf16.msra.mxu0 0
      %3169 = vmatprep.subr.bf16.mxu0 0
      %3170 = vmatpush1.bf16.msra.mxu0 0
      %3171 = vmatprep.subr.bf16.mxu0 0
      %3172 = vmatpush1.bf16.msra.mxu0 0
      %3173 = vmatprep.subr.bf16.mxu0 0
      %3174 = vmatpush1.bf16.msra.mxu0 0
      %3175 = vmatprep.subr.bf16.mxu0 0
      %3176 = vmatpush1.bf16.msra.mxu0 0
      %3177 = vmatprep.subr.bf16.mxu0 0
      %3178 = vmatpush1.bf16.msra.mxu0 0
      %3179 = vmatprep.mubr.bf16.mxu0 0
      %3180 = vmatmul.mubr.bf16.gmra.mrb[0].mxu0 %v3100
      %v3181 = vpop.f32.mrb[0].mxu0
      %v3182 = vadd.f32 0.0, %v3181
      %v3183 = vpop.f32.mrb[0].mxu0
      %v3184 = vpop.f32.mrb[0].mxu0
      %v3185 = vadd.f32 0.0, %v3184
      %v3186 = vpop.f32.mrb[0].mxu0
      %3187 = vmatprep.mubr.bf16.mxu0 0
      %3188 = vmatmul.mubr.bf16.gmra.mrb[0].mxu0 %v3103
      %v3189 = vpop.f32.mrb[0].mxu0
      %v3190 = vadd.f32 0.0, %v3189
      %v3191 = vpop.f32.mrb[0].mxu0
      %v3192 = vpop.f32.mrb[0].mxu0
      %v3193 = vadd.f32 0.0, %v3192
      %v3194 = vpop.f32.mrb[0].mxu0
      %3195 = vmatprep.mubr.bf16.mxu0 0
      %3196 = vmatmul.mubr.bf16.gmra.mrb[0].mxu0 %v3106
      %v3197 = vpop.f32.mrb[0].mxu0
      %v3198 = vadd.f32 0.0, %v3197
      %v3199 = vpop.f32.mrb[0].mxu0
      %v3200 = vpop.f32.mrb[0].mxu0
      %v3201 = vadd.f32 0.0, %v3200
      %v3202 = vpop.f32.mrb[0].mxu0
      %3203 = vmatprep.mubr.bf16.mxu0 0
      %3204 = vmatmul.mubr.bf16.gmra.mrb[0].mxu0 %v3109
      %v3205 = vpop.f32.mrb[0].mxu0
      %v3206 = vadd.f32 0.0, %v3205
      %v3207 = vpop.f32.mrb[0].mxu0
      %v3208 = vpop.f32.mrb[0].mxu0
      %v3209 = vadd.f32 0.0, %v3208
      %v3210 = vpop.f32.mrb[0].mxu0
      %3211 = vmatprep.mubr.bf16.mxu0 0
      %3212 = vmatmul.mubr.bf16.gmra.mrb[0].mxu0 %v3112
      %v3213 = vpop.f32.mrb[0].mxu0
      %v3214 = vadd.f32 0.0, %v3213
      %v3215 = vpop.f32.mrb[0].mxu0
      %v3216 = vpop.f32.mrb[0].mxu0
      %v3217 = vadd.f32 0.0, %v3216
      %v3218 = vpop.f32.mrb[0].mxu0
      %3219 = vmatprep.mubr.bf16.mxu0 0
      %3220 = vmatmul.mubr.bf16.gmra.mrb[0].mxu0 %v3115
      %v3221 = vpop.f32.mrb[0].mxu0
      %v3222 = vadd.f32 0.0, %v3221
      %v3223 = vpop.f32.mrb[0].mxu0
      %v3224 = vpop.f32.mrb[0].mxu0
      %v3225 = vadd.f32 0.0, %v3224
      %v3226 = vpop.f32.mrb[0].mxu0
      %3227 = vmatprep.mubr.bf16.mxu0 0
      %3228 = vmatmul.mubr.bf16.gmra.mrb[0].mxu0 %v3118
      %v3229 = vpop.f32.mrb[0].mxu0
      %v3230 = vadd.f32 0.0, %v3229
      %v3231 = vpop.f32.mrb[0].mxu0
      %v3232 = vpop.f32.mrb[0].mxu0
      %v3233 = vadd.f32 0.0, %v3232
      %v3234 = vpop.f32.mrb[0].mxu0
      %3235 = vmatprep.mubr.bf16.mxu0 0
      %3236 = vmatmul.mubr.bf16.gmra.mrb[0].mxu0 %v3121
      %v3237 = vpop.f32.mrb[0].mxu0
      %v3238 = vadd.f32 0.0, %v3237
      %v3239 = vpop.f32.mrb[0].mxu0
      %v3240 = vpop.f32.mrb[0].mxu0
      %v3241 = vadd.f32 0.0, %v3240
      %v3242 = vpop.f32.mrb[0].mxu0
      %3243 = vmatprep.mubr.bf16.mxu0 0
      %3244 = vmatmul.mubr.bf16.gmra.mrb[0].mxu0 %v3124
      %v3245 = vpop.f32.mrb[0].mxu0
      %v3246 = vadd.f32 0.0, %v3245
      %v3247 = vpop.f32.mrb[0].mxu0
      %v3248 = vpop.f32.mrb[0].mxu0
      %v3249 = vadd.f32 0.0, %v3248
      %v3250 = vpop.f32.mrb[0].mxu0
      %3251 = vmatprep.mubr.bf16.mxu0 0
      %3252 = vmatmul.mubr.bf16.gmra.mrb[0].mxu0 %v3127
      %v3253 = vpop.f32.mrb[0].mxu0
      %v3254 = vadd.f32 0.0, %v3253
      %v3255 = vpop.f32.mrb[0].mxu0
      %v3256 = vpop.f32.mrb[0].mxu0
      %v3257 = vadd.f32 0.0, %v3256
      %v3258 = vpop.f32.mrb[0].mxu0
      %3259 = vmatprep.mubr.bf16.mxu0 0
      %3260 = vmatmul.mubr.bf16.gmra.mrb[0].mxu0 %v3130
      %v3261 = vpop.f32.mrb[0].mxu0
      %v3262 = vadd.f32 0.0, %v3261
      %v3263 = vpop.f32.mrb[0].mxu0
      %v3264 = vpop.f32.mrb[0].mxu0
      %v3265 = vadd.f32 0.0, %v3264
      %v3266 = vpop.f32.mrb[0].mxu0
      %3267 = vmatprep.mubr.bf16.mxu0 0
      %3268 = vmatmul.mubr.bf16.gmra.mrb[0].mxu0 %v3133
      %v3269 = vpop.f32.mrb[0].mxu0
      %v3270 = vadd.f32 0.0, %v3269
      %v3271 = vpop.f32.mrb[0].mxu0
      %v3272 = vpop.f32.mrb[0].mxu0
      %v3273 = vadd.f32 0.0, %v3272
      %v3274 = vpop.f32.mrb[0].mxu0
      %3275 = vmatprep.mubr.bf16.mxu0 0
      %3276 = vmatmul.mubr.bf16.gmra.mrb[0].mxu0 %v3136
      %v3277 = vpop.f32.mrb[0].mxu0
      %v3278 = vadd.f32 0.0, %v3277
      %v3279 = vpop.f32.mrb[0].mxu0
      %v3280 = vpop.f32.mrb[0].mxu0
      %v3281 = vadd.f32 0.0, %v3280
      %v3282 = vpop.f32.mrb[0].mxu0
      %3283 = vmatprep.mubr.bf16.mxu0 0
      %3284 = vmatmul.mubr.bf16.gmra.mrb[0].mxu0 %v3139
      %v3285 = vpop.f32.mrb[0].mxu0
      %v3286 = vadd.f32 0.0, %v3285
      %v3287 = vpop.f32.mrb[0].mxu0
      %v3288 = vpop.f32.mrb[0].mxu0
      %v3289 = vadd.f32 0.0, %v3288
      %v3290 = vpop.f32.mrb[0].mxu0
      %3291 = vmatprep.mubr.bf16.mxu0 0
      %3292 = vmatmul.mubr.bf16.gmra.mrb[0].mxu0 %v3142
      %v3293 = vpop.f32.mrb[0].mxu0
      %v3294 = vadd.f32 0.0, %v3293
      %v3295 = vpop.f32.mrb[0].mxu0
      %v3296 = vpop.f32.mrb[0].mxu0
      %v3297 = vadd.f32 0.0, %v3296
      %v3298 = vpop.f32.mrb[0].mxu0
      %3299 = vmatprep.mubr.bf16.mxu0 0
      %3300 = vmatmul.mubr.bf16.gmra.mrb[0].mxu0 %v3145
      %v3301 = vpop.f32.mrb[0].mxu0
      %v3302 = vadd.f32 0.0, %v3301
      %v3303 = vpop.f32.mrb[0].mxu0
      %v3304 = vpop.f32.mrb[0].mxu0
      %v3305 = vadd.f32 0.0, %v3304
      %v3306 = vpop.f32.mrb[0].mxu0
      %3307 = vdwg.mxu0
      %v3308 = vadd.f32 %v2986, %v3182
      %v3309 = vadd.f32 %v2987, %v3185
      %v3310 = vadd.f32 %v2988, %v3190
      %v3311 = vadd.f32 %v2989, %v3193
      %v3312 = vadd.f32 %v2990, %v3198
      %v3313 = vadd.f32 %v2991, %v3201
      %v3314 = vadd.f32 %v2992, %v3206
      %v3315 = vadd.f32 %v2993, %v3209
      %v3316 = vadd.f32 %v2994, %v3214
      %v3317 = vadd.f32 %v2995, %v3217
      %v3318 = vadd.f32 %v2996, %v3222
      %v3319 = vadd.f32 %v2997, %v3225
      %v3320 = vadd.f32 %v2998, %v3230
      %v3321 = vadd.f32 %v2999, %v3233
      %v3322 = vadd.f32 %v3000, %v3238
      %v3323 = vadd.f32 %v3001, %v3241
      %v3324 = vadd.f32 %v3002, %v3246
      %v3325 = vadd.f32 %v3003, %v3249
      %v3326 = vadd.f32 %v3004, %v3254
      %v3327 = vadd.f32 %v3005, %v3257
      %v3328 = vadd.f32 %v3006, %v3262
      %v3329 = vadd.f32 %v3007, %v3265
      %v3330 = vadd.f32 %v3008, %v3270
      %v3331 = vadd.f32 %v3009, %v3273
      %v3332 = vadd.f32 %v3010, %v3278
      %v3333 = vadd.f32 %v3011, %v3281
      %v3334 = vadd.f32 %v3012, %v3286
      %v3335 = vadd.f32 %v3013, %v3289
      %v3336 = vadd.f32 %v3014, %v3294
      %v3337 = vadd.f32 %v3015, %v3297
      %v3338 = vadd.f32 %v3016, %v3302
      %v3339 = vadd.f32 %v3017, %v3305
      %v3340 = vld [vmem:[%s2695 + $0x2] sm:$0xff]
      %v3341 = vld [vmem:[%s2695 + $0xa] sm:$0xff]
      %v3342 = vld [vmem:[%s2695 + $0x1a] sm:$0xff]
      %v3343 = vld [vmem:[%s2695 + $0x22] sm:$0xff]
      %v3344 = vld [vmem:[%s2695 + $0x32] sm:$0xff]
      %v3345 = vld [vmem:[%s2695 + $0x3a] sm:$0xff]
      %v3346 = vld [vmem:[%s2695 + $0x4a] sm:$0xff]
      %v3347 = vld [vmem:[%s2695 + $0x52] sm:$0xff]
      %v3348 = vld [vmem:[%s2695 + $0x62] sm:$0xff]
      %v3349 = vld [vmem:[%s2695 + $0x6a] sm:$0xff]
      %v3350 = vld [vmem:[%s2695 + $0x7a] sm:$0xff]
      %v3351 = vld [vmem:[%s2695 + $0x82] sm:$0xff]
      %v3352 = vld [vmem:[%s2695 + $0x92] sm:$0xff]
      %v3353 = vld [vmem:[%s2695 + $0x9a] sm:$0xff]
      %v3354 = vld [vmem:[%s2695 + $0xaa] sm:$0xff]
      %v3355 = vld [vmem:[%s2695 + $0xb2] sm:$0xff]
      %v3356 = vld [vmem:[%s2695 + $0xc2] sm:$0xff]
      %v3357 = vld [vmem:[%s2695 + $0xca] sm:$0xff]
      %v3358 = vld [vmem:[%s2695 + $0xda] sm:$0xff]
      %v3359 = vld [vmem:[%s2695 + $0xe2] sm:$0xff]
      %v3360 = vld [vmem:[%s2695 + $0xf2] sm:$0xff]
      %v3361 = vld [vmem:[%s2695 + $0xfa] sm:$0xff]
      %v3362 = vld [vmem:[%s2695 + $0x10a] sm:$0xff]
      %v3363 = vld [vmem:[%s2695 + $0x112] sm:$0xff]
      %v3364 = vld [vmem:[%s2695 + $0x122] sm:$0xff]
      %v3365 = vld [vmem:[%s2695 + $0x12a] sm:$0xff]
      %v3366 = vld [vmem:[%s2695 + $0x13a] sm:$0xff]
      %v3367 = vld [vmem:[%s2695 + $0x142] sm:$0xff]
      %v3368 = vld [vmem:[%s2695 + $0x152] sm:$0xff]
      %v3369 = vld [vmem:[%s2695 + $0x15a] sm:$0xff]
      %v3370 = vld [vmem:[%s2695 + $0x16a] sm:$0xff]
      %v3371 = vld [vmem:[%s2695 + $0x172] sm:$0xff]
      %v3372 = vpack.c.bf16 %v3341, %v3340
      %v3373 = vpack.c.bf16 %v3343, %v3342
      %v3374 = vpack.c.bf16 %v3345, %v3344
      %v3375 = vpack.c.bf16 %v3347, %v3346
      %v3376 = vpack.c.bf16 %v3349, %v3348
      %v3377 = vpack.c.bf16 %v3351, %v3350
      %v3378 = vpack.c.bf16 %v3353, %v3352
      %v3379 = vpack.c.bf16 %v3355, %v3354
      %v3380 = vpack.c.bf16 %v3357, %v3356
      %v3381 = vpack.c.bf16 %v3359, %v3358
      %v3382 = vpack.c.bf16 %v3361, %v3360
      %v3383 = vpack.c.bf16 %v3363, %v3362
      %v3384 = vpack.c.bf16 %v3365, %v3364
      %v3385 = vpack.c.bf16 %v3367, %v3366
      %v3386 = vpack.c.bf16 %v3369, %v3368
      %v3387 = vpack.c.bf16 %v3371, %v3370
      %s3388 = scalar_lea.vmem %s3, 256
      %v3389 = vld [vmem:[%s3388] sm:$0xf]
      %v3390 = vld [vmem:[%s3388 + $0x4] sm:$0xf]
      %v3391 = vld [vmem:[%s3388 + $0x8] sm:$0xf]
      %v3392 = vld [vmem:[%s3388 + $0xc] sm:$0xf]
      %v3393 = vld [vmem:[%s3388 + $0x10] sm:$0xf]
      %v3394 = vld [vmem:[%s3388 + $0x14] sm:$0xf]
      %v3395 = vld [vmem:[%s3388 + $0x18] sm:$0xf]
      %v3396 = vld [vmem:[%s3388 + $0x1c] sm:$0xf]
      %v3405 = vunpack.c.l.b16 %v3389
      %v3406 = vunpack.c.l.b16 %v3390
      %v3407 = vunpack.c.l.b16 %v3391
      %v3408 = vunpack.c.l.b16 %v3392
      %v3409 = vunpack.c.l.b16 %v3393
      %v3410 = vunpack.c.l.b16 %v3394
      %v3411 = vunpack.c.l.b16 %v3395
      %v3412 = vunpack.c.l.b16 %v3396
      %v3413 = vpack.c.b16 %v3406, %v3405
      %v3414 = vpack.c.b16 %v3408, %v3407
      %v3415 = vpack.c.b16 %v3410, %v3409
      %v3416 = vpack.c.b16 %v3412, %v3411
      %v3422 = vsel %vm711, %v3372, 0
      %v3425 = vsel %vm711, %v3373, 0
      %v3428 = vsel %vm711, %v3374, 0
      %v3431 = vsel %vm711, %v3375, 0
      %v3434 = vsel %vm711, %v3376, 0
      %v3437 = vsel %vm711, %v3377, 0
      %v3440 = vsel %vm711, %v3378, 0
      %v3443 = vsel %vm711, %v3379, 0
      %v3446 = vsel %vm711, %v3380, 0
      %v3449 = vsel %vm711, %v3381, 0
      %v3452 = vsel %vm711, %v3382, 0
      %v3455 = vsel %vm711, %v3383, 0
      %v3458 = vsel %vm711, %v3384, 0
      %v3461 = vsel %vm711, %v3385, 0
      %v3464 = vsel %vm711, %v3386, 0
      %v3467 = vsel %vm711, %v3387, 0
      %3469 = vmatprep.subr.bf16.mxu0 0
      %3470 = vmatpush1.bf16.msra.mxu0 %v3413
      %3471 = vmatprep.subr.bf16.mxu0 0
      %3472 = vmatpush1.bf16.msra.mxu0 %v3414
      %3473 = vmatprep.subr.bf16.mxu0 0
      %3474 = vmatpush1.bf16.msra.mxu0 %v3415
      %3475 = vmatprep.subr.bf16.mxu0 0
      %3476 = vmatpush1.bf16.msra.mxu0 %v3416
      %3477 = vmatprep.subr.bf16.mxu0 0
      %3478 = vmatpush1.bf16.msra.mxu0 0
      %3479 = vmatprep.subr.bf16.mxu0 0
      %3480 = vmatpush1.bf16.msra.mxu0 0
      %3481 = vmatprep.subr.bf16.mxu0 0
      %3482 = vmatpush1.bf16.msra.mxu0 0
      %3483 = vmatprep.subr.bf16.mxu0 0
      %3484 = vmatpush1.bf16.msra.mxu0 0
      %3485 = vmatprep.subr.bf16.mxu0 0
      %3486 = vmatpush1.bf16.msra.mxu0 0
      %3487 = vmatprep.subr.bf16.mxu0 0
      %3488 = vmatpush1.bf16.msra.mxu0 0
      %3489 = vmatprep.subr.bf16.mxu0 0
      %3490 = vmatpush1.bf16.msra.mxu0 0
      %3491 = vmatprep.subr.bf16.mxu0 0
      %3492 = vmatpush1.bf16.msra.mxu0 0
      %3493 = vmatprep.subr.bf16.mxu0 0
      %3494 = vmatpush1.bf16.msra.mxu0 0
      %3495 = vmatprep.subr.bf16.mxu0 0
      %3496 = vmatpush1.bf16.msra.mxu0 0
      %3497 = vmatprep.subr.bf16.mxu0 0
      %3498 = vmatpush1.bf16.msra.mxu0 0
      %3499 = vmatprep.subr.bf16.mxu0 0
      %3500 = vmatpush1.bf16.msra.mxu0 0
      %3501 = vmatprep.mubr.bf16.mxu0 0
      %3502 = vmatmul.mubr.bf16.gmra.mrb[0].mxu0 %v3422
      %v3503 = vpop.f32.mrb[0].mxu0
      %v3504 = vadd.f32 0.0, %v3503
      %v3505 = vpop.f32.mrb[0].mxu0
      %v3506 = vpop.f32.mrb[0].mxu0
      %v3507 = vadd.f32 0.0, %v3506
      %v3508 = vpop.f32.mrb[0].mxu0
      %3509 = vmatprep.mubr.bf16.mxu0 0
      %3510 = vmatmul.mubr.bf16.gmra.mrb[0].mxu0 %v3425
      %v3511 = vpop.f32.mrb[0].mxu0
      %v3512 = vadd.f32 0.0, %v3511
      %v3513 = vpop.f32.mrb[0].mxu0
      %v3514 = vpop.f32.mrb[0].mxu0
      %v3515 = vadd.f32 0.0, %v3514
      %v3516 = vpop.f32.mrb[0].mxu0
      %3517 = vmatprep.mubr.bf16.mxu0 0
      %3518 = vmatmul.mubr.bf16.gmra.mrb[0].mxu0 %v3428
      %v3519 = vpop.f32.mrb[0].mxu0
      %v3520 = vadd.f32 0.0, %v3519
      %v3521 = vpop.f32.mrb[0].mxu0
      %v3522 = vpop.f32.mrb[0].mxu0
      %v3523 = vadd.f32 0.0, %v3522
      %v3524 = vpop.f32.mrb[0].mxu0
      %3525 = vmatprep.mubr.bf16.mxu0 0
      %3526 = vmatmul.mubr.bf16.gmra.mrb[0].mxu0 %v3431
      %v3527 = vpop.f32.mrb[0].mxu0
      %v3528 = vadd.f32 0.0, %v3527
      %v3529 = vpop.f32.mrb[0].mxu0
      %v3530 = vpop.f32.mrb[0].mxu0
      %v3531 = vadd.f32 0.0, %v3530
      %v3532 = vpop.f32.mrb[0].mxu0
      %3533 = vmatprep.mubr.bf16.mxu0 0
      %3534 = vmatmul.mubr.bf16.gmra.mrb[0].mxu0 %v3434
      %v3535 = vpop.f32.mrb[0].mxu0
      %v3536 = vadd.f32 0.0, %v3535
      %v3537 = vpop.f32.mrb[0].mxu0
      %v3538 = vpop.f32.mrb[0].mxu0
      %v3539 = vadd.f32 0.0, %v3538
      %v3540 = vpop.f32.mrb[0].mxu0
      %3541 = vmatprep.mubr.bf16.mxu0 0
      %3542 = vmatmul.mubr.bf16.gmra.mrb[0].mxu0 %v3437
      %v3543 = vpop.f32.mrb[0].mxu0
      %v3544 = vadd.f32 0.0, %v3543
      %v3545 = vpop.f32.mrb[0].mxu0
      %v3546 = vpop.f32.mrb[0].mxu0
      %v3547 = vadd.f32 0.0, %v3546
      %v3548 = vpop.f32.mrb[0].mxu0
      %3549 = vmatprep.mubr.bf16.mxu0 0
      %3550 = vmatmul.mubr.bf16.gmra.mrb[0].mxu0 %v3440
      %v3551 = vpop.f32.mrb[0].mxu0
      %v3552 = vadd.f32 0.0, %v3551
      %v3553 = vpop.f32.mrb[0].mxu0
      %v3554 = vpop.f32.mrb[0].mxu0
      %v3555 = vadd.f32 0.0, %v3554
      %v3556 = vpop.f32.mrb[0].mxu0
      %3557 = vmatprep.mubr.bf16.mxu0 0
      %3558 = vmatmul.mubr.bf16.gmra.mrb[0].mxu0 %v3443
      %v3559 = vpop.f32.mrb[0].mxu0
      %v3560 = vadd.f32 0.0, %v3559
      %v3561 = vpop.f32.mrb[0].mxu0
      %v3562 = vpop.f32.mrb[0].mxu0
      %v3563 = vadd.f32 0.0, %v3562
      %v3564 = vpop.f32.mrb[0].mxu0
      %3565 = vmatprep.mubr.bf16.mxu0 0
      %3566 = vmatmul.mubr.bf16.gmra.mrb[0].mxu0 %v3446
      %v3567 = vpop.f32.mrb[0].mxu0
      %v3568 = vadd.f32 0.0, %v3567
      %v3569 = vpop.f32.mrb[0].mxu0
      %v3570 = vpop.f32.mrb[0].mxu0
      %v3571 = vadd.f32 0.0, %v3570
      %v3572 = vpop.f32.mrb[0].mxu0
      %3573 = vmatprep.mubr.bf16.mxu0 0
      %3574 = vmatmul.mubr.bf16.gmra.mrb[0].mxu0 %v3449
      %v3575 = vpop.f32.mrb[0].mxu0
      %v3576 = vadd.f32 0.0, %v3575
      %v3577 = vpop.f32.mrb[0].mxu0
      %v3578 = vpop.f32.mrb[0].mxu0
      %v3579 = vadd.f32 0.0, %v3578
      %v3580 = vpop.f32.mrb[0].mxu0
      %3581 = vmatprep.mubr.bf16.mxu0 0
      %3582 = vmatmul.mubr.bf16.gmra.mrb[0].mxu0 %v3452
      %v3583 = vpop.f32.mrb[0].mxu0
      %v3584 = vadd.f32 0.0, %v3583
      %v3585 = vpop.f32.mrb[0].mxu0
      %v3586 = vpop.f32.mrb[0].mxu0
      %v3587 = vadd.f32 0.0, %v3586
      %v3588 = vpop.f32.mrb[0].mxu0
      %3589 = vmatprep.mubr.bf16.mxu0 0
      %3590 = vmatmul.mubr.bf16.gmra.mrb[0].mxu0 %v3455
      %v3591 = vpop.f32.mrb[0].mxu0
      %v3592 = vadd.f32 0.0, %v3591
      %v3593 = vpop.f32.mrb[0].mxu0
      %v3594 = vpop.f32.mrb[0].mxu0
      %v3595 = vadd.f32 0.0, %v3594
      %v3596 = vpop.f32.mrb[0].mxu0
      %3597 = vmatprep.mubr.bf16.mxu0 0
      %3598 = vmatmul.mubr.bf16.gmra.mrb[0].mxu0 %v3458
      %v3599 = vpop.f32.mrb[0].mxu0
      %v3600 = vadd.f32 0.0, %v3599
      %v3601 = vpop.f32.mrb[0].mxu0
      %v3602 = vpop.f32.mrb[0].mxu0
      %v3603 = vadd.f32 0.0, %v3602
      %v3604 = vpop.f32.mrb[0].mxu0
      %3605 = vmatprep.mubr.bf16.mxu0 0
      %3606 = vmatmul.mubr.bf16.gmra.mrb[0].mxu0 %v3461
      %v3607 = vpop.f32.mrb[0].mxu0
      %v3608 = vadd.f32 0.0, %v3607
      %v3609 = vpop.f32.mrb[0].mxu0
      %v3610 = vpop.f32.mrb[0].mxu0
      %v3611 = vadd.f32 0.0, %v3610
      %v3612 = vpop.f32.mrb[0].mxu0
      %3613 = vmatprep.mubr.bf16.mxu0 0
      %3614 = vmatmul.mubr.bf16.gmra.mrb[0].mxu0 %v3464
      %v3615 = vpop.f32.mrb[0].mxu0
      %v3616 = vadd.f32 0.0, %v3615
      %v3617 = vpop.f32.mrb[0].mxu0
      %v3618 = vpop.f32.mrb[0].mxu0
      %v3619 = vadd.f32 0.0, %v3618
      %v3620 = vpop.f32.mrb[0].mxu0
      %3621 = vmatprep.mubr.bf16.mxu0 0
      %3622 = vmatmul.mubr.bf16.gmra.mrb[0].mxu0 %v3467
      %v3623 = vpop.f32.mrb[0].mxu0
      %v3624 = vadd.f32 0.0, %v3623
      %v3625 = vpop.f32.mrb[0].mxu0
      %v3626 = vpop.f32.mrb[0].mxu0
      %v3627 = vadd.f32 0.0, %v3626
      %v3628 = vpop.f32.mrb[0].mxu0
      %3629 = vdwg.mxu0
      %v3630 = vadd.f32 %v3308, %v3504
      %v3631 = vadd.f32 %v3309, %v3507
      %v3632 = vadd.f32 %v3310, %v3512
      %v3633 = vadd.f32 %v3311, %v3515
      %v3634 = vadd.f32 %v3312, %v3520
      %v3635 = vadd.f32 %v3313, %v3523
      %v3636 = vadd.f32 %v3314, %v3528
      %v3637 = vadd.f32 %v3315, %v3531
      %v3638 = vadd.f32 %v3316, %v3536
      %v3639 = vadd.f32 %v3317, %v3539
      %v3640 = vadd.f32 %v3318, %v3544
      %v3641 = vadd.f32 %v3319, %v3547
      %v3642 = vadd.f32 %v3320, %v3552
      %v3643 = vadd.f32 %v3321, %v3555
      %v3644 = vadd.f32 %v3322, %v3560
      %v3645 = vadd.f32 %v3323, %v3563
      %v3646 = vadd.f32 %v3324, %v3568
      %v3647 = vadd.f32 %v3325, %v3571
      %v3648 = vadd.f32 %v3326, %v3576
      %v3649 = vadd.f32 %v3327, %v3579
      %v3650 = vadd.f32 %v3328, %v3584
      %v3651 = vadd.f32 %v3329, %v3587
      %v3652 = vadd.f32 %v3330, %v3592
      %v3653 = vadd.f32 %v3331, %v3595
      %v3654 = vadd.f32 %v3332, %v3600
      %v3655 = vadd.f32 %v3333, %v3603
      %v3656 = vadd.f32 %v3334, %v3608
      %v3657 = vadd.f32 %v3335, %v3611
      %v3658 = vadd.f32 %v3336, %v3616
      %v3659 = vadd.f32 %v3337, %v3619
      %v3660 = vadd.f32 %v3338, %v3624
      %v3661 = vadd.f32 %v3339, %v3627
      %v3662 = vld [vmem:[%s4] sm:$0x1]
      %v3664 = vlaneseq
      %v3665 = vshrl.u32 %v3664, 7
      %v3666 = vsub.s32 0, %v3665
      %v3667 = vrot.slane %v3662, %v3666
      %v3669 = vadd.f32 %v3630, %v3667
      %v3670 = vadd.f32 %v3631, %v3667
      %v3671 = vadd.f32 %v3632, %v3667
      %v3672 = vadd.f32 %v3633, %v3667
      %v3673 = vadd.f32 %v3634, %v3667
      %v3674 = vadd.f32 %v3635, %v3667
      %v3675 = vadd.f32 %v3636, %v3667
      %v3676 = vadd.f32 %v3637, %v3667
      %v3677 = vadd.f32 %v3638, %v3667
      %v3678 = vadd.f32 %v3639, %v3667
      %v3679 = vadd.f32 %v3640, %v3667
      %v3680 = vadd.f32 %v3641, %v3667
      %v3681 = vadd.f32 %v3642, %v3667
      %v3682 = vadd.f32 %v3643, %v3667
      %v3683 = vadd.f32 %v3644, %v3667
      %v3684 = vadd.f32 %v3645, %v3667
      %v3685 = vadd.f32 %v3646, %v3667
      %v3686 = vadd.f32 %v3647, %v3667
      %v3687 = vadd.f32 %v3648, %v3667
      %v3688 = vadd.f32 %v3649, %v3667
      %v3689 = vadd.f32 %v3650, %v3667
      %v3690 = vadd.f32 %v3651, %v3667
      %v3691 = vadd.f32 %v3652, %v3667
      %v3692 = vadd.f32 %v3653, %v3667
      %v3693 = vadd.f32 %v3654, %v3667
      %v3694 = vadd.f32 %v3655, %v3667
      %v3695 = vadd.f32 %v3656, %v3667
      %v3696 = vadd.f32 %v3657, %v3667
      %v3697 = vadd.f32 %v3658, %v3667
      %v3698 = vadd.f32 %v3659, %v3667
      %v3699 = vadd.f32 %v3660, %v3667
      %v3700 = vadd.f32 %v3661, %v3667
      %v3701 = vmax.f32 %v3669, 0.0
      %v3702 = vmax.f32 %v3670, 0.0
      %v3703 = vmax.f32 %v3671, 0.0
      %v3704 = vmax.f32 %v3672, 0.0
      %v3705 = vmax.f32 %v3673, 0.0
      %v3706 = vmax.f32 %v3674, 0.0
      %v3707 = vmax.f32 %v3675, 0.0
      %v3708 = vmax.f32 %v3676, 0.0
      %v3709 = vmax.f32 %v3677, 0.0
      %v3710 = vmax.f32 %v3678, 0.0
      %v3711 = vmax.f32 %v3679, 0.0
      %v3712 = vmax.f32 %v3680, 0.0
      %v3713 = vmax.f32 %v3681, 0.0
      %v3714 = vmax.f32 %v3682, 0.0
      %v3715 = vmax.f32 %v3683, 0.0
      %v3716 = vmax.f32 %v3684, 0.0
      %v3717 = vmax.f32 %v3685, 0.0
      %v3718 = vmax.f32 %v3686, 0.0
      %v3719 = vmax.f32 %v3687, 0.0
      %v3720 = vmax.f32 %v3688, 0.0
      %v3721 = vmax.f32 %v3689, 0.0
      %v3722 = vmax.f32 %v3690, 0.0
      %v3723 = vmax.f32 %v3691, 0.0
      %v3724 = vmax.f32 %v3692, 0.0
      %v3725 = vmax.f32 %v3693, 0.0
      %v3726 = vmax.f32 %v3694, 0.0
      %v3727 = vmax.f32 %v3695, 0.0
      %v3728 = vmax.f32 %v3696, 0.0
      %v3729 = vmax.f32 %v3697, 0.0
      %v3730 = vmax.f32 %v3698, 0.0
      %v3731 = vmax.f32 %v3699, 0.0
      %v3732 = vmax.f32 %v3700, 0.0
      %3733 = vst.msk [vmem:[%s720 + $0x1] sm:$0xff] %vm711, %v3701
      %3734 = vst.msk [vmem:[%s720 + $0x9] sm:$0xff] %vm711, %v3702
      %3735 = vst.msk [vmem:[%s720 + $0x19] sm:$0xff] %vm711, %v3703
      %3736 = vst.msk [vmem:[%s720 + $0x21] sm:$0xff] %vm711, %v3704
      %3737 = vst.msk [vmem:[%s720 + $0x31] sm:$0xff] %vm711, %v3705
      %3738 = vst.msk [vmem:[%s720 + $0x39] sm:$0xff] %vm711, %v3706
      %3739 = vst.msk [vmem:[%s720 + $0x49] sm:$0xff] %vm711, %v3707
      %3740 = vst.msk [vmem:[%s720 + $0x51] sm:$0xff] %vm711, %v3708
      %3741 = vst.msk [vmem:[%s720 + $0x61] sm:$0xff] %vm711, %v3709
      %3742 = vst.msk [vmem:[%s720 + $0x69] sm:$0xff] %vm711, %v3710
      %3743 = vst.msk [vmem:[%s720 + $0x79] sm:$0xff] %vm711, %v3711
      %3744 = vst.msk [vmem:[%s720 + $0x81] sm:$0xff] %vm711, %v3712
      %3745 = vst.msk [vmem:[%s720 + $0x91] sm:$0xff] %vm711, %v3713
      %3746 = vst.msk [vmem:[%s720 + $0x99] sm:$0xff] %vm711, %v3714
      %3747 = vst.msk [vmem:[%s720 + $0xa9] sm:$0xff] %vm711, %v3715
      %3748 = vst.msk [vmem:[%s720 + $0xb1] sm:$0xff] %vm711, %v3716
      %3749 = vst.msk [vmem:[%s720 + $0xc1] sm:$0xff] %vm711, %v3717
      %3750 = vst.msk [vmem:[%s720 + $0xc9] sm:$0xff] %vm711, %v3718
      %3751 = vst.msk [vmem:[%s720 + $0xd9] sm:$0xff] %vm711, %v3719
      %3752 = vst.msk [vmem:[%s720 + $0xe1] sm:$0xff] %vm711, %v3720
      %3753 = vst.msk [vmem:[%s720 + $0xf1] sm:$0xff] %vm711, %v3721
      %3754 = vst.msk [vmem:[%s720 + $0xf9] sm:$0xff] %vm711, %v3722
      %3755 = vst.msk [vmem:[%s720 + $0x109] sm:$0xff] %vm711, %v3723
      %3756 = vst.msk [vmem:[%s720 + $0x111] sm:$0xff] %vm711, %v3724
      %3757 = vst.msk [vmem:[%s720 + $0x121] sm:$0xff] %vm711, %v3725
      %3758 = vst.msk [vmem:[%s720 + $0x129] sm:$0xff] %vm711, %v3726
      %3759 = vst.msk [vmem:[%s720 + $0x139] sm:$0xff] %vm711, %v3727
      %3760 = vst.msk [vmem:[%s720 + $0x141] sm:$0xff] %vm711, %v3728
      %3761 = vst.msk [vmem:[%s720 + $0x151] sm:$0xff] %vm711, %v3729
      %3762 = vst.msk [vmem:[%s720 + $0x159] sm:$0xff] %vm711, %v3730
      %3763 = vst.msk [vmem:[%s720 + $0x169] sm:$0xff] %vm711, %v3731
      %3764 = vst.msk [vmem:[%s720 + $0x171] sm:$0xff] %vm711, %v3732
      %v3765 = vld [vmem:[#allocation2] sm:$0xff]
      %v3766 = vld [vmem:[#allocation2 + $0x8] sm:$0xff]
      %v3767 = vld [vmem:[#allocation2 + $0x18] sm:$0xff]
      %v3768 = vld [vmem:[#allocation2 + $0x20] sm:$0xff]
      %v3769 = vld [vmem:[#allocation2 + $0x30] sm:$0xff]
      %v3770 = vld [vmem:[#allocation2 + $0x38] sm:$0xff]
      %v3771 = vld [vmem:[#allocation2 + $0x48] sm:$0xff]
      %v3772 = vld [vmem:[#allocation2 + $0x50] sm:$0xff]
      %v3773 = vld [vmem:[#allocation2 + $0x60] sm:$0xff]
      %v3774 = vld [vmem:[#allocation2 + $0x68] sm:$0xff]
      %v3775 = vld [vmem:[#allocation2 + $0x78] sm:$0xff]
      %v3776 = vld [vmem:[#allocation2 + $0x80] sm:$0xff]
      %v3777 = vld [vmem:[#allocation2 + $0x90] sm:$0xff]
      %v3778 = vld [vmem:[#allocation2 + $0x98] sm:$0xff]
      %v3779 = vld [vmem:[#allocation2 + $0xa8] sm:$0xff]
      %v3780 = vld [vmem:[#allocation2 + $0xb0] sm:$0xff]
      %v3781 = vld [vmem:[#allocation2 + $0xc0] sm:$0xff]
      %v3782 = vld [vmem:[#allocation2 + $0xc8] sm:$0xff]
      %v3783 = vld [vmem:[#allocation2 + $0xd8] sm:$0xff]
      %v3784 = vld [vmem:[#allocation2 + $0xe0] sm:$0xff]
      %v3785 = vld [vmem:[#allocation2 + $0xf0] sm:$0xff]
      %v3786 = vld [vmem:[#allocation2 + $0xf8] sm:$0xff]
      %v3787 = vld [vmem:[#allocation2 + $0x108] sm:$0xff]
      %v3788 = vld [vmem:[#allocation2 + $0x110] sm:$0xff]
      %v3789 = vld [vmem:[#allocation2 + $0x120] sm:$0xff]
      %v3790 = vld [vmem:[#allocation2 + $0x128] sm:$0xff]
      %v3791 = vld [vmem:[#allocation2 + $0x138] sm:$0xff]
      %v3792 = vld [vmem:[#allocation2 + $0x140] sm:$0xff]
      %v3793 = vld [vmem:[#allocation2 + $0x150] sm:$0xff]
      %v3794 = vld [vmem:[#allocation2 + $0x158] sm:$0xff]
      %v3795 = vld [vmem:[#allocation2 + $0x168] sm:$0xff]
      %v3796 = vld [vmem:[#allocation2 + $0x170] sm:$0xff]
      %v3797 = vpack.c.bf16 %v3766, %v3765
      %v3798 = vpack.c.bf16 %v3768, %v3767
      %v3799 = vpack.c.bf16 %v3770, %v3769
      %v3800 = vpack.c.bf16 %v3772, %v3771
      %v3801 = vpack.c.bf16 %v3774, %v3773
      %v3802 = vpack.c.bf16 %v3776, %v3775
      %v3803 = vpack.c.bf16 %v3778, %v3777
      %v3804 = vpack.c.bf16 %v3780, %v3779
      %v3805 = vpack.c.bf16 %v3782, %v3781
      %v3806 = vpack.c.bf16 %v3784, %v3783
      %v3807 = vpack.c.bf16 %v3786, %v3785
      %v3808 = vpack.c.bf16 %v3788, %v3787
      %v3809 = vpack.c.bf16 %v3790, %v3789
      %v3810 = vpack.c.bf16 %v3792, %v3791
      %v3811 = vpack.c.bf16 %v3794, %v3793
      %v3812 = vpack.c.bf16 %v3796, %v3795
      %v3813 = vld [vmem:[%s5] sm:$0xf]
      %v3814 = vld [vmem:[%s5 + $0x4] sm:$0xf]
      %v3815 = vld [vmem:[%s5 + $0x8] sm:$0xf]
      %v3816 = vld [vmem:[%s5 + $0xc] sm:$0xf]
      %v3817 = vld [vmem:[%s5 + $0x10] sm:$0xf]
      %v3818 = vld [vmem:[%s5 + $0x14] sm:$0xf]
      %v3819 = vld [vmem:[%s5 + $0x18] sm:$0xf]
      %v3820 = vld [vmem:[%s5 + $0x1c] sm:$0xf]
      %v3821 = vld [vmem:[#allocation2 + $0x1] sm:$0xff]
      %v3822 = vld [vmem:[#allocation2 + $0x9] sm:$0xff]
      %v3823 = vld [vmem:[#allocation2 + $0x19] sm:$0xff]
      %v3824 = vld [vmem:[#allocation2 + $0x21] sm:$0xff]
      %v3825 = vld [vmem:[#allocation2 + $0x31] sm:$0xff]
      %v3826 = vld [vmem:[#allocation2 + $0x39] sm:$0xff]
      %v3827 = vld [vmem:[#allocation2 + $0x49] sm:$0xff]
      %v3828 = vld [vmem:[#allocation2 + $0x51] sm:$0xff]
      %v3829 = vld [vmem:[#allocation2 + $0x61] sm:$0xff]
      %v3830 = vld [vmem:[#allocation2 + $0x69] sm:$0xff]
      %v3831 = vld [vmem:[#allocation2 + $0x79] sm:$0xff]
      %v3832 = vld [vmem:[#allocation2 + $0x81] sm:$0xff]
      %v3833 = vld [vmem:[#allocation2 + $0x91] sm:$0xff]
      %v3834 = vld [vmem:[#allocation2 + $0x99] sm:$0xff]
      %v3835 = vld [vmem:[#allocation2 + $0xa9] sm:$0xff]
      %v3836 = vld [vmem:[#allocation2 + $0xb1] sm:$0xff]
      %v3837 = vld [vmem:[#allocation2 + $0xc1] sm:$0xff]
      %v3838 = vld [vmem:[#allocation2 + $0xc9] sm:$0xff]
      %v3839 = vld [vmem:[#allocation2 + $0xd9] sm:$0xff]
      %v3840 = vld [vmem:[#allocation2 + $0xe1] sm:$0xff]
      %v3841 = vld [vmem:[#allocation2 + $0xf1] sm:$0xff]
      %v3842 = vld [vmem:[#allocation2 + $0xf9] sm:$0xff]
      %v3843 = vld [vmem:[#allocation2 + $0x109] sm:$0xff]
      %v3844 = vld [vmem:[#allocation2 + $0x111] sm:$0xff]
      %v3845 = vld [vmem:[#allocation2 + $0x121] sm:$0xff]
      %v3846 = vld [vmem:[#allocation2 + $0x129] sm:$0xff]
      %v3847 = vld [vmem:[#allocation2 + $0x139] sm:$0xff]
      %v3848 = vld [vmem:[#allocation2 + $0x141] sm:$0xff]
      %v3849 = vld [vmem:[#allocation2 + $0x151] sm:$0xff]
      %v3850 = vld [vmem:[#allocation2 + $0x159] sm:$0xff]
      %v3851 = vld [vmem:[#allocation2 + $0x169] sm:$0xff]
      %v3852 = vld [vmem:[#allocation2 + $0x171] sm:$0xff]
      %v3853 = vpack.c.bf16 %v3822, %v3821
      %v3854 = vpack.c.bf16 %v3824, %v3823
      %v3855 = vpack.c.bf16 %v3826, %v3825
      %v3856 = vpack.c.bf16 %v3828, %v3827
      %v3857 = vpack.c.bf16 %v3830, %v3829
      %v3858 = vpack.c.bf16 %v3832, %v3831
      %v3859 = vpack.c.bf16 %v3834, %v3833
      %v3860 = vpack.c.bf16 %v3836, %v3835
      %v3861 = vpack.c.bf16 %v3838, %v3837
      %v3862 = vpack.c.bf16 %v3840, %v3839
      %v3863 = vpack.c.bf16 %v3842, %v3841
      %v3864 = vpack.c.bf16 %v3844, %v3843
      %v3865 = vpack.c.bf16 %v3846, %v3845
      %v3866 = vpack.c.bf16 %v3848, %v3847
      %v3867 = vpack.c.bf16 %v3850, %v3849
      %v3868 = vpack.c.bf16 %v3852, %v3851
      %s3869 = scalar_lea.vmem %s5, 32
      %v3870 = vld [vmem:[%s3869] sm:$0xf]
      %v3871 = vld [vmem:[%s3869 + $0x4] sm:$0xf]
      %v3872 = vld [vmem:[%s3869 + $0x8] sm:$0xf]
      %v3873 = vld [vmem:[%s3869 + $0xc] sm:$0xf]
      %v3874 = vld [vmem:[%s3869 + $0x10] sm:$0xf]
      %v3875 = vld [vmem:[%s3869 + $0x14] sm:$0xf]
      %v3876 = vld [vmem:[%s3869 + $0x18] sm:$0xf]
      %v3877 = vld [vmem:[%s3869 + $0x1c] sm:$0xf]
      %v3886 = vunpack.c.l.b16 %v3870
      %v3887 = vunpack.c.l.b16 %v3871
      %v3888 = vunpack.c.l.b16 %v3872
      %v3889 = vunpack.c.l.b16 %v3873
      %v3890 = vunpack.c.l.b16 %v3874
      %v3891 = vunpack.c.l.b16 %v3875
      %v3892 = vunpack.c.l.b16 %v3876
      %v3893 = vunpack.c.l.b16 %v3877
      %v3894 = vpack.c.b16 %v3887, %v3886
      %v3895 = vpack.c.b16 %v3889, %v3888
      %v3896 = vpack.c.b16 %v3891, %v3890
      %v3897 = vpack.c.b16 %v3893, %v3892
      %v3903 = vsel %vm711, %v3853, 0
      %v3906 = vsel %vm711, %v3854, 0
      %v3909 = vsel %vm711, %v3855, 0
      %v3912 = vsel %vm711, %v3856, 0
      %v3915 = vsel %vm711, %v3857, 0
      %v3918 = vsel %vm711, %v3858, 0
      %v3921 = vsel %vm711, %v3859, 0
      %v3924 = vsel %vm711, %v3860, 0
      %v3927 = vsel %vm711, %v3861, 0
      %v3930 = vsel %vm711, %v3862, 0
      %v3933 = vsel %vm711, %v3863, 0
      %v3936 = vsel %vm711, %v3864, 0
      %v3939 = vsel %vm711, %v3865, 0
      %v3942 = vsel %vm711, %v3866, 0
      %v3945 = vsel %vm711, %v3867, 0
      %v3948 = vsel %vm711, %v3868, 0
      %3950 = vmatprep.subr.bf16.mxu0 0
      %3951 = vmatpush1.bf16.msra.mxu0 %v3894
      %3952 = vmatprep.subr.bf16.mxu0 0
      %3953 = vmatpush1.bf16.msra.mxu0 %v3895
      %3954 = vmatprep.subr.bf16.mxu0 0
      %3955 = vmatpush1.bf16.msra.mxu0 %v3896
      %3956 = vmatprep.subr.bf16.mxu0 0
      %3957 = vmatpush1.bf16.msra.mxu0 %v3897
      %3958 = vmatprep.subr.bf16.mxu0 0
      %3959 = vmatpush1.bf16.msra.mxu0 0
      %3960 = vmatprep.subr.bf16.mxu0 0
      %3961 = vmatpush1.bf16.msra.mxu0 0
      %3962 = vmatprep.subr.bf16.mxu0 0
      %3963 = vmatpush1.bf16.msra.mxu0 0
      %3964 = vmatprep.subr.bf16.mxu0 0
      %3965 = vmatpush1.bf16.msra.mxu0 0
      %3966 = vmatprep.subr.bf16.mxu0 0
      %3967 = vmatpush1.bf16.msra.mxu0 0
      %3968 = vmatprep.subr.bf16.mxu0 0
      %3969 = vmatpush1.bf16.msra.mxu0 0
      %3970 = vmatprep.subr.bf16.mxu0 0
      %3971 = vmatpush1.bf16.msra.mxu0 0
      %3972 = vmatprep.subr.bf16.mxu0 0
      %3973 = vmatpush1.bf16.msra.mxu0 0
      %3974 = vmatprep.subr.bf16.mxu0 0
      %3975 = vmatpush1.bf16.msra.mxu0 0
      %3976 = vmatprep.subr.bf16.mxu0 0
      %3977 = vmatpush1.bf16.msra.mxu0 0
      %3978 = vmatprep.subr.bf16.mxu0 0
      %3979 = vmatpush1.bf16.msra.mxu0 0
      %3980 = vmatprep.subr.bf16.mxu0 0
      %3981 = vmatpush1.bf16.msra.mxu0 0
      %3982 = vmatprep.mubr.bf16.mxu0 0
      %3983 = vmatmul.mubr.bf16.gmra.mrb[0].mxu0 %v3903
      %v3984 = vpop.f32.mrb[0].mxu0
      %v3985 = vadd.f32 0.0, %v3984
      %v3986 = vpop.f32.mrb[0].mxu0
      %v3987 = vpop.f32.mrb[0].mxu0
      %v3988 = vadd.f32 0.0, %v3987
      %v3989 = vpop.f32.mrb[0].mxu0
      %3990 = vmatprep.mubr.bf16.mxu0 0
      %3991 = vmatmul.mubr.bf16.gmra.mrb[0].mxu0 %v3906
      %v3992 = vpop.f32.mrb[0].mxu0
      %v3993 = vadd.f32 0.0, %v3992
      %v3994 = vpop.f32.mrb[0].mxu0
      %v3995 = vpop.f32.mrb[0].mxu0
      %v3996 = vadd.f32 0.0, %v3995
      %v3997 = vpop.f32.mrb[0].mxu0
      %3998 = vmatprep.mubr.bf16.mxu0 0
      %3999 = vmatmul.mubr.bf16.gmra.mrb[0].mxu0 %v3909
      %v4000 = vpop.f32.mrb[0].mxu0
      %v4001 = vadd.f32 0.0, %v4000
      %v4002 = vpop.f32.mrb[0].mxu0
      %v4003 = vpop.f32.mrb[0].mxu0
      %v4004 = vadd.f32 0.0, %v4003
      %v4005 = vpop.f32.mrb[0].mxu0
      %4006 = vmatprep.mubr.bf16.mxu0 0
      %4007 = vmatmul.mubr.bf16.gmra.mrb[0].mxu0 %v3912
      %v4008 = vpop.f32.mrb[0].mxu0
      %v4009 = vadd.f32 0.0, %v4008
      %v4010 = vpop.f32.mrb[0].mxu0
      %v4011 = vpop.f32.mrb[0].mxu0
      %v4012 = vadd.f32 0.0, %v4011
      %v4013 = vpop.f32.mrb[0].mxu0
      %4014 = vmatprep.mubr.bf16.mxu0 0
      %4015 = vmatmul.mubr.bf16.gmra.mrb[0].mxu0 %v3915
      %v4016 = vpop.f32.mrb[0].mxu0
      %v4017 = vadd.f32 0.0, %v4016
      %v4018 = vpop.f32.mrb[0].mxu0
      %v4019 = vpop.f32.mrb[0].mxu0
      %v4020 = vadd.f32 0.0, %v4019
      %v4021 = vpop.f32.mrb[0].mxu0
      %4022 = vmatprep.mubr.bf16.mxu0 0
      %4023 = vmatmul.mubr.bf16.gmra.mrb[0].mxu0 %v3918
      %v4024 = vpop.f32.mrb[0].mxu0
      %v4025 = vadd.f32 0.0, %v4024
      %v4026 = vpop.f32.mrb[0].mxu0
      %v4027 = vpop.f32.mrb[0].mxu0
      %v4028 = vadd.f32 0.0, %v4027
      %v4029 = vpop.f32.mrb[0].mxu0
      %4030 = vmatprep.mubr.bf16.mxu0 0
      %4031 = vmatmul.mubr.bf16.gmra.mrb[0].mxu0 %v3921
      %v4032 = vpop.f32.mrb[0].mxu0
      %v4033 = vadd.f32 0.0, %v4032
      %v4034 = vpop.f32.mrb[0].mxu0
      %v4035 = vpop.f32.mrb[0].mxu0
      %v4036 = vadd.f32 0.0, %v4035
      %v4037 = vpop.f32.mrb[0].mxu0
      %4038 = vmatprep.mubr.bf16.mxu0 0
      %4039 = vmatmul.mubr.bf16.gmra.mrb[0].mxu0 %v3924
      %v4040 = vpop.f32.mrb[0].mxu0
      %v4041 = vadd.f32 0.0, %v4040
      %v4042 = vpop.f32.mrb[0].mxu0
      %v4043 = vpop.f32.mrb[0].mxu0
      %v4044 = vadd.f32 0.0, %v4043
      %v4045 = vpop.f32.mrb[0].mxu0
      %4046 = vmatprep.mubr.bf16.mxu0 0
      %4047 = vmatmul.mubr.bf16.gmra.mrb[0].mxu0 %v3927
      %v4048 = vpop.f32.mrb[0].mxu0
      %v4049 = vadd.f32 0.0, %v4048
      %v4050 = vpop.f32.mrb[0].mxu0
      %v4051 = vpop.f32.mrb[0].mxu0
      %v4052 = vadd.f32 0.0, %v4051
      %v4053 = vpop.f32.mrb[0].mxu0
      %4054 = vmatprep.mubr.bf16.mxu0 0
      %4055 = vmatmul.mubr.bf16.gmra.mrb[0].mxu0 %v3930
      %v4056 = vpop.f32.mrb[0].mxu0
      %v4057 = vadd.f32 0.0, %v4056
      %v4058 = vpop.f32.mrb[0].mxu0
      %v4059 = vpop.f32.mrb[0].mxu0
      %v4060 = vadd.f32 0.0, %v4059
      %v4061 = vpop.f32.mrb[0].mxu0
      %4062 = vmatprep.mubr.bf16.mxu0 0
      %4063 = vmatmul.mubr.bf16.gmra.mrb[0].mxu0 %v3933
      %v4064 = vpop.f32.mrb[0].mxu0
      %v4065 = vadd.f32 0.0, %v4064
      %v4066 = vpop.f32.mrb[0].mxu0
      %v4067 = vpop.f32.mrb[0].mxu0
      %v4068 = vadd.f32 0.0, %v4067
      %v4069 = vpop.f32.mrb[0].mxu0
      %4070 = vmatprep.mubr.bf16.mxu0 0
      %4071 = vmatmul.mubr.bf16.gmra.mrb[0].mxu0 %v3936
      %v4072 = vpop.f32.mrb[0].mxu0
      %v4073 = vadd.f32 0.0, %v4072
      %v4074 = vpop.f32.mrb[0].mxu0
      %v4075 = vpop.f32.mrb[0].mxu0
      %v4076 = vadd.f32 0.0, %v4075
      %v4077 = vpop.f32.mrb[0].mxu0
      %4078 = vmatprep.mubr.bf16.mxu0 0
      %4079 = vmatmul.mubr.bf16.gmra.mrb[0].mxu0 %v3939
      %v4080 = vpop.f32.mrb[0].mxu0
      %v4081 = vadd.f32 0.0, %v4080
      %v4082 = vpop.f32.mrb[0].mxu0
      %v4083 = vpop.f32.mrb[0].mxu0
      %v4084 = vadd.f32 0.0, %v4083
      %v4085 = vpop.f32.mrb[0].mxu0
      %4086 = vmatprep.mubr.bf16.mxu0 0
      %4087 = vmatmul.mubr.bf16.gmra.mrb[0].mxu0 %v3942
      %v4088 = vpop.f32.mrb[0].mxu0
      %v4089 = vadd.f32 0.0, %v4088
      %v4090 = vpop.f32.mrb[0].mxu0
      %v4091 = vpop.f32.mrb[0].mxu0
      %v4092 = vadd.f32 0.0, %v4091
      %v4093 = vpop.f32.mrb[0].mxu0
      %4094 = vmatprep.mubr.bf16.mxu0 0
      %4095 = vmatmul.mubr.bf16.gmra.mrb[0].mxu0 %v3945
      %v4096 = vpop.f32.mrb[0].mxu0
      %v4097 = vadd.f32 0.0, %v4096
      %v4098 = vpop.f32.mrb[0].mxu0
      %v4099 = vpop.f32.mrb[0].mxu0
      %v4100 = vadd.f32 0.0, %v4099
      %v4101 = vpop.f32.mrb[0].mxu0
      %4102 = vmatprep.mubr.bf16.mxu0 0
      %4103 = vmatmul.mubr.bf16.gmra.mrb[0].mxu0 %v3948
      %v4104 = vpop.f32.mrb[0].mxu0
      %v4105 = vadd.f32 0.0, %v4104
      %v4106 = vpop.f32.mrb[0].mxu0
      %v4107 = vpop.f32.mrb[0].mxu0
      %v4108 = vadd.f32 0.0, %v4107
      %v4109 = vpop.f32.mrb[0].mxu0
      %4110 = vdwg.mxu0
      %v4119 = vunpack.c.l.b16 %v3813
      %v4120 = vunpack.c.l.b16 %v3814
      %v4121 = vunpack.c.l.b16 %v3815
      %v4122 = vunpack.c.l.b16 %v3816
      %v4123 = vunpack.c.l.b16 %v3817
      %v4124 = vunpack.c.l.b16 %v3818
      %v4125 = vunpack.c.l.b16 %v3819
      %v4126 = vunpack.c.l.b16 %v3820
      %v4127 = vpack.c.b16 %v4120, %v4119
      %v4128 = vpack.c.b16 %v4122, %v4121
      %v4129 = vpack.c.b16 %v4124, %v4123
      %v4130 = vpack.c.b16 %v4126, %v4125
      %v4136 = vsel %vm711, %v3797, 0
      %v4139 = vsel %vm711, %v3798, 0
      %v4142 = vsel %vm711, %v3799, 0
      %v4145 = vsel %vm711, %v3800, 0
      %v4148 = vsel %vm711, %v3801, 0
      %v4151 = vsel %vm711, %v3802, 0
      %v4154 = vsel %vm711, %v3803, 0
      %v4157 = vsel %vm711, %v3804, 0
      %v4160 = vsel %vm711, %v3805, 0
      %v4163 = vsel %vm711, %v3806, 0
      %v4166 = vsel %vm711, %v3807, 0
      %v4169 = vsel %vm711, %v3808, 0
      %v4172 = vsel %vm711, %v3809, 0
      %v4175 = vsel %vm711, %v3810, 0
      %v4178 = vsel %vm711, %v3811, 0
      %v4181 = vsel %vm711, %v3812, 0
      %4183 = vmatprep.subr.bf16.mxu0 0
      %4184 = vmatpush1.bf16.msra.mxu0 %v4127
      %4185 = vmatprep.subr.bf16.mxu0 0
      %4186 = vmatpush1.bf16.msra.mxu0 %v4128
      %4187 = vmatprep.subr.bf16.mxu0 0
      %4188 = vmatpush1.bf16.msra.mxu0 %v4129
      %4189 = vmatprep.subr.bf16.mxu0 0
      %4190 = vmatpush1.bf16.msra.mxu0 %v4130
      %4191 = vmatprep.subr.bf16.mxu0 0
      %4192 = vmatpush1.bf16.msra.mxu0 0
      %4193 = vmatprep.subr.bf16.mxu0 0
      %4194 = vmatpush1.bf16.msra.mxu0 0
      %4195 = vmatprep.subr.bf16.mxu0 0
      %4196 = vmatpush1.bf16.msra.mxu0 0
      %4197 = vmatprep.subr.bf16.mxu0 0
      %4198 = vmatpush1.bf16.msra.mxu0 0
      %4199 = vmatprep.subr.bf16.mxu0 0
      %4200 = vmatpush1.bf16.msra.mxu0 0
      %4201 = vmatprep.subr.bf16.mxu0 0
      %4202 = vmatpush1.bf16.msra.mxu0 0
      %4203 = vmatprep.subr.bf16.mxu0 0
      %4204 = vmatpush1.bf16.msra.mxu0 0
      %4205 = vmatprep.subr.bf16.mxu0 0
      %4206 = vmatpush1.bf16.msra.mxu0 0
      %4207 = vmatprep.subr.bf16.mxu0 0
      %4208 = vmatpush1.bf16.msra.mxu0 0
      %4209 = vmatprep.subr.bf16.mxu0 0
      %4210 = vmatpush1.bf16.msra.mxu0 0
      %4211 = vmatprep.subr.bf16.mxu0 0
      %4212 = vmatpush1.bf16.msra.mxu0 0
      %4213 = vmatprep.subr.bf16.mxu0 0
      %4214 = vmatpush1.bf16.msra.mxu0 0
      %4215 = vmatprep.mubr.bf16.mxu0 0
      %4216 = vmatmul.mubr.bf16.gmra.mrb[0].mxu0 %v4136
      %v4217 = vpop.f32.mrb[0].mxu0
      %v4218 = vadd.f32 %v3985, %v4217
      %v4219 = vpop.f32.mrb[0].mxu0
      %v4220 = vpop.f32.mrb[0].mxu0
      %v4221 = vadd.f32 %v3988, %v4220
      %v4222 = vpop.f32.mrb[0].mxu0
      %4223 = vmatprep.mubr.bf16.mxu0 0
      %4224 = vmatmul.mubr.bf16.gmra.mrb[0].mxu0 %v4139
      %v4225 = vpop.f32.mrb[0].mxu0
      %v4226 = vadd.f32 %v3993, %v4225
      %v4227 = vpop.f32.mrb[0].mxu0
      %v4228 = vpop.f32.mrb[0].mxu0
      %v4229 = vadd.f32 %v3996, %v4228
      %v4230 = vpop.f32.mrb[0].mxu0
      %4231 = vmatprep.mubr.bf16.mxu0 0
      %4232 = vmatmul.mubr.bf16.gmra.mrb[0].mxu0 %v4142
      %v4233 = vpop.f32.mrb[0].mxu0
      %v4234 = vadd.f32 %v4001, %v4233
      %v4235 = vpop.f32.mrb[0].mxu0
      %v4236 = vpop.f32.mrb[0].mxu0
      %v4237 = vadd.f32 %v4004, %v4236
      %v4238 = vpop.f32.mrb[0].mxu0
      %4239 = vmatprep.mubr.bf16.mxu0 0
      %4240 = vmatmul.mubr.bf16.gmra.mrb[0].mxu0 %v4145
      %v4241 = vpop.f32.mrb[0].mxu0
      %v4242 = vadd.f32 %v4009, %v4241
      %v4243 = vpop.f32.mrb[0].mxu0
      %v4244 = vpop.f32.mrb[0].mxu0
      %v4245 = vadd.f32 %v4012, %v4244
      %v4246 = vpop.f32.mrb[0].mxu0
      %4247 = vmatprep.mubr.bf16.mxu0 0
      %4248 = vmatmul.mubr.bf16.gmra.mrb[0].mxu0 %v4148
      %v4249 = vpop.f32.mrb[0].mxu0
      %v4250 = vadd.f32 %v4017, %v4249
      %v4251 = vpop.f32.mrb[0].mxu0
      %v4252 = vpop.f32.mrb[0].mxu0
      %v4253 = vadd.f32 %v4020, %v4252
      %v4254 = vpop.f32.mrb[0].mxu0
      %4255 = vmatprep.mubr.bf16.mxu0 0
      %4256 = vmatmul.mubr.bf16.gmra.mrb[0].mxu0 %v4151
      %v4257 = vpop.f32.mrb[0].mxu0
      %v4258 = vadd.f32 %v4025, %v4257
      %v4259 = vpop.f32.mrb[0].mxu0
      %v4260 = vpop.f32.mrb[0].mxu0
      %v4261 = vadd.f32 %v4028, %v4260
      %v4262 = vpop.f32.mrb[0].mxu0
      %4263 = vmatprep.mubr.bf16.mxu0 0
      %4264 = vmatmul.mubr.bf16.gmra.mrb[0].mxu0 %v4154
      %v4265 = vpop.f32.mrb[0].mxu0
      %v4266 = vadd.f32 %v4033, %v4265
      %v4267 = vpop.f32.mrb[0].mxu0
      %v4268 = vpop.f32.mrb[0].mxu0
      %v4269 = vadd.f32 %v4036, %v4268
      %v4270 = vpop.f32.mrb[0].mxu0
      %4271 = vmatprep.mubr.bf16.mxu0 0
      %4272 = vmatmul.mubr.bf16.gmra.mrb[0].mxu0 %v4157
      %v4273 = vpop.f32.mrb[0].mxu0
      %v4274 = vadd.f32 %v4041, %v4273
      %v4275 = vpop.f32.mrb[0].mxu0
      %v4276 = vpop.f32.mrb[0].mxu0
      %v4277 = vadd.f32 %v4044, %v4276
      %v4278 = vpop.f32.mrb[0].mxu0
      %4279 = vmatprep.mubr.bf16.mxu0 0
      %4280 = vmatmul.mubr.bf16.gmra.mrb[0].mxu0 %v4160
      %v4281 = vpop.f32.mrb[0].mxu0
      %v4282 = vadd.f32 %v4049, %v4281
      %v4283 = vpop.f32.mrb[0].mxu0
      %v4284 = vpop.f32.mrb[0].mxu0
      %v4285 = vadd.f32 %v4052, %v4284
      %v4286 = vpop.f32.mrb[0].mxu0
      %4287 = vmatprep.mubr.bf16.mxu0 0
      %4288 = vmatmul.mubr.bf16.gmra.mrb[0].mxu0 %v4163
      %v4289 = vpop.f32.mrb[0].mxu0
      %v4290 = vadd.f32 %v4057, %v4289
      %v4291 = vpop.f32.mrb[0].mxu0
      %v4292 = vpop.f32.mrb[0].mxu0
      %v4293 = vadd.f32 %v4060, %v4292
      %v4294 = vpop.f32.mrb[0].mxu0
      %4295 = vmatprep.mubr.bf16.mxu0 0
      %4296 = vmatmul.mubr.bf16.gmra.mrb[0].mxu0 %v4166
      %v4297 = vpop.f32.mrb[0].mxu0
      %v4298 = vadd.f32 %v4065, %v4297
      %v4299 = vpop.f32.mrb[0].mxu0
      %v4300 = vpop.f32.mrb[0].mxu0
      %v4301 = vadd.f32 %v4068, %v4300
      %v4302 = vpop.f32.mrb[0].mxu0
      %4303 = vmatprep.mubr.bf16.mxu0 0
      %4304 = vmatmul.mubr.bf16.gmra.mrb[0].mxu0 %v4169
      %v4305 = vpop.f32.mrb[0].mxu0
      %v4306 = vadd.f32 %v4073, %v4305
      %v4307 = vpop.f32.mrb[0].mxu0
      %v4308 = vpop.f32.mrb[0].mxu0
      %v4309 = vadd.f32 %v4076, %v4308
      %v4310 = vpop.f32.mrb[0].mxu0
      %4311 = vmatprep.mubr.bf16.mxu0 0
      %4312 = vmatmul.mubr.bf16.gmra.mrb[0].mxu0 %v4172
      %v4313 = vpop.f32.mrb[0].mxu0
      %v4314 = vadd.f32 %v4081, %v4313
      %v4315 = vpop.f32.mrb[0].mxu0
      %v4316 = vpop.f32.mrb[0].mxu0
      %v4317 = vadd.f32 %v4084, %v4316
      %v4318 = vpop.f32.mrb[0].mxu0
      %4319 = vmatprep.mubr.bf16.mxu0 0
      %4320 = vmatmul.mubr.bf16.gmra.mrb[0].mxu0 %v4175
      %v4321 = vpop.f32.mrb[0].mxu0
      %v4322 = vadd.f32 %v4089, %v4321
      %v4323 = vpop.f32.mrb[0].mxu0
      %v4324 = vpop.f32.mrb[0].mxu0
      %v4325 = vadd.f32 %v4092, %v4324
      %v4326 = vpop.f32.mrb[0].mxu0
      %4327 = vmatprep.mubr.bf16.mxu0 0
      %4328 = vmatmul.mubr.bf16.gmra.mrb[0].mxu0 %v4178
      %v4329 = vpop.f32.mrb[0].mxu0
      %v4330 = vadd.f32 %v4097, %v4329
      %v4331 = vpop.f32.mrb[0].mxu0
      %v4332 = vpop.f32.mrb[0].mxu0
      %v4333 = vadd.f32 %v4100, %v4332
      %v4334 = vpop.f32.mrb[0].mxu0
      %4335 = vmatprep.mubr.bf16.mxu0 0
      %4336 = vmatmul.mubr.bf16.gmra.mrb[0].mxu0 %v4181
      %v4337 = vpop.f32.mrb[0].mxu0
      %v4338 = vadd.f32 %v4105, %v4337
      %v4339 = vpop.f32.mrb[0].mxu0
      %v4340 = vpop.f32.mrb[0].mxu0
      %v4341 = vadd.f32 %v4108, %v4340
      %v4342 = vpop.f32.mrb[0].mxu0
      %4343 = vdwg.mxu0
      %v4344 = vld [vmem:[#allocation2 + $0x2] sm:$0xff]
      %v4345 = vld [vmem:[#allocation2 + $0xa] sm:$0xff]
      %v4346 = vld [vmem:[#allocation2 + $0x1a] sm:$0xff]
      %v4347 = vld [vmem:[#allocation2 + $0x22] sm:$0xff]
      %v4348 = vld [vmem:[#allocation2 + $0x32] sm:$0xff]
      %v4349 = vld [vmem:[#allocation2 + $0x3a] sm:$0xff]
      %v4350 = vld [vmem:[#allocation2 + $0x4a] sm:$0xff]
      %v4351 = vld [vmem:[#allocation2 + $0x52] sm:$0xff]
      %v4352 = vld [vmem:[#allocation2 + $0x62] sm:$0xff]
      %v4353 = vld [vmem:[#allocation2 + $0x6a] sm:$0xff]
      %v4354 = vld [vmem:[#allocation2 + $0x7a] sm:$0xff]
      %v4355 = vld [vmem:[#allocation2 + $0x82] sm:$0xff]
      %v4356 = vld [vmem:[#allocation2 + $0x92] sm:$0xff]
      %v4357 = vld [vmem:[#allocation2 + $0x9a] sm:$0xff]
      %v4358 = vld [vmem:[#allocation2 + $0xaa] sm:$0xff]
      %v4359 = vld [vmem:[#allocation2 + $0xb2] sm:$0xff]
      %v4360 = vld [vmem:[#allocation2 + $0xc2] sm:$0xff]
      %v4361 = vld [vmem:[#allocation2 + $0xca] sm:$0xff]
      %v4362 = vld [vmem:[#allocation2 + $0xda] sm:$0xff]
      %v4363 = vld [vmem:[#allocation2 + $0xe2] sm:$0xff]
      %v4364 = vld [vmem:[#allocation2 + $0xf2] sm:$0xff]
      %v4365 = vld [vmem:[#allocation2 + $0xfa] sm:$0xff]
      %v4366 = vld [vmem:[#allocation2 + $0x10a] sm:$0xff]
      %v4367 = vld [vmem:[#allocation2 + $0x112] sm:$0xff]
      %v4368 = vld [vmem:[#allocation2 + $0x122] sm:$0xff]
      %v4369 = vld [vmem:[#allocation2 + $0x12a] sm:$0xff]
      %v4370 = vld [vmem:[#allocation2 + $0x13a] sm:$0xff]
      %v4371 = vld [vmem:[#allocation2 + $0x142] sm:$0xff]
      %v4372 = vld [vmem:[#allocation2 + $0x152] sm:$0xff]
      %v4373 = vld [vmem:[#allocation2 + $0x15a] sm:$0xff]
      %v4374 = vld [vmem:[#allocation2 + $0x16a] sm:$0xff]
      %v4375 = vld [vmem:[#allocation2 + $0x172] sm:$0xff]
      %v4376 = vpack.c.bf16 %v4345, %v4344
      %v4377 = vpack.c.bf16 %v4347, %v4346
      %v4378 = vpack.c.bf16 %v4349, %v4348
      %v4379 = vpack.c.bf16 %v4351, %v4350
      %v4380 = vpack.c.bf16 %v4353, %v4352
      %v4381 = vpack.c.bf16 %v4355, %v4354
      %v4382 = vpack.c.bf16 %v4357, %v4356
      %v4383 = vpack.c.bf16 %v4359, %v4358
      %v4384 = vpack.c.bf16 %v4361, %v4360
      %v4385 = vpack.c.bf16 %v4363, %v4362
      %v4386 = vpack.c.bf16 %v4365, %v4364
      %v4387 = vpack.c.bf16 %v4367, %v4366
      %v4388 = vpack.c.bf16 %v4369, %v4368
      %v4389 = vpack.c.bf16 %v4371, %v4370
      %v4390 = vpack.c.bf16 %v4373, %v4372
      %v4391 = vpack.c.bf16 %v4375, %v4374
      %s4392 = scalar_lea.vmem %s5, 64
      %v4393 = vld [vmem:[%s4392] sm:$0xf]
      %v4394 = vld [vmem:[%s4392 + $0x4] sm:$0xf]
      %v4395 = vld [vmem:[%s4392 + $0x8] sm:$0xf]
      %v4396 = vld [vmem:[%s4392 + $0xc] sm:$0xf]
      %v4397 = vld [vmem:[%s4392 + $0x10] sm:$0xf]
      %v4398 = vld [vmem:[%s4392 + $0x14] sm:$0xf]
      %v4399 = vld [vmem:[%s4392 + $0x18] sm:$0xf]
      %v4400 = vld [vmem:[%s4392 + $0x1c] sm:$0xf]
      %v4409 = vunpack.c.l.b16 %v4393
      %v4410 = vunpack.c.l.b16 %v4394
      %v4411 = vunpack.c.l.b16 %v4395
      %v4412 = vunpack.c.l.b16 %v4396
      %v4413 = vunpack.c.l.b16 %v4397
      %v4414 = vunpack.c.l.b16 %v4398
      %v4415 = vunpack.c.l.b16 %v4399
      %v4416 = vunpack.c.l.b16 %v4400
      %v4417 = vpack.c.b16 %v4410, %v4409
      %v4418 = vpack.c.b16 %v4412, %v4411
      %v4419 = vpack.c.b16 %v4414, %v4413
      %v4420 = vpack.c.b16 %v4416, %v4415
      %v4426 = vsel %vm711, %v4376, 0
      %v4429 = vsel %vm711, %v4377, 0
      %v4432 = vsel %vm711, %v4378, 0
      %v4435 = vsel %vm711, %v4379, 0
      %v4438 = vsel %vm711, %v4380, 0
      %v4441 = vsel %vm711, %v4381, 0
      %v4444 = vsel %vm711, %v4382, 0
      %v4447 = vsel %vm711, %v4383, 0
      %v4450 = vsel %vm711, %v4384, 0
      %v4453 = vsel %vm711, %v4385, 0
      %v4456 = vsel %vm711, %v4386, 0
      %v4459 = vsel %vm711, %v4387, 0
      %v4462 = vsel %vm711, %v4388, 0
      %v4465 = vsel %vm711, %v4389, 0
      %v4468 = vsel %vm711, %v4390, 0
      %v4471 = vsel %vm711, %v4391, 0
      %4473 = vmatprep.subr.bf16.mxu0 0
      %4474 = vmatpush1.bf16.msra.mxu0 %v4417
      %4475 = vmatprep.subr.bf16.mxu0 0
      %4476 = vmatpush1.bf16.msra.mxu0 %v4418
      %4477 = vmatprep.subr.bf16.mxu0 0
      %4478 = vmatpush1.bf16.msra.mxu0 %v4419
      %4479 = vmatprep.subr.bf16.mxu0 0
      %4480 = vmatpush1.bf16.msra.mxu0 %v4420
      %4481 = vmatprep.subr.bf16.mxu0 0
      %4482 = vmatpush1.bf16.msra.mxu0 0
      %4483 = vmatprep.subr.bf16.mxu0 0
      %4484 = vmatpush1.bf16.msra.mxu0 0
      %4485 = vmatprep.subr.bf16.mxu0 0
      %4486 = vmatpush1.bf16.msra.mxu0 0
      %4487 = vmatprep.subr.bf16.mxu0 0
      %4488 = vmatpush1.bf16.msra.mxu0 0
      %4489 = vmatprep.subr.bf16.mxu0 0
      %4490 = vmatpush1.bf16.msra.mxu0 0
      %4491 = vmatprep.subr.bf16.mxu0 0
      %4492 = vmatpush1.bf16.msra.mxu0 0
      %4493 = vmatprep.subr.bf16.mxu0 0
      %4494 = vmatpush1.bf16.msra.mxu0 0
      %4495 = vmatprep.subr.bf16.mxu0 0
      %4496 = vmatpush1.bf16.msra.mxu0 0
      %4497 = vmatprep.subr.bf16.mxu0 0
      %4498 = vmatpush1.bf16.msra.mxu0 0
      %4499 = vmatprep.subr.bf16.mxu0 0
      %4500 = vmatpush1.bf16.msra.mxu0 0
      %4501 = vmatprep.subr.bf16.mxu0 0
      %4502 = vmatpush1.bf16.msra.mxu0 0
      %4503 = vmatprep.subr.bf16.mxu0 0
      %4504 = vmatpush1.bf16.msra.mxu0 0
      %4505 = vmatprep.mubr.bf16.mxu0 0
      %4506 = vmatmul.mubr.bf16.gmra.mrb[0].mxu0 %v4426
      %v4507 = vpop.f32.mrb[0].mxu0
      %v4508 = vadd.f32 0.0, %v4507
      %v4509 = vpop.f32.mrb[0].mxu0
      %v4510 = vpop.f32.mrb[0].mxu0
      %v4511 = vadd.f32 0.0, %v4510
      %v4512 = vpop.f32.mrb[0].mxu0
      %4513 = vmatprep.mubr.bf16.mxu0 0
      %4514 = vmatmul.mubr.bf16.gmra.mrb[0].mxu0 %v4429
      %v4515 = vpop.f32.mrb[0].mxu0
      %v4516 = vadd.f32 0.0, %v4515
      %v4517 = vpop.f32.mrb[0].mxu0
      %v4518 = vpop.f32.mrb[0].mxu0
      %v4519 = vadd.f32 0.0, %v4518
      %v4520 = vpop.f32.mrb[0].mxu0
      %4521 = vmatprep.mubr.bf16.mxu0 0
      %4522 = vmatmul.mubr.bf16.gmra.mrb[0].mxu0 %v4432
      %v4523 = vpop.f32.mrb[0].mxu0
      %v4524 = vadd.f32 0.0, %v4523
      %v4525 = vpop.f32.mrb[0].mxu0
      %v4526 = vpop.f32.mrb[0].mxu0
      %v4527 = vadd.f32 0.0, %v4526
      %v4528 = vpop.f32.mrb[0].mxu0
      %4529 = vmatprep.mubr.bf16.mxu0 0
      %4530 = vmatmul.mubr.bf16.gmra.mrb[0].mxu0 %v4435
      %v4531 = vpop.f32.mrb[0].mxu0
      %v4532 = vadd.f32 0.0, %v4531
      %v4533 = vpop.f32.mrb[0].mxu0
      %v4534 = vpop.f32.mrb[0].mxu0
      %v4535 = vadd.f32 0.0, %v4534
      %v4536 = vpop.f32.mrb[0].mxu0
      %4537 = vmatprep.mubr.bf16.mxu0 0
      %4538 = vmatmul.mubr.bf16.gmra.mrb[0].mxu0 %v4438
      %v4539 = vpop.f32.mrb[0].mxu0
      %v4540 = vadd.f32 0.0, %v4539
      %v4541 = vpop.f32.mrb[0].mxu0
      %v4542 = vpop.f32.mrb[0].mxu0
      %v4543 = vadd.f32 0.0, %v4542
      %v4544 = vpop.f32.mrb[0].mxu0
      %4545 = vmatprep.mubr.bf16.mxu0 0
      %4546 = vmatmul.mubr.bf16.gmra.mrb[0].mxu0 %v4441
      %v4547 = vpop.f32.mrb[0].mxu0
      %v4548 = vadd.f32 0.0, %v4547
      %v4549 = vpop.f32.mrb[0].mxu0
      %v4550 = vpop.f32.mrb[0].mxu0
      %v4551 = vadd.f32 0.0, %v4550
      %v4552 = vpop.f32.mrb[0].mxu0
      %4553 = vmatprep.mubr.bf16.mxu0 0
      %4554 = vmatmul.mubr.bf16.gmra.mrb[0].mxu0 %v4444
      %v4555 = vpop.f32.mrb[0].mxu0
      %v4556 = vadd.f32 0.0, %v4555
      %v4557 = vpop.f32.mrb[0].mxu0
      %v4558 = vpop.f32.mrb[0].mxu0
      %v4559 = vadd.f32 0.0, %v4558
      %v4560 = vpop.f32.mrb[0].mxu0
      %4561 = vmatprep.mubr.bf16.mxu0 0
      %4562 = vmatmul.mubr.bf16.gmra.mrb[0].mxu0 %v4447
      %v4563 = vpop.f32.mrb[0].mxu0
      %v4564 = vadd.f32 0.0, %v4563
      %v4565 = vpop.f32.mrb[0].mxu0
      %v4566 = vpop.f32.mrb[0].mxu0
      %v4567 = vadd.f32 0.0, %v4566
      %v4568 = vpop.f32.mrb[0].mxu0
      %4569 = vmatprep.mubr.bf16.mxu0 0
      %4570 = vmatmul.mubr.bf16.gmra.mrb[0].mxu0 %v4450
      %v4571 = vpop.f32.mrb[0].mxu0
      %v4572 = vadd.f32 0.0, %v4571
      %v4573 = vpop.f32.mrb[0].mxu0
      %v4574 = vpop.f32.mrb[0].mxu0
      %v4575 = vadd.f32 0.0, %v4574
      %v4576 = vpop.f32.mrb[0].mxu0
      %4577 = vmatprep.mubr.bf16.mxu0 0
      %4578 = vmatmul.mubr.bf16.gmra.mrb[0].mxu0 %v4453
      %v4579 = vpop.f32.mrb[0].mxu0
      %v4580 = vadd.f32 0.0, %v4579
      %v4581 = vpop.f32.mrb[0].mxu0
      %v4582 = vpop.f32.mrb[0].mxu0
      %v4583 = vadd.f32 0.0, %v4582
      %v4584 = vpop.f32.mrb[0].mxu0
      %4585 = vmatprep.mubr.bf16.mxu0 0
      %4586 = vmatmul.mubr.bf16.gmra.mrb[0].mxu0 %v4456
      %v4587 = vpop.f32.mrb[0].mxu0
      %v4588 = vadd.f32 0.0, %v4587
      %v4589 = vpop.f32.mrb[0].mxu0
      %v4590 = vpop.f32.mrb[0].mxu0
      %v4591 = vadd.f32 0.0, %v4590
      %v4592 = vpop.f32.mrb[0].mxu0
      %4593 = vmatprep.mubr.bf16.mxu0 0
      %4594 = vmatmul.mubr.bf16.gmra.mrb[0].mxu0 %v4459
      %v4595 = vpop.f32.mrb[0].mxu0
      %v4596 = vadd.f32 0.0, %v4595
      %v4597 = vpop.f32.mrb[0].mxu0
      %v4598 = vpop.f32.mrb[0].mxu0
      %v4599 = vadd.f32 0.0, %v4598
      %v4600 = vpop.f32.mrb[0].mxu0
      %4601 = vmatprep.mubr.bf16.mxu0 0
      %4602 = vmatmul.mubr.bf16.gmra.mrb[0].mxu0 %v4462
      %v4603 = vpop.f32.mrb[0].mxu0
      %v4604 = vadd.f32 0.0, %v4603
      %v4605 = vpop.f32.mrb[0].mxu0
      %v4606 = vpop.f32.mrb[0].mxu0
      %v4607 = vadd.f32 0.0, %v4606
      %v4608 = vpop.f32.mrb[0].mxu0
      %4609 = vmatprep.mubr.bf16.mxu0 0
      %4610 = vmatmul.mubr.bf16.gmra.mrb[0].mxu0 %v4465
      %v4611 = vpop.f32.mrb[0].mxu0
      %v4612 = vadd.f32 0.0, %v4611
      %v4613 = vpop.f32.mrb[0].mxu0
      %v4614 = vpop.f32.mrb[0].mxu0
      %v4615 = vadd.f32 0.0, %v4614
      %v4616 = vpop.f32.mrb[0].mxu0
      %4617 = vmatprep.mubr.bf16.mxu0 0
      %4618 = vmatmul.mubr.bf16.gmra.mrb[0].mxu0 %v4468
      %v4619 = vpop.f32.mrb[0].mxu0
      %v4620 = vadd.f32 0.0, %v4619
      %v4621 = vpop.f32.mrb[0].mxu0
      %v4622 = vpop.f32.mrb[0].mxu0
      %v4623 = vadd.f32 0.0, %v4622
      %v4624 = vpop.f32.mrb[0].mxu0
      %4625 = vmatprep.mubr.bf16.mxu0 0
      %4626 = vmatmul.mubr.bf16.gmra.mrb[0].mxu0 %v4471
      %v4627 = vpop.f32.mrb[0].mxu0
      %v4628 = vadd.f32 0.0, %v4627
      %v4629 = vpop.f32.mrb[0].mxu0
      %v4630 = vpop.f32.mrb[0].mxu0
      %v4631 = vadd.f32 0.0, %v4630
      %v4632 = vpop.f32.mrb[0].mxu0
      %4633 = vdwg.mxu0
      %v4634 = vadd.f32 %v4218, %v4508
      %v4635 = vadd.f32 %v4221, %v4511
      %v4636 = vadd.f32 %v4226, %v4516
      %v4637 = vadd.f32 %v4229, %v4519
      %v4638 = vadd.f32 %v4234, %v4524
      %v4639 = vadd.f32 %v4237, %v4527
      %v4640 = vadd.f32 %v4242, %v4532
      %v4641 = vadd.f32 %v4245, %v4535
      %v4642 = vadd.f32 %v4250, %v4540
      %v4643 = vadd.f32 %v4253, %v4543
      %v4644 = vadd.f32 %v4258, %v4548
      %v4645 = vadd.f32 %v4261, %v4551
      %v4646 = vadd.f32 %v4266, %v4556
      %v4647 = vadd.f32 %v4269, %v4559
      %v4648 = vadd.f32 %v4274, %v4564
      %v4649 = vadd.f32 %v4277, %v4567
      %v4650 = vadd.f32 %v4282, %v4572
      %v4651 = vadd.f32 %v4285, %v4575
      %v4652 = vadd.f32 %v4290, %v4580
      %v4653 = vadd.f32 %v4293, %v4583
      %v4654 = vadd.f32 %v4298, %v4588
      %v4655 = vadd.f32 %v4301, %v4591
      %v4656 = vadd.f32 %v4306, %v4596
      %v4657 = vadd.f32 %v4309, %v4599
      %v4658 = vadd.f32 %v4314, %v4604
      %v4659 = vadd.f32 %v4317, %v4607
      %v4660 = vadd.f32 %v4322, %v4612
      %v4661 = vadd.f32 %v4325, %v4615
      %v4662 = vadd.f32 %v4330, %v4620
      %v4663 = vadd.f32 %v4333, %v4623
      %v4664 = vadd.f32 %v4338, %v4628
      %v4665 = vadd.f32 %v4341, %v4631
      %v4666 = vld [vmem:[%s720] sm:$0xff]
      %v4667 = vld [vmem:[%s720 + $0x8] sm:$0xff]
      %v4668 = vld [vmem:[%s720 + $0x18] sm:$0xff]
      %v4669 = vld [vmem:[%s720 + $0x20] sm:$0xff]
      %v4670 = vld [vmem:[%s720 + $0x30] sm:$0xff]
      %v4671 = vld [vmem:[%s720 + $0x38] sm:$0xff]
      %v4672 = vld [vmem:[%s720 + $0x48] sm:$0xff]
      %v4673 = vld [vmem:[%s720 + $0x50] sm:$0xff]
      %v4674 = vld [vmem:[%s720 + $0x60] sm:$0xff]
      %v4675 = vld [vmem:[%s720 + $0x68] sm:$0xff]
      %v4676 = vld [vmem:[%s720 + $0x78] sm:$0xff]
      %v4677 = vld [vmem:[%s720 + $0x80] sm:$0xff]
      %v4678 = vld [vmem:[%s720 + $0x90] sm:$0xff]
      %v4679 = vld [vmem:[%s720 + $0x98] sm:$0xff]
      %v4680 = vld [vmem:[%s720 + $0xa8] sm:$0xff]
      %v4681 = vld [vmem:[%s720 + $0xb0] sm:$0xff]
      %v4682 = vld [vmem:[%s720 + $0xc0] sm:$0xff]
      %v4683 = vld [vmem:[%s720 + $0xc8] sm:$0xff]
      %v4684 = vld [vmem:[%s720 + $0xd8] sm:$0xff]
      %v4685 = vld [vmem:[%s720 + $0xe0] sm:$0xff]
      %v4686 = vld [vmem:[%s720 + $0xf0] sm:$0xff]
      %v4687 = vld [vmem:[%s720 + $0xf8] sm:$0xff]
      %v4688 = vld [vmem:[%s720 + $0x108] sm:$0xff]
      %v4689 = vld [vmem:[%s720 + $0x110] sm:$0xff]
      %v4690 = vld [vmem:[%s720 + $0x120] sm:$0xff]
      %v4691 = vld [vmem:[%s720 + $0x128] sm:$0xff]
      %v4692 = vld [vmem:[%s720 + $0x138] sm:$0xff]
      %v4693 = vld [vmem:[%s720 + $0x140] sm:$0xff]
      %v4694 = vld [vmem:[%s720 + $0x150] sm:$0xff]
      %v4695 = vld [vmem:[%s720 + $0x158] sm:$0xff]
      %v4696 = vld [vmem:[%s720 + $0x168] sm:$0xff]
      %v4697 = vld [vmem:[%s720 + $0x170] sm:$0xff]
      %v4698 = vpack.c.bf16 %v4667, %v4666
      %v4699 = vpack.c.bf16 %v4669, %v4668
      %v4700 = vpack.c.bf16 %v4671, %v4670
      %v4701 = vpack.c.bf16 %v4673, %v4672
      %v4702 = vpack.c.bf16 %v4675, %v4674
      %v4703 = vpack.c.bf16 %v4677, %v4676
      %v4704 = vpack.c.bf16 %v4679, %v4678
      %v4705 = vpack.c.bf16 %v4681, %v4680
      %v4706 = vpack.c.bf16 %v4683, %v4682
      %v4707 = vpack.c.bf16 %v4685, %v4684
      %v4708 = vpack.c.bf16 %v4687, %v4686
      %v4709 = vpack.c.bf16 %v4689, %v4688
      %v4710 = vpack.c.bf16 %v4691, %v4690
      %v4711 = vpack.c.bf16 %v4693, %v4692
      %v4712 = vpack.c.bf16 %v4695, %v4694
      %v4713 = vpack.c.bf16 %v4697, %v4696
      %s4714 = scalar_lea.vmem %s5, 96
      %v4715 = vld [vmem:[%s4714] sm:$0xf]
      %v4716 = vld [vmem:[%s4714 + $0x4] sm:$0xf]
      %v4717 = vld [vmem:[%s4714 + $0x8] sm:$0xf]
      %v4718 = vld [vmem:[%s4714 + $0xc] sm:$0xf]
      %v4719 = vld [vmem:[%s4714 + $0x10] sm:$0xf]
      %v4720 = vld [vmem:[%s4714 + $0x14] sm:$0xf]
      %v4721 = vld [vmem:[%s4714 + $0x18] sm:$0xf]
      %v4722 = vld [vmem:[%s4714 + $0x1c] sm:$0xf]
      %v4731 = vunpack.c.l.b16 %v4715
      %v4732 = vunpack.c.l.b16 %v4716
      %v4733 = vunpack.c.l.b16 %v4717
      %v4734 = vunpack.c.l.b16 %v4718
      %v4735 = vunpack.c.l.b16 %v4719
      %v4736 = vunpack.c.l.b16 %v4720
      %v4737 = vunpack.c.l.b16 %v4721
      %v4738 = vunpack.c.l.b16 %v4722
      %v4739 = vpack.c.b16 %v4732, %v4731
      %v4740 = vpack.c.b16 %v4734, %v4733
      %v4741 = vpack.c.b16 %v4736, %v4735
      %v4742 = vpack.c.b16 %v4738, %v4737
      %v4748 = vsel %vm711, %v4698, 0
      %v4751 = vsel %vm711, %v4699, 0
      %v4754 = vsel %vm711, %v4700, 0
      %v4757 = vsel %vm711, %v4701, 0
      %v4760 = vsel %vm711, %v4702, 0
      %v4763 = vsel %vm711, %v4703, 0
      %v4766 = vsel %vm711, %v4704, 0
      %v4769 = vsel %vm711, %v4705, 0
      %v4772 = vsel %vm711, %v4706, 0
      %v4775 = vsel %vm711, %v4707, 0
      %v4778 = vsel %vm711, %v4708, 0
      %v4781 = vsel %vm711, %v4709, 0
      %v4784 = vsel %vm711, %v4710, 0
      %v4787 = vsel %vm711, %v4711, 0
      %v4790 = vsel %vm711, %v4712, 0
      %v4793 = vsel %vm711, %v4713, 0
      %4795 = vmatprep.subr.bf16.mxu0 0
      %4796 = vmatpush1.bf16.msra.mxu0 %v4739
      %4797 = vmatprep.subr.bf16.mxu0 0
      %4798 = vmatpush1.bf16.msra.mxu0 %v4740
      %4799 = vmatprep.subr.bf16.mxu0 0
      %4800 = vmatpush1.bf16.msra.mxu0 %v4741
      %4801 = vmatprep.subr.bf16.mxu0 0
      %4802 = vmatpush1.bf16.msra.mxu0 %v4742
      %4803 = vmatprep.subr.bf16.mxu0 0
      %4804 = vmatpush1.bf16.msra.mxu0 0
      %4805 = vmatprep.subr.bf16.mxu0 0
      %4806 = vmatpush1.bf16.msra.mxu0 0
      %4807 = vmatprep.subr.bf16.mxu0 0
      %4808 = vmatpush1.bf16.msra.mxu0 0
      %4809 = vmatprep.subr.bf16.mxu0 0
      %4810 = vmatpush1.bf16.msra.mxu0 0
      %4811 = vmatprep.subr.bf16.mxu0 0
      %4812 = vmatpush1.bf16.msra.mxu0 0
      %4813 = vmatprep.subr.bf16.mxu0 0
      %4814 = vmatpush1.bf16.msra.mxu0 0
      %4815 = vmatprep.subr.bf16.mxu0 0
      %4816 = vmatpush1.bf16.msra.mxu0 0
      %4817 = vmatprep.subr.bf16.mxu0 0
      %4818 = vmatpush1.bf16.msra.mxu0 0
      %4819 = vmatprep.subr.bf16.mxu0 0
      %4820 = vmatpush1.bf16.msra.mxu0 0
      %4821 = vmatprep.subr.bf16.mxu0 0
      %4822 = vmatpush1.bf16.msra.mxu0 0
      %4823 = vmatprep.subr.bf16.mxu0 0
      %4824 = vmatpush1.bf16.msra.mxu0 0
      %4825 = vmatprep.subr.bf16.mxu0 0
      %4826 = vmatpush1.bf16.msra.mxu0 0
      %4827 = vmatprep.mubr.bf16.mxu0 0
      %4828 = vmatmul.mubr.bf16.gmra.mrb[0].mxu0 %v4748
      %v4829 = vpop.f32.mrb[0].mxu0
      %v4830 = vadd.f32 0.0, %v4829
      %v4831 = vpop.f32.mrb[0].mxu0
      %v4832 = vpop.f32.mrb[0].mxu0
      %v4833 = vadd.f32 0.0, %v4832
      %v4834 = vpop.f32.mrb[0].mxu0
      %4835 = vmatprep.mubr.bf16.mxu0 0
      %4836 = vmatmul.mubr.bf16.gmra.mrb[0].mxu0 %v4751
      %v4837 = vpop.f32.mrb[0].mxu0
      %v4838 = vadd.f32 0.0, %v4837
      %v4839 = vpop.f32.mrb[0].mxu0
      %v4840 = vpop.f32.mrb[0].mxu0
      %v4841 = vadd.f32 0.0, %v4840
      %v4842 = vpop.f32.mrb[0].mxu0
      %4843 = vmatprep.mubr.bf16.mxu0 0
      %4844 = vmatmul.mubr.bf16.gmra.mrb[0].mxu0 %v4754
      %v4845 = vpop.f32.mrb[0].mxu0
      %v4846 = vadd.f32 0.0, %v4845
      %v4847 = vpop.f32.mrb[0].mxu0
      %v4848 = vpop.f32.mrb[0].mxu0
      %v4849 = vadd.f32 0.0, %v4848
      %v4850 = vpop.f32.mrb[0].mxu0
      %4851 = vmatprep.mubr.bf16.mxu0 0
      %4852 = vmatmul.mubr.bf16.gmra.mrb[0].mxu0 %v4757
      %v4853 = vpop.f32.mrb[0].mxu0
      %v4854 = vadd.f32 0.0, %v4853
      %v4855 = vpop.f32.mrb[0].mxu0
      %v4856 = vpop.f32.mrb[0].mxu0
      %v4857 = vadd.f32 0.0, %v4856
      %v4858 = vpop.f32.mrb[0].mxu0
      %4859 = vmatprep.mubr.bf16.mxu0 0
      %4860 = vmatmul.mubr.bf16.gmra.mrb[0].mxu0 %v4760
      %v4861 = vpop.f32.mrb[0].mxu0
      %v4862 = vadd.f32 0.0, %v4861
      %v4863 = vpop.f32.mrb[0].mxu0
      %v4864 = vpop.f32.mrb[0].mxu0
      %v4865 = vadd.f32 0.0, %v4864
      %v4866 = vpop.f32.mrb[0].mxu0
      %4867 = vmatprep.mubr.bf16.mxu0 0
      %4868 = vmatmul.mubr.bf16.gmra.mrb[0].mxu0 %v4763
      %v4869 = vpop.f32.mrb[0].mxu0
      %v4870 = vadd.f32 0.0, %v4869
      %v4871 = vpop.f32.mrb[0].mxu0
      %v4872 = vpop.f32.mrb[0].mxu0
      %v4873 = vadd.f32 0.0, %v4872
      %v4874 = vpop.f32.mrb[0].mxu0
      %4875 = vmatprep.mubr.bf16.mxu0 0
      %4876 = vmatmul.mubr.bf16.gmra.mrb[0].mxu0 %v4766
      %v4877 = vpop.f32.mrb[0].mxu0
      %v4878 = vadd.f32 0.0, %v4877
      %v4879 = vpop.f32.mrb[0].mxu0
      %v4880 = vpop.f32.mrb[0].mxu0
      %v4881 = vadd.f32 0.0, %v4880
      %v4882 = vpop.f32.mrb[0].mxu0
      %4883 = vmatprep.mubr.bf16.mxu0 0
      %4884 = vmatmul.mubr.bf16.gmra.mrb[0].mxu0 %v4769
      %v4885 = vpop.f32.mrb[0].mxu0
      %v4886 = vadd.f32 0.0, %v4885
      %v4887 = vpop.f32.mrb[0].mxu0
      %v4888 = vpop.f32.mrb[0].mxu0
      %v4889 = vadd.f32 0.0, %v4888
      %v4890 = vpop.f32.mrb[0].mxu0
      %4891 = vmatprep.mubr.bf16.mxu0 0
      %4892 = vmatmul.mubr.bf16.gmra.mrb[0].mxu0 %v4772
      %v4893 = vpop.f32.mrb[0].mxu0
      %v4894 = vadd.f32 0.0, %v4893
      %v4895 = vpop.f32.mrb[0].mxu0
      %v4896 = vpop.f32.mrb[0].mxu0
      %v4897 = vadd.f32 0.0, %v4896
      %v4898 = vpop.f32.mrb[0].mxu0
      %4899 = vmatprep.mubr.bf16.mxu0 0
      %4900 = vmatmul.mubr.bf16.gmra.mrb[0].mxu0 %v4775
      %v4901 = vpop.f32.mrb[0].mxu0
      %v4902 = vadd.f32 0.0, %v4901
      %v4903 = vpop.f32.mrb[0].mxu0
      %v4904 = vpop.f32.mrb[0].mxu0
      %v4905 = vadd.f32 0.0, %v4904
      %v4906 = vpop.f32.mrb[0].mxu0
      %4907 = vmatprep.mubr.bf16.mxu0 0
      %4908 = vmatmul.mubr.bf16.gmra.mrb[0].mxu0 %v4778
      %v4909 = vpop.f32.mrb[0].mxu0
      %v4910 = vadd.f32 0.0, %v4909
      %v4911 = vpop.f32.mrb[0].mxu0
      %v4912 = vpop.f32.mrb[0].mxu0
      %v4913 = vadd.f32 0.0, %v4912
      %v4914 = vpop.f32.mrb[0].mxu0
      %4915 = vmatprep.mubr.bf16.mxu0 0
      %4916 = vmatmul.mubr.bf16.gmra.mrb[0].mxu0 %v4781
      %v4917 = vpop.f32.mrb[0].mxu0
      %v4918 = vadd.f32 0.0, %v4917
      %v4919 = vpop.f32.mrb[0].mxu0
      %v4920 = vpop.f32.mrb[0].mxu0
      %v4921 = vadd.f32 0.0, %v4920
      %v4922 = vpop.f32.mrb[0].mxu0
      %4923 = vmatprep.mubr.bf16.mxu0 0
      %4924 = vmatmul.mubr.bf16.gmra.mrb[0].mxu0 %v4784
      %v4925 = vpop.f32.mrb[0].mxu0
      %v4926 = vadd.f32 0.0, %v4925
      %v4927 = vpop.f32.mrb[0].mxu0
      %v4928 = vpop.f32.mrb[0].mxu0
      %v4929 = vadd.f32 0.0, %v4928
      %v4930 = vpop.f32.mrb[0].mxu0
      %4931 = vmatprep.mubr.bf16.mxu0 0
      %4932 = vmatmul.mubr.bf16.gmra.mrb[0].mxu0 %v4787
      %v4933 = vpop.f32.mrb[0].mxu0
      %v4934 = vadd.f32 0.0, %v4933
      %v4935 = vpop.f32.mrb[0].mxu0
      %v4936 = vpop.f32.mrb[0].mxu0
      %v4937 = vadd.f32 0.0, %v4936
      %v4938 = vpop.f32.mrb[0].mxu0
      %4939 = vmatprep.mubr.bf16.mxu0 0
      %4940 = vmatmul.mubr.bf16.gmra.mrb[0].mxu0 %v4790
      %v4941 = vpop.f32.mrb[0].mxu0
      %v4942 = vadd.f32 0.0, %v4941
      %v4943 = vpop.f32.mrb[0].mxu0
      %v4944 = vpop.f32.mrb[0].mxu0
      %v4945 = vadd.f32 0.0, %v4944
      %v4946 = vpop.f32.mrb[0].mxu0
      %4947 = vmatprep.mubr.bf16.mxu0 0
      %4948 = vmatmul.mubr.bf16.gmra.mrb[0].mxu0 %v4793
      %v4949 = vpop.f32.mrb[0].mxu0
      %v4950 = vadd.f32 0.0, %v4949
      %v4951 = vpop.f32.mrb[0].mxu0
      %v4952 = vpop.f32.mrb[0].mxu0
      %v4953 = vadd.f32 0.0, %v4952
      %v4954 = vpop.f32.mrb[0].mxu0
      %4955 = vdwg.mxu0
      %v4956 = vadd.f32 %v4634, %v4830
      %v4957 = vadd.f32 %v4635, %v4833
      %v4958 = vadd.f32 %v4636, %v4838
      %v4959 = vadd.f32 %v4637, %v4841
      %v4960 = vadd.f32 %v4638, %v4846
      %v4961 = vadd.f32 %v4639, %v4849
      %v4962 = vadd.f32 %v4640, %v4854
      %v4963 = vadd.f32 %v4641, %v4857
      %v4964 = vadd.f32 %v4642, %v4862
      %v4965 = vadd.f32 %v4643, %v4865
      %v4966 = vadd.f32 %v4644, %v4870
      %v4967 = vadd.f32 %v4645, %v4873
      %v4968 = vadd.f32 %v4646, %v4878
      %v4969 = vadd.f32 %v4647, %v4881
      %v4970 = vadd.f32 %v4648, %v4886
      %v4971 = vadd.f32 %v4649, %v4889
      %v4972 = vadd.f32 %v4650, %v4894
      %v4973 = vadd.f32 %v4651, %v4897
      %v4974 = vadd.f32 %v4652, %v4902
      %v4975 = vadd.f32 %v4653, %v4905
      %v4976 = vadd.f32 %v4654, %v4910
      %v4977 = vadd.f32 %v4655, %v4913
      %v4978 = vadd.f32 %v4656, %v4918
      %v4979 = vadd.f32 %v4657, %v4921
      %v4980 = vadd.f32 %v4658, %v4926
      %v4981 = vadd.f32 %v4659, %v4929
      %v4982 = vadd.f32 %v4660, %v4934
      %v4983 = vadd.f32 %v4661, %v4937
      %v4984 = vadd.f32 %v4662, %v4942
      %v4985 = vadd.f32 %v4663, %v4945
      %v4986 = vadd.f32 %v4664, %v4950
      %v4987 = vadd.f32 %v4665, %v4953
      %v4988 = vld [vmem:[%s720 + $0x1] sm:$0xff]
      %v4989 = vld [vmem:[%s720 + $0x9] sm:$0xff]
      %v4990 = vld [vmem:[%s720 + $0x19] sm:$0xff]
      %v4991 = vld [vmem:[%s720 + $0x21] sm:$0xff]
      %v4992 = vld [vmem:[%s720 + $0x31] sm:$0xff]
      %v4993 = vld [vmem:[%s720 + $0x39] sm:$0xff]
      %v4994 = vld [vmem:[%s720 + $0x49] sm:$0xff]
      %v4995 = vld [vmem:[%s720 + $0x51] sm:$0xff]
      %v4996 = vld [vmem:[%s720 + $0x61] sm:$0xff]
      %v4997 = vld [vmem:[%s720 + $0x69] sm:$0xff]
      %v4998 = vld [vmem:[%s720 + $0x79] sm:$0xff]
      %v4999 = vld [vmem:[%s720 + $0x81] sm:$0xff]
      %v5000 = vld [vmem:[%s720 + $0x91] sm:$0xff]
      %v5001 = vld [vmem:[%s720 + $0x99] sm:$0xff]
      %v5002 = vld [vmem:[%s720 + $0xa9] sm:$0xff]
      %v5003 = vld [vmem:[%s720 + $0xb1] sm:$0xff]
      %v5004 = vld [vmem:[%s720 + $0xc1] sm:$0xff]
      %v5005 = vld [vmem:[%s720 + $0xc9] sm:$0xff]
      %v5006 = vld [vmem:[%s720 + $0xd9] sm:$0xff]
      %v5007 = vld [vmem:[%s720 + $0xe1] sm:$0xff]
      %v5008 = vld [vmem:[%s720 + $0xf1] sm:$0xff]
      %v5009 = vld [vmem:[%s720 + $0xf9] sm:$0xff]
      %v5010 = vld [vmem:[%s720 + $0x109] sm:$0xff]
      %v5011 = vld [vmem:[%s720 + $0x111] sm:$0xff]
      %v5012 = vld [vmem:[%s720 + $0x121] sm:$0xff]
      %v5013 = vld [vmem:[%s720 + $0x129] sm:$0xff]
      %v5014 = vld [vmem:[%s720 + $0x139] sm:$0xff]
      %v5015 = vld [vmem:[%s720 + $0x141] sm:$0xff]
      %v5016 = vld [vmem:[%s720 + $0x151] sm:$0xff]
      %v5017 = vld [vmem:[%s720 + $0x159] sm:$0xff]
      %v5018 = vld [vmem:[%s720 + $0x169] sm:$0xff]
      %v5019 = vld [vmem:[%s720 + $0x171] sm:$0xff]
      %v5020 = vpack.c.bf16 %v4989, %v4988
      %v5021 = vpack.c.bf16 %v4991, %v4990
      %v5022 = vpack.c.bf16 %v4993, %v4992
      %v5023 = vpack.c.bf16 %v4995, %v4994
      %v5024 = vpack.c.bf16 %v4997, %v4996
      %v5025 = vpack.c.bf16 %v4999, %v4998
      %v5026 = vpack.c.bf16 %v5001, %v5000
      %v5027 = vpack.c.bf16 %v5003, %v5002
      %v5028 = vpack.c.bf16 %v5005, %v5004
      %v5029 = vpack.c.bf16 %v5007, %v5006
      %v5030 = vpack.c.bf16 %v5009, %v5008
      %v5031 = vpack.c.bf16 %v5011, %v5010
      %v5032 = vpack.c.bf16 %v5013, %v5012
      %v5033 = vpack.c.bf16 %v5015, %v5014
      %v5034 = vpack.c.bf16 %v5017, %v5016
      %v5035 = vpack.c.bf16 %v5019, %v5018
      %s5036 = scalar_lea.vmem %s5, 128
      %v5037 = vld [vmem:[%s5036] sm:$0xf]
      %v5038 = vld [vmem:[%s5036 + $0x4] sm:$0xf]
      %v5039 = vld [vmem:[%s5036 + $0x8] sm:$0xf]
      %v5040 = vld [vmem:[%s5036 + $0xc] sm:$0xf]
      %v5041 = vld [vmem:[%s5036 + $0x10] sm:$0xf]
      %v5042 = vld [vmem:[%s5036 + $0x14] sm:$0xf]
      %v5043 = vld [vmem:[%s5036 + $0x18] sm:$0xf]
      %v5044 = vld [vmem:[%s5036 + $0x1c] sm:$0xf]
      %v5053 = vunpack.c.l.b16 %v5037
      %v5054 = vunpack.c.l.b16 %v5038
      %v5055 = vunpack.c.l.b16 %v5039
      %v5056 = vunpack.c.l.b16 %v5040
      %v5057 = vunpack.c.l.b16 %v5041
      %v5058 = vunpack.c.l.b16 %v5042
      %v5059 = vunpack.c.l.b16 %v5043
      %v5060 = vunpack.c.l.b16 %v5044
      %v5061 = vpack.c.b16 %v5054, %v5053
      %v5062 = vpack.c.b16 %v5056, %v5055
      %v5063 = vpack.c.b16 %v5058, %v5057
      %v5064 = vpack.c.b16 %v5060, %v5059
      %v5070 = vsel %vm711, %v5020, 0
      %v5073 = vsel %vm711, %v5021, 0
      %v5076 = vsel %vm711, %v5022, 0
      %v5079 = vsel %vm711, %v5023, 0
      %v5082 = vsel %vm711, %v5024, 0
      %v5085 = vsel %vm711, %v5025, 0
      %v5088 = vsel %vm711, %v5026, 0
      %v5091 = vsel %vm711, %v5027, 0
      %v5094 = vsel %vm711, %v5028, 0
      %v5097 = vsel %vm711, %v5029, 0
      %v5100 = vsel %vm711, %v5030, 0
      %v5103 = vsel %vm711, %v5031, 0
      %v5106 = vsel %vm711, %v5032, 0
      %v5109 = vsel %vm711, %v5033, 0
      %v5112 = vsel %vm711, %v5034, 0
      %v5115 = vsel %vm711, %v5035, 0
      %5117 = vmatprep.subr.bf16.mxu0 0
      %5118 = vmatpush1.bf16.msra.mxu0 %v5061
      %5119 = vmatprep.subr.bf16.mxu0 0
      %5120 = vmatpush1.bf16.msra.mxu0 %v5062
      %5121 = vmatprep.subr.bf16.mxu0 0
      %5122 = vmatpush1.bf16.msra.mxu0 %v5063
      %5123 = vmatprep.subr.bf16.mxu0 0
      %5124 = vmatpush1.bf16.msra.mxu0 %v5064
      %5125 = vmatprep.subr.bf16.mxu0 0
      %5126 = vmatpush1.bf16.msra.mxu0 0
      %5127 = vmatprep.subr.bf16.mxu0 0
      %5128 = vmatpush1.bf16.msra.mxu0 0
      %5129 = vmatprep.subr.bf16.mxu0 0
      %5130 = vmatpush1.bf16.msra.mxu0 0
      %5131 = vmatprep.subr.bf16.mxu0 0
      %5132 = vmatpush1.bf16.msra.mxu0 0
      %5133 = vmatprep.subr.bf16.mxu0 0
      %5134 = vmatpush1.bf16.msra.mxu0 0
      %5135 = vmatprep.subr.bf16.mxu0 0
      %5136 = vmatpush1.bf16.msra.mxu0 0
      %5137 = vmatprep.subr.bf16.mxu0 0
      %5138 = vmatpush1.bf16.msra.mxu0 0
      %5139 = vmatprep.subr.bf16.mxu0 0
      %5140 = vmatpush1.bf16.msra.mxu0 0
      %5141 = vmatprep.subr.bf16.mxu0 0
      %5142 = vmatpush1.bf16.msra.mxu0 0
      %5143 = vmatprep.subr.bf16.mxu0 0
      %5144 = vmatpush1.bf16.msra.mxu0 0
      %5145 = vmatprep.subr.bf16.mxu0 0
      %5146 = vmatpush1.bf16.msra.mxu0 0
      %5147 = vmatprep.subr.bf16.mxu0 0
      %5148 = vmatpush1.bf16.msra.mxu0 0
      %5149 = vmatprep.mubr.bf16.mxu0 0
      %5150 = vmatmul.mubr.bf16.gmra.mrb[0].mxu0 %v5070
      %v5151 = vpop.f32.mrb[0].mxu0
      %v5152 = vadd.f32 0.0, %v5151
      %v5153 = vpop.f32.mrb[0].mxu0
      %v5154 = vpop.f32.mrb[0].mxu0
      %v5155 = vadd.f32 0.0, %v5154
      %v5156 = vpop.f32.mrb[0].mxu0
      %5157 = vmatprep.mubr.bf16.mxu0 0
      %5158 = vmatmul.mubr.bf16.gmra.mrb[0].mxu0 %v5073
      %v5159 = vpop.f32.mrb[0].mxu0
      %v5160 = vadd.f32 0.0, %v5159
      %v5161 = vpop.f32.mrb[0].mxu0
      %v5162 = vpop.f32.mrb[0].mxu0
      %v5163 = vadd.f32 0.0, %v5162
      %v5164 = vpop.f32.mrb[0].mxu0
      %5165 = vmatprep.mubr.bf16.mxu0 0
      %5166 = vmatmul.mubr.bf16.gmra.mrb[0].mxu0 %v5076
      %v5167 = vpop.f32.mrb[0].mxu0
      %v5168 = vadd.f32 0.0, %v5167
      %v5169 = vpop.f32.mrb[0].mxu0
      %v5170 = vpop.f32.mrb[0].mxu0
      %v5171 = vadd.f32 0.0, %v5170
      %v5172 = vpop.f32.mrb[0].mxu0
      %5173 = vmatprep.mubr.bf16.mxu0 0
      %5174 = vmatmul.mubr.bf16.gmra.mrb[0].mxu0 %v5079
      %v5175 = vpop.f32.mrb[0].mxu0
      %v5176 = vadd.f32 0.0, %v5175
      %v5177 = vpop.f32.mrb[0].mxu0
      %v5178 = vpop.f32.mrb[0].mxu0
      %v5179 = vadd.f32 0.0, %v5178
      %v5180 = vpop.f32.mrb[0].mxu0
      %5181 = vmatprep.mubr.bf16.mxu0 0
      %5182 = vmatmul.mubr.bf16.gmra.mrb[0].mxu0 %v5082
      %v5183 = vpop.f32.mrb[0].mxu0
      %v5184 = vadd.f32 0.0, %v5183
      %v5185 = vpop.f32.mrb[0].mxu0
      %v5186 = vpop.f32.mrb[0].mxu0
      %v5187 = vadd.f32 0.0, %v5186
      %v5188 = vpop.f32.mrb[0].mxu0
      %5189 = vmatprep.mubr.bf16.mxu0 0
      %5190 = vmatmul.mubr.bf16.gmra.mrb[0].mxu0 %v5085
      %v5191 = vpop.f32.mrb[0].mxu0
      %v5192 = vadd.f32 0.0, %v5191
      %v5193 = vpop.f32.mrb[0].mxu0
      %v5194 = vpop.f32.mrb[0].mxu0
      %v5195 = vadd.f32 0.0, %v5194
      %v5196 = vpop.f32.mrb[0].mxu0
      %5197 = vmatprep.mubr.bf16.mxu0 0
      %5198 = vmatmul.mubr.bf16.gmra.mrb[0].mxu0 %v5088
      %v5199 = vpop.f32.mrb[0].mxu0
      %v5200 = vadd.f32 0.0, %v5199
      %v5201 = vpop.f32.mrb[0].mxu0
      %v5202 = vpop.f32.mrb[0].mxu0
      %v5203 = vadd.f32 0.0, %v5202
      %v5204 = vpop.f32.mrb[0].mxu0
      %5205 = vmatprep.mubr.bf16.mxu0 0
      %5206 = vmatmul.mubr.bf16.gmra.mrb[0].mxu0 %v5091
      %v5207 = vpop.f32.mrb[0].mxu0
      %v5208 = vadd.f32 0.0, %v5207
      %v5209 = vpop.f32.mrb[0].mxu0
      %v5210 = vpop.f32.mrb[0].mxu0
      %v5211 = vadd.f32 0.0, %v5210
      %v5212 = vpop.f32.mrb[0].mxu0
      %5213 = vmatprep.mubr.bf16.mxu0 0
      %5214 = vmatmul.mubr.bf16.gmra.mrb[0].mxu0 %v5094
      %v5215 = vpop.f32.mrb[0].mxu0
      %v5216 = vadd.f32 0.0, %v5215
      %v5217 = vpop.f32.mrb[0].mxu0
      %v5218 = vpop.f32.mrb[0].mxu0
      %v5219 = vadd.f32 0.0, %v5218
      %v5220 = vpop.f32.mrb[0].mxu0
      %5221 = vmatprep.mubr.bf16.mxu0 0
      %5222 = vmatmul.mubr.bf16.gmra.mrb[0].mxu0 %v5097
      %v5223 = vpop.f32.mrb[0].mxu0
      %v5224 = vadd.f32 0.0, %v5223
      %v5225 = vpop.f32.mrb[0].mxu0
      %v5226 = vpop.f32.mrb[0].mxu0
      %v5227 = vadd.f32 0.0, %v5226
      %v5228 = vpop.f32.mrb[0].mxu0
      %5229 = vmatprep.mubr.bf16.mxu0 0
      %5230 = vmatmul.mubr.bf16.gmra.mrb[0].mxu0 %v5100
      %v5231 = vpop.f32.mrb[0].mxu0
      %v5232 = vadd.f32 0.0, %v5231
      %v5233 = vpop.f32.mrb[0].mxu0
      %v5234 = vpop.f32.mrb[0].mxu0
      %v5235 = vadd.f32 0.0, %v5234
      %v5236 = vpop.f32.mrb[0].mxu0
      %5237 = vmatprep.mubr.bf16.mxu0 0
      %5238 = vmatmul.mubr.bf16.gmra.mrb[0].mxu0 %v5103
      %v5239 = vpop.f32.mrb[0].mxu0
      %v5240 = vadd.f32 0.0, %v5239
      %v5241 = vpop.f32.mrb[0].mxu0
      %v5242 = vpop.f32.mrb[0].mxu0
      %v5243 = vadd.f32 0.0, %v5242
      %v5244 = vpop.f32.mrb[0].mxu0
      %5245 = vmatprep.mubr.bf16.mxu0 0
      %5246 = vmatmul.mubr.bf16.gmra.mrb[0].mxu0 %v5106
      %v5247 = vpop.f32.mrb[0].mxu0
      %v5248 = vadd.f32 0.0, %v5247
      %v5249 = vpop.f32.mrb[0].mxu0
      %v5250 = vpop.f32.mrb[0].mxu0
      %v5251 = vadd.f32 0.0, %v5250
      %v5252 = vpop.f32.mrb[0].mxu0
      %5253 = vmatprep.mubr.bf16.mxu0 0
      %5254 = vmatmul.mubr.bf16.gmra.mrb[0].mxu0 %v5109
      %v5255 = vpop.f32.mrb[0].mxu0
      %v5256 = vadd.f32 0.0, %v5255
      %v5257 = vpop.f32.mrb[0].mxu0
      %v5258 = vpop.f32.mrb[0].mxu0
      %v5259 = vadd.f32 0.0, %v5258
      %v5260 = vpop.f32.mrb[0].mxu0
      %5261 = vmatprep.mubr.bf16.mxu0 0
      %5262 = vmatmul.mubr.bf16.gmra.mrb[0].mxu0 %v5112
      %v5263 = vpop.f32.mrb[0].mxu0
      %v5264 = vadd.f32 0.0, %v5263
      %v5265 = vpop.f32.mrb[0].mxu0
      %v5266 = vpop.f32.mrb[0].mxu0
      %v5267 = vadd.f32 0.0, %v5266
      %v5268 = vpop.f32.mrb[0].mxu0
      %5269 = vmatprep.mubr.bf16.mxu0 0
      %5270 = vmatmul.mubr.bf16.gmra.mrb[0].mxu0 %v5115
      %v5271 = vpop.f32.mrb[0].mxu0
      %v5272 = vadd.f32 0.0, %v5271
      %v5273 = vpop.f32.mrb[0].mxu0
      %v5274 = vpop.f32.mrb[0].mxu0
      %v5275 = vadd.f32 0.0, %v5274
      %v5276 = vpop.f32.mrb[0].mxu0
      %5277 = vdwg.mxu0
      %v5278 = vadd.f32 %v4956, %v5152
      %v5279 = vadd.f32 %v4957, %v5155
      %v5280 = vadd.f32 %v4958, %v5160
      %v5281 = vadd.f32 %v4959, %v5163
      %v5282 = vadd.f32 %v4960, %v5168
      %v5283 = vadd.f32 %v4961, %v5171
      %v5284 = vadd.f32 %v4962, %v5176
      %v5285 = vadd.f32 %v4963, %v5179
      %v5286 = vadd.f32 %v4964, %v5184
      %v5287 = vadd.f32 %v4965, %v5187
      %v5288 = vadd.f32 %v4966, %v5192
      %v5289 = vadd.f32 %v4967, %v5195
      %v5290 = vadd.f32 %v4968, %v5200
      %v5291 = vadd.f32 %v4969, %v5203
      %v5292 = vadd.f32 %v4970, %v5208
      %v5293 = vadd.f32 %v4971, %v5211
      %v5294 = vadd.f32 %v4972, %v5216
      %v5295 = vadd.f32 %v4973, %v5219
      %v5296 = vadd.f32 %v4974, %v5224
      %v5297 = vadd.f32 %v4975, %v5227
      %v5298 = vadd.f32 %v4976, %v5232
      %v5299 = vadd.f32 %v4977, %v5235
      %v5300 = vadd.f32 %v4978, %v5240
      %v5301 = vadd.f32 %v4979, %v5243
      %v5302 = vadd.f32 %v4980, %v5248
      %v5303 = vadd.f32 %v4981, %v5251
      %v5304 = vadd.f32 %v4982, %v5256
      %v5305 = vadd.f32 %v4983, %v5259
      %v5306 = vadd.f32 %v4984, %v5264
      %v5307 = vadd.f32 %v4985, %v5267
      %v5308 = vadd.f32 %v4986, %v5272
      %v5309 = vadd.f32 %v4987, %v5275
      %v5310 = vld [vmem:[%s720 + $0x2] sm:$0xff]
      %v5311 = vld [vmem:[%s720 + $0xa] sm:$0xff]
      %v5312 = vld [vmem:[%s720 + $0x1a] sm:$0xff]
      %v5313 = vld [vmem:[%s720 + $0x22] sm:$0xff]
      %v5314 = vld [vmem:[%s720 + $0x32] sm:$0xff]
      %v5315 = vld [vmem:[%s720 + $0x3a] sm:$0xff]
      %v5316 = vld [vmem:[%s720 + $0x4a] sm:$0xff]
      %v5317 = vld [vmem:[%s720 + $0x52] sm:$0xff]
      %v5318 = vld [vmem:[%s720 + $0x62] sm:$0xff]
      %v5319 = vld [vmem:[%s720 + $0x6a] sm:$0xff]
      %v5320 = vld [vmem:[%s720 + $0x7a] sm:$0xff]
      %v5321 = vld [vmem:[%s720 + $0x82] sm:$0xff]
      %v5322 = vld [vmem:[%s720 + $0x92] sm:$0xff]
      %v5323 = vld [vmem:[%s720 + $0x9a] sm:$0xff]
      %v5324 = vld [vmem:[%s720 + $0xaa] sm:$0xff]
      %v5325 = vld [vmem:[%s720 + $0xb2] sm:$0xff]
      %v5326 = vld [vmem:[%s720 + $0xc2] sm:$0xff]
      %v5327 = vld [vmem:[%s720 + $0xca] sm:$0xff]
      %v5328 = vld [vmem:[%s720 + $0xda] sm:$0xff]
      %v5329 = vld [vmem:[%s720 + $0xe2] sm:$0xff]
      %v5330 = vld [vmem:[%s720 + $0xf2] sm:$0xff]
      %v5331 = vld [vmem:[%s720 + $0xfa] sm:$0xff]
      %v5332 = vld [vmem:[%s720 + $0x10a] sm:$0xff]
      %v5333 = vld [vmem:[%s720 + $0x112] sm:$0xff]
      %v5334 = vld [vmem:[%s720 + $0x122] sm:$0xff]
      %v5335 = vld [vmem:[%s720 + $0x12a] sm:$0xff]
      %v5336 = vld [vmem:[%s720 + $0x13a] sm:$0xff]
      %v5337 = vld [vmem:[%s720 + $0x142] sm:$0xff]
      %v5338 = vld [vmem:[%s720 + $0x152] sm:$0xff]
      %v5339 = vld [vmem:[%s720 + $0x15a] sm:$0xff]
      %v5340 = vld [vmem:[%s720 + $0x16a] sm:$0xff]
      %v5341 = vld [vmem:[%s720 + $0x172] sm:$0xff]
      %v5342 = vpack.c.bf16 %v5311, %v5310
      %v5343 = vpack.c.bf16 %v5313, %v5312
      %v5344 = vpack.c.bf16 %v5315, %v5314
      %v5345 = vpack.c.bf16 %v5317, %v5316
      %v5346 = vpack.c.bf16 %v5319, %v5318
      %v5347 = vpack.c.bf16 %v5321, %v5320
      %v5348 = vpack.c.bf16 %v5323, %v5322
      %v5349 = vpack.c.bf16 %v5325, %v5324
      %v5350 = vpack.c.bf16 %v5327, %v5326
      %v5351 = vpack.c.bf16 %v5329, %v5328
      %v5352 = vpack.c.bf16 %v5331, %v5330
      %v5353 = vpack.c.bf16 %v5333, %v5332
      %v5354 = vpack.c.bf16 %v5335, %v5334
      %v5355 = vpack.c.bf16 %v5337, %v5336
      %v5356 = vpack.c.bf16 %v5339, %v5338
      %v5357 = vpack.c.bf16 %v5341, %v5340
      %s5358 = scalar_lea.vmem %s5, 160
      %v5359 = vld [vmem:[%s5358] sm:$0xf]
      %v5360 = vld [vmem:[%s5358 + $0x4] sm:$0xf]
      %v5361 = vld [vmem:[%s5358 + $0x8] sm:$0xf]
      %v5362 = vld [vmem:[%s5358 + $0xc] sm:$0xf]
      %v5363 = vld [vmem:[%s5358 + $0x10] sm:$0xf]
      %v5364 = vld [vmem:[%s5358 + $0x14] sm:$0xf]
      %v5365 = vld [vmem:[%s5358 + $0x18] sm:$0xf]
      %v5366 = vld [vmem:[%s5358 + $0x1c] sm:$0xf]
      %v5375 = vunpack.c.l.b16 %v5359
      %v5376 = vunpack.c.l.b16 %v5360
      %v5377 = vunpack.c.l.b16 %v5361
      %v5378 = vunpack.c.l.b16 %v5362
      %v5379 = vunpack.c.l.b16 %v5363
      %v5380 = vunpack.c.l.b16 %v5364
      %v5381 = vunpack.c.l.b16 %v5365
      %v5382 = vunpack.c.l.b16 %v5366
      %v5383 = vpack.c.b16 %v5376, %v5375
      %v5384 = vpack.c.b16 %v5378, %v5377
      %v5385 = vpack.c.b16 %v5380, %v5379
      %v5386 = vpack.c.b16 %v5382, %v5381
      %v5392 = vsel %vm711, %v5342, 0
      %v5395 = vsel %vm711, %v5343, 0
      %v5398 = vsel %vm711, %v5344, 0
      %v5401 = vsel %vm711, %v5345, 0
      %v5404 = vsel %vm711, %v5346, 0
      %v5407 = vsel %vm711, %v5347, 0
      %v5410 = vsel %vm711, %v5348, 0
      %v5413 = vsel %vm711, %v5349, 0
      %v5416 = vsel %vm711, %v5350, 0
      %v5419 = vsel %vm711, %v5351, 0
      %v5422 = vsel %vm711, %v5352, 0
      %v5425 = vsel %vm711, %v5353, 0
      %v5428 = vsel %vm711, %v5354, 0
      %v5431 = vsel %vm711, %v5355, 0
      %v5434 = vsel %vm711, %v5356, 0
      %v5437 = vsel %vm711, %v5357, 0
      %5439 = vmatprep.subr.bf16.mxu0 0
      %5440 = vmatpush1.bf16.msra.mxu0 %v5383
      %5441 = vmatprep.subr.bf16.mxu0 0
      %5442 = vmatpush1.bf16.msra.mxu0 %v5384
      %5443 = vmatprep.subr.bf16.mxu0 0
      %5444 = vmatpush1.bf16.msra.mxu0 %v5385
      %5445 = vmatprep.subr.bf16.mxu0 0
      %5446 = vmatpush1.bf16.msra.mxu0 %v5386
      %5447 = vmatprep.subr.bf16.mxu0 0
      %5448 = vmatpush1.bf16.msra.mxu0 0
      %5449 = vmatprep.subr.bf16.mxu0 0
      %5450 = vmatpush1.bf16.msra.mxu0 0
      %5451 = vmatprep.subr.bf16.mxu0 0
      %5452 = vmatpush1.bf16.msra.mxu0 0
      %5453 = vmatprep.subr.bf16.mxu0 0
      %5454 = vmatpush1.bf16.msra.mxu0 0
      %5455 = vmatprep.subr.bf16.mxu0 0
      %5456 = vmatpush1.bf16.msra.mxu0 0
      %5457 = vmatprep.subr.bf16.mxu0 0
      %5458 = vmatpush1.bf16.msra.mxu0 0
      %5459 = vmatprep.subr.bf16.mxu0 0
      %5460 = vmatpush1.bf16.msra.mxu0 0
      %5461 = vmatprep.subr.bf16.mxu0 0
      %5462 = vmatpush1.bf16.msra.mxu0 0
      %5463 = vmatprep.subr.bf16.mxu0 0
      %5464 = vmatpush1.bf16.msra.mxu0 0
      %5465 = vmatprep.subr.bf16.mxu0 0
      %5466 = vmatpush1.bf16.msra.mxu0 0
      %5467 = vmatprep.subr.bf16.mxu0 0
      %5468 = vmatpush1.bf16.msra.mxu0 0
      %5469 = vmatprep.subr.bf16.mxu0 0
      %5470 = vmatpush1.bf16.msra.mxu0 0
      %5471 = vmatprep.mubr.bf16.mxu0 0
      %5472 = vmatmul.mubr.bf16.gmra.mrb[0].mxu0 %v5392
      %v5473 = vpop.f32.mrb[0].mxu0
      %v5474 = vadd.f32 0.0, %v5473
      %v5475 = vpop.f32.mrb[0].mxu0
      %v5476 = vpop.f32.mrb[0].mxu0
      %v5477 = vadd.f32 0.0, %v5476
      %v5478 = vpop.f32.mrb[0].mxu0
      %5479 = vmatprep.mubr.bf16.mxu0 0
      %5480 = vmatmul.mubr.bf16.gmra.mrb[0].mxu0 %v5395
      %v5481 = vpop.f32.mrb[0].mxu0
      %v5482 = vadd.f32 0.0, %v5481
      %v5483 = vpop.f32.mrb[0].mxu0
      %v5484 = vpop.f32.mrb[0].mxu0
      %v5485 = vadd.f32 0.0, %v5484
      %v5486 = vpop.f32.mrb[0].mxu0
      %5487 = vmatprep.mubr.bf16.mxu0 0
      %5488 = vmatmul.mubr.bf16.gmra.mrb[0].mxu0 %v5398
      %v5489 = vpop.f32.mrb[0].mxu0
      %v5490 = vadd.f32 0.0, %v5489
      %v5491 = vpop.f32.mrb[0].mxu0
      %v5492 = vpop.f32.mrb[0].mxu0
      %v5493 = vadd.f32 0.0, %v5492
      %v5494 = vpop.f32.mrb[0].mxu0
      %5495 = vmatprep.mubr.bf16.mxu0 0
      %5496 = vmatmul.mubr.bf16.gmra.mrb[0].mxu0 %v5401
      %v5497 = vpop.f32.mrb[0].mxu0
      %v5498 = vadd.f32 0.0, %v5497
      %v5499 = vpop.f32.mrb[0].mxu0
      %v5500 = vpop.f32.mrb[0].mxu0
      %v5501 = vadd.f32 0.0, %v5500
      %v5502 = vpop.f32.mrb[0].mxu0
      %5503 = vmatprep.mubr.bf16.mxu0 0
      %5504 = vmatmul.mubr.bf16.gmra.mrb[0].mxu0 %v5404
      %v5505 = vpop.f32.mrb[0].mxu0
      %v5506 = vadd.f32 0.0, %v5505
      %v5507 = vpop.f32.mrb[0].mxu0
      %v5508 = vpop.f32.mrb[0].mxu0
      %v5509 = vadd.f32 0.0, %v5508
      %v5510 = vpop.f32.mrb[0].mxu0
      %5511 = vmatprep.mubr.bf16.mxu0 0
      %5512 = vmatmul.mubr.bf16.gmra.mrb[0].mxu0 %v5407
      %v5513 = vpop.f32.mrb[0].mxu0
      %v5514 = vadd.f32 0.0, %v5513
      %v5515 = vpop.f32.mrb[0].mxu0
      %v5516 = vpop.f32.mrb[0].mxu0
      %v5517 = vadd.f32 0.0, %v5516
      %v5518 = vpop.f32.mrb[0].mxu0
      %5519 = vmatprep.mubr.bf16.mxu0 0
      %5520 = vmatmul.mubr.bf16.gmra.mrb[0].mxu0 %v5410
      %v5521 = vpop.f32.mrb[0].mxu0
      %v5522 = vadd.f32 0.0, %v5521
      %v5523 = vpop.f32.mrb[0].mxu0
      %v5524 = vpop.f32.mrb[0].mxu0
      %v5525 = vadd.f32 0.0, %v5524
      %v5526 = vpop.f32.mrb[0].mxu0
      %5527 = vmatprep.mubr.bf16.mxu0 0
      %5528 = vmatmul.mubr.bf16.gmra.mrb[0].mxu0 %v5413
      %v5529 = vpop.f32.mrb[0].mxu0
      %v5530 = vadd.f32 0.0, %v5529
      %v5531 = vpop.f32.mrb[0].mxu0
      %v5532 = vpop.f32.mrb[0].mxu0
      %v5533 = vadd.f32 0.0, %v5532
      %v5534 = vpop.f32.mrb[0].mxu0
      %5535 = vmatprep.mubr.bf16.mxu0 0
      %5536 = vmatmul.mubr.bf16.gmra.mrb[0].mxu0 %v5416
      %v5537 = vpop.f32.mrb[0].mxu0
      %v5538 = vadd.f32 0.0, %v5537
      %v5539 = vpop.f32.mrb[0].mxu0
      %v5540 = vpop.f32.mrb[0].mxu0
      %v5541 = vadd.f32 0.0, %v5540
      %v5542 = vpop.f32.mrb[0].mxu0
      %5543 = vmatprep.mubr.bf16.mxu0 0
      %5544 = vmatmul.mubr.bf16.gmra.mrb[0].mxu0 %v5419
      %v5545 = vpop.f32.mrb[0].mxu0
      %v5546 = vadd.f32 0.0, %v5545
      %v5547 = vpop.f32.mrb[0].mxu0
      %v5548 = vpop.f32.mrb[0].mxu0
      %v5549 = vadd.f32 0.0, %v5548
      %v5550 = vpop.f32.mrb[0].mxu0
      %5551 = vmatprep.mubr.bf16.mxu0 0
      %5552 = vmatmul.mubr.bf16.gmra.mrb[0].mxu0 %v5422
      %v5553 = vpop.f32.mrb[0].mxu0
      %v5554 = vadd.f32 0.0, %v5553
      %v5555 = vpop.f32.mrb[0].mxu0
      %v5556 = vpop.f32.mrb[0].mxu0
      %v5557 = vadd.f32 0.0, %v5556
      %v5558 = vpop.f32.mrb[0].mxu0
      %5559 = vmatprep.mubr.bf16.mxu0 0
      %5560 = vmatmul.mubr.bf16.gmra.mrb[0].mxu0 %v5425
      %v5561 = vpop.f32.mrb[0].mxu0
      %v5562 = vadd.f32 0.0, %v5561
      %v5563 = vpop.f32.mrb[0].mxu0
      %v5564 = vpop.f32.mrb[0].mxu0
      %v5565 = vadd.f32 0.0, %v5564
      %v5566 = vpop.f32.mrb[0].mxu0
      %5567 = vmatprep.mubr.bf16.mxu0 0
      %5568 = vmatmul.mubr.bf16.gmra.mrb[0].mxu0 %v5428
      %v5569 = vpop.f32.mrb[0].mxu0
      %v5570 = vadd.f32 0.0, %v5569
      %v5571 = vpop.f32.mrb[0].mxu0
      %v5572 = vpop.f32.mrb[0].mxu0
      %v5573 = vadd.f32 0.0, %v5572
      %v5574 = vpop.f32.mrb[0].mxu0
      %5575 = vmatprep.mubr.bf16.mxu0 0
      %5576 = vmatmul.mubr.bf16.gmra.mrb[0].mxu0 %v5431
      %v5577 = vpop.f32.mrb[0].mxu0
      %v5578 = vadd.f32 0.0, %v5577
      %v5579 = vpop.f32.mrb[0].mxu0
      %v5580 = vpop.f32.mrb[0].mxu0
      %v5581 = vadd.f32 0.0, %v5580
      %v5582 = vpop.f32.mrb[0].mxu0
      %5583 = vmatprep.mubr.bf16.mxu0 0
      %5584 = vmatmul.mubr.bf16.gmra.mrb[0].mxu0 %v5434
      %v5585 = vpop.f32.mrb[0].mxu0
      %v5586 = vadd.f32 0.0, %v5585
      %v5587 = vpop.f32.mrb[0].mxu0
      %v5588 = vpop.f32.mrb[0].mxu0
      %v5589 = vadd.f32 0.0, %v5588
      %v5590 = vpop.f32.mrb[0].mxu0
      %5591 = vmatprep.mubr.bf16.mxu0 0
      %5592 = vmatmul.mubr.bf16.gmra.mrb[0].mxu0 %v5437
      %v5593 = vpop.f32.mrb[0].mxu0
      %v5594 = vadd.f32 0.0, %v5593
      %v5595 = vpop.f32.mrb[0].mxu0
      %v5596 = vpop.f32.mrb[0].mxu0
      %v5597 = vadd.f32 0.0, %v5596
      %v5598 = vpop.f32.mrb[0].mxu0
      %5599 = vdwg.mxu0
      %v5600 = vadd.f32 %v5278, %v5474
      %v5601 = vadd.f32 %v5279, %v5477
      %v5602 = vadd.f32 %v5280, %v5482
      %v5603 = vadd.f32 %v5281, %v5485
      %v5604 = vadd.f32 %v5282, %v5490
      %v5605 = vadd.f32 %v5283, %v5493
      %v5606 = vadd.f32 %v5284, %v5498
      %v5607 = vadd.f32 %v5285, %v5501
      %v5608 = vadd.f32 %v5286, %v5506
      %v5609 = vadd.f32 %v5287, %v5509
      %v5610 = vadd.f32 %v5288, %v5514
      %v5611 = vadd.f32 %v5289, %v5517
      %v5612 = vadd.f32 %v5290, %v5522
      %v5613 = vadd.f32 %v5291, %v5525
      %v5614 = vadd.f32 %v5292, %v5530
      %v5615 = vadd.f32 %v5293, %v5533
      %v5616 = vadd.f32 %v5294, %v5538
      %v5617 = vadd.f32 %v5295, %v5541
      %v5618 = vadd.f32 %v5296, %v5546
      %v5619 = vadd.f32 %v5297, %v5549
      %v5620 = vadd.f32 %v5298, %v5554
      %v5621 = vadd.f32 %v5299, %v5557
      %v5622 = vadd.f32 %v5300, %v5562
      %v5623 = vadd.f32 %v5301, %v5565
      %v5624 = vadd.f32 %v5302, %v5570
      %v5625 = vadd.f32 %v5303, %v5573
      %v5626 = vadd.f32 %v5304, %v5578
      %v5627 = vadd.f32 %v5305, %v5581
      %v5628 = vadd.f32 %v5306, %v5586
      %v5629 = vadd.f32 %v5307, %v5589
      %v5630 = vadd.f32 %v5308, %v5594
      %v5631 = vadd.f32 %v5309, %v5597
      %v5632 = vld [vmem:[%s2695] sm:$0xff]
      %v5633 = vld [vmem:[%s2695 + $0x8] sm:$0xff]
      %v5634 = vld [vmem:[%s2695 + $0x18] sm:$0xff]
      %v5635 = vld [vmem:[%s2695 + $0x20] sm:$0xff]
      %v5636 = vld [vmem:[%s2695 + $0x30] sm:$0xff]
      %v5637 = vld [vmem:[%s2695 + $0x38] sm:$0xff]
      %v5638 = vld [vmem:[%s2695 + $0x48] sm:$0xff]
      %v5639 = vld [vmem:[%s2695 + $0x50] sm:$0xff]
      %v5640 = vld [vmem:[%s2695 + $0x60] sm:$0xff]
      %v5641 = vld [vmem:[%s2695 + $0x68] sm:$0xff]
      %v5642 = vld [vmem:[%s2695 + $0x78] sm:$0xff]
      %v5643 = vld [vmem:[%s2695 + $0x80] sm:$0xff]
      %v5644 = vld [vmem:[%s2695 + $0x90] sm:$0xff]
      %v5645 = vld [vmem:[%s2695 + $0x98] sm:$0xff]
      %v5646 = vld [vmem:[%s2695 + $0xa8] sm:$0xff]
      %v5647 = vld [vmem:[%s2695 + $0xb0] sm:$0xff]
      %v5648 = vld [vmem:[%s2695 + $0xc0] sm:$0xff]
      %v5649 = vld [vmem:[%s2695 + $0xc8] sm:$0xff]
      %v5650 = vld [vmem:[%s2695 + $0xd8] sm:$0xff]
      %v5651 = vld [vmem:[%s2695 + $0xe0] sm:$0xff]
      %v5652 = vld [vmem:[%s2695 + $0xf0] sm:$0xff]
      %v5653 = vld [vmem:[%s2695 + $0xf8] sm:$0xff]
      %v5654 = vld [vmem:[%s2695 + $0x108] sm:$0xff]
      %v5655 = vld [vmem:[%s2695 + $0x110] sm:$0xff]
      %v5656 = vld [vmem:[%s2695 + $0x120] sm:$0xff]
      %v5657 = vld [vmem:[%s2695 + $0x128] sm:$0xff]
      %v5658 = vld [vmem:[%s2695 + $0x138] sm:$0xff]
      %v5659 = vld [vmem:[%s2695 + $0x140] sm:$0xff]
      %v5660 = vld [vmem:[%s2695 + $0x150] sm:$0xff]
      %v5661 = vld [vmem:[%s2695 + $0x158] sm:$0xff]
      %v5662 = vld [vmem:[%s2695 + $0x168] sm:$0xff]
      %v5663 = vld [vmem:[%s2695 + $0x170] sm:$0xff]
      %v5664 = vpack.c.bf16 %v5633, %v5632
      %v5665 = vpack.c.bf16 %v5635, %v5634
      %v5666 = vpack.c.bf16 %v5637, %v5636
      %v5667 = vpack.c.bf16 %v5639, %v5638
      %v5668 = vpack.c.bf16 %v5641, %v5640
      %v5669 = vpack.c.bf16 %v5643, %v5642
      %v5670 = vpack.c.bf16 %v5645, %v5644
      %v5671 = vpack.c.bf16 %v5647, %v5646
      %v5672 = vpack.c.bf16 %v5649, %v5648
      %v5673 = vpack.c.bf16 %v5651, %v5650
      %v5674 = vpack.c.bf16 %v5653, %v5652
      %v5675 = vpack.c.bf16 %v5655, %v5654
      %v5676 = vpack.c.bf16 %v5657, %v5656
      %v5677 = vpack.c.bf16 %v5659, %v5658
      %v5678 = vpack.c.bf16 %v5661, %v5660
      %v5679 = vpack.c.bf16 %v5663, %v5662
      %s5680 = scalar_lea.vmem %s5, 192
      %v5681 = vld [vmem:[%s5680] sm:$0xf]
      %v5682 = vld [vmem:[%s5680 + $0x4] sm:$0xf]
      %v5683 = vld [vmem:[%s5680 + $0x8] sm:$0xf]
      %v5684 = vld [vmem:[%s5680 + $0xc] sm:$0xf]
      %v5685 = vld [vmem:[%s5680 + $0x10] sm:$0xf]
      %v5686 = vld [vmem:[%s5680 + $0x14] sm:$0xf]
      %v5687 = vld [vmem:[%s5680 + $0x18] sm:$0xf]
      %v5688 = vld [vmem:[%s5680 + $0x1c] sm:$0xf]
      %v5697 = vunpack.c.l.b16 %v5681
      %v5698 = vunpack.c.l.b16 %v5682
      %v5699 = vunpack.c.l.b16 %v5683
      %v5700 = vunpack.c.l.b16 %v5684
      %v5701 = vunpack.c.l.b16 %v5685
      %v5702 = vunpack.c.l.b16 %v5686
      %v5703 = vunpack.c.l.b16 %v5687
      %v5704 = vunpack.c.l.b16 %v5688
      %v5705 = vpack.c.b16 %v5698, %v5697
      %v5706 = vpack.c.b16 %v5700, %v5699
      %v5707 = vpack.c.b16 %v5702, %v5701
      %v5708 = vpack.c.b16 %v5704, %v5703
      %v5714 = vsel %vm711, %v5664, 0
      %v5717 = vsel %vm711, %v5665, 0
      %v5720 = vsel %vm711, %v5666, 0
      %v5723 = vsel %vm711, %v5667, 0
      %v5726 = vsel %vm711, %v5668, 0
      %v5729 = vsel %vm711, %v5669, 0
      %v5732 = vsel %vm711, %v5670, 0
      %v5735 = vsel %vm711, %v5671, 0
      %v5738 = vsel %vm711, %v5672, 0
      %v5741 = vsel %vm711, %v5673, 0
      %v5744 = vsel %vm711, %v5674, 0
      %v5747 = vsel %vm711, %v5675, 0
      %v5750 = vsel %vm711, %v5676, 0
      %v5753 = vsel %vm711, %v5677, 0
      %v5756 = vsel %vm711, %v5678, 0
      %v5759 = vsel %vm711, %v5679, 0
      %5761 = vmatprep.subr.bf16.mxu0 0
      %5762 = vmatpush1.bf16.msra.mxu0 %v5705
      %5763 = vmatprep.subr.bf16.mxu0 0
      %5764 = vmatpush1.bf16.msra.mxu0 %v5706
      %5765 = vmatprep.subr.bf16.mxu0 0
      %5766 = vmatpush1.bf16.msra.mxu0 %v5707
      %5767 = vmatprep.subr.bf16.mxu0 0
      %5768 = vmatpush1.bf16.msra.mxu0 %v5708
      %5769 = vmatprep.subr.bf16.mxu0 0
      %5770 = vmatpush1.bf16.msra.mxu0 0
      %5771 = vmatprep.subr.bf16.mxu0 0
      %5772 = vmatpush1.bf16.msra.mxu0 0
      %5773 = vmatprep.subr.bf16.mxu0 0
      %5774 = vmatpush1.bf16.msra.mxu0 0
      %5775 = vmatprep.subr.bf16.mxu0 0
      %5776 = vmatpush1.bf16.msra.mxu0 0
      %5777 = vmatprep.subr.bf16.mxu0 0
      %5778 = vmatpush1.bf16.msra.mxu0 0
      %5779 = vmatprep.subr.bf16.mxu0 0
      %5780 = vmatpush1.bf16.msra.mxu0 0
      %5781 = vmatprep.subr.bf16.mxu0 0
      %5782 = vmatpush1.bf16.msra.mxu0 0
      %5783 = vmatprep.subr.bf16.mxu0 0
      %5784 = vmatpush1.bf16.msra.mxu0 0
      %5785 = vmatprep.subr.bf16.mxu0 0
      %5786 = vmatpush1.bf16.msra.mxu0 0
      %5787 = vmatprep.subr.bf16.mxu0 0
      %5788 = vmatpush1.bf16.msra.mxu0 0
      %5789 = vmatprep.subr.bf16.mxu0 0
      %5790 = vmatpush1.bf16.msra.mxu0 0
      %5791 = vmatprep.subr.bf16.mxu0 0
      %5792 = vmatpush1.bf16.msra.mxu0 0
      %5793 = vmatprep.mubr.bf16.mxu0 0
      %5794 = vmatmul.mubr.bf16.gmra.mrb[0].mxu0 %v5714
      %v5795 = vpop.f32.mrb[0].mxu0
      %v5796 = vadd.f32 0.0, %v5795
      %v5797 = vpop.f32.mrb[0].mxu0
      %v5798 = vpop.f32.mrb[0].mxu0
      %v5799 = vadd.f32 0.0, %v5798
      %v5800 = vpop.f32.mrb[0].mxu0
      %5801 = vmatprep.mubr.bf16.mxu0 0
      %5802 = vmatmul.mubr.bf16.gmra.mrb[0].mxu0 %v5717
      %v5803 = vpop.f32.mrb[0].mxu0
      %v5804 = vadd.f32 0.0, %v5803
      %v5805 = vpop.f32.mrb[0].mxu0
      %v5806 = vpop.f32.mrb[0].mxu0
      %v5807 = vadd.f32 0.0, %v5806
      %v5808 = vpop.f32.mrb[0].mxu0
      %5809 = vmatprep.mubr.bf16.mxu0 0
      %5810 = vmatmul.mubr.bf16.gmra.mrb[0].mxu0 %v5720
      %v5811 = vpop.f32.mrb[0].mxu0
      %v5812 = vadd.f32 0.0, %v5811
      %v5813 = vpop.f32.mrb[0].mxu0
      %v5814 = vpop.f32.mrb[0].mxu0
      %v5815 = vadd.f32 0.0, %v5814
      %v5816 = vpop.f32.mrb[0].mxu0
      %5817 = vmatprep.mubr.bf16.mxu0 0
      %5818 = vmatmul.mubr.bf16.gmra.mrb[0].mxu0 %v5723
      %v5819 = vpop.f32.mrb[0].mxu0
      %v5820 = vadd.f32 0.0, %v5819
      %v5821 = vpop.f32.mrb[0].mxu0
      %v5822 = vpop.f32.mrb[0].mxu0
      %v5823 = vadd.f32 0.0, %v5822
      %v5824 = vpop.f32.mrb[0].mxu0
      %5825 = vmatprep.mubr.bf16.mxu0 0
      %5826 = vmatmul.mubr.bf16.gmra.mrb[0].mxu0 %v5726
      %v5827 = vpop.f32.mrb[0].mxu0
      %v5828 = vadd.f32 0.0, %v5827
      %v5829 = vpop.f32.mrb[0].mxu0
      %v5830 = vpop.f32.mrb[0].mxu0
      %v5831 = vadd.f32 0.0, %v5830
      %v5832 = vpop.f32.mrb[0].mxu0
      %5833 = vmatprep.mubr.bf16.mxu0 0
      %5834 = vmatmul.mubr.bf16.gmra.mrb[0].mxu0 %v5729
      %v5835 = vpop.f32.mrb[0].mxu0
      %v5836 = vadd.f32 0.0, %v5835
      %v5837 = vpop.f32.mrb[0].mxu0
      %v5838 = vpop.f32.mrb[0].mxu0
      %v5839 = vadd.f32 0.0, %v5838
      %v5840 = vpop.f32.mrb[0].mxu0
      %5841 = vmatprep.mubr.bf16.mxu0 0
      %5842 = vmatmul.mubr.bf16.gmra.mrb[0].mxu0 %v5732
      %v5843 = vpop.f32.mrb[0].mxu0
      %v5844 = vadd.f32 0.0, %v5843
      %v5845 = vpop.f32.mrb[0].mxu0
      %v5846 = vpop.f32.mrb[0].mxu0
      %v5847 = vadd.f32 0.0, %v5846
      %v5848 = vpop.f32.mrb[0].mxu0
      %5849 = vmatprep.mubr.bf16.mxu0 0
      %5850 = vmatmul.mubr.bf16.gmra.mrb[0].mxu0 %v5735
      %v5851 = vpop.f32.mrb[0].mxu0
      %v5852 = vadd.f32 0.0, %v5851
      %v5853 = vpop.f32.mrb[0].mxu0
      %v5854 = vpop.f32.mrb[0].mxu0
      %v5855 = vadd.f32 0.0, %v5854
      %v5856 = vpop.f32.mrb[0].mxu0
      %5857 = vmatprep.mubr.bf16.mxu0 0
      %5858 = vmatmul.mubr.bf16.gmra.mrb[0].mxu0 %v5738
      %v5859 = vpop.f32.mrb[0].mxu0
      %v5860 = vadd.f32 0.0, %v5859
      %v5861 = vpop.f32.mrb[0].mxu0
      %v5862 = vpop.f32.mrb[0].mxu0
      %v5863 = vadd.f32 0.0, %v5862
      %v5864 = vpop.f32.mrb[0].mxu0
      %5865 = vmatprep.mubr.bf16.mxu0 0
      %5866 = vmatmul.mubr.bf16.gmra.mrb[0].mxu0 %v5741
      %v5867 = vpop.f32.mrb[0].mxu0
      %v5868 = vadd.f32 0.0, %v5867
      %v5869 = vpop.f32.mrb[0].mxu0
      %v5870 = vpop.f32.mrb[0].mxu0
      %v5871 = vadd.f32 0.0, %v5870
      %v5872 = vpop.f32.mrb[0].mxu0
      %5873 = vmatprep.mubr.bf16.mxu0 0
      %5874 = vmatmul.mubr.bf16.gmra.mrb[0].mxu0 %v5744
      %v5875 = vpop.f32.mrb[0].mxu0
      %v5876 = vadd.f32 0.0, %v5875
      %v5877 = vpop.f32.mrb[0].mxu0
      %v5878 = vpop.f32.mrb[0].mxu0
      %v5879 = vadd.f32 0.0, %v5878
      %v5880 = vpop.f32.mrb[0].mxu0
      %5881 = vmatprep.mubr.bf16.mxu0 0
      %5882 = vmatmul.mubr.bf16.gmra.mrb[0].mxu0 %v5747
      %v5883 = vpop.f32.mrb[0].mxu0
      %v5884 = vadd.f32 0.0, %v5883
      %v5885 = vpop.f32.mrb[0].mxu0
      %v5886 = vpop.f32.mrb[0].mxu0
      %v5887 = vadd.f32 0.0, %v5886
      %v5888 = vpop.f32.mrb[0].mxu0
      %5889 = vmatprep.mubr.bf16.mxu0 0
      %5890 = vmatmul.mubr.bf16.gmra.mrb[0].mxu0 %v5750
      %v5891 = vpop.f32.mrb[0].mxu0
      %v5892 = vadd.f32 0.0, %v5891
      %v5893 = vpop.f32.mrb[0].mxu0
      %v5894 = vpop.f32.mrb[0].mxu0
      %v5895 = vadd.f32 0.0, %v5894
      %v5896 = vpop.f32.mrb[0].mxu0
      %5897 = vmatprep.mubr.bf16.mxu0 0
      %5898 = vmatmul.mubr.bf16.gmra.mrb[0].mxu0 %v5753
      %v5899 = vpop.f32.mrb[0].mxu0
      %v5900 = vadd.f32 0.0, %v5899
      %v5901 = vpop.f32.mrb[0].mxu0
      %v5902 = vpop.f32.mrb[0].mxu0
      %v5903 = vadd.f32 0.0, %v5902
      %v5904 = vpop.f32.mrb[0].mxu0
      %5905 = vmatprep.mubr.bf16.mxu0 0
      %5906 = vmatmul.mubr.bf16.gmra.mrb[0].mxu0 %v5756
      %v5907 = vpop.f32.mrb[0].mxu0
      %v5908 = vadd.f32 0.0, %v5907
      %v5909 = vpop.f32.mrb[0].mxu0
      %v5910 = vpop.f32.mrb[0].mxu0
      %v5911 = vadd.f32 0.0, %v5910
      %v5912 = vpop.f32.mrb[0].mxu0
      %5913 = vmatprep.mubr.bf16.mxu0 0
      %5914 = vmatmul.mubr.bf16.gmra.mrb[0].mxu0 %v5759
      %v5915 = vpop.f32.mrb[0].mxu0
      %v5916 = vadd.f32 0.0, %v5915
      %v5917 = vpop.f32.mrb[0].mxu0
      %v5918 = vpop.f32.mrb[0].mxu0
      %v5919 = vadd.f32 0.0, %v5918
      %v5920 = vpop.f32.mrb[0].mxu0
      %5921 = vdwg.mxu0
      %v5922 = vadd.f32 %v5600, %v5796
      %v5923 = vadd.f32 %v5601, %v5799
      %v5924 = vadd.f32 %v5602, %v5804
      %v5925 = vadd.f32 %v5603, %v5807
      %v5926 = vadd.f32 %v5604, %v5812
      %v5927 = vadd.f32 %v5605, %v5815
      %v5928 = vadd.f32 %v5606, %v5820
      %v5929 = vadd.f32 %v5607, %v5823
      %v5930 = vadd.f32 %v5608, %v5828
      %v5931 = vadd.f32 %v5609, %v5831
      %v5932 = vadd.f32 %v5610, %v5836
      %v5933 = vadd.f32 %v5611, %v5839
      %v5934 = vadd.f32 %v5612, %v5844
      %v5935 = vadd.f32 %v5613, %v5847
      %v5936 = vadd.f32 %v5614, %v5852
      %v5937 = vadd.f32 %v5615, %v5855
      %v5938 = vadd.f32 %v5616, %v5860
      %v5939 = vadd.f32 %v5617, %v5863
      %v5940 = vadd.f32 %v5618, %v5868
      %v5941 = vadd.f32 %v5619, %v5871
      %v5942 = vadd.f32 %v5620, %v5876
      %v5943 = vadd.f32 %v5621, %v5879
      %v5944 = vadd.f32 %v5622, %v5884
      %v5945 = vadd.f32 %v5623, %v5887
      %v5946 = vadd.f32 %v5624, %v5892
      %v5947 = vadd.f32 %v5625, %v5895
      %v5948 = vadd.f32 %v5626, %v5900
      %v5949 = vadd.f32 %v5627, %v5903
      %v5950 = vadd.f32 %v5628, %v5908
      %v5951 = vadd.f32 %v5629, %v5911
      %v5952 = vadd.f32 %v5630, %v5916
      %v5953 = vadd.f32 %v5631, %v5919
      %v5954 = vld [vmem:[%s2695 + $0x1] sm:$0xff]
      %v5955 = vld [vmem:[%s2695 + $0x9] sm:$0xff]
      %v5956 = vld [vmem:[%s2695 + $0x19] sm:$0xff]
      %v5957 = vld [vmem:[%s2695 + $0x21] sm:$0xff]
      %v5958 = vld [vmem:[%s2695 + $0x31] sm:$0xff]
      %v5959 = vld [vmem:[%s2695 + $0x39] sm:$0xff]
      %v5960 = vld [vmem:[%s2695 + $0x49] sm:$0xff]
      %v5961 = vld [vmem:[%s2695 + $0x51] sm:$0xff]
      %v5962 = vld [vmem:[%s2695 + $0x61] sm:$0xff]
      %v5963 = vld [vmem:[%s2695 + $0x69] sm:$0xff]
      %v5964 = vld [vmem:[%s2695 + $0x79] sm:$0xff]
      %v5965 = vld [vmem:[%s2695 + $0x81] sm:$0xff]
      %v5966 = vld [vmem:[%s2695 + $0x91] sm:$0xff]
      %v5967 = vld [vmem:[%s2695 + $0x99] sm:$0xff]
      %v5968 = vld [vmem:[%s2695 + $0xa9] sm:$0xff]
      %v5969 = vld [vmem:[%s2695 + $0xb1] sm:$0xff]
      %v5970 = vld [vmem:[%s2695 + $0xc1] sm:$0xff]
      %v5971 = vld [vmem:[%s2695 + $0xc9] sm:$0xff]
      %v5972 = vld [vmem:[%s2695 + $0xd9] sm:$0xff]
      %v5973 = vld [vmem:[%s2695 + $0xe1] sm:$0xff]
      %v5974 = vld [vmem:[%s2695 + $0xf1] sm:$0xff]
      %v5975 = vld [vmem:[%s2695 + $0xf9] sm:$0xff]
      %v5976 = vld [vmem:[%s2695 + $0x109] sm:$0xff]
      %v5977 = vld [vmem:[%s2695 + $0x111] sm:$0xff]
      %v5978 = vld [vmem:[%s2695 + $0x121] sm:$0xff]
      %v5979 = vld [vmem:[%s2695 + $0x129] sm:$0xff]
      %v5980 = vld [vmem:[%s2695 + $0x139] sm:$0xff]
      %v5981 = vld [vmem:[%s2695 + $0x141] sm:$0xff]
      %v5982 = vld [vmem:[%s2695 + $0x151] sm:$0xff]
      %v5983 = vld [vmem:[%s2695 + $0x159] sm:$0xff]
      %v5984 = vld [vmem:[%s2695 + $0x169] sm:$0xff]
      %v5985 = vld [vmem:[%s2695 + $0x171] sm:$0xff]
      %v5986 = vpack.c.bf16 %v5955, %v5954
      %v5987 = vpack.c.bf16 %v5957, %v5956
      %v5988 = vpack.c.bf16 %v5959, %v5958
      %v5989 = vpack.c.bf16 %v5961, %v5960
      %v5990 = vpack.c.bf16 %v5963, %v5962
      %v5991 = vpack.c.bf16 %v5965, %v5964
      %v5992 = vpack.c.bf16 %v5967, %v5966
      %v5993 = vpack.c.bf16 %v5969, %v5968
      %v5994 = vpack.c.bf16 %v5971, %v5970
      %v5995 = vpack.c.bf16 %v5973, %v5972
      %v5996 = vpack.c.bf16 %v5975, %v5974
      %v5997 = vpack.c.bf16 %v5977, %v5976
      %v5998 = vpack.c.bf16 %v5979, %v5978
      %v5999 = vpack.c.bf16 %v5981, %v5980
      %v6000 = vpack.c.bf16 %v5983, %v5982
      %v6001 = vpack.c.bf16 %v5985, %v5984
      %s6002 = scalar_lea.vmem %s5, 224
      %v6003 = vld [vmem:[%s6002] sm:$0xf]
      %v6004 = vld [vmem:[%s6002 + $0x4] sm:$0xf]
      %v6005 = vld [vmem:[%s6002 + $0x8] sm:$0xf]
      %v6006 = vld [vmem:[%s6002 + $0xc] sm:$0xf]
      %v6007 = vld [vmem:[%s6002 + $0x10] sm:$0xf]
      %v6008 = vld [vmem:[%s6002 + $0x14] sm:$0xf]
      %v6009 = vld [vmem:[%s6002 + $0x18] sm:$0xf]
      %v6010 = vld [vmem:[%s6002 + $0x1c] sm:$0xf]
      %v6019 = vunpack.c.l.b16 %v6003
      %v6020 = vunpack.c.l.b16 %v6004
      %v6021 = vunpack.c.l.b16 %v6005
      %v6022 = vunpack.c.l.b16 %v6006
      %v6023 = vunpack.c.l.b16 %v6007
      %v6024 = vunpack.c.l.b16 %v6008
      %v6025 = vunpack.c.l.b16 %v6009
      %v6026 = vunpack.c.l.b16 %v6010
      %v6027 = vpack.c.b16 %v6020, %v6019
      %v6028 = vpack.c.b16 %v6022, %v6021
      %v6029 = vpack.c.b16 %v6024, %v6023
      %v6030 = vpack.c.b16 %v6026, %v6025
      %v6036 = vsel %vm711, %v5986, 0
      %v6039 = vsel %vm711, %v5987, 0
      %v6042 = vsel %vm711, %v5988, 0
      %v6045 = vsel %vm711, %v5989, 0
      %v6048 = vsel %vm711, %v5990, 0
      %v6051 = vsel %vm711, %v5991, 0
      %v6054 = vsel %vm711, %v5992, 0
      %v6057 = vsel %vm711, %v5993, 0
      %v6060 = vsel %vm711, %v5994, 0
      %v6063 = vsel %vm711, %v5995, 0
      %v6066 = vsel %vm711, %v5996, 0
      %v6069 = vsel %vm711, %v5997, 0
      %v6072 = vsel %vm711, %v5998, 0
      %v6075 = vsel %vm711, %v5999, 0
      %v6078 = vsel %vm711, %v6000, 0
      %v6081 = vsel %vm711, %v6001, 0
      %6083 = vmatprep.subr.bf16.mxu0 0
      %6084 = vmatpush1.bf16.msra.mxu0 %v6027
      %6085 = vmatprep.subr.bf16.mxu0 0
      %6086 = vmatpush1.bf16.msra.mxu0 %v6028
      %6087 = vmatprep.subr.bf16.mxu0 0
      %6088 = vmatpush1.bf16.msra.mxu0 %v6029
      %6089 = vmatprep.subr.bf16.mxu0 0
      %6090 = vmatpush1.bf16.msra.mxu0 %v6030
      %6091 = vmatprep.subr.bf16.mxu0 0
      %6092 = vmatpush1.bf16.msra.mxu0 0
      %6093 = vmatprep.subr.bf16.mxu0 0
      %6094 = vmatpush1.bf16.msra.mxu0 0
      %6095 = vmatprep.subr.bf16.mxu0 0
      %6096 = vmatpush1.bf16.msra.mxu0 0
      %6097 = vmatprep.subr.bf16.mxu0 0
      %6098 = vmatpush1.bf16.msra.mxu0 0
      %6099 = vmatprep.subr.bf16.mxu0 0
      %6100 = vmatpush1.bf16.msra.mxu0 0
      %6101 = vmatprep.subr.bf16.mxu0 0
      %6102 = vmatpush1.bf16.msra.mxu0 0
      %6103 = vmatprep.subr.bf16.mxu0 0
      %6104 = vmatpush1.bf16.msra.mxu0 0
      %6105 = vmatprep.subr.bf16.mxu0 0
      %6106 = vmatpush1.bf16.msra.mxu0 0
      %6107 = vmatprep.subr.bf16.mxu0 0
      %6108 = vmatpush1.bf16.msra.mxu0 0
      %6109 = vmatprep.subr.bf16.mxu0 0
      %6110 = vmatpush1.bf16.msra.mxu0 0
      %6111 = vmatprep.subr.bf16.mxu0 0
      %6112 = vmatpush1.bf16.msra.mxu0 0
      %6113 = vmatprep.subr.bf16.mxu0 0
      %6114 = vmatpush1.bf16.msra.mxu0 0
      %6115 = vmatprep.mubr.bf16.mxu0 0
      %6116 = vmatmul.mubr.bf16.gmra.mrb[0].mxu0 %v6036
      %v6117 = vpop.f32.mrb[0].mxu0
      %v6118 = vadd.f32 0.0, %v6117
      %v6119 = vpop.f32.mrb[0].mxu0
      %v6120 = vpop.f32.mrb[0].mxu0
      %v6121 = vadd.f32 0.0, %v6120
      %v6122 = vpop.f32.mrb[0].mxu0
      %6123 = vmatprep.mubr.bf16.mxu0 0
      %6124 = vmatmul.mubr.bf16.gmra.mrb[0].mxu0 %v6039
      %v6125 = vpop.f32.mrb[0].mxu0
      %v6126 = vadd.f32 0.0, %v6125
      %v6127 = vpop.f32.mrb[0].mxu0
      %v6128 = vpop.f32.mrb[0].mxu0
      %v6129 = vadd.f32 0.0, %v6128
      %v6130 = vpop.f32.mrb[0].mxu0
      %6131 = vmatprep.mubr.bf16.mxu0 0
      %6132 = vmatmul.mubr.bf16.gmra.mrb[0].mxu0 %v6042
      %v6133 = vpop.f32.mrb[0].mxu0
      %v6134 = vadd.f32 0.0, %v6133
      %v6135 = vpop.f32.mrb[0].mxu0
      %v6136 = vpop.f32.mrb[0].mxu0
      %v6137 = vadd.f32 0.0, %v6136
      %v6138 = vpop.f32.mrb[0].mxu0
      %6139 = vmatprep.mubr.bf16.mxu0 0
      %6140 = vmatmul.mubr.bf16.gmra.mrb[0].mxu0 %v6045
      %v6141 = vpop.f32.mrb[0].mxu0
      %v6142 = vadd.f32 0.0, %v6141
      %v6143 = vpop.f32.mrb[0].mxu0
      %v6144 = vpop.f32.mrb[0].mxu0
      %v6145 = vadd.f32 0.0, %v6144
      %v6146 = vpop.f32.mrb[0].mxu0
      %6147 = vmatprep.mubr.bf16.mxu0 0
      %6148 = vmatmul.mubr.bf16.gmra.mrb[0].mxu0 %v6048
      %v6149 = vpop.f32.mrb[0].mxu0
      %v6150 = vadd.f32 0.0, %v6149
      %v6151 = vpop.f32.mrb[0].mxu0
      %v6152 = vpop.f32.mrb[0].mxu0
      %v6153 = vadd.f32 0.0, %v6152
      %v6154 = vpop.f32.mrb[0].mxu0
      %6155 = vmatprep.mubr.bf16.mxu0 0
      %6156 = vmatmul.mubr.bf16.gmra.mrb[0].mxu0 %v6051
      %v6157 = vpop.f32.mrb[0].mxu0
      %v6158 = vadd.f32 0.0, %v6157
      %v6159 = vpop.f32.mrb[0].mxu0
      %v6160 = vpop.f32.mrb[0].mxu0
      %v6161 = vadd.f32 0.0, %v6160
      %v6162 = vpop.f32.mrb[0].mxu0
      %6163 = vmatprep.mubr.bf16.mxu0 0
      %6164 = vmatmul.mubr.bf16.gmra.mrb[0].mxu0 %v6054
      %v6165 = vpop.f32.mrb[0].mxu0
      %v6166 = vadd.f32 0.0, %v6165
      %v6167 = vpop.f32.mrb[0].mxu0
      %v6168 = vpop.f32.mrb[0].mxu0
      %v6169 = vadd.f32 0.0, %v6168
      %v6170 = vpop.f32.mrb[0].mxu0
      %6171 = vmatprep.mubr.bf16.mxu0 0
      %6172 = vmatmul.mubr.bf16.gmra.mrb[0].mxu0 %v6057
      %v6173 = vpop.f32.mrb[0].mxu0
      %v6174 = vadd.f32 0.0, %v6173
      %v6175 = vpop.f32.mrb[0].mxu0
      %v6176 = vpop.f32.mrb[0].mxu0
      %v6177 = vadd.f32 0.0, %v6176
      %v6178 = vpop.f32.mrb[0].mxu0
      %6179 = vmatprep.mubr.bf16.mxu0 0
      %6180 = vmatmul.mubr.bf16.gmra.mrb[0].mxu0 %v6060
      %v6181 = vpop.f32.mrb[0].mxu0
      %v6182 = vadd.f32 0.0, %v6181
      %v6183 = vpop.f32.mrb[0].mxu0
      %v6184 = vpop.f32.mrb[0].mxu0
      %v6185 = vadd.f32 0.0, %v6184
      %v6186 = vpop.f32.mrb[0].mxu0
      %6187 = vmatprep.mubr.bf16.mxu0 0
      %6188 = vmatmul.mubr.bf16.gmra.mrb[0].mxu0 %v6063
      %v6189 = vpop.f32.mrb[0].mxu0
      %v6190 = vadd.f32 0.0, %v6189
      %v6191 = vpop.f32.mrb[0].mxu0
      %v6192 = vpop.f32.mrb[0].mxu0
      %v6193 = vadd.f32 0.0, %v6192
      %v6194 = vpop.f32.mrb[0].mxu0
      %6195 = vmatprep.mubr.bf16.mxu0 0
      %6196 = vmatmul.mubr.bf16.gmra.mrb[0].mxu0 %v6066
      %v6197 = vpop.f32.mrb[0].mxu0
      %v6198 = vadd.f32 0.0, %v6197
      %v6199 = vpop.f32.mrb[0].mxu0
      %v6200 = vpop.f32.mrb[0].mxu0
      %v6201 = vadd.f32 0.0, %v6200
      %v6202 = vpop.f32.mrb[0].mxu0
      %6203 = vmatprep.mubr.bf16.mxu0 0
      %6204 = vmatmul.mubr.bf16.gmra.mrb[0].mxu0 %v6069
      %v6205 = vpop.f32.mrb[0].mxu0
      %v6206 = vadd.f32 0.0, %v6205
      %v6207 = vpop.f32.mrb[0].mxu0
      %v6208 = vpop.f32.mrb[0].mxu0
      %v6209 = vadd.f32 0.0, %v6208
      %v6210 = vpop.f32.mrb[0].mxu0
      %6211 = vmatprep.mubr.bf16.mxu0 0
      %6212 = vmatmul.mubr.bf16.gmra.mrb[0].mxu0 %v6072
      %v6213 = vpop.f32.mrb[0].mxu0
      %v6214 = vadd.f32 0.0, %v6213
      %v6215 = vpop.f32.mrb[0].mxu0
      %v6216 = vpop.f32.mrb[0].mxu0
      %v6217 = vadd.f32 0.0, %v6216
      %v6218 = vpop.f32.mrb[0].mxu0
      %6219 = vmatprep.mubr.bf16.mxu0 0
      %6220 = vmatmul.mubr.bf16.gmra.mrb[0].mxu0 %v6075
      %v6221 = vpop.f32.mrb[0].mxu0
      %v6222 = vadd.f32 0.0, %v6221
      %v6223 = vpop.f32.mrb[0].mxu0
      %v6224 = vpop.f32.mrb[0].mxu0
      %v6225 = vadd.f32 0.0, %v6224
      %v6226 = vpop.f32.mrb[0].mxu0
      %6227 = vmatprep.mubr.bf16.mxu0 0
      %6228 = vmatmul.mubr.bf16.gmra.mrb[0].mxu0 %v6078
      %v6229 = vpop.f32.mrb[0].mxu0
      %v6230 = vadd.f32 0.0, %v6229
      %v6231 = vpop.f32.mrb[0].mxu0
      %v6232 = vpop.f32.mrb[0].mxu0
      %v6233 = vadd.f32 0.0, %v6232
      %v6234 = vpop.f32.mrb[0].mxu0
      %6235 = vmatprep.mubr.bf16.mxu0 0
      %6236 = vmatmul.mubr.bf16.gmra.mrb[0].mxu0 %v6081
      %v6237 = vpop.f32.mrb[0].mxu0
      %v6238 = vadd.f32 0.0, %v6237
      %v6239 = vpop.f32.mrb[0].mxu0
      %v6240 = vpop.f32.mrb[0].mxu0
      %v6241 = vadd.f32 0.0, %v6240
      %v6242 = vpop.f32.mrb[0].mxu0
      %6243 = vdwg.mxu0
      %v6244 = vadd.f32 %v5922, %v6118
      %v6245 = vadd.f32 %v5923, %v6121
      %v6246 = vadd.f32 %v5924, %v6126
      %v6247 = vadd.f32 %v5925, %v6129
      %v6248 = vadd.f32 %v5926, %v6134
      %v6249 = vadd.f32 %v5927, %v6137
      %v6250 = vadd.f32 %v5928, %v6142
      %v6251 = vadd.f32 %v5929, %v6145
      %v6252 = vadd.f32 %v5930, %v6150
      %v6253 = vadd.f32 %v5931, %v6153
      %v6254 = vadd.f32 %v5932, %v6158
      %v6255 = vadd.f32 %v5933, %v6161
      %v6256 = vadd.f32 %v5934, %v6166
      %v6257 = vadd.f32 %v5935, %v6169
      %v6258 = vadd.f32 %v5936, %v6174
      %v6259 = vadd.f32 %v5937, %v6177
      %v6260 = vadd.f32 %v5938, %v6182
      %v6261 = vadd.f32 %v5939, %v6185
      %v6262 = vadd.f32 %v5940, %v6190
      %v6263 = vadd.f32 %v5941, %v6193
      %v6264 = vadd.f32 %v5942, %v6198
      %v6265 = vadd.f32 %v5943, %v6201
      %v6266 = vadd.f32 %v5944, %v6206
      %v6267 = vadd.f32 %v5945, %v6209
      %v6268 = vadd.f32 %v5946, %v6214
      %v6269 = vadd.f32 %v5947, %v6217
      %v6270 = vadd.f32 %v5948, %v6222
      %v6271 = vadd.f32 %v5949, %v6225
      %v6272 = vadd.f32 %v5950, %v6230
      %v6273 = vadd.f32 %v5951, %v6233
      %v6274 = vadd.f32 %v5952, %v6238
      %v6275 = vadd.f32 %v5953, %v6241
      %v6276 = vld [vmem:[%s2695 + $0x2] sm:$0xff]
      %v6277 = vld [vmem:[%s2695 + $0xa] sm:$0xff]
      %v6278 = vld [vmem:[%s2695 + $0x1a] sm:$0xff]
      %v6279 = vld [vmem:[%s2695 + $0x22] sm:$0xff]
      %v6280 = vld [vmem:[%s2695 + $0x32] sm:$0xff]
      %v6281 = vld [vmem:[%s2695 + $0x3a] sm:$0xff]
      %v6282 = vld [vmem:[%s2695 + $0x4a] sm:$0xff]
      %v6283 = vld [vmem:[%s2695 + $0x52] sm:$0xff]
      %v6284 = vld [vmem:[%s2695 + $0x62] sm:$0xff]
      %v6285 = vld [vmem:[%s2695 + $0x6a] sm:$0xff]
      %v6286 = vld [vmem:[%s2695 + $0x7a] sm:$0xff]
      %v6287 = vld [vmem:[%s2695 + $0x82] sm:$0xff]
      %v6288 = vld [vmem:[%s2695 + $0x92] sm:$0xff]
      %v6289 = vld [vmem:[%s2695 + $0x9a] sm:$0xff]
      %v6290 = vld [vmem:[%s2695 + $0xaa] sm:$0xff]
      %v6291 = vld [vmem:[%s2695 + $0xb2] sm:$0xff]
      %v6292 = vld [vmem:[%s2695 + $0xc2] sm:$0xff]
      %v6293 = vld [vmem:[%s2695 + $0xca] sm:$0xff]
      %v6294 = vld [vmem:[%s2695 + $0xda] sm:$0xff]
      %v6295 = vld [vmem:[%s2695 + $0xe2] sm:$0xff]
      %v6296 = vld [vmem:[%s2695 + $0xf2] sm:$0xff]
      %v6297 = vld [vmem:[%s2695 + $0xfa] sm:$0xff]
      %v6298 = vld [vmem:[%s2695 + $0x10a] sm:$0xff]
      %v6299 = vld [vmem:[%s2695 + $0x112] sm:$0xff]
      %v6300 = vld [vmem:[%s2695 + $0x122] sm:$0xff]
      %v6301 = vld [vmem:[%s2695 + $0x12a] sm:$0xff]
      %v6302 = vld [vmem:[%s2695 + $0x13a] sm:$0xff]
      %v6303 = vld [vmem:[%s2695 + $0x142] sm:$0xff]
      %v6304 = vld [vmem:[%s2695 + $0x152] sm:$0xff]
      %v6305 = vld [vmem:[%s2695 + $0x15a] sm:$0xff]
      %v6306 = vld [vmem:[%s2695 + $0x16a] sm:$0xff]
      %v6307 = vld [vmem:[%s2695 + $0x172] sm:$0xff]
      %v6308 = vpack.c.bf16 %v6277, %v6276
      %v6309 = vpack.c.bf16 %v6279, %v6278
      %v6310 = vpack.c.bf16 %v6281, %v6280
      %v6311 = vpack.c.bf16 %v6283, %v6282
      %v6312 = vpack.c.bf16 %v6285, %v6284
      %v6313 = vpack.c.bf16 %v6287, %v6286
      %v6314 = vpack.c.bf16 %v6289, %v6288
      %v6315 = vpack.c.bf16 %v6291, %v6290
      %v6316 = vpack.c.bf16 %v6293, %v6292
      %v6317 = vpack.c.bf16 %v6295, %v6294
      %v6318 = vpack.c.bf16 %v6297, %v6296
      %v6319 = vpack.c.bf16 %v6299, %v6298
      %v6320 = vpack.c.bf16 %v6301, %v6300
      %v6321 = vpack.c.bf16 %v6303, %v6302
      %v6322 = vpack.c.bf16 %v6305, %v6304
      %v6323 = vpack.c.bf16 %v6307, %v6306
      %s6324 = scalar_lea.vmem %s5, 256
      %v6325 = vld [vmem:[%s6324] sm:$0xf]
      %v6326 = vld [vmem:[%s6324 + $0x4] sm:$0xf]
      %v6327 = vld [vmem:[%s6324 + $0x8] sm:$0xf]
      %v6328 = vld [vmem:[%s6324 + $0xc] sm:$0xf]
      %v6329 = vld [vmem:[%s6324 + $0x10] sm:$0xf]
      %v6330 = vld [vmem:[%s6324 + $0x14] sm:$0xf]
      %v6331 = vld [vmem:[%s6324 + $0x18] sm:$0xf]
      %v6332 = vld [vmem:[%s6324 + $0x1c] sm:$0xf]
      %v6341 = vunpack.c.l.b16 %v6325
      %v6342 = vunpack.c.l.b16 %v6326
      %v6343 = vunpack.c.l.b16 %v6327
      %v6344 = vunpack.c.l.b16 %v6328
      %v6345 = vunpack.c.l.b16 %v6329
      %v6346 = vunpack.c.l.b16 %v6330
      %v6347 = vunpack.c.l.b16 %v6331
      %v6348 = vunpack.c.l.b16 %v6332
      %v6349 = vpack.c.b16 %v6342, %v6341
      %v6350 = vpack.c.b16 %v6344, %v6343
      %v6351 = vpack.c.b16 %v6346, %v6345
      %v6352 = vpack.c.b16 %v6348, %v6347
      %v6358 = vsel %vm711, %v6308, 0
      %v6361 = vsel %vm711, %v6309, 0
      %v6364 = vsel %vm711, %v6310, 0
      %v6367 = vsel %vm711, %v6311, 0
      %v6370 = vsel %vm711, %v6312, 0
      %v6373 = vsel %vm711, %v6313, 0
      %v6376 = vsel %vm711, %v6314, 0
      %v6379 = vsel %vm711, %v6315, 0
      %v6382 = vsel %vm711, %v6316, 0
      %v6385 = vsel %vm711, %v6317, 0
      %v6388 = vsel %vm711, %v6318, 0
      %v6391 = vsel %vm711, %v6319, 0
      %v6394 = vsel %vm711, %v6320, 0
      %v6397 = vsel %vm711, %v6321, 0
      %v6400 = vsel %vm711, %v6322, 0
      %v6403 = vsel %vm711, %v6323, 0
      %6405 = vmatprep.subr.bf16.mxu0 0
      %6406 = vmatpush1.bf16.msra.mxu0 %v6349
      %6407 = vmatprep.subr.bf16.mxu0 0
      %6408 = vmatpush1.bf16.msra.mxu0 %v6350
      %6409 = vmatprep.subr.bf16.mxu0 0
      %6410 = vmatpush1.bf16.msra.mxu0 %v6351
      %6411 = vmatprep.subr.bf16.mxu0 0
      %6412 = vmatpush1.bf16.msra.mxu0 %v6352
      %6413 = vmatprep.subr.bf16.mxu0 0
      %6414 = vmatpush1.bf16.msra.mxu0 0
      %6415 = vmatprep.subr.bf16.mxu0 0
      %6416 = vmatpush1.bf16.msra.mxu0 0
      %6417 = vmatprep.subr.bf16.mxu0 0
      %6418 = vmatpush1.bf16.msra.mxu0 0
      %6419 = vmatprep.subr.bf16.mxu0 0
      %6420 = vmatpush1.bf16.msra.mxu0 0
      %6421 = vmatprep.subr.bf16.mxu0 0
      %6422 = vmatpush1.bf16.msra.mxu0 0
      %6423 = vmatprep.subr.bf16.mxu0 0
      %6424 = vmatpush1.bf16.msra.mxu0 0
      %6425 = vmatprep.subr.bf16.mxu0 0
      %6426 = vmatpush1.bf16.msra.mxu0 0
      %6427 = vmatprep.subr.bf16.mxu0 0
      %6428 = vmatpush1.bf16.msra.mxu0 0
      %6429 = vmatprep.subr.bf16.mxu0 0
      %6430 = vmatpush1.bf16.msra.mxu0 0
      %6431 = vmatprep.subr.bf16.mxu0 0
      %6432 = vmatpush1.bf16.msra.mxu0 0
      %6433 = vmatprep.subr.bf16.mxu0 0
      %6434 = vmatpush1.bf16.msra.mxu0 0
      %6435 = vmatprep.subr.bf16.mxu0 0
      %6436 = vmatpush1.bf16.msra.mxu0 0
      %6437 = vmatprep.mubr.bf16.mxu0 0
      %6438 = vmatmul.mubr.bf16.gmra.mrb[0].mxu0 %v6358
      %v6439 = vpop.f32.mrb[0].mxu0
      %v6440 = vadd.f32 0.0, %v6439
      %v6441 = vpop.f32.mrb[0].mxu0
      %v6442 = vpop.f32.mrb[0].mxu0
      %v6443 = vadd.f32 0.0, %v6442
      %v6444 = vpop.f32.mrb[0].mxu0
      %6445 = vmatprep.mubr.bf16.mxu0 0
      %6446 = vmatmul.mubr.bf16.gmra.mrb[0].mxu0 %v6361
      %v6447 = vpop.f32.mrb[0].mxu0
      %v6448 = vadd.f32 0.0, %v6447
      %v6449 = vpop.f32.mrb[0].mxu0
      %v6450 = vpop.f32.mrb[0].mxu0
      %v6451 = vadd.f32 0.0, %v6450
      %v6452 = vpop.f32.mrb[0].mxu0
      %6453 = vmatprep.mubr.bf16.mxu0 0
      %6454 = vmatmul.mubr.bf16.gmra.mrb[0].mxu0 %v6364
      %v6455 = vpop.f32.mrb[0].mxu0
      %v6456 = vadd.f32 0.0, %v6455
      %v6457 = vpop.f32.mrb[0].mxu0
      %v6458 = vpop.f32.mrb[0].mxu0
      %v6459 = vadd.f32 0.0, %v6458
      %v6460 = vpop.f32.mrb[0].mxu0
      %6461 = vmatprep.mubr.bf16.mxu0 0
      %6462 = vmatmul.mubr.bf16.gmra.mrb[0].mxu0 %v6367
      %v6463 = vpop.f32.mrb[0].mxu0
      %v6464 = vadd.f32 0.0, %v6463
      %v6465 = vpop.f32.mrb[0].mxu0
      %v6466 = vpop.f32.mrb[0].mxu0
      %v6467 = vadd.f32 0.0, %v6466
      %v6468 = vpop.f32.mrb[0].mxu0
      %6469 = vmatprep.mubr.bf16.mxu0 0
      %6470 = vmatmul.mubr.bf16.gmra.mrb[0].mxu0 %v6370
      %v6471 = vpop.f32.mrb[0].mxu0
      %v6472 = vadd.f32 0.0, %v6471
      %v6473 = vpop.f32.mrb[0].mxu0
      %v6474 = vpop.f32.mrb[0].mxu0
      %v6475 = vadd.f32 0.0, %v6474
      %v6476 = vpop.f32.mrb[0].mxu0
      %6477 = vmatprep.mubr.bf16.mxu0 0
      %6478 = vmatmul.mubr.bf16.gmra.mrb[0].mxu0 %v6373
      %v6479 = vpop.f32.mrb[0].mxu0
      %v6480 = vadd.f32 0.0, %v6479
      %v6481 = vpop.f32.mrb[0].mxu0
      %v6482 = vpop.f32.mrb[0].mxu0
      %v6483 = vadd.f32 0.0, %v6482
      %v6484 = vpop.f32.mrb[0].mxu0
      %6485 = vmatprep.mubr.bf16.mxu0 0
      %6486 = vmatmul.mubr.bf16.gmra.mrb[0].mxu0 %v6376
      %v6487 = vpop.f32.mrb[0].mxu0
      %v6488 = vadd.f32 0.0, %v6487
      %v6489 = vpop.f32.mrb[0].mxu0
      %v6490 = vpop.f32.mrb[0].mxu0
      %v6491 = vadd.f32 0.0, %v6490
      %v6492 = vpop.f32.mrb[0].mxu0
      %6493 = vmatprep.mubr.bf16.mxu0 0
      %6494 = vmatmul.mubr.bf16.gmra.mrb[0].mxu0 %v6379
      %v6495 = vpop.f32.mrb[0].mxu0
      %v6496 = vadd.f32 0.0, %v6495
      %v6497 = vpop.f32.mrb[0].mxu0
      %v6498 = vpop.f32.mrb[0].mxu0
      %v6499 = vadd.f32 0.0, %v6498
      %v6500 = vpop.f32.mrb[0].mxu0
      %6501 = vmatprep.mubr.bf16.mxu0 0
      %6502 = vmatmul.mubr.bf16.gmra.mrb[0].mxu0 %v6382
      %v6503 = vpop.f32.mrb[0].mxu0
      %v6504 = vadd.f32 0.0, %v6503
      %v6505 = vpop.f32.mrb[0].mxu0
      %v6506 = vpop.f32.mrb[0].mxu0
      %v6507 = vadd.f32 0.0, %v6506
      %v6508 = vpop.f32.mrb[0].mxu0
      %6509 = vmatprep.mubr.bf16.mxu0 0
      %6510 = vmatmul.mubr.bf16.gmra.mrb[0].mxu0 %v6385
      %v6511 = vpop.f32.mrb[0].mxu0
      %v6512 = vadd.f32 0.0, %v6511
      %v6513 = vpop.f32.mrb[0].mxu0
      %v6514 = vpop.f32.mrb[0].mxu0
      %v6515 = vadd.f32 0.0, %v6514
      %v6516 = vpop.f32.mrb[0].mxu0
      %6517 = vmatprep.mubr.bf16.mxu0 0
      %6518 = vmatmul.mubr.bf16.gmra.mrb[0].mxu0 %v6388
      %v6519 = vpop.f32.mrb[0].mxu0
      %v6520 = vadd.f32 0.0, %v6519
      %v6521 = vpop.f32.mrb[0].mxu0
      %v6522 = vpop.f32.mrb[0].mxu0
      %v6523 = vadd.f32 0.0, %v6522
      %v6524 = vpop.f32.mrb[0].mxu0
      %6525 = vmatprep.mubr.bf16.mxu0 0
      %6526 = vmatmul.mubr.bf16.gmra.mrb[0].mxu0 %v6391
      %v6527 = vpop.f32.mrb[0].mxu0
      %v6528 = vadd.f32 0.0, %v6527
      %v6529 = vpop.f32.mrb[0].mxu0
      %v6530 = vpop.f32.mrb[0].mxu0
      %v6531 = vadd.f32 0.0, %v6530
      %v6532 = vpop.f32.mrb[0].mxu0
      %6533 = vmatprep.mubr.bf16.mxu0 0
      %6534 = vmatmul.mubr.bf16.gmra.mrb[0].mxu0 %v6394
      %v6535 = vpop.f32.mrb[0].mxu0
      %v6536 = vadd.f32 0.0, %v6535
      %v6537 = vpop.f32.mrb[0].mxu0
      %v6538 = vpop.f32.mrb[0].mxu0
      %v6539 = vadd.f32 0.0, %v6538
      %v6540 = vpop.f32.mrb[0].mxu0
      %6541 = vmatprep.mubr.bf16.mxu0 0
      %6542 = vmatmul.mubr.bf16.gmra.mrb[0].mxu0 %v6397
      %v6543 = vpop.f32.mrb[0].mxu0
      %v6544 = vadd.f32 0.0, %v6543
      %v6545 = vpop.f32.mrb[0].mxu0
      %v6546 = vpop.f32.mrb[0].mxu0
      %v6547 = vadd.f32 0.0, %v6546
      %v6548 = vpop.f32.mrb[0].mxu0
      %6549 = vmatprep.mubr.bf16.mxu0 0
      %6550 = vmatmul.mubr.bf16.gmra.mrb[0].mxu0 %v6400
      %v6551 = vpop.f32.mrb[0].mxu0
      %v6552 = vadd.f32 0.0, %v6551
      %v6553 = vpop.f32.mrb[0].mxu0
      %v6554 = vpop.f32.mrb[0].mxu0
      %v6555 = vadd.f32 0.0, %v6554
      %v6556 = vpop.f32.mrb[0].mxu0
      %6557 = vmatprep.mubr.bf16.mxu0 0
      %6558 = vmatmul.mubr.bf16.gmra.mrb[0].mxu0 %v6403
      %v6559 = vpop.f32.mrb[0].mxu0
      %v6560 = vadd.f32 0.0, %v6559
      %v6561 = vpop.f32.mrb[0].mxu0
      %v6562 = vpop.f32.mrb[0].mxu0
      %v6563 = vadd.f32 0.0, %v6562
      %v6564 = vpop.f32.mrb[0].mxu0
      %6565 = vdwg.mxu0
      %v6566 = vadd.f32 %v6244, %v6440
      %v6567 = vadd.f32 %v6245, %v6443
      %v6568 = vadd.f32 %v6246, %v6448
      %v6569 = vadd.f32 %v6247, %v6451
      %v6570 = vadd.f32 %v6248, %v6456
      %v6571 = vadd.f32 %v6249, %v6459
      %v6572 = vadd.f32 %v6250, %v6464
      %v6573 = vadd.f32 %v6251, %v6467
      %v6574 = vadd.f32 %v6252, %v6472
      %v6575 = vadd.f32 %v6253, %v6475
      %v6576 = vadd.f32 %v6254, %v6480
      %v6577 = vadd.f32 %v6255, %v6483
      %v6578 = vadd.f32 %v6256, %v6488
      %v6579 = vadd.f32 %v6257, %v6491
      %v6580 = vadd.f32 %v6258, %v6496
      %v6581 = vadd.f32 %v6259, %v6499
      %v6582 = vadd.f32 %v6260, %v6504
      %v6583 = vadd.f32 %v6261, %v6507
      %v6584 = vadd.f32 %v6262, %v6512
      %v6585 = vadd.f32 %v6263, %v6515
      %v6586 = vadd.f32 %v6264, %v6520
      %v6587 = vadd.f32 %v6265, %v6523
      %v6588 = vadd.f32 %v6266, %v6528
      %v6589 = vadd.f32 %v6267, %v6531
      %v6590 = vadd.f32 %v6268, %v6536
      %v6591 = vadd.f32 %v6269, %v6539
      %v6592 = vadd.f32 %v6270, %v6544
      %v6593 = vadd.f32 %v6271, %v6547
      %v6594 = vadd.f32 %v6272, %v6552
      %v6595 = vadd.f32 %v6273, %v6555
      %v6596 = vadd.f32 %v6274, %v6560
      %v6597 = vadd.f32 %v6275, %v6563
      %v6598 = vld [vmem:[%s6] sm:$0x1]
      %v6600 = vlaneseq
      %v6601 = vshrl.u32 %v6600, 7
      %v6602 = vsub.s32 0, %v6601
      %v6603 = vrot.slane %v6598, %v6602
      %v6605 = vadd.f32 %v6566, %v6603
      %v6606 = vadd.f32 %v6567, %v6603
      %v6607 = vadd.f32 %v6568, %v6603
      %v6608 = vadd.f32 %v6569, %v6603
      %v6609 = vadd.f32 %v6570, %v6603
      %v6610 = vadd.f32 %v6571, %v6603
      %v6611 = vadd.f32 %v6572, %v6603
      %v6612 = vadd.f32 %v6573, %v6603
      %v6613 = vadd.f32 %v6574, %v6603
      %v6614 = vadd.f32 %v6575, %v6603
      %v6615 = vadd.f32 %v6576, %v6603
      %v6616 = vadd.f32 %v6577, %v6603
      %v6617 = vadd.f32 %v6578, %v6603
      %v6618 = vadd.f32 %v6579, %v6603
      %v6619 = vadd.f32 %v6580, %v6603
      %v6620 = vadd.f32 %v6581, %v6603
      %v6621 = vadd.f32 %v6582, %v6603
      %v6622 = vadd.f32 %v6583, %v6603
      %v6623 = vadd.f32 %v6584, %v6603
      %v6624 = vadd.f32 %v6585, %v6603
      %v6625 = vadd.f32 %v6586, %v6603
      %v6626 = vadd.f32 %v6587, %v6603
      %v6627 = vadd.f32 %v6588, %v6603
      %v6628 = vadd.f32 %v6589, %v6603
      %v6629 = vadd.f32 %v6590, %v6603
      %v6630 = vadd.f32 %v6591, %v6603
      %v6631 = vadd.f32 %v6592, %v6603
      %v6632 = vadd.f32 %v6593, %v6603
      %v6633 = vadd.f32 %v6594, %v6603
      %v6634 = vadd.f32 %v6595, %v6603
      %v6635 = vadd.f32 %v6596, %v6603
      %v6636 = vadd.f32 %v6597, %v6603
      %v6637 = vmax.f32 %v6605, 0.0
      %v6638 = vmax.f32 %v6606, 0.0
      %v6639 = vmax.f32 %v6607, 0.0
      %v6640 = vmax.f32 %v6608, 0.0
      %v6641 = vmax.f32 %v6609, 0.0
      %v6642 = vmax.f32 %v6610, 0.0
      %v6643 = vmax.f32 %v6611, 0.0
      %v6644 = vmax.f32 %v6612, 0.0
      %v6645 = vmax.f32 %v6613, 0.0
      %v6646 = vmax.f32 %v6614, 0.0
      %v6647 = vmax.f32 %v6615, 0.0
      %v6648 = vmax.f32 %v6616, 0.0
      %v6649 = vmax.f32 %v6617, 0.0
      %v6650 = vmax.f32 %v6618, 0.0
      %v6651 = vmax.f32 %v6619, 0.0
      %v6652 = vmax.f32 %v6620, 0.0
      %v6653 = vmax.f32 %v6621, 0.0
      %v6654 = vmax.f32 %v6622, 0.0
      %v6655 = vmax.f32 %v6623, 0.0
      %v6656 = vmax.f32 %v6624, 0.0
      %v6657 = vmax.f32 %v6625, 0.0
      %v6658 = vmax.f32 %v6626, 0.0
      %v6659 = vmax.f32 %v6627, 0.0
      %v6660 = vmax.f32 %v6628, 0.0
      %v6661 = vmax.f32 %v6629, 0.0
      %v6662 = vmax.f32 %v6630, 0.0
      %v6663 = vmax.f32 %v6631, 0.0
      %v6664 = vmax.f32 %v6632, 0.0
      %v6665 = vmax.f32 %v6633, 0.0
      %v6666 = vmax.f32 %v6634, 0.0
      %v6667 = vmax.f32 %v6635, 0.0
      %v6668 = vmax.f32 %v6636, 0.0
      %6669 = vst.msk [vmem:[%s762 + $0x1] sm:$0xff] %vm469, %v6637
      %6670 = vst.msk [vmem:[%s762 + $0x9] sm:$0xff] %vm469, %v6638
      %6671 = vst.msk [vmem:[%s762 + $0x19] sm:$0xff] %vm469, %v6639
      %6672 = vst.msk [vmem:[%s762 + $0x21] sm:$0xff] %vm469, %v6640
      %6673 = vst.msk [vmem:[%s762 + $0x31] sm:$0xff] %vm469, %v6641
      %6674 = vst.msk [vmem:[%s762 + $0x39] sm:$0xff] %vm469, %v6642
      %6675 = vst.msk [vmem:[%s762 + $0x49] sm:$0xff] %vm469, %v6643
      %6676 = vst.msk [vmem:[%s762 + $0x51] sm:$0xff] %vm469, %v6644
      %6677 = vst.msk [vmem:[%s762 + $0x61] sm:$0xff] %vm469, %v6645
      %6678 = vst.msk [vmem:[%s762 + $0x69] sm:$0xff] %vm469, %v6646
      %6679 = vst.msk [vmem:[%s762 + $0x79] sm:$0xff] %vm469, %v6647
      %6680 = vst.msk [vmem:[%s762 + $0x81] sm:$0xff] %vm469, %v6648
      %6681 = vst.msk [vmem:[%s762 + $0x91] sm:$0xff] %vm469, %v6649
      %6682 = vst.msk [vmem:[%s762 + $0x99] sm:$0xff] %vm469, %v6650
      %6683 = vst.msk [vmem:[%s762 + $0xa9] sm:$0xff] %vm469, %v6651
      %6684 = vst.msk [vmem:[%s762 + $0xb1] sm:$0xff] %vm469, %v6652
      %6685 = vst.msk [vmem:[%s762 + $0xc1] sm:$0xff] %vm469, %v6653
      %6686 = vst.msk [vmem:[%s762 + $0xc9] sm:$0xff] %vm469, %v6654
      %6687 = vst.msk [vmem:[%s762 + $0xd9] sm:$0xff] %vm469, %v6655
      %6688 = vst.msk [vmem:[%s762 + $0xe1] sm:$0xff] %vm469, %v6656
      %6689 = vst.msk [vmem:[%s762 + $0xf1] sm:$0xff] %vm469, %v6657
      %6690 = vst.msk [vmem:[%s762 + $0xf9] sm:$0xff] %vm469, %v6658
      %6691 = vst.msk [vmem:[%s762 + $0x109] sm:$0xff] %vm469, %v6659
      %6692 = vst.msk [vmem:[%s762 + $0x111] sm:$0xff] %vm469, %v6660
      %6693 = vst.msk [vmem:[%s762 + $0x121] sm:$0xff] %vm469, %v6661
      %6694 = vst.msk [vmem:[%s762 + $0x129] sm:$0xff] %vm469, %v6662
      %6695 = vst.msk [vmem:[%s762 + $0x139] sm:$0xff] %vm469, %v6663
      %6696 = vst.msk [vmem:[%s762 + $0x141] sm:$0xff] %vm469, %v6664
      %6697 = vst.msk [vmem:[%s762 + $0x151] sm:$0xff] %vm469, %v6665
      %6698 = vst.msk [vmem:[%s762 + $0x159] sm:$0xff] %vm469, %v6666
      %6699 = vst.msk [vmem:[%s762 + $0x169] sm:$0xff] %vm469, %v6667
      %6700 = vst.msk [vmem:[%s762 + $0x171] sm:$0xff] %vm469, %v6668
      %v6701 = vld [vmem:[#allocation3] sm:$0xff]
      %v6702 = vld [vmem:[#allocation3 + $0x8] sm:$0xff]
      %v6703 = vld [vmem:[#allocation3 + $0x18] sm:$0xff]
      %v6704 = vld [vmem:[#allocation3 + $0x20] sm:$0xff]
      %v6705 = vld [vmem:[#allocation3 + $0x30] sm:$0xff]
      %v6706 = vld [vmem:[#allocation3 + $0x38] sm:$0xff]
      %v6707 = vld [vmem:[#allocation3 + $0x48] sm:$0xff]
      %v6708 = vld [vmem:[#allocation3 + $0x50] sm:$0xff]
      %v6709 = vld [vmem:[#allocation3 + $0x60] sm:$0xff]
      %v6710 = vld [vmem:[#allocation3 + $0x68] sm:$0xff]
      %v6711 = vld [vmem:[#allocation3 + $0x78] sm:$0xff]
      %v6712 = vld [vmem:[#allocation3 + $0x80] sm:$0xff]
      %v6713 = vld [vmem:[#allocation3 + $0x90] sm:$0xff]
      %v6714 = vld [vmem:[#allocation3 + $0x98] sm:$0xff]
      %v6715 = vld [vmem:[#allocation3 + $0xa8] sm:$0xff]
      %v6716 = vld [vmem:[#allocation3 + $0xb0] sm:$0xff]
      %v6717 = vld [vmem:[#allocation3 + $0xc0] sm:$0xff]
      %v6718 = vld [vmem:[#allocation3 + $0xc8] sm:$0xff]
      %v6719 = vld [vmem:[#allocation3 + $0xd8] sm:$0xff]
      %v6720 = vld [vmem:[#allocation3 + $0xe0] sm:$0xff]
      %v6721 = vld [vmem:[#allocation3 + $0xf0] sm:$0xff]
      %v6722 = vld [vmem:[#allocation3 + $0xf8] sm:$0xff]
      %v6723 = vld [vmem:[#allocation3 + $0x108] sm:$0xff]
      %v6724 = vld [vmem:[#allocation3 + $0x110] sm:$0xff]
      %v6725 = vld [vmem:[#allocation3 + $0x120] sm:$0xff]
      %v6726 = vld [vmem:[#allocation3 + $0x128] sm:$0xff]
      %v6727 = vld [vmem:[#allocation3 + $0x138] sm:$0xff]
      %v6728 = vld [vmem:[#allocation3 + $0x140] sm:$0xff]
      %v6729 = vld [vmem:[#allocation3 + $0x150] sm:$0xff]
      %v6730 = vld [vmem:[#allocation3 + $0x158] sm:$0xff]
      %v6731 = vld [vmem:[#allocation3 + $0x168] sm:$0xff]
      %v6732 = vld [vmem:[#allocation3 + $0x170] sm:$0xff]
      %v6733 = vpack.c.bf16 %v6702, %v6701
      %v6734 = vpack.c.bf16 %v6704, %v6703
      %v6735 = vpack.c.bf16 %v6706, %v6705
      %v6736 = vpack.c.bf16 %v6708, %v6707
      %v6737 = vpack.c.bf16 %v6710, %v6709
      %v6738 = vpack.c.bf16 %v6712, %v6711
      %v6739 = vpack.c.bf16 %v6714, %v6713
      %v6740 = vpack.c.bf16 %v6716, %v6715
      %v6741 = vpack.c.bf16 %v6718, %v6717
      %v6742 = vpack.c.bf16 %v6720, %v6719
      %v6743 = vpack.c.bf16 %v6722, %v6721
      %v6744 = vpack.c.bf16 %v6724, %v6723
      %v6745 = vpack.c.bf16 %v6726, %v6725
      %v6746 = vpack.c.bf16 %v6728, %v6727
      %v6747 = vpack.c.bf16 %v6730, %v6729
      %v6748 = vpack.c.bf16 %v6732, %v6731
      %v6749 = vld [vmem:[%s7] sm:$0xf]
      %v6750 = vld [vmem:[%s7 + $0x4] sm:$0xf]
      %v6751 = vld [vmem:[%s7 + $0x8] sm:$0xf]
      %v6752 = vld [vmem:[%s7 + $0xc] sm:$0xf]
      %v6753 = vld [vmem:[#allocation3 + $0x1] sm:$0xff]
      %v6754 = vld [vmem:[#allocation3 + $0x9] sm:$0xff]
      %v6755 = vld [vmem:[#allocation3 + $0x19] sm:$0xff]
      %v6756 = vld [vmem:[#allocation3 + $0x21] sm:$0xff]
      %v6757 = vld [vmem:[#allocation3 + $0x31] sm:$0xff]
      %v6758 = vld [vmem:[#allocation3 + $0x39] sm:$0xff]
      %v6759 = vld [vmem:[#allocation3 + $0x49] sm:$0xff]
      %v6760 = vld [vmem:[#allocation3 + $0x51] sm:$0xff]
      %v6761 = vld [vmem:[#allocation3 + $0x61] sm:$0xff]
      %v6762 = vld [vmem:[#allocation3 + $0x69] sm:$0xff]
      %v6763 = vld [vmem:[#allocation3 + $0x79] sm:$0xff]
      %v6764 = vld [vmem:[#allocation3 + $0x81] sm:$0xff]
      %v6765 = vld [vmem:[#allocation3 + $0x91] sm:$0xff]
      %v6766 = vld [vmem:[#allocation3 + $0x99] sm:$0xff]
      %v6767 = vld [vmem:[#allocation3 + $0xa9] sm:$0xff]
      %v6768 = vld [vmem:[#allocation3 + $0xb1] sm:$0xff]
      %v6769 = vld [vmem:[#allocation3 + $0xc1] sm:$0xff]
      %v6770 = vld [vmem:[#allocation3 + $0xc9] sm:$0xff]
      %v6771 = vld [vmem:[#allocation3 + $0xd9] sm:$0xff]
      %v6772 = vld [vmem:[#allocation3 + $0xe1] sm:$0xff]
      %v6773 = vld [vmem:[#allocation3 + $0xf1] sm:$0xff]
      %v6774 = vld [vmem:[#allocation3 + $0xf9] sm:$0xff]
      %v6775 = vld [vmem:[#allocation3 + $0x109] sm:$0xff]
      %v6776 = vld [vmem:[#allocation3 + $0x111] sm:$0xff]
      %v6777 = vld [vmem:[#allocation3 + $0x121] sm:$0xff]
      %v6778 = vld [vmem:[#allocation3 + $0x129] sm:$0xff]
      %v6779 = vld [vmem:[#allocation3 + $0x139] sm:$0xff]
      %v6780 = vld [vmem:[#allocation3 + $0x141] sm:$0xff]
      %v6781 = vld [vmem:[#allocation3 + $0x151] sm:$0xff]
      %v6782 = vld [vmem:[#allocation3 + $0x159] sm:$0xff]
      %v6783 = vld [vmem:[#allocation3 + $0x169] sm:$0xff]
      %v6784 = vld [vmem:[#allocation3 + $0x171] sm:$0xff]
      %v6785 = vpack.c.bf16 %v6754, %v6753
      %v6786 = vpack.c.bf16 %v6756, %v6755
      %v6787 = vpack.c.bf16 %v6758, %v6757
      %v6788 = vpack.c.bf16 %v6760, %v6759
      %v6789 = vpack.c.bf16 %v6762, %v6761
      %v6790 = vpack.c.bf16 %v6764, %v6763
      %v6791 = vpack.c.bf16 %v6766, %v6765
      %v6792 = vpack.c.bf16 %v6768, %v6767
      %v6793 = vpack.c.bf16 %v6770, %v6769
      %v6794 = vpack.c.bf16 %v6772, %v6771
      %v6795 = vpack.c.bf16 %v6774, %v6773
      %v6796 = vpack.c.bf16 %v6776, %v6775
      %v6797 = vpack.c.bf16 %v6778, %v6777
      %v6798 = vpack.c.bf16 %v6780, %v6779
      %v6799 = vpack.c.bf16 %v6782, %v6781
      %v6800 = vpack.c.bf16 %v6784, %v6783
      %s6801 = scalar_lea.vmem %s7, 16
      %v6802 = vld [vmem:[%s6801] sm:$0xf]
      %v6803 = vld [vmem:[%s6801 + $0x4] sm:$0xf]
      %v6804 = vld [vmem:[%s6801 + $0x8] sm:$0xf]
      %v6805 = vld [vmem:[%s6801 + $0xc] sm:$0xf]
      %v6810 = vunpack.c.l.b16 %v6802
      %v6811 = vunpack.c.l.b16 %v6803
      %v6812 = vunpack.c.l.b16 %v6804
      %v6813 = vunpack.c.l.b16 %v6805
      %v6814 = vpack.c.b16 %v6811, %v6810
      %v6815 = vpack.c.b16 %v6813, %v6812
      %v6819 = vsel %vm469, %v6785, 0
      %v6822 = vsel %vm469, %v6786, 0
      %v6825 = vsel %vm469, %v6787, 0
      %v6828 = vsel %vm469, %v6788, 0
      %v6831 = vsel %vm469, %v6789, 0
      %v6834 = vsel %vm469, %v6790, 0
      %v6837 = vsel %vm469, %v6791, 0
      %v6840 = vsel %vm469, %v6792, 0
      %v6843 = vsel %vm469, %v6793, 0
      %v6846 = vsel %vm469, %v6794, 0
      %v6849 = vsel %vm469, %v6795, 0
      %v6852 = vsel %vm469, %v6796, 0
      %v6855 = vsel %vm469, %v6797, 0
      %v6858 = vsel %vm469, %v6798, 0
      %v6861 = vsel %vm469, %v6799, 0
      %v6864 = vsel %vm469, %v6800, 0
      %6866 = vmatprep.subr.bf16.mxu0 0
      %6867 = vmatpush1.bf16.msra.mxu0 %v6814
      %6868 = vmatprep.subr.bf16.mxu0 0
      %6869 = vmatpush1.bf16.msra.mxu0 %v6815
      %6870 = vmatprep.subr.bf16.mxu0 0
      %6871 = vmatpush1.bf16.msra.mxu0 0
      %6872 = vmatprep.subr.bf16.mxu0 0
      %6873 = vmatpush1.bf16.msra.mxu0 0
      %6874 = vmatprep.subr.bf16.mxu0 0
      %6875 = vmatpush1.bf16.msra.mxu0 0
      %6876 = vmatprep.subr.bf16.mxu0 0
      %6877 = vmatpush1.bf16.msra.mxu0 0
      %6878 = vmatprep.subr.bf16.mxu0 0
      %6879 = vmatpush1.bf16.msra.mxu0 0
      %6880 = vmatprep.subr.bf16.mxu0 0
      %6881 = vmatpush1.bf16.msra.mxu0 0
      %6882 = vmatprep.subr.bf16.mxu0 0
      %6883 = vmatpush1.bf16.msra.mxu0 0
      %6884 = vmatprep.subr.bf16.mxu0 0
      %6885 = vmatpush1.bf16.msra.mxu0 0
      %6886 = vmatprep.subr.bf16.mxu0 0
      %6887 = vmatpush1.bf16.msra.mxu0 0
      %6888 = vmatprep.subr.bf16.mxu0 0
      %6889 = vmatpush1.bf16.msra.mxu0 0
      %6890 = vmatprep.subr.bf16.mxu0 0
      %6891 = vmatpush1.bf16.msra.mxu0 0
      %6892 = vmatprep.subr.bf16.mxu0 0
      %6893 = vmatpush1.bf16.msra.mxu0 0
      %6894 = vmatprep.subr.bf16.mxu0 0
      %6895 = vmatpush1.bf16.msra.mxu0 0
      %6896 = vmatprep.subr.bf16.mxu0 0
      %6897 = vmatpush1.bf16.msra.mxu0 0
      %6898 = vmatprep.mubr.bf16.mxu0 0
      %6899 = vmatmul.mubr.bf16.gmra.mrb[0].mxu0 %v6819
      %v6900 = vpop.f32.mrb[0].mxu0
      %v6901 = vadd.f32 0.0, %v6900
      %v6902 = vpop.f32.mrb[0].mxu0
      %v6903 = vpop.f32.mrb[0].mxu0
      %v6904 = vadd.f32 0.0, %v6903
      %v6905 = vpop.f32.mrb[0].mxu0
      %6906 = vmatprep.mubr.bf16.mxu0 0
      %6907 = vmatmul.mubr.bf16.gmra.mrb[0].mxu0 %v6822
      %v6908 = vpop.f32.mrb[0].mxu0
      %v6909 = vadd.f32 0.0, %v6908
      %v6910 = vpop.f32.mrb[0].mxu0
      %v6911 = vpop.f32.mrb[0].mxu0
      %v6912 = vadd.f32 0.0, %v6911
      %v6913 = vpop.f32.mrb[0].mxu0
      %6914 = vmatprep.mubr.bf16.mxu0 0
      %6915 = vmatmul.mubr.bf16.gmra.mrb[0].mxu0 %v6825
      %v6916 = vpop.f32.mrb[0].mxu0
      %v6917 = vadd.f32 0.0, %v6916
      %v6918 = vpop.f32.mrb[0].mxu0
      %v6919 = vpop.f32.mrb[0].mxu0
      %v6920 = vadd.f32 0.0, %v6919
      %v6921 = vpop.f32.mrb[0].mxu0
      %6922 = vmatprep.mubr.bf16.mxu0 0
      %6923 = vmatmul.mubr.bf16.gmra.mrb[0].mxu0 %v6828
      %v6924 = vpop.f32.mrb[0].mxu0
      %v6925 = vadd.f32 0.0, %v6924
      %v6926 = vpop.f32.mrb[0].mxu0
      %v6927 = vpop.f32.mrb[0].mxu0
      %v6928 = vadd.f32 0.0, %v6927
      %v6929 = vpop.f32.mrb[0].mxu0
      %6930 = vmatprep.mubr.bf16.mxu0 0
      %6931 = vmatmul.mubr.bf16.gmra.mrb[0].mxu0 %v6831
      %v6932 = vpop.f32.mrb[0].mxu0
      %v6933 = vadd.f32 0.0, %v6932
      %v6934 = vpop.f32.mrb[0].mxu0
      %v6935 = vpop.f32.mrb[0].mxu0
      %v6936 = vadd.f32 0.0, %v6935
      %v6937 = vpop.f32.mrb[0].mxu0
      %6938 = vmatprep.mubr.bf16.mxu0 0
      %6939 = vmatmul.mubr.bf16.gmra.mrb[0].mxu0 %v6834
      %v6940 = vpop.f32.mrb[0].mxu0
      %v6941 = vadd.f32 0.0, %v6940
      %v6942 = vpop.f32.mrb[0].mxu0
      %v6943 = vpop.f32.mrb[0].mxu0
      %v6944 = vadd.f32 0.0, %v6943
      %v6945 = vpop.f32.mrb[0].mxu0
      %6946 = vmatprep.mubr.bf16.mxu0 0
      %6947 = vmatmul.mubr.bf16.gmra.mrb[0].mxu0 %v6837
      %v6948 = vpop.f32.mrb[0].mxu0
      %v6949 = vadd.f32 0.0, %v6948
      %v6950 = vpop.f32.mrb[0].mxu0
      %v6951 = vpop.f32.mrb[0].mxu0
      %v6952 = vadd.f32 0.0, %v6951
      %v6953 = vpop.f32.mrb[0].mxu0
      %6954 = vmatprep.mubr.bf16.mxu0 0
      %6955 = vmatmul.mubr.bf16.gmra.mrb[0].mxu0 %v6840
      %v6956 = vpop.f32.mrb[0].mxu0
      %v6957 = vadd.f32 0.0, %v6956
      %v6958 = vpop.f32.mrb[0].mxu0
      %v6959 = vpop.f32.mrb[0].mxu0
      %v6960 = vadd.f32 0.0, %v6959
      %v6961 = vpop.f32.mrb[0].mxu0
      %6962 = vmatprep.mubr.bf16.mxu0 0
      %6963 = vmatmul.mubr.bf16.gmra.mrb[0].mxu0 %v6843
      %v6964 = vpop.f32.mrb[0].mxu0
      %v6965 = vadd.f32 0.0, %v6964
      %v6966 = vpop.f32.mrb[0].mxu0
      %v6967 = vpop.f32.mrb[0].mxu0
      %v6968 = vadd.f32 0.0, %v6967
      %v6969 = vpop.f32.mrb[0].mxu0
      %6970 = vmatprep.mubr.bf16.mxu0 0
      %6971 = vmatmul.mubr.bf16.gmra.mrb[0].mxu0 %v6846
      %v6972 = vpop.f32.mrb[0].mxu0
      %v6973 = vadd.f32 0.0, %v6972
      %v6974 = vpop.f32.mrb[0].mxu0
      %v6975 = vpop.f32.mrb[0].mxu0
      %v6976 = vadd.f32 0.0, %v6975
      %v6977 = vpop.f32.mrb[0].mxu0
      %6978 = vmatprep.mubr.bf16.mxu0 0
      %6979 = vmatmul.mubr.bf16.gmra.mrb[0].mxu0 %v6849
      %v6980 = vpop.f32.mrb[0].mxu0
      %v6981 = vadd.f32 0.0, %v6980
      %v6982 = vpop.f32.mrb[0].mxu0
      %v6983 = vpop.f32.mrb[0].mxu0
      %v6984 = vadd.f32 0.0, %v6983
      %v6985 = vpop.f32.mrb[0].mxu0
      %6986 = vmatprep.mubr.bf16.mxu0 0
      %6987 = vmatmul.mubr.bf16.gmra.mrb[0].mxu0 %v6852
      %v6988 = vpop.f32.mrb[0].mxu0
      %v6989 = vadd.f32 0.0, %v6988
      %v6990 = vpop.f32.mrb[0].mxu0
      %v6991 = vpop.f32.mrb[0].mxu0
      %v6992 = vadd.f32 0.0, %v6991
      %v6993 = vpop.f32.mrb[0].mxu0
      %6994 = vmatprep.mubr.bf16.mxu0 0
      %6995 = vmatmul.mubr.bf16.gmra.mrb[0].mxu0 %v6855
      %v6996 = vpop.f32.mrb[0].mxu0
      %v6997 = vadd.f32 0.0, %v6996
      %v6998 = vpop.f32.mrb[0].mxu0
      %v6999 = vpop.f32.mrb[0].mxu0
      %v7000 = vadd.f32 0.0, %v6999
      %v7001 = vpop.f32.mrb[0].mxu0
      %7002 = vmatprep.mubr.bf16.mxu0 0
      %7003 = vmatmul.mubr.bf16.gmra.mrb[0].mxu0 %v6858
      %v7004 = vpop.f32.mrb[0].mxu0
      %v7005 = vadd.f32 0.0, %v7004
      %v7006 = vpop.f32.mrb[0].mxu0
      %v7007 = vpop.f32.mrb[0].mxu0
      %v7008 = vadd.f32 0.0, %v7007
      %v7009 = vpop.f32.mrb[0].mxu0
      %7010 = vmatprep.mubr.bf16.mxu0 0
      %7011 = vmatmul.mubr.bf16.gmra.mrb[0].mxu0 %v6861
      %v7012 = vpop.f32.mrb[0].mxu0
      %v7013 = vadd.f32 0.0, %v7012
      %v7014 = vpop.f32.mrb[0].mxu0
      %v7015 = vpop.f32.mrb[0].mxu0
      %v7016 = vadd.f32 0.0, %v7015
      %v7017 = vpop.f32.mrb[0].mxu0
      %7018 = vmatprep.mubr.bf16.mxu0 0
      %7019 = vmatmul.mubr.bf16.gmra.mrb[0].mxu0 %v6864
      %v7020 = vpop.f32.mrb[0].mxu0
      %v7021 = vadd.f32 0.0, %v7020
      %v7022 = vpop.f32.mrb[0].mxu0
      %v7023 = vpop.f32.mrb[0].mxu0
      %v7024 = vadd.f32 0.0, %v7023
      %v7025 = vpop.f32.mrb[0].mxu0
      %7026 = vdwg.mxu0
      %v7031 = vunpack.c.l.b16 %v6749
      %v7032 = vunpack.c.l.b16 %v6750
      %v7033 = vunpack.c.l.b16 %v6751
      %v7034 = vunpack.c.l.b16 %v6752
      %v7035 = vpack.c.b16 %v7032, %v7031
      %v7036 = vpack.c.b16 %v7034, %v7033
      %v7040 = vsel %vm469, %v6733, 0
      %v7043 = vsel %vm469, %v6734, 0
      %v7046 = vsel %vm469, %v6735, 0
      %v7049 = vsel %vm469, %v6736, 0
      %v7052 = vsel %vm469, %v6737, 0
      %v7055 = vsel %vm469, %v6738, 0
      %v7058 = vsel %vm469, %v6739, 0
      %v7061 = vsel %vm469, %v6740, 0
      %v7064 = vsel %vm469, %v6741, 0
      %v7067 = vsel %vm469, %v6742, 0
      %v7070 = vsel %vm469, %v6743, 0
      %v7073 = vsel %vm469, %v6744, 0
      %v7076 = vsel %vm469, %v6745, 0
      %v7079 = vsel %vm469, %v6746, 0
      %v7082 = vsel %vm469, %v6747, 0
      %v7085 = vsel %vm469, %v6748, 0
      %7087 = vmatprep.subr.bf16.mxu0 0
      %7088 = vmatpush1.bf16.msra.mxu0 %v7035
      %7089 = vmatprep.subr.bf16.mxu0 0
      %7090 = vmatpush1.bf16.msra.mxu0 %v7036
      %7091 = vmatprep.subr.bf16.mxu0 0
      %7092 = vmatpush1.bf16.msra.mxu0 0
      %7093 = vmatprep.subr.bf16.mxu0 0
      %7094 = vmatpush1.bf16.msra.mxu0 0
      %7095 = vmatprep.subr.bf16.mxu0 0
      %7096 = vmatpush1.bf16.msra.mxu0 0
      %7097 = vmatprep.subr.bf16.mxu0 0
      %7098 = vmatpush1.bf16.msra.mxu0 0
      %7099 = vmatprep.subr.bf16.mxu0 0
      %7100 = vmatpush1.bf16.msra.mxu0 0
      %7101 = vmatprep.subr.bf16.mxu0 0
      %7102 = vmatpush1.bf16.msra.mxu0 0
      %7103 = vmatprep.subr.bf16.mxu0 0
      %7104 = vmatpush1.bf16.msra.mxu0 0
      %7105 = vmatprep.subr.bf16.mxu0 0
      %7106 = vmatpush1.bf16.msra.mxu0 0
      %7107 = vmatprep.subr.bf16.mxu0 0
      %7108 = vmatpush1.bf16.msra.mxu0 0
      %7109 = vmatprep.subr.bf16.mxu0 0
      %7110 = vmatpush1.bf16.msra.mxu0 0
      %7111 = vmatprep.subr.bf16.mxu0 0
      %7112 = vmatpush1.bf16.msra.mxu0 0
      %7113 = vmatprep.subr.bf16.mxu0 0
      %7114 = vmatpush1.bf16.msra.mxu0 0
      %7115 = vmatprep.subr.bf16.mxu0 0
      %7116 = vmatpush1.bf16.msra.mxu0 0
      %7117 = vmatprep.subr.bf16.mxu0 0
      %7118 = vmatpush1.bf16.msra.mxu0 0
      %7119 = vmatprep.mubr.bf16.mxu0 0
      %7120 = vmatmul.mubr.bf16.gmra.mrb[0].mxu0 %v7040
      %v7121 = vpop.f32.mrb[0].mxu0
      %v7122 = vadd.f32 %v6901, %v7121
      %v7123 = vpop.f32.mrb[0].mxu0
      %v7124 = vpop.f32.mrb[0].mxu0
      %v7125 = vadd.f32 %v6904, %v7124
      %v7126 = vpop.f32.mrb[0].mxu0
      %7127 = vmatprep.mubr.bf16.mxu0 0
      %7128 = vmatmul.mubr.bf16.gmra.mrb[0].mxu0 %v7043
      %v7129 = vpop.f32.mrb[0].mxu0
      %v7130 = vadd.f32 %v6909, %v7129
      %v7131 = vpop.f32.mrb[0].mxu0
      %v7132 = vpop.f32.mrb[0].mxu0
      %v7133 = vadd.f32 %v6912, %v7132
      %v7134 = vpop.f32.mrb[0].mxu0
      %7135 = vmatprep.mubr.bf16.mxu0 0
      %7136 = vmatmul.mubr.bf16.gmra.mrb[0].mxu0 %v7046
      %v7137 = vpop.f32.mrb[0].mxu0
      %v7138 = vadd.f32 %v6917, %v7137
      %v7139 = vpop.f32.mrb[0].mxu0
      %v7140 = vpop.f32.mrb[0].mxu0
      %v7141 = vadd.f32 %v6920, %v7140
      %v7142 = vpop.f32.mrb[0].mxu0
      %7143 = vmatprep.mubr.bf16.mxu0 0
      %7144 = vmatmul.mubr.bf16.gmra.mrb[0].mxu0 %v7049
      %v7145 = vpop.f32.mrb[0].mxu0
      %v7146 = vadd.f32 %v6925, %v7145
      %v7147 = vpop.f32.mrb[0].mxu0
      %v7148 = vpop.f32.mrb[0].mxu0
      %v7149 = vadd.f32 %v6928, %v7148
      %v7150 = vpop.f32.mrb[0].mxu0
      %7151 = vmatprep.mubr.bf16.mxu0 0
      %7152 = vmatmul.mubr.bf16.gmra.mrb[0].mxu0 %v7052
      %v7153 = vpop.f32.mrb[0].mxu0
      %v7154 = vadd.f32 %v6933, %v7153
      %v7155 = vpop.f32.mrb[0].mxu0
      %v7156 = vpop.f32.mrb[0].mxu0
      %v7157 = vadd.f32 %v6936, %v7156
      %v7158 = vpop.f32.mrb[0].mxu0
      %7159 = vmatprep.mubr.bf16.mxu0 0
      %7160 = vmatmul.mubr.bf16.gmra.mrb[0].mxu0 %v7055
      %v7161 = vpop.f32.mrb[0].mxu0
      %v7162 = vadd.f32 %v6941, %v7161
      %v7163 = vpop.f32.mrb[0].mxu0
      %v7164 = vpop.f32.mrb[0].mxu0
      %v7165 = vadd.f32 %v6944, %v7164
      %v7166 = vpop.f32.mrb[0].mxu0
      %7167 = vmatprep.mubr.bf16.mxu0 0
      %7168 = vmatmul.mubr.bf16.gmra.mrb[0].mxu0 %v7058
      %v7169 = vpop.f32.mrb[0].mxu0
      %v7170 = vadd.f32 %v6949, %v7169
      %v7171 = vpop.f32.mrb[0].mxu0
      %v7172 = vpop.f32.mrb[0].mxu0
      %v7173 = vadd.f32 %v6952, %v7172
      %v7174 = vpop.f32.mrb[0].mxu0
      %7175 = vmatprep.mubr.bf16.mxu0 0
      %7176 = vmatmul.mubr.bf16.gmra.mrb[0].mxu0 %v7061
      %v7177 = vpop.f32.mrb[0].mxu0
      %v7178 = vadd.f32 %v6957, %v7177
      %v7179 = vpop.f32.mrb[0].mxu0
      %v7180 = vpop.f32.mrb[0].mxu0
      %v7181 = vadd.f32 %v6960, %v7180
      %v7182 = vpop.f32.mrb[0].mxu0
      %7183 = vmatprep.mubr.bf16.mxu0 0
      %7184 = vmatmul.mubr.bf16.gmra.mrb[0].mxu0 %v7064
      %v7185 = vpop.f32.mrb[0].mxu0
      %v7186 = vadd.f32 %v6965, %v7185
      %v7187 = vpop.f32.mrb[0].mxu0
      %v7188 = vpop.f32.mrb[0].mxu0
      %v7189 = vadd.f32 %v6968, %v7188
      %v7190 = vpop.f32.mrb[0].mxu0
      %7191 = vmatprep.mubr.bf16.mxu0 0
      %7192 = vmatmul.mubr.bf16.gmra.mrb[0].mxu0 %v7067
      %v7193 = vpop.f32.mrb[0].mxu0
      %v7194 = vadd.f32 %v6973, %v7193
      %v7195 = vpop.f32.mrb[0].mxu0
      %v7196 = vpop.f32.mrb[0].mxu0
      %v7197 = vadd.f32 %v6976, %v7196
      %v7198 = vpop.f32.mrb[0].mxu0
      %7199 = vmatprep.mubr.bf16.mxu0 0
      %7200 = vmatmul.mubr.bf16.gmra.mrb[0].mxu0 %v7070
      %v7201 = vpop.f32.mrb[0].mxu0
      %v7202 = vadd.f32 %v6981, %v7201
      %v7203 = vpop.f32.mrb[0].mxu0
      %v7204 = vpop.f32.mrb[0].mxu0
      %v7205 = vadd.f32 %v6984, %v7204
      %v7206 = vpop.f32.mrb[0].mxu0
      %7207 = vmatprep.mubr.bf16.mxu0 0
      %7208 = vmatmul.mubr.bf16.gmra.mrb[0].mxu0 %v7073
      %v7209 = vpop.f32.mrb[0].mxu0
      %v7210 = vadd.f32 %v6989, %v7209
      %v7211 = vpop.f32.mrb[0].mxu0
      %v7212 = vpop.f32.mrb[0].mxu0
      %v7213 = vadd.f32 %v6992, %v7212
      %v7214 = vpop.f32.mrb[0].mxu0
      %7215 = vmatprep.mubr.bf16.mxu0 0
      %7216 = vmatmul.mubr.bf16.gmra.mrb[0].mxu0 %v7076
      %v7217 = vpop.f32.mrb[0].mxu0
      %v7218 = vadd.f32 %v6997, %v7217
      %v7219 = vpop.f32.mrb[0].mxu0
      %v7220 = vpop.f32.mrb[0].mxu0
      %v7221 = vadd.f32 %v7000, %v7220
      %v7222 = vpop.f32.mrb[0].mxu0
      %7223 = vmatprep.mubr.bf16.mxu0 0
      %7224 = vmatmul.mubr.bf16.gmra.mrb[0].mxu0 %v7079
      %v7225 = vpop.f32.mrb[0].mxu0
      %v7226 = vadd.f32 %v7005, %v7225
      %v7227 = vpop.f32.mrb[0].mxu0
      %v7228 = vpop.f32.mrb[0].mxu0
      %v7229 = vadd.f32 %v7008, %v7228
      %v7230 = vpop.f32.mrb[0].mxu0
      %7231 = vmatprep.mubr.bf16.mxu0 0
      %7232 = vmatmul.mubr.bf16.gmra.mrb[0].mxu0 %v7082
      %v7233 = vpop.f32.mrb[0].mxu0
      %v7234 = vadd.f32 %v7013, %v7233
      %v7235 = vpop.f32.mrb[0].mxu0
      %v7236 = vpop.f32.mrb[0].mxu0
      %v7237 = vadd.f32 %v7016, %v7236
      %v7238 = vpop.f32.mrb[0].mxu0
      %7239 = vmatprep.mubr.bf16.mxu0 0
      %7240 = vmatmul.mubr.bf16.gmra.mrb[0].mxu0 %v7085
      %v7241 = vpop.f32.mrb[0].mxu0
      %v7242 = vadd.f32 %v7021, %v7241
      %v7243 = vpop.f32.mrb[0].mxu0
      %v7244 = vpop.f32.mrb[0].mxu0
      %v7245 = vadd.f32 %v7024, %v7244
      %v7246 = vpop.f32.mrb[0].mxu0
      %7247 = vdwg.mxu0
      %v7248 = vld [vmem:[#allocation3 + $0x2] sm:$0xff]
      %v7249 = vld [vmem:[#allocation3 + $0xa] sm:$0xff]
      %v7250 = vld [vmem:[#allocation3 + $0x1a] sm:$0xff]
      %v7251 = vld [vmem:[#allocation3 + $0x22] sm:$0xff]
      %v7252 = vld [vmem:[#allocation3 + $0x32] sm:$0xff]
      %v7253 = vld [vmem:[#allocation3 + $0x3a] sm:$0xff]
      %v7254 = vld [vmem:[#allocation3 + $0x4a] sm:$0xff]
      %v7255 = vld [vmem:[#allocation3 + $0x52] sm:$0xff]
      %v7256 = vld [vmem:[#allocation3 + $0x62] sm:$0xff]
      %v7257 = vld [vmem:[#allocation3 + $0x6a] sm:$0xff]
      %v7258 = vld [vmem:[#allocation3 + $0x7a] sm:$0xff]
      %v7259 = vld [vmem:[#allocation3 + $0x82] sm:$0xff]
      %v7260 = vld [vmem:[#allocation3 + $0x92] sm:$0xff]
      %v7261 = vld [vmem:[#allocation3 + $0x9a] sm:$0xff]
      %v7262 = vld [vmem:[#allocation3 + $0xaa] sm:$0xff]
      %v7263 = vld [vmem:[#allocation3 + $0xb2] sm:$0xff]
      %v7264 = vld [vmem:[#allocation3 + $0xc2] sm:$0xff]
      %v7265 = vld [vmem:[#allocation3 + $0xca] sm:$0xff]
      %v7266 = vld [vmem:[#allocation3 + $0xda] sm:$0xff]
      %v7267 = vld [vmem:[#allocation3 + $0xe2] sm:$0xff]
      %v7268 = vld [vmem:[#allocation3 + $0xf2] sm:$0xff]
      %v7269 = vld [vmem:[#allocation3 + $0xfa] sm:$0xff]
      %v7270 = vld [vmem:[#allocation3 + $0x10a] sm:$0xff]
      %v7271 = vld [vmem:[#allocation3 + $0x112] sm:$0xff]
      %v7272 = vld [vmem:[#allocation3 + $0x122] sm:$0xff]
      %v7273 = vld [vmem:[#allocation3 + $0x12a] sm:$0xff]
      %v7274 = vld [vmem:[#allocation3 + $0x13a] sm:$0xff]
      %v7275 = vld [vmem:[#allocation3 + $0x142] sm:$0xff]
      %v7276 = vld [vmem:[#allocation3 + $0x152] sm:$0xff]
      %v7277 = vld [vmem:[#allocation3 + $0x15a] sm:$0xff]
      %v7278 = vld [vmem:[#allocation3 + $0x16a] sm:$0xff]
      %v7279 = vld [vmem:[#allocation3 + $0x172] sm:$0xff]
      %v7280 = vpack.c.bf16 %v7249, %v7248
      %v7281 = vpack.c.bf16 %v7251, %v7250
      %v7282 = vpack.c.bf16 %v7253, %v7252
      %v7283 = vpack.c.bf16 %v7255, %v7254
      %v7284 = vpack.c.bf16 %v7257, %v7256
      %v7285 = vpack.c.bf16 %v7259, %v7258
      %v7286 = vpack.c.bf16 %v7261, %v7260
      %v7287 = vpack.c.bf16 %v7263, %v7262
      %v7288 = vpack.c.bf16 %v7265, %v7264
      %v7289 = vpack.c.bf16 %v7267, %v7266
      %v7290 = vpack.c.bf16 %v7269, %v7268
      %v7291 = vpack.c.bf16 %v7271, %v7270
      %v7292 = vpack.c.bf16 %v7273, %v7272
      %v7293 = vpack.c.bf16 %v7275, %v7274
      %v7294 = vpack.c.bf16 %v7277, %v7276
      %v7295 = vpack.c.bf16 %v7279, %v7278
      %s7296 = scalar_lea.vmem %s7, 32
      %v7297 = vld [vmem:[%s7296] sm:$0xf]
      %v7298 = vld [vmem:[%s7296 + $0x4] sm:$0xf]
      %v7299 = vld [vmem:[%s7296 + $0x8] sm:$0xf]
      %v7300 = vld [vmem:[%s7296 + $0xc] sm:$0xf]
      %v7305 = vunpack.c.l.b16 %v7297
      %v7306 = vunpack.c.l.b16 %v7298
      %v7307 = vunpack.c.l.b16 %v7299
      %v7308 = vunpack.c.l.b16 %v7300
      %v7309 = vpack.c.b16 %v7306, %v7305
      %v7310 = vpack.c.b16 %v7308, %v7307
      %v7314 = vsel %vm469, %v7280, 0
      %v7317 = vsel %vm469, %v7281, 0
      %v7320 = vsel %vm469, %v7282, 0
      %v7323 = vsel %vm469, %v7283, 0
      %v7326 = vsel %vm469, %v7284, 0
      %v7329 = vsel %vm469, %v7285, 0
      %v7332 = vsel %vm469, %v7286, 0
      %v7335 = vsel %vm469, %v7287, 0
      %v7338 = vsel %vm469, %v7288, 0
      %v7341 = vsel %vm469, %v7289, 0
      %v7344 = vsel %vm469, %v7290, 0
      %v7347 = vsel %vm469, %v7291, 0
      %v7350 = vsel %vm469, %v7292, 0
      %v7353 = vsel %vm469, %v7293, 0
      %v7356 = vsel %vm469, %v7294, 0
      %v7359 = vsel %vm469, %v7295, 0
      %7361 = vmatprep.subr.bf16.mxu0 0
      %7362 = vmatpush1.bf16.msra.mxu0 %v7309
      %7363 = vmatprep.subr.bf16.mxu0 0
      %7364 = vmatpush1.bf16.msra.mxu0 %v7310
      %7365 = vmatprep.subr.bf16.mxu0 0
      %7366 = vmatpush1.bf16.msra.mxu0 0
      %7367 = vmatprep.subr.bf16.mxu0 0
      %7368 = vmatpush1.bf16.msra.mxu0 0
      %7369 = vmatprep.subr.bf16.mxu0 0
      %7370 = vmatpush1.bf16.msra.mxu0 0
      %7371 = vmatprep.subr.bf16.mxu0 0
      %7372 = vmatpush1.bf16.msra.mxu0 0
      %7373 = vmatprep.subr.bf16.mxu0 0
      %7374 = vmatpush1.bf16.msra.mxu0 0
      %7375 = vmatprep.subr.bf16.mxu0 0
      %7376 = vmatpush1.bf16.msra.mxu0 0
      %7377 = vmatprep.subr.bf16.mxu0 0
      %7378 = vmatpush1.bf16.msra.mxu0 0
      %7379 = vmatprep.subr.bf16.mxu0 0
      %7380 = vmatpush1.bf16.msra.mxu0 0
      %7381 = vmatprep.subr.bf16.mxu0 0
      %7382 = vmatpush1.bf16.msra.mxu0 0
      %7383 = vmatprep.subr.bf16.mxu0 0
      %7384 = vmatpush1.bf16.msra.mxu0 0
      %7385 = vmatprep.subr.bf16.mxu0 0
      %7386 = vmatpush1.bf16.msra.mxu0 0
      %7387 = vmatprep.subr.bf16.mxu0 0
      %7388 = vmatpush1.bf16.msra.mxu0 0
      %7389 = vmatprep.subr.bf16.mxu0 0
      %7390 = vmatpush1.bf16.msra.mxu0 0
      %7391 = vmatprep.subr.bf16.mxu0 0
      %7392 = vmatpush1.bf16.msra.mxu0 0
      %7393 = vmatprep.mubr.bf16.mxu0 0
      %7394 = vmatmul.mubr.bf16.gmra.mrb[0].mxu0 %v7314
      %v7395 = vpop.f32.mrb[0].mxu0
      %v7396 = vadd.f32 0.0, %v7395
      %v7397 = vpop.f32.mrb[0].mxu0
      %v7398 = vpop.f32.mrb[0].mxu0
      %v7399 = vadd.f32 0.0, %v7398
      %v7400 = vpop.f32.mrb[0].mxu0
      %7401 = vmatprep.mubr.bf16.mxu0 0
      %7402 = vmatmul.mubr.bf16.gmra.mrb[0].mxu0 %v7317
      %v7403 = vpop.f32.mrb[0].mxu0
      %v7404 = vadd.f32 0.0, %v7403
      %v7405 = vpop.f32.mrb[0].mxu0
      %v7406 = vpop.f32.mrb[0].mxu0
      %v7407 = vadd.f32 0.0, %v7406
      %v7408 = vpop.f32.mrb[0].mxu0
      %7409 = vmatprep.mubr.bf16.mxu0 0
      %7410 = vmatmul.mubr.bf16.gmra.mrb[0].mxu0 %v7320
      %v7411 = vpop.f32.mrb[0].mxu0
      %v7412 = vadd.f32 0.0, %v7411
      %v7413 = vpop.f32.mrb[0].mxu0
      %v7414 = vpop.f32.mrb[0].mxu0
      %v7415 = vadd.f32 0.0, %v7414
      %v7416 = vpop.f32.mrb[0].mxu0
      %7417 = vmatprep.mubr.bf16.mxu0 0
      %7418 = vmatmul.mubr.bf16.gmra.mrb[0].mxu0 %v7323
      %v7419 = vpop.f32.mrb[0].mxu0
      %v7420 = vadd.f32 0.0, %v7419
      %v7421 = vpop.f32.mrb[0].mxu0
      %v7422 = vpop.f32.mrb[0].mxu0
      %v7423 = vadd.f32 0.0, %v7422
      %v7424 = vpop.f32.mrb[0].mxu0
      %7425 = vmatprep.mubr.bf16.mxu0 0
      %7426 = vmatmul.mubr.bf16.gmra.mrb[0].mxu0 %v7326
      %v7427 = vpop.f32.mrb[0].mxu0
      %v7428 = vadd.f32 0.0, %v7427
      %v7429 = vpop.f32.mrb[0].mxu0
      %v7430 = vpop.f32.mrb[0].mxu0
      %v7431 = vadd.f32 0.0, %v7430
      %v7432 = vpop.f32.mrb[0].mxu0
      %7433 = vmatprep.mubr.bf16.mxu0 0
      %7434 = vmatmul.mubr.bf16.gmra.mrb[0].mxu0 %v7329
      %v7435 = vpop.f32.mrb[0].mxu0
      %v7436 = vadd.f32 0.0, %v7435
      %v7437 = vpop.f32.mrb[0].mxu0
      %v7438 = vpop.f32.mrb[0].mxu0
      %v7439 = vadd.f32 0.0, %v7438
      %v7440 = vpop.f32.mrb[0].mxu0
      %7441 = vmatprep.mubr.bf16.mxu0 0
      %7442 = vmatmul.mubr.bf16.gmra.mrb[0].mxu0 %v7332
      %v7443 = vpop.f32.mrb[0].mxu0
      %v7444 = vadd.f32 0.0, %v7443
      %v7445 = vpop.f32.mrb[0].mxu0
      %v7446 = vpop.f32.mrb[0].mxu0
      %v7447 = vadd.f32 0.0, %v7446
      %v7448 = vpop.f32.mrb[0].mxu0
      %7449 = vmatprep.mubr.bf16.mxu0 0
      %7450 = vmatmul.mubr.bf16.gmra.mrb[0].mxu0 %v7335
      %v7451 = vpop.f32.mrb[0].mxu0
      %v7452 = vadd.f32 0.0, %v7451
      %v7453 = vpop.f32.mrb[0].mxu0
      %v7454 = vpop.f32.mrb[0].mxu0
      %v7455 = vadd.f32 0.0, %v7454
      %v7456 = vpop.f32.mrb[0].mxu0
      %7457 = vmatprep.mubr.bf16.mxu0 0
      %7458 = vmatmul.mubr.bf16.gmra.mrb[0].mxu0 %v7338
      %v7459 = vpop.f32.mrb[0].mxu0
      %v7460 = vadd.f32 0.0, %v7459
      %v7461 = vpop.f32.mrb[0].mxu0
      %v7462 = vpop.f32.mrb[0].mxu0
      %v7463 = vadd.f32 0.0, %v7462
      %v7464 = vpop.f32.mrb[0].mxu0
      %7465 = vmatprep.mubr.bf16.mxu0 0
      %7466 = vmatmul.mubr.bf16.gmra.mrb[0].mxu0 %v7341
      %v7467 = vpop.f32.mrb[0].mxu0
      %v7468 = vadd.f32 0.0, %v7467
      %v7469 = vpop.f32.mrb[0].mxu0
      %v7470 = vpop.f32.mrb[0].mxu0
      %v7471 = vadd.f32 0.0, %v7470
      %v7472 = vpop.f32.mrb[0].mxu0
      %7473 = vmatprep.mubr.bf16.mxu0 0
      %7474 = vmatmul.mubr.bf16.gmra.mrb[0].mxu0 %v7344
      %v7475 = vpop.f32.mrb[0].mxu0
      %v7476 = vadd.f32 0.0, %v7475
      %v7477 = vpop.f32.mrb[0].mxu0
      %v7478 = vpop.f32.mrb[0].mxu0
      %v7479 = vadd.f32 0.0, %v7478
      %v7480 = vpop.f32.mrb[0].mxu0
      %7481 = vmatprep.mubr.bf16.mxu0 0
      %7482 = vmatmul.mubr.bf16.gmra.mrb[0].mxu0 %v7347
      %v7483 = vpop.f32.mrb[0].mxu0
      %v7484 = vadd.f32 0.0, %v7483
      %v7485 = vpop.f32.mrb[0].mxu0
      %v7486 = vpop.f32.mrb[0].mxu0
      %v7487 = vadd.f32 0.0, %v7486
      %v7488 = vpop.f32.mrb[0].mxu0
      %7489 = vmatprep.mubr.bf16.mxu0 0
      %7490 = vmatmul.mubr.bf16.gmra.mrb[0].mxu0 %v7350
      %v7491 = vpop.f32.mrb[0].mxu0
      %v7492 = vadd.f32 0.0, %v7491
      %v7493 = vpop.f32.mrb[0].mxu0
      %v7494 = vpop.f32.mrb[0].mxu0
      %v7495 = vadd.f32 0.0, %v7494
      %v7496 = vpop.f32.mrb[0].mxu0
      %7497 = vmatprep.mubr.bf16.mxu0 0
      %7498 = vmatmul.mubr.bf16.gmra.mrb[0].mxu0 %v7353
      %v7499 = vpop.f32.mrb[0].mxu0
      %v7500 = vadd.f32 0.0, %v7499
      %v7501 = vpop.f32.mrb[0].mxu0
      %v7502 = vpop.f32.mrb[0].mxu0
      %v7503 = vadd.f32 0.0, %v7502
      %v7504 = vpop.f32.mrb[0].mxu0
      %7505 = vmatprep.mubr.bf16.mxu0 0
      %7506 = vmatmul.mubr.bf16.gmra.mrb[0].mxu0 %v7356
      %v7507 = vpop.f32.mrb[0].mxu0
      %v7508 = vadd.f32 0.0, %v7507
      %v7509 = vpop.f32.mrb[0].mxu0
      %v7510 = vpop.f32.mrb[0].mxu0
      %v7511 = vadd.f32 0.0, %v7510
      %v7512 = vpop.f32.mrb[0].mxu0
      %7513 = vmatprep.mubr.bf16.mxu0 0
      %7514 = vmatmul.mubr.bf16.gmra.mrb[0].mxu0 %v7359
      %v7515 = vpop.f32.mrb[0].mxu0
      %v7516 = vadd.f32 0.0, %v7515
      %v7517 = vpop.f32.mrb[0].mxu0
      %v7518 = vpop.f32.mrb[0].mxu0
      %v7519 = vadd.f32 0.0, %v7518
      %v7520 = vpop.f32.mrb[0].mxu0
      %7521 = vdwg.mxu0
      %v7522 = vadd.f32 %v7122, %v7396
      %v7523 = vadd.f32 %v7125, %v7399
      %v7524 = vadd.f32 %v7130, %v7404
      %v7525 = vadd.f32 %v7133, %v7407
      %v7526 = vadd.f32 %v7138, %v7412
      %v7527 = vadd.f32 %v7141, %v7415
      %v7528 = vadd.f32 %v7146, %v7420
      %v7529 = vadd.f32 %v7149, %v7423
      %v7530 = vadd.f32 %v7154, %v7428
      %v7531 = vadd.f32 %v7157, %v7431
      %v7532 = vadd.f32 %v7162, %v7436
      %v7533 = vadd.f32 %v7165, %v7439
      %v7534 = vadd.f32 %v7170, %v7444
      %v7535 = vadd.f32 %v7173, %v7447
      %v7536 = vadd.f32 %v7178, %v7452
      %v7537 = vadd.f32 %v7181, %v7455
      %v7538 = vadd.f32 %v7186, %v7460
      %v7539 = vadd.f32 %v7189, %v7463
      %v7540 = vadd.f32 %v7194, %v7468
      %v7541 = vadd.f32 %v7197, %v7471
      %v7542 = vadd.f32 %v7202, %v7476
      %v7543 = vadd.f32 %v7205, %v7479
      %v7544 = vadd.f32 %v7210, %v7484
      %v7545 = vadd.f32 %v7213, %v7487
      %v7546 = vadd.f32 %v7218, %v7492
      %v7547 = vadd.f32 %v7221, %v7495
      %v7548 = vadd.f32 %v7226, %v7500
      %v7549 = vadd.f32 %v7229, %v7503
      %v7550 = vadd.f32 %v7234, %v7508
      %v7551 = vadd.f32 %v7237, %v7511
      %v7552 = vadd.f32 %v7242, %v7516
      %v7553 = vadd.f32 %v7245, %v7519
      %v7554 = vld [vmem:[%s762] sm:$0xff]
      %v7555 = vld [vmem:[%s762 + $0x8] sm:$0xff]
      %v7556 = vld [vmem:[%s762 + $0x18] sm:$0xff]
      %v7557 = vld [vmem:[%s762 + $0x20] sm:$0xff]
      %v7558 = vld [vmem:[%s762 + $0x30] sm:$0xff]
      %v7559 = vld [vmem:[%s762 + $0x38] sm:$0xff]
      %v7560 = vld [vmem:[%s762 + $0x48] sm:$0xff]
      %v7561 = vld [vmem:[%s762 + $0x50] sm:$0xff]
      %v7562 = vld [vmem:[%s762 + $0x60] sm:$0xff]
      %v7563 = vld [vmem:[%s762 + $0x68] sm:$0xff]
      %v7564 = vld [vmem:[%s762 + $0x78] sm:$0xff]
      %v7565 = vld [vmem:[%s762 + $0x80] sm:$0xff]
      %v7566 = vld [vmem:[%s762 + $0x90] sm:$0xff]
      %v7567 = vld [vmem:[%s762 + $0x98] sm:$0xff]
      %v7568 = vld [vmem:[%s762 + $0xa8] sm:$0xff]
      %v7569 = vld [vmem:[%s762 + $0xb0] sm:$0xff]
      %v7570 = vld [vmem:[%s762 + $0xc0] sm:$0xff]
      %v7571 = vld [vmem:[%s762 + $0xc8] sm:$0xff]
      %v7572 = vld [vmem:[%s762 + $0xd8] sm:$0xff]
      %v7573 = vld [vmem:[%s762 + $0xe0] sm:$0xff]
      %v7574 = vld [vmem:[%s762 + $0xf0] sm:$0xff]
      %v7575 = vld [vmem:[%s762 + $0xf8] sm:$0xff]
      %v7576 = vld [vmem:[%s762 + $0x108] sm:$0xff]
      %v7577 = vld [vmem:[%s762 + $0x110] sm:$0xff]
      %v7578 = vld [vmem:[%s762 + $0x120] sm:$0xff]
      %v7579 = vld [vmem:[%s762 + $0x128] sm:$0xff]
      %v7580 = vld [vmem:[%s762 + $0x138] sm:$0xff]
      %v7581 = vld [vmem:[%s762 + $0x140] sm:$0xff]
      %v7582 = vld [vmem:[%s762 + $0x150] sm:$0xff]
      %v7583 = vld [vmem:[%s762 + $0x158] sm:$0xff]
      %v7584 = vld [vmem:[%s762 + $0x168] sm:$0xff]
      %v7585 = vld [vmem:[%s762 + $0x170] sm:$0xff]
      %v7586 = vpack.c.bf16 %v7555, %v7554
      %v7587 = vpack.c.bf16 %v7557, %v7556
      %v7588 = vpack.c.bf16 %v7559, %v7558
      %v7589 = vpack.c.bf16 %v7561, %v7560
      %v7590 = vpack.c.bf16 %v7563, %v7562
      %v7591 = vpack.c.bf16 %v7565, %v7564
      %v7592 = vpack.c.bf16 %v7567, %v7566
      %v7593 = vpack.c.bf16 %v7569, %v7568
      %v7594 = vpack.c.bf16 %v7571, %v7570
      %v7595 = vpack.c.bf16 %v7573, %v7572
      %v7596 = vpack.c.bf16 %v7575, %v7574
      %v7597 = vpack.c.bf16 %v7577, %v7576
      %v7598 = vpack.c.bf16 %v7579, %v7578
      %v7599 = vpack.c.bf16 %v7581, %v7580
      %v7600 = vpack.c.bf16 %v7583, %v7582
      %v7601 = vpack.c.bf16 %v7585, %v7584
      %s7602 = scalar_lea.vmem %s7, 48
      %v7603 = vld [vmem:[%s7602] sm:$0xf]
      %v7604 = vld [vmem:[%s7602 + $0x4] sm:$0xf]
      %v7605 = vld [vmem:[%s7602 + $0x8] sm:$0xf]
      %v7606 = vld [vmem:[%s7602 + $0xc] sm:$0xf]
      %v7611 = vunpack.c.l.b16 %v7603
      %v7612 = vunpack.c.l.b16 %v7604
      %v7613 = vunpack.c.l.b16 %v7605
      %v7614 = vunpack.c.l.b16 %v7606
      %v7615 = vpack.c.b16 %v7612, %v7611
      %v7616 = vpack.c.b16 %v7614, %v7613
      %v7620 = vsel %vm469, %v7586, 0
      %v7623 = vsel %vm469, %v7587, 0
      %v7626 = vsel %vm469, %v7588, 0
      %v7629 = vsel %vm469, %v7589, 0
      %v7632 = vsel %vm469, %v7590, 0
      %v7635 = vsel %vm469, %v7591, 0
      %v7638 = vsel %vm469, %v7592, 0
      %v7641 = vsel %vm469, %v7593, 0
      %v7644 = vsel %vm469, %v7594, 0
      %v7647 = vsel %vm469, %v7595, 0
      %v7650 = vsel %vm469, %v7596, 0
      %v7653 = vsel %vm469, %v7597, 0
      %v7656 = vsel %vm469, %v7598, 0
      %v7659 = vsel %vm469, %v7599, 0
      %v7662 = vsel %vm469, %v7600, 0
      %v7665 = vsel %vm469, %v7601, 0
      %7667 = vmatprep.subr.bf16.mxu0 0
      %7668 = vmatpush1.bf16.msra.mxu0 %v7615
      %7669 = vmatprep.subr.bf16.mxu0 0
      %7670 = vmatpush1.bf16.msra.mxu0 %v7616
      %7671 = vmatprep.subr.bf16.mxu0 0
      %7672 = vmatpush1.bf16.msra.mxu0 0
      %7673 = vmatprep.subr.bf16.mxu0 0
      %7674 = vmatpush1.bf16.msra.mxu0 0
      %7675 = vmatprep.subr.bf16.mxu0 0
      %7676 = vmatpush1.bf16.msra.mxu0 0
      %7677 = vmatprep.subr.bf16.mxu0 0
      %7678 = vmatpush1.bf16.msra.mxu0 0
      %7679 = vmatprep.subr.bf16.mxu0 0
      %7680 = vmatpush1.bf16.msra.mxu0 0
      %7681 = vmatprep.subr.bf16.mxu0 0
      %7682 = vmatpush1.bf16.msra.mxu0 0
      %7683 = vmatprep.subr.bf16.mxu0 0
      %7684 = vmatpush1.bf16.msra.mxu0 0
      %7685 = vmatprep.subr.bf16.mxu0 0
      %7686 = vmatpush1.bf16.msra.mxu0 0
      %7687 = vmatprep.subr.bf16.mxu0 0
      %7688 = vmatpush1.bf16.msra.mxu0 0
      %7689 = vmatprep.subr.bf16.mxu0 0
      %7690 = vmatpush1.bf16.msra.mxu0 0
      %7691 = vmatprep.subr.bf16.mxu0 0
      %7692 = vmatpush1.bf16.msra.mxu0 0
      %7693 = vmatprep.subr.bf16.mxu0 0
      %7694 = vmatpush1.bf16.msra.mxu0 0
      %7695 = vmatprep.subr.bf16.mxu0 0
      %7696 = vmatpush1.bf16.msra.mxu0 0
      %7697 = vmatprep.subr.bf16.mxu0 0
      %7698 = vmatpush1.bf16.msra.mxu0 0
      %7699 = vmatprep.mubr.bf16.mxu0 0
      %7700 = vmatmul.mubr.bf16.gmra.mrb[0].mxu0 %v7620
      %v7701 = vpop.f32.mrb[0].mxu0
      %v7702 = vadd.f32 0.0, %v7701
      %v7703 = vpop.f32.mrb[0].mxu0
      %v7704 = vpop.f32.mrb[0].mxu0
      %v7705 = vadd.f32 0.0, %v7704
      %v7706 = vpop.f32.mrb[0].mxu0
      %7707 = vmatprep.mubr.bf16.mxu0 0
      %7708 = vmatmul.mubr.bf16.gmra.mrb[0].mxu0 %v7623
      %v7709 = vpop.f32.mrb[0].mxu0
      %v7710 = vadd.f32 0.0, %v7709
      %v7711 = vpop.f32.mrb[0].mxu0
      %v7712 = vpop.f32.mrb[0].mxu0
      %v7713 = vadd.f32 0.0, %v7712
      %v7714 = vpop.f32.mrb[0].mxu0
      %7715 = vmatprep.mubr.bf16.mxu0 0
      %7716 = vmatmul.mubr.bf16.gmra.mrb[0].mxu0 %v7626
      %v7717 = vpop.f32.mrb[0].mxu0
      %v7718 = vadd.f32 0.0, %v7717
      %v7719 = vpop.f32.mrb[0].mxu0
      %v7720 = vpop.f32.mrb[0].mxu0
      %v7721 = vadd.f32 0.0, %v7720
      %v7722 = vpop.f32.mrb[0].mxu0
      %7723 = vmatprep.mubr.bf16.mxu0 0
      %7724 = vmatmul.mubr.bf16.gmra.mrb[0].mxu0 %v7629
      %v7725 = vpop.f32.mrb[0].mxu0
      %v7726 = vadd.f32 0.0, %v7725
      %v7727 = vpop.f32.mrb[0].mxu0
      %v7728 = vpop.f32.mrb[0].mxu0
      %v7729 = vadd.f32 0.0, %v7728
      %v7730 = vpop.f32.mrb[0].mxu0
      %7731 = vmatprep.mubr.bf16.mxu0 0
      %7732 = vmatmul.mubr.bf16.gmra.mrb[0].mxu0 %v7632
      %v7733 = vpop.f32.mrb[0].mxu0
      %v7734 = vadd.f32 0.0, %v7733
      %v7735 = vpop.f32.mrb[0].mxu0
      %v7736 = vpop.f32.mrb[0].mxu0
      %v7737 = vadd.f32 0.0, %v7736
      %v7738 = vpop.f32.mrb[0].mxu0
      %7739 = vmatprep.mubr.bf16.mxu0 0
      %7740 = vmatmul.mubr.bf16.gmra.mrb[0].mxu0 %v7635
      %v7741 = vpop.f32.mrb[0].mxu0
      %v7742 = vadd.f32 0.0, %v7741
      %v7743 = vpop.f32.mrb[0].mxu0
      %v7744 = vpop.f32.mrb[0].mxu0
      %v7745 = vadd.f32 0.0, %v7744
      %v7746 = vpop.f32.mrb[0].mxu0
      %7747 = vmatprep.mubr.bf16.mxu0 0
      %7748 = vmatmul.mubr.bf16.gmra.mrb[0].mxu0 %v7638
      %v7749 = vpop.f32.mrb[0].mxu0
      %v7750 = vadd.f32 0.0, %v7749
      %v7751 = vpop.f32.mrb[0].mxu0
      %v7752 = vpop.f32.mrb[0].mxu0
      %v7753 = vadd.f32 0.0, %v7752
      %v7754 = vpop.f32.mrb[0].mxu0
      %7755 = vmatprep.mubr.bf16.mxu0 0
      %7756 = vmatmul.mubr.bf16.gmra.mrb[0].mxu0 %v7641
      %v7757 = vpop.f32.mrb[0].mxu0
      %v7758 = vadd.f32 0.0, %v7757
      %v7759 = vpop.f32.mrb[0].mxu0
      %v7760 = vpop.f32.mrb[0].mxu0
      %v7761 = vadd.f32 0.0, %v7760
      %v7762 = vpop.f32.mrb[0].mxu0
      %7763 = vmatprep.mubr.bf16.mxu0 0
      %7764 = vmatmul.mubr.bf16.gmra.mrb[0].mxu0 %v7644
      %v7765 = vpop.f32.mrb[0].mxu0
      %v7766 = vadd.f32 0.0, %v7765
      %v7767 = vpop.f32.mrb[0].mxu0
      %v7768 = vpop.f32.mrb[0].mxu0
      %v7769 = vadd.f32 0.0, %v7768
      %v7770 = vpop.f32.mrb[0].mxu0
      %7771 = vmatprep.mubr.bf16.mxu0 0
      %7772 = vmatmul.mubr.bf16.gmra.mrb[0].mxu0 %v7647
      %v7773 = vpop.f32.mrb[0].mxu0
      %v7774 = vadd.f32 0.0, %v7773
      %v7775 = vpop.f32.mrb[0].mxu0
      %v7776 = vpop.f32.mrb[0].mxu0
      %v7777 = vadd.f32 0.0, %v7776
      %v7778 = vpop.f32.mrb[0].mxu0
      %7779 = vmatprep.mubr.bf16.mxu0 0
      %7780 = vmatmul.mubr.bf16.gmra.mrb[0].mxu0 %v7650
      %v7781 = vpop.f32.mrb[0].mxu0
      %v7782 = vadd.f32 0.0, %v7781
      %v7783 = vpop.f32.mrb[0].mxu0
      %v7784 = vpop.f32.mrb[0].mxu0
      %v7785 = vadd.f32 0.0, %v7784
      %v7786 = vpop.f32.mrb[0].mxu0
      %7787 = vmatprep.mubr.bf16.mxu0 0
      %7788 = vmatmul.mubr.bf16.gmra.mrb[0].mxu0 %v7653
      %v7789 = vpop.f32.mrb[0].mxu0
      %v7790 = vadd.f32 0.0, %v7789
      %v7791 = vpop.f32.mrb[0].mxu0
      %v7792 = vpop.f32.mrb[0].mxu0
      %v7793 = vadd.f32 0.0, %v7792
      %v7794 = vpop.f32.mrb[0].mxu0
      %7795 = vmatprep.mubr.bf16.mxu0 0
      %7796 = vmatmul.mubr.bf16.gmra.mrb[0].mxu0 %v7656
      %v7797 = vpop.f32.mrb[0].mxu0
      %v7798 = vadd.f32 0.0, %v7797
      %v7799 = vpop.f32.mrb[0].mxu0
      %v7800 = vpop.f32.mrb[0].mxu0
      %v7801 = vadd.f32 0.0, %v7800
      %v7802 = vpop.f32.mrb[0].mxu0
      %7803 = vmatprep.mubr.bf16.mxu0 0
      %7804 = vmatmul.mubr.bf16.gmra.mrb[0].mxu0 %v7659
      %v7805 = vpop.f32.mrb[0].mxu0
      %v7806 = vadd.f32 0.0, %v7805
      %v7807 = vpop.f32.mrb[0].mxu0
      %v7808 = vpop.f32.mrb[0].mxu0
      %v7809 = vadd.f32 0.0, %v7808
      %v7810 = vpop.f32.mrb[0].mxu0
      %7811 = vmatprep.mubr.bf16.mxu0 0
      %7812 = vmatmul.mubr.bf16.gmra.mrb[0].mxu0 %v7662
      %v7813 = vpop.f32.mrb[0].mxu0
      %v7814 = vadd.f32 0.0, %v7813
      %v7815 = vpop.f32.mrb[0].mxu0
      %v7816 = vpop.f32.mrb[0].mxu0
      %v7817 = vadd.f32 0.0, %v7816
      %v7818 = vpop.f32.mrb[0].mxu0
      %7819 = vmatprep.mubr.bf16.mxu0 0
      %7820 = vmatmul.mubr.bf16.gmra.mrb[0].mxu0 %v7665
      %v7821 = vpop.f32.mrb[0].mxu0
      %v7822 = vadd.f32 0.0, %v7821
      %v7823 = vpop.f32.mrb[0].mxu0
      %v7824 = vpop.f32.mrb[0].mxu0
      %v7825 = vadd.f32 0.0, %v7824
      %v7826 = vpop.f32.mrb[0].mxu0
      %7827 = vdwg.mxu0
      %v7828 = vadd.f32 %v7522, %v7702
      %v7829 = vadd.f32 %v7523, %v7705
      %v7830 = vadd.f32 %v7524, %v7710
      %v7831 = vadd.f32 %v7525, %v7713
      %v7832 = vadd.f32 %v7526, %v7718
      %v7833 = vadd.f32 %v7527, %v7721
      %v7834 = vadd.f32 %v7528, %v7726
      %v7835 = vadd.f32 %v7529, %v7729
      %v7836 = vadd.f32 %v7530, %v7734
      %v7837 = vadd.f32 %v7531, %v7737
      %v7838 = vadd.f32 %v7532, %v7742
      %v7839 = vadd.f32 %v7533, %v7745
      %v7840 = vadd.f32 %v7534, %v7750
      %v7841 = vadd.f32 %v7535, %v7753
      %v7842 = vadd.f32 %v7536, %v7758
      %v7843 = vadd.f32 %v7537, %v7761
      %v7844 = vadd.f32 %v7538, %v7766
      %v7845 = vadd.f32 %v7539, %v7769
      %v7846 = vadd.f32 %v7540, %v7774
      %v7847 = vadd.f32 %v7541, %v7777
      %v7848 = vadd.f32 %v7542, %v7782
      %v7849 = vadd.f32 %v7543, %v7785
      %v7850 = vadd.f32 %v7544, %v7790
      %v7851 = vadd.f32 %v7545, %v7793
      %v7852 = vadd.f32 %v7546, %v7798
      %v7853 = vadd.f32 %v7547, %v7801
      %v7854 = vadd.f32 %v7548, %v7806
      %v7855 = vadd.f32 %v7549, %v7809
      %v7856 = vadd.f32 %v7550, %v7814
      %v7857 = vadd.f32 %v7551, %v7817
      %v7858 = vadd.f32 %v7552, %v7822
      %v7859 = vadd.f32 %v7553, %v7825
      %v7860 = vld [vmem:[%s762 + $0x1] sm:$0xff]
      %v7861 = vld [vmem:[%s762 + $0x9] sm:$0xff]
      %v7862 = vld [vmem:[%s762 + $0x19] sm:$0xff]
      %v7863 = vld [vmem:[%s762 + $0x21] sm:$0xff]
      %v7864 = vld [vmem:[%s762 + $0x31] sm:$0xff]
      %v7865 = vld [vmem:[%s762 + $0x39] sm:$0xff]
      %v7866 = vld [vmem:[%s762 + $0x49] sm:$0xff]
      %v7867 = vld [vmem:[%s762 + $0x51] sm:$0xff]
      %v7868 = vld [vmem:[%s762 + $0x61] sm:$0xff]
      %v7869 = vld [vmem:[%s762 + $0x69] sm:$0xff]
      %v7870 = vld [vmem:[%s762 + $0x79] sm:$0xff]
      %v7871 = vld [vmem:[%s762 + $0x81] sm:$0xff]
      %v7872 = vld [vmem:[%s762 + $0x91] sm:$0xff]
      %v7873 = vld [vmem:[%s762 + $0x99] sm:$0xff]
      %v7874 = vld [vmem:[%s762 + $0xa9] sm:$0xff]
      %v7875 = vld [vmem:[%s762 + $0xb1] sm:$0xff]
      %v7876 = vld [vmem:[%s762 + $0xc1] sm:$0xff]
      %v7877 = vld [vmem:[%s762 + $0xc9] sm:$0xff]
      %v7878 = vld [vmem:[%s762 + $0xd9] sm:$0xff]
      %v7879 = vld [vmem:[%s762 + $0xe1] sm:$0xff]
      %v7880 = vld [vmem:[%s762 + $0xf1] sm:$0xff]
      %v7881 = vld [vmem:[%s762 + $0xf9] sm:$0xff]
      %v7882 = vld [vmem:[%s762 + $0x109] sm:$0xff]
      %v7883 = vld [vmem:[%s762 + $0x111] sm:$0xff]
      %v7884 = vld [vmem:[%s762 + $0x121] sm:$0xff]
      %v7885 = vld [vmem:[%s762 + $0x129] sm:$0xff]
      %v7886 = vld [vmem:[%s762 + $0x139] sm:$0xff]
      %v7887 = vld [vmem:[%s762 + $0x141] sm:$0xff]
      %v7888 = vld [vmem:[%s762 + $0x151] sm:$0xff]
      %v7889 = vld [vmem:[%s762 + $0x159] sm:$0xff]
      %v7890 = vld [vmem:[%s762 + $0x169] sm:$0xff]
      %v7891 = vld [vmem:[%s762 + $0x171] sm:$0xff]
      %v7892 = vpack.c.bf16 %v7861, %v7860
      %v7893 = vpack.c.bf16 %v7863, %v7862
      %v7894 = vpack.c.bf16 %v7865, %v7864
      %v7895 = vpack.c.bf16 %v7867, %v7866
      %v7896 = vpack.c.bf16 %v7869, %v7868
      %v7897 = vpack.c.bf16 %v7871, %v7870
      %v7898 = vpack.c.bf16 %v7873, %v7872
      %v7899 = vpack.c.bf16 %v7875, %v7874
      %v7900 = vpack.c.bf16 %v7877, %v7876
      %v7901 = vpack.c.bf16 %v7879, %v7878
      %v7902 = vpack.c.bf16 %v7881, %v7880
      %v7903 = vpack.c.bf16 %v7883, %v7882
      %v7904 = vpack.c.bf16 %v7885, %v7884
      %v7905 = vpack.c.bf16 %v7887, %v7886
      %v7906 = vpack.c.bf16 %v7889, %v7888
      %v7907 = vpack.c.bf16 %v7891, %v7890
      %s7908 = scalar_lea.vmem %s7, 64
      %v7909 = vld [vmem:[%s7908] sm:$0xf]
      %v7910 = vld [vmem:[%s7908 + $0x4] sm:$0xf]
      %v7911 = vld [vmem:[%s7908 + $0x8] sm:$0xf]
      %v7912 = vld [vmem:[%s7908 + $0xc] sm:$0xf]
      %v7917 = vunpack.c.l.b16 %v7909
      %v7918 = vunpack.c.l.b16 %v7910
      %v7919 = vunpack.c.l.b16 %v7911
      %v7920 = vunpack.c.l.b16 %v7912
      %v7921 = vpack.c.b16 %v7918, %v7917
      %v7922 = vpack.c.b16 %v7920, %v7919
      %v7926 = vsel %vm469, %v7892, 0
      %v7929 = vsel %vm469, %v7893, 0
      %v7932 = vsel %vm469, %v7894, 0
      %v7935 = vsel %vm469, %v7895, 0
      %v7938 = vsel %vm469, %v7896, 0
      %v7941 = vsel %vm469, %v7897, 0
      %v7944 = vsel %vm469, %v7898, 0
      %v7947 = vsel %vm469, %v7899, 0
      %v7950 = vsel %vm469, %v7900, 0
      %v7953 = vsel %vm469, %v7901, 0
      %v7956 = vsel %vm469, %v7902, 0
      %v7959 = vsel %vm469, %v7903, 0
      %v7962 = vsel %vm469, %v7904, 0
      %v7965 = vsel %vm469, %v7905, 0
      %v7968 = vsel %vm469, %v7906, 0
      %v7971 = vsel %vm469, %v7907, 0
      %7973 = vmatprep.subr.bf16.mxu0 0
      %7974 = vmatpush1.bf16.msra.mxu0 %v7921
      %7975 = vmatprep.subr.bf16.mxu0 0
      %7976 = vmatpush1.bf16.msra.mxu0 %v7922
      %7977 = vmatprep.subr.bf16.mxu0 0
      %7978 = vmatpush1.bf16.msra.mxu0 0
      %7979 = vmatprep.subr.bf16.mxu0 0
      %7980 = vmatpush1.bf16.msra.mxu0 0
      %7981 = vmatprep.subr.bf16.mxu0 0
      %7982 = vmatpush1.bf16.msra.mxu0 0
      %7983 = vmatprep.subr.bf16.mxu0 0
      %7984 = vmatpush1.bf16.msra.mxu0 0
      %7985 = vmatprep.subr.bf16.mxu0 0
      %7986 = vmatpush1.bf16.msra.mxu0 0
      %7987 = vmatprep.subr.bf16.mxu0 0
      %7988 = vmatpush1.bf16.msra.mxu0 0
      %7989 = vmatprep.subr.bf16.mxu0 0
      %7990 = vmatpush1.bf16.msra.mxu0 0
      %7991 = vmatprep.subr.bf16.mxu0 0
      %7992 = vmatpush1.bf16.msra.mxu0 0
      %7993 = vmatprep.subr.bf16.mxu0 0
      %7994 = vmatpush1.bf16.msra.mxu0 0
      %7995 = vmatprep.subr.bf16.mxu0 0
      %7996 = vmatpush1.bf16.msra.mxu0 0
      %7997 = vmatprep.subr.bf16.mxu0 0
      %7998 = vmatpush1.bf16.msra.mxu0 0
      %7999 = vmatprep.subr.bf16.mxu0 0
      %8000 = vmatpush1.bf16.msra.mxu0 0
      %8001 = vmatprep.subr.bf16.mxu0 0
      %8002 = vmatpush1.bf16.msra.mxu0 0
      %8003 = vmatprep.subr.bf16.mxu0 0
      %8004 = vmatpush1.bf16.msra.mxu0 0
      %8005 = vmatprep.mubr.bf16.mxu0 0
      %8006 = vmatmul.mubr.bf16.gmra.mrb[0].mxu0 %v7926
      %v8007 = vpop.f32.mrb[0].mxu0
      %v8008 = vadd.f32 0.0, %v8007
      %v8009 = vpop.f32.mrb[0].mxu0
      %v8010 = vpop.f32.mrb[0].mxu0
      %v8011 = vadd.f32 0.0, %v8010
      %v8012 = vpop.f32.mrb[0].mxu0
      %8013 = vmatprep.mubr.bf16.mxu0 0
      %8014 = vmatmul.mubr.bf16.gmra.mrb[0].mxu0 %v7929
      %v8015 = vpop.f32.mrb[0].mxu0
      %v8016 = vadd.f32 0.0, %v8015
      %v8017 = vpop.f32.mrb[0].mxu0
      %v8018 = vpop.f32.mrb[0].mxu0
      %v8019 = vadd.f32 0.0, %v8018
      %v8020 = vpop.f32.mrb[0].mxu0
      %8021 = vmatprep.mubr.bf16.mxu0 0
      %8022 = vmatmul.mubr.bf16.gmra.mrb[0].mxu0 %v7932
      %v8023 = vpop.f32.mrb[0].mxu0
      %v8024 = vadd.f32 0.0, %v8023
      %v8025 = vpop.f32.mrb[0].mxu0
      %v8026 = vpop.f32.mrb[0].mxu0
      %v8027 = vadd.f32 0.0, %v8026
      %v8028 = vpop.f32.mrb[0].mxu0
      %8029 = vmatprep.mubr.bf16.mxu0 0
      %8030 = vmatmul.mubr.bf16.gmra.mrb[0].mxu0 %v7935
      %v8031 = vpop.f32.mrb[0].mxu0
      %v8032 = vadd.f32 0.0, %v8031
      %v8033 = vpop.f32.mrb[0].mxu0
      %v8034 = vpop.f32.mrb[0].mxu0
      %v8035 = vadd.f32 0.0, %v8034
      %v8036 = vpop.f32.mrb[0].mxu0
      %8037 = vmatprep.mubr.bf16.mxu0 0
      %8038 = vmatmul.mubr.bf16.gmra.mrb[0].mxu0 %v7938
      %v8039 = vpop.f32.mrb[0].mxu0
      %v8040 = vadd.f32 0.0, %v8039
      %v8041 = vpop.f32.mrb[0].mxu0
      %v8042 = vpop.f32.mrb[0].mxu0
      %v8043 = vadd.f32 0.0, %v8042
      %v8044 = vpop.f32.mrb[0].mxu0
      %8045 = vmatprep.mubr.bf16.mxu0 0
      %8046 = vmatmul.mubr.bf16.gmra.mrb[0].mxu0 %v7941
      %v8047 = vpop.f32.mrb[0].mxu0
      %v8048 = vadd.f32 0.0, %v8047
      %v8049 = vpop.f32.mrb[0].mxu0
      %v8050 = vpop.f32.mrb[0].mxu0
      %v8051 = vadd.f32 0.0, %v8050
      %v8052 = vpop.f32.mrb[0].mxu0
      %8053 = vmatprep.mubr.bf16.mxu0 0
      %8054 = vmatmul.mubr.bf16.gmra.mrb[0].mxu0 %v7944
      %v8055 = vpop.f32.mrb[0].mxu0
      %v8056 = vadd.f32 0.0, %v8055
      %v8057 = vpop.f32.mrb[0].mxu0
      %v8058 = vpop.f32.mrb[0].mxu0
      %v8059 = vadd.f32 0.0, %v8058
      %v8060 = vpop.f32.mrb[0].mxu0
      %8061 = vmatprep.mubr.bf16.mxu0 0
      %8062 = vmatmul.mubr.bf16.gmra.mrb[0].mxu0 %v7947
      %v8063 = vpop.f32.mrb[0].mxu0
      %v8064 = vadd.f32 0.0, %v8063
      %v8065 = vpop.f32.mrb[0].mxu0
      %v8066 = vpop.f32.mrb[0].mxu0
      %v8067 = vadd.f32 0.0, %v8066
      %v8068 = vpop.f32.mrb[0].mxu0
      %8069 = vmatprep.mubr.bf16.mxu0 0
      %8070 = vmatmul.mubr.bf16.gmra.mrb[0].mxu0 %v7950
      %v8071 = vpop.f32.mrb[0].mxu0
      %v8072 = vadd.f32 0.0, %v8071
      %v8073 = vpop.f32.mrb[0].mxu0
      %v8074 = vpop.f32.mrb[0].mxu0
      %v8075 = vadd.f32 0.0, %v8074
      %v8076 = vpop.f32.mrb[0].mxu0
      %8077 = vmatprep.mubr.bf16.mxu0 0
      %8078 = vmatmul.mubr.bf16.gmra.mrb[0].mxu0 %v7953
      %v8079 = vpop.f32.mrb[0].mxu0
      %v8080 = vadd.f32 0.0, %v8079
      %v8081 = vpop.f32.mrb[0].mxu0
      %v8082 = vpop.f32.mrb[0].mxu0
      %v8083 = vadd.f32 0.0, %v8082
      %v8084 = vpop.f32.mrb[0].mxu0
      %8085 = vmatprep.mubr.bf16.mxu0 0
      %8086 = vmatmul.mubr.bf16.gmra.mrb[0].mxu0 %v7956
      %v8087 = vpop.f32.mrb[0].mxu0
      %v8088 = vadd.f32 0.0, %v8087
      %v8089 = vpop.f32.mrb[0].mxu0
      %v8090 = vpop.f32.mrb[0].mxu0
      %v8091 = vadd.f32 0.0, %v8090
      %v8092 = vpop.f32.mrb[0].mxu0
      %8093 = vmatprep.mubr.bf16.mxu0 0
      %8094 = vmatmul.mubr.bf16.gmra.mrb[0].mxu0 %v7959
      %v8095 = vpop.f32.mrb[0].mxu0
      %v8096 = vadd.f32 0.0, %v8095
      %v8097 = vpop.f32.mrb[0].mxu0
      %v8098 = vpop.f32.mrb[0].mxu0
      %v8099 = vadd.f32 0.0, %v8098
      %v8100 = vpop.f32.mrb[0].mxu0
      %8101 = vmatprep.mubr.bf16.mxu0 0
      %8102 = vmatmul.mubr.bf16.gmra.mrb[0].mxu0 %v7962
      %v8103 = vpop.f32.mrb[0].mxu0
      %v8104 = vadd.f32 0.0, %v8103
      %v8105 = vpop.f32.mrb[0].mxu0
      %v8106 = vpop.f32.mrb[0].mxu0
      %v8107 = vadd.f32 0.0, %v8106
      %v8108 = vpop.f32.mrb[0].mxu0
      %8109 = vmatprep.mubr.bf16.mxu0 0
      %8110 = vmatmul.mubr.bf16.gmra.mrb[0].mxu0 %v7965
      %v8111 = vpop.f32.mrb[0].mxu0
      %v8112 = vadd.f32 0.0, %v8111
      %v8113 = vpop.f32.mrb[0].mxu0
      %v8114 = vpop.f32.mrb[0].mxu0
      %v8115 = vadd.f32 0.0, %v8114
      %v8116 = vpop.f32.mrb[0].mxu0
      %8117 = vmatprep.mubr.bf16.mxu0 0
      %8118 = vmatmul.mubr.bf16.gmra.mrb[0].mxu0 %v7968
      %v8119 = vpop.f32.mrb[0].mxu0
      %v8120 = vadd.f32 0.0, %v8119
      %v8121 = vpop.f32.mrb[0].mxu0
      %v8122 = vpop.f32.mrb[0].mxu0
      %v8123 = vadd.f32 0.0, %v8122
      %v8124 = vpop.f32.mrb[0].mxu0
      %8125 = vmatprep.mubr.bf16.mxu0 0
      %8126 = vmatmul.mubr.bf16.gmra.mrb[0].mxu0 %v7971
      %v8127 = vpop.f32.mrb[0].mxu0
      %v8128 = vadd.f32 0.0, %v8127
      %v8129 = vpop.f32.mrb[0].mxu0
      %v8130 = vpop.f32.mrb[0].mxu0
      %v8131 = vadd.f32 0.0, %v8130
      %v8132 = vpop.f32.mrb[0].mxu0
      %8133 = vdwg.mxu0
      %v8134 = vadd.f32 %v7828, %v8008
      %v8135 = vadd.f32 %v7829, %v8011
      %v8136 = vadd.f32 %v7830, %v8016
      %v8137 = vadd.f32 %v7831, %v8019
      %v8138 = vadd.f32 %v7832, %v8024
      %v8139 = vadd.f32 %v7833, %v8027
      %v8140 = vadd.f32 %v7834, %v8032
      %v8141 = vadd.f32 %v7835, %v8035
      %v8142 = vadd.f32 %v7836, %v8040
      %v8143 = vadd.f32 %v7837, %v8043
      %v8144 = vadd.f32 %v7838, %v8048
      %v8145 = vadd.f32 %v7839, %v8051
      %v8146 = vadd.f32 %v7840, %v8056
      %v8147 = vadd.f32 %v7841, %v8059
      %v8148 = vadd.f32 %v7842, %v8064
      %v8149 = vadd.f32 %v7843, %v8067
      %v8150 = vadd.f32 %v7844, %v8072
      %v8151 = vadd.f32 %v7845, %v8075
      %v8152 = vadd.f32 %v7846, %v8080
      %v8153 = vadd.f32 %v7847, %v8083
      %v8154 = vadd.f32 %v7848, %v8088
      %v8155 = vadd.f32 %v7849, %v8091
      %v8156 = vadd.f32 %v7850, %v8096
      %v8157 = vadd.f32 %v7851, %v8099
      %v8158 = vadd.f32 %v7852, %v8104
      %v8159 = vadd.f32 %v7853, %v8107
      %v8160 = vadd.f32 %v7854, %v8112
      %v8161 = vadd.f32 %v7855, %v8115
      %v8162 = vadd.f32 %v7856, %v8120
      %v8163 = vadd.f32 %v7857, %v8123
      %v8164 = vadd.f32 %v7858, %v8128
      %v8165 = vadd.f32 %v7859, %v8131
      %v8166 = vld [vmem:[%s762 + $0x2] sm:$0xff]
      %v8167 = vld [vmem:[%s762 + $0xa] sm:$0xff]
      %v8168 = vld [vmem:[%s762 + $0x1a] sm:$0xff]
      %v8169 = vld [vmem:[%s762 + $0x22] sm:$0xff]
      %v8170 = vld [vmem:[%s762 + $0x32] sm:$0xff]
      %v8171 = vld [vmem:[%s762 + $0x3a] sm:$0xff]
      %v8172 = vld [vmem:[%s762 + $0x4a] sm:$0xff]
      %v8173 = vld [vmem:[%s762 + $0x52] sm:$0xff]
      %v8174 = vld [vmem:[%s762 + $0x62] sm:$0xff]
      %v8175 = vld [vmem:[%s762 + $0x6a] sm:$0xff]
      %v8176 = vld [vmem:[%s762 + $0x7a] sm:$0xff]
      %v8177 = vld [vmem:[%s762 + $0x82] sm:$0xff]
      %v8178 = vld [vmem:[%s762 + $0x92] sm:$0xff]
      %v8179 = vld [vmem:[%s762 + $0x9a] sm:$0xff]
      %v8180 = vld [vmem:[%s762 + $0xaa] sm:$0xff]
      %v8181 = vld [vmem:[%s762 + $0xb2] sm:$0xff]
      %v8182 = vld [vmem:[%s762 + $0xc2] sm:$0xff]
      %v8183 = vld [vmem:[%s762 + $0xca] sm:$0xff]
      %v8184 = vld [vmem:[%s762 + $0xda] sm:$0xff]
      %v8185 = vld [vmem:[%s762 + $0xe2] sm:$0xff]
      %v8186 = vld [vmem:[%s762 + $0xf2] sm:$0xff]
      %v8187 = vld [vmem:[%s762 + $0xfa] sm:$0xff]
      %v8188 = vld [vmem:[%s762 + $0x10a] sm:$0xff]
      %v8189 = vld [vmem:[%s762 + $0x112] sm:$0xff]
      %v8190 = vld [vmem:[%s762 + $0x122] sm:$0xff]
      %v8191 = vld [vmem:[%s762 + $0x12a] sm:$0xff]
      %v8192 = vld [vmem:[%s762 + $0x13a] sm:$0xff]
      %v8193 = vld [vmem:[%s762 + $0x142] sm:$0xff]
      %v8194 = vld [vmem:[%s762 + $0x152] sm:$0xff]
      %v8195 = vld [vmem:[%s762 + $0x15a] sm:$0xff]
      %v8196 = vld [vmem:[%s762 + $0x16a] sm:$0xff]
      %v8197 = vld [vmem:[%s762 + $0x172] sm:$0xff]
      %v8198 = vpack.c.bf16 %v8167, %v8166
      %v8199 = vpack.c.bf16 %v8169, %v8168
      %v8200 = vpack.c.bf16 %v8171, %v8170
      %v8201 = vpack.c.bf16 %v8173, %v8172
      %v8202 = vpack.c.bf16 %v8175, %v8174
      %v8203 = vpack.c.bf16 %v8177, %v8176
      %v8204 = vpack.c.bf16 %v8179, %v8178
      %v8205 = vpack.c.bf16 %v8181, %v8180
      %v8206 = vpack.c.bf16 %v8183, %v8182
      %v8207 = vpack.c.bf16 %v8185, %v8184
      %v8208 = vpack.c.bf16 %v8187, %v8186
      %v8209 = vpack.c.bf16 %v8189, %v8188
      %v8210 = vpack.c.bf16 %v8191, %v8190
      %v8211 = vpack.c.bf16 %v8193, %v8192
      %v8212 = vpack.c.bf16 %v8195, %v8194
      %v8213 = vpack.c.bf16 %v8197, %v8196
      %s8214 = scalar_lea.vmem %s7, 80
      %v8215 = vld [vmem:[%s8214] sm:$0xf]
      %v8216 = vld [vmem:[%s8214 + $0x4] sm:$0xf]
      %v8217 = vld [vmem:[%s8214 + $0x8] sm:$0xf]
      %v8218 = vld [vmem:[%s8214 + $0xc] sm:$0xf]
      %v8223 = vunpack.c.l.b16 %v8215
      %v8224 = vunpack.c.l.b16 %v8216
      %v8225 = vunpack.c.l.b16 %v8217
      %v8226 = vunpack.c.l.b16 %v8218
      %v8227 = vpack.c.b16 %v8224, %v8223
      %v8228 = vpack.c.b16 %v8226, %v8225
      %v8232 = vsel %vm469, %v8198, 0
      %v8235 = vsel %vm469, %v8199, 0
      %v8238 = vsel %vm469, %v8200, 0
      %v8241 = vsel %vm469, %v8201, 0
      %v8244 = vsel %vm469, %v8202, 0
      %v8247 = vsel %vm469, %v8203, 0
      %v8250 = vsel %vm469, %v8204, 0
      %v8253 = vsel %vm469, %v8205, 0
      %v8256 = vsel %vm469, %v8206, 0
      %v8259 = vsel %vm469, %v8207, 0
      %v8262 = vsel %vm469, %v8208, 0
      %v8265 = vsel %vm469, %v8209, 0
      %v8268 = vsel %vm469, %v8210, 0
      %v8271 = vsel %vm469, %v8211, 0
      %v8274 = vsel %vm469, %v8212, 0
      %v8277 = vsel %vm469, %v8213, 0
      %8279 = vmatprep.subr.bf16.mxu0 0
      %8280 = vmatpush1.bf16.msra.mxu0 %v8227
      %8281 = vmatprep.subr.bf16.mxu0 0
      %8282 = vmatpush1.bf16.msra.mxu0 %v8228
      %8283 = vmatprep.subr.bf16.mxu0 0
      %8284 = vmatpush1.bf16.msra.mxu0 0
      %8285 = vmatprep.subr.bf16.mxu0 0
      %8286 = vmatpush1.bf16.msra.mxu0 0
      %8287 = vmatprep.subr.bf16.mxu0 0
      %8288 = vmatpush1.bf16.msra.mxu0 0
      %8289 = vmatprep.subr.bf16.mxu0 0
      %8290 = vmatpush1.bf16.msra.mxu0 0
      %8291 = vmatprep.subr.bf16.mxu0 0
      %8292 = vmatpush1.bf16.msra.mxu0 0
      %8293 = vmatprep.subr.bf16.mxu0 0
      %8294 = vmatpush1.bf16.msra.mxu0 0
      %8295 = vmatprep.subr.bf16.mxu0 0
      %8296 = vmatpush1.bf16.msra.mxu0 0
      %8297 = vmatprep.subr.bf16.mxu0 0
      %8298 = vmatpush1.bf16.msra.mxu0 0
      %8299 = vmatprep.subr.bf16.mxu0 0
      %8300 = vmatpush1.bf16.msra.mxu0 0
      %8301 = vmatprep.subr.bf16.mxu0 0
      %8302 = vmatpush1.bf16.msra.mxu0 0
      %8303 = vmatprep.subr.bf16.mxu0 0
      %8304 = vmatpush1.bf16.msra.mxu0 0
      %8305 = vmatprep.subr.bf16.mxu0 0
      %8306 = vmatpush1.bf16.msra.mxu0 0
      %8307 = vmatprep.subr.bf16.mxu0 0
      %8308 = vmatpush1.bf16.msra.mxu0 0
      %8309 = vmatprep.subr.bf16.mxu0 0
      %8310 = vmatpush1.bf16.msra.mxu0 0
      %8311 = vmatprep.mubr.bf16.mxu0 0
      %8312 = vmatmul.mubr.bf16.gmra.mrb[0].mxu0 %v8232
      %v8313 = vpop.f32.mrb[0].mxu0
      %v8314 = vadd.f32 0.0, %v8313
      %v8315 = vpop.f32.mrb[0].mxu0
      %v8316 = vpop.f32.mrb[0].mxu0
      %v8317 = vadd.f32 0.0, %v8316
      %v8318 = vpop.f32.mrb[0].mxu0
      %8319 = vmatprep.mubr.bf16.mxu0 0
      %8320 = vmatmul.mubr.bf16.gmra.mrb[0].mxu0 %v8235
      %v8321 = vpop.f32.mrb[0].mxu0
      %v8322 = vadd.f32 0.0, %v8321
      %v8323 = vpop.f32.mrb[0].mxu0
      %v8324 = vpop.f32.mrb[0].mxu0
      %v8325 = vadd.f32 0.0, %v8324
      %v8326 = vpop.f32.mrb[0].mxu0
      %8327 = vmatprep.mubr.bf16.mxu0 0
      %8328 = vmatmul.mubr.bf16.gmra.mrb[0].mxu0 %v8238
      %v8329 = vpop.f32.mrb[0].mxu0
      %v8330 = vadd.f32 0.0, %v8329
      %v8331 = vpop.f32.mrb[0].mxu0
      %v8332 = vpop.f32.mrb[0].mxu0
      %v8333 = vadd.f32 0.0, %v8332
      %v8334 = vpop.f32.mrb[0].mxu0
      %8335 = vmatprep.mubr.bf16.mxu0 0
      %8336 = vmatmul.mubr.bf16.gmra.mrb[0].mxu0 %v8241
      %v8337 = vpop.f32.mrb[0].mxu0
      %v8338 = vadd.f32 0.0, %v8337
      %v8339 = vpop.f32.mrb[0].mxu0
      %v8340 = vpop.f32.mrb[0].mxu0
      %v8341 = vadd.f32 0.0, %v8340
      %v8342 = vpop.f32.mrb[0].mxu0
      %8343 = vmatprep.mubr.bf16.mxu0 0
      %8344 = vmatmul.mubr.bf16.gmra.mrb[0].mxu0 %v8244
      %v8345 = vpop.f32.mrb[0].mxu0
      %v8346 = vadd.f32 0.0, %v8345
      %v8347 = vpop.f32.mrb[0].mxu0
      %v8348 = vpop.f32.mrb[0].mxu0
      %v8349 = vadd.f32 0.0, %v8348
      %v8350 = vpop.f32.mrb[0].mxu0
      %8351 = vmatprep.mubr.bf16.mxu0 0
      %8352 = vmatmul.mubr.bf16.gmra.mrb[0].mxu0 %v8247
      %v8353 = vpop.f32.mrb[0].mxu0
      %v8354 = vadd.f32 0.0, %v8353
      %v8355 = vpop.f32.mrb[0].mxu0
      %v8356 = vpop.f32.mrb[0].mxu0
      %v8357 = vadd.f32 0.0, %v8356
      %v8358 = vpop.f32.mrb[0].mxu0
      %8359 = vmatprep.mubr.bf16.mxu0 0
      %8360 = vmatmul.mubr.bf16.gmra.mrb[0].mxu0 %v8250
      %v8361 = vpop.f32.mrb[0].mxu0
      %v8362 = vadd.f32 0.0, %v8361
      %v8363 = vpop.f32.mrb[0].mxu0
      %v8364 = vpop.f32.mrb[0].mxu0
      %v8365 = vadd.f32 0.0, %v8364
      %v8366 = vpop.f32.mrb[0].mxu0
      %8367 = vmatprep.mubr.bf16.mxu0 0
      %8368 = vmatmul.mubr.bf16.gmra.mrb[0].mxu0 %v8253
      %v8369 = vpop.f32.mrb[0].mxu0
      %v8370 = vadd.f32 0.0, %v8369
      %v8371 = vpop.f32.mrb[0].mxu0
      %v8372 = vpop.f32.mrb[0].mxu0
      %v8373 = vadd.f32 0.0, %v8372
      %v8374 = vpop.f32.mrb[0].mxu0
      %8375 = vmatprep.mubr.bf16.mxu0 0
      %8376 = vmatmul.mubr.bf16.gmra.mrb[0].mxu0 %v8256
      %v8377 = vpop.f32.mrb[0].mxu0
      %v8378 = vadd.f32 0.0, %v8377
      %v8379 = vpop.f32.mrb[0].mxu0
      %v8380 = vpop.f32.mrb[0].mxu0
      %v8381 = vadd.f32 0.0, %v8380
      %v8382 = vpop.f32.mrb[0].mxu0
      %8383 = vmatprep.mubr.bf16.mxu0 0
      %8384 = vmatmul.mubr.bf16.gmra.mrb[0].mxu0 %v8259
      %v8385 = vpop.f32.mrb[0].mxu0
      %v8386 = vadd.f32 0.0, %v8385
      %v8387 = vpop.f32.mrb[0].mxu0
      %v8388 = vpop.f32.mrb[0].mxu0
      %v8389 = vadd.f32 0.0, %v8388
      %v8390 = vpop.f32.mrb[0].mxu0
      %8391 = vmatprep.mubr.bf16.mxu0 0
      %8392 = vmatmul.mubr.bf16.gmra.mrb[0].mxu0 %v8262
      %v8393 = vpop.f32.mrb[0].mxu0
      %v8394 = vadd.f32 0.0, %v8393
      %v8395 = vpop.f32.mrb[0].mxu0
      %v8396 = vpop.f32.mrb[0].mxu0
      %v8397 = vadd.f32 0.0, %v8396
      %v8398 = vpop.f32.mrb[0].mxu0
      %8399 = vmatprep.mubr.bf16.mxu0 0
      %8400 = vmatmul.mubr.bf16.gmra.mrb[0].mxu0 %v8265
      %v8401 = vpop.f32.mrb[0].mxu0
      %v8402 = vadd.f32 0.0, %v8401
      %v8403 = vpop.f32.mrb[0].mxu0
      %v8404 = vpop.f32.mrb[0].mxu0
      %v8405 = vadd.f32 0.0, %v8404
      %v8406 = vpop.f32.mrb[0].mxu0
      %8407 = vmatprep.mubr.bf16.mxu0 0
      %8408 = vmatmul.mubr.bf16.gmra.mrb[0].mxu0 %v8268
      %v8409 = vpop.f32.mrb[0].mxu0
      %v8410 = vadd.f32 0.0, %v8409
      %v8411 = vpop.f32.mrb[0].mxu0
      %v8412 = vpop.f32.mrb[0].mxu0
      %v8413 = vadd.f32 0.0, %v8412
      %v8414 = vpop.f32.mrb[0].mxu0
      %8415 = vmatprep.mubr.bf16.mxu0 0
      %8416 = vmatmul.mubr.bf16.gmra.mrb[0].mxu0 %v8271
      %v8417 = vpop.f32.mrb[0].mxu0
      %v8418 = vadd.f32 0.0, %v8417
      %v8419 = vpop.f32.mrb[0].mxu0
      %v8420 = vpop.f32.mrb[0].mxu0
      %v8421 = vadd.f32 0.0, %v8420
      %v8422 = vpop.f32.mrb[0].mxu0
      %8423 = vmatprep.mubr.bf16.mxu0 0
      %8424 = vmatmul.mubr.bf16.gmra.mrb[0].mxu0 %v8274
      %v8425 = vpop.f32.mrb[0].mxu0
      %v8426 = vadd.f32 0.0, %v8425
      %v8427 = vpop.f32.mrb[0].mxu0
      %v8428 = vpop.f32.mrb[0].mxu0
      %v8429 = vadd.f32 0.0, %v8428
      %v8430 = vpop.f32.mrb[0].mxu0
      %8431 = vmatprep.mubr.bf16.mxu0 0
      %8432 = vmatmul.mubr.bf16.gmra.mrb[0].mxu0 %v8277
      %v8433 = vpop.f32.mrb[0].mxu0
      %v8434 = vadd.f32 0.0, %v8433
      %v8435 = vpop.f32.mrb[0].mxu0
      %v8436 = vpop.f32.mrb[0].mxu0
      %v8437 = vadd.f32 0.0, %v8436
      %v8438 = vpop.f32.mrb[0].mxu0
      %8439 = vdwg.mxu0
      %v8440 = vadd.f32 %v8134, %v8314
      %v8441 = vadd.f32 %v8135, %v8317
      %v8442 = vadd.f32 %v8136, %v8322
      %v8443 = vadd.f32 %v8137, %v8325
      %v8444 = vadd.f32 %v8138, %v8330
      %v8445 = vadd.f32 %v8139, %v8333
      %v8446 = vadd.f32 %v8140, %v8338
      %v8447 = vadd.f32 %v8141, %v8341
      %v8448 = vadd.f32 %v8142, %v8346
      %v8449 = vadd.f32 %v8143, %v8349
      %v8450 = vadd.f32 %v8144, %v8354
      %v8451 = vadd.f32 %v8145, %v8357
      %v8452 = vadd.f32 %v8146, %v8362
      %v8453 = vadd.f32 %v8147, %v8365
      %v8454 = vadd.f32 %v8148, %v8370
      %v8455 = vadd.f32 %v8149, %v8373
      %v8456 = vadd.f32 %v8150, %v8378
      %v8457 = vadd.f32 %v8151, %v8381
      %v8458 = vadd.f32 %v8152, %v8386
      %v8459 = vadd.f32 %v8153, %v8389
      %v8460 = vadd.f32 %v8154, %v8394
      %v8461 = vadd.f32 %v8155, %v8397
      %v8462 = vadd.f32 %v8156, %v8402
      %v8463 = vadd.f32 %v8157, %v8405
      %v8464 = vadd.f32 %v8158, %v8410
      %v8465 = vadd.f32 %v8159, %v8413
      %v8466 = vadd.f32 %v8160, %v8418
      %v8467 = vadd.f32 %v8161, %v8421
      %v8468 = vadd.f32 %v8162, %v8426
      %v8469 = vadd.f32 %v8163, %v8429
      %v8470 = vadd.f32 %v8164, %v8434
      %v8471 = vadd.f32 %v8165, %v8437
      %s8472 = scalar_lea.vmem [#allocation3], 48
      %v8473 = vld [vmem:[%s8472] sm:$0xff]
      %v8474 = vld [vmem:[%s8472 + $0x8] sm:$0xff]
      %v8475 = vld [vmem:[%s8472 + $0x18] sm:$0xff]
      %v8476 = vld [vmem:[%s8472 + $0x20] sm:$0xff]
      %v8477 = vld [vmem:[%s8472 + $0x30] sm:$0xff]
      %v8478 = vld [vmem:[%s8472 + $0x38] sm:$0xff]
      %v8479 = vld [vmem:[%s8472 + $0x48] sm:$0xff]
      %v8480 = vld [vmem:[%s8472 + $0x50] sm:$0xff]
      %v8481 = vld [vmem:[%s8472 + $0x60] sm:$0xff]
      %v8482 = vld [vmem:[%s8472 + $0x68] sm:$0xff]
      %v8483 = vld [vmem:[%s8472 + $0x78] sm:$0xff]
      %v8484 = vld [vmem:[%s8472 + $0x80] sm:$0xff]
      %v8485 = vld [vmem:[%s8472 + $0x90] sm:$0xff]
      %v8486 = vld [vmem:[%s8472 + $0x98] sm:$0xff]
      %v8487 = vld [vmem:[%s8472 + $0xa8] sm:$0xff]
      %v8488 = vld [vmem:[%s8472 + $0xb0] sm:$0xff]
      %v8489 = vld [vmem:[%s8472 + $0xc0] sm:$0xff]
      %v8490 = vld [vmem:[%s8472 + $0xc8] sm:$0xff]
      %v8491 = vld [vmem:[%s8472 + $0xd8] sm:$0xff]
      %v8492 = vld [vmem:[%s8472 + $0xe0] sm:$0xff]
      %v8493 = vld [vmem:[%s8472 + $0xf0] sm:$0xff]
      %v8494 = vld [vmem:[%s8472 + $0xf8] sm:$0xff]
      %v8495 = vld [vmem:[%s8472 + $0x108] sm:$0xff]
      %v8496 = vld [vmem:[%s8472 + $0x110] sm:$0xff]
      %v8497 = vld [vmem:[%s8472 + $0x120] sm:$0xff]
      %v8498 = vld [vmem:[%s8472 + $0x128] sm:$0xff]
      %v8499 = vld [vmem:[%s8472 + $0x138] sm:$0xff]
      %v8500 = vld [vmem:[%s8472 + $0x140] sm:$0xff]
      %v8501 = vld [vmem:[%s8472 + $0x150] sm:$0xff]
      %v8502 = vld [vmem:[%s8472 + $0x158] sm:$0xff]
      %v8503 = vld [vmem:[%s8472 + $0x168] sm:$0xff]
      %v8504 = vld [vmem:[%s8472 + $0x170] sm:$0xff]
      %v8505 = vpack.c.bf16 %v8474, %v8473
      %v8506 = vpack.c.bf16 %v8476, %v8475
      %v8507 = vpack.c.bf16 %v8478, %v8477
      %v8508 = vpack.c.bf16 %v8480, %v8479
      %v8509 = vpack.c.bf16 %v8482, %v8481
      %v8510 = vpack.c.bf16 %v8484, %v8483
      %v8511 = vpack.c.bf16 %v8486, %v8485
      %v8512 = vpack.c.bf16 %v8488, %v8487
      %v8513 = vpack.c.bf16 %v8490, %v8489
      %v8514 = vpack.c.bf16 %v8492, %v8491
      %v8515 = vpack.c.bf16 %v8494, %v8493
      %v8516 = vpack.c.bf16 %v8496, %v8495
      %v8517 = vpack.c.bf16 %v8498, %v8497
      %v8518 = vpack.c.bf16 %v8500, %v8499
      %v8519 = vpack.c.bf16 %v8502, %v8501
      %v8520 = vpack.c.bf16 %v8504, %v8503
      %s8521 = scalar_lea.vmem %s7, 96
      %v8522 = vld [vmem:[%s8521] sm:$0xf]
      %v8523 = vld [vmem:[%s8521 + $0x4] sm:$0xf]
      %v8524 = vld [vmem:[%s8521 + $0x8] sm:$0xf]
      %v8525 = vld [vmem:[%s8521 + $0xc] sm:$0xf]
      %v8530 = vunpack.c.l.b16 %v8522
      %v8531 = vunpack.c.l.b16 %v8523
      %v8532 = vunpack.c.l.b16 %v8524
      %v8533 = vunpack.c.l.b16 %v8525
      %v8534 = vpack.c.b16 %v8531, %v8530
      %v8535 = vpack.c.b16 %v8533, %v8532
      %v8539 = vsel %vm469, %v8505, 0
      %v8542 = vsel %vm469, %v8506, 0
      %v8545 = vsel %vm469, %v8507, 0
      %v8548 = vsel %vm469, %v8508, 0
      %v8551 = vsel %vm469, %v8509, 0
      %v8554 = vsel %vm469, %v8510, 0
      %v8557 = vsel %vm469, %v8511, 0
      %v8560 = vsel %vm469, %v8512, 0
      %v8563 = vsel %vm469, %v8513, 0
      %v8566 = vsel %vm469, %v8514, 0
      %v8569 = vsel %vm469, %v8515, 0
      %v8572 = vsel %vm469, %v8516, 0
      %v8575 = vsel %vm469, %v8517, 0
      %v8578 = vsel %vm469, %v8518, 0
      %v8581 = vsel %vm469, %v8519, 0
      %v8584 = vsel %vm469, %v8520, 0
      %8586 = vmatprep.subr.bf16.mxu0 0
      %8587 = vmatpush1.bf16.msra.mxu0 %v8534
      %8588 = vmatprep.subr.bf16.mxu0 0
      %8589 = vmatpush1.bf16.msra.mxu0 %v8535
      %8590 = vmatprep.subr.bf16.mxu0 0
      %8591 = vmatpush1.bf16.msra.mxu0 0
      %8592 = vmatprep.subr.bf16.mxu0 0
      %8593 = vmatpush1.bf16.msra.mxu0 0
      %8594 = vmatprep.subr.bf16.mxu0 0
      %8595 = vmatpush1.bf16.msra.mxu0 0
      %8596 = vmatprep.subr.bf16.mxu0 0
      %8597 = vmatpush1.bf16.msra.mxu0 0
      %8598 = vmatprep.subr.bf16.mxu0 0
      %8599 = vmatpush1.bf16.msra.mxu0 0
      %8600 = vmatprep.subr.bf16.mxu0 0
      %8601 = vmatpush1.bf16.msra.mxu0 0
      %8602 = vmatprep.subr.bf16.mxu0 0
      %8603 = vmatpush1.bf16.msra.mxu0 0
      %8604 = vmatprep.subr.bf16.mxu0 0
      %8605 = vmatpush1.bf16.msra.mxu0 0
      %8606 = vmatprep.subr.bf16.mxu0 0
      %8607 = vmatpush1.bf16.msra.mxu0 0
      %8608 = vmatprep.subr.bf16.mxu0 0
      %8609 = vmatpush1.bf16.msra.mxu0 0
      %8610 = vmatprep.subr.bf16.mxu0 0
      %8611 = vmatpush1.bf16.msra.mxu0 0
      %8612 = vmatprep.subr.bf16.mxu0 0
      %8613 = vmatpush1.bf16.msra.mxu0 0
      %8614 = vmatprep.subr.bf16.mxu0 0
      %8615 = vmatpush1.bf16.msra.mxu0 0
      %8616 = vmatprep.subr.bf16.mxu0 0
      %8617 = vmatpush1.bf16.msra.mxu0 0
      %8618 = vmatprep.mubr.bf16.mxu0 0
      %8619 = vmatmul.mubr.bf16.gmra.mrb[0].mxu0 %v8539
      %v8620 = vpop.f32.mrb[0].mxu0
      %v8621 = vadd.f32 0.0, %v8620
      %v8622 = vpop.f32.mrb[0].mxu0
      %v8623 = vpop.f32.mrb[0].mxu0
      %v8624 = vadd.f32 0.0, %v8623
      %v8625 = vpop.f32.mrb[0].mxu0
      %8626 = vmatprep.mubr.bf16.mxu0 0
      %8627 = vmatmul.mubr.bf16.gmra.mrb[0].mxu0 %v8542
      %v8628 = vpop.f32.mrb[0].mxu0
      %v8629 = vadd.f32 0.0, %v8628
      %v8630 = vpop.f32.mrb[0].mxu0
      %v8631 = vpop.f32.mrb[0].mxu0
      %v8632 = vadd.f32 0.0, %v8631
      %v8633 = vpop.f32.mrb[0].mxu0
      %8634 = vmatprep.mubr.bf16.mxu0 0
      %8635 = vmatmul.mubr.bf16.gmra.mrb[0].mxu0 %v8545
      %v8636 = vpop.f32.mrb[0].mxu0
      %v8637 = vadd.f32 0.0, %v8636
      %v8638 = vpop.f32.mrb[0].mxu0
      %v8639 = vpop.f32.mrb[0].mxu0
      %v8640 = vadd.f32 0.0, %v8639
      %v8641 = vpop.f32.mrb[0].mxu0
      %8642 = vmatprep.mubr.bf16.mxu0 0
      %8643 = vmatmul.mubr.bf16.gmra.mrb[0].mxu0 %v8548
      %v8644 = vpop.f32.mrb[0].mxu0
      %v8645 = vadd.f32 0.0, %v8644
      %v8646 = vpop.f32.mrb[0].mxu0
      %v8647 = vpop.f32.mrb[0].mxu0
      %v8648 = vadd.f32 0.0, %v8647
      %v8649 = vpop.f32.mrb[0].mxu0
      %8650 = vmatprep.mubr.bf16.mxu0 0
      %8651 = vmatmul.mubr.bf16.gmra.mrb[0].mxu0 %v8551
      %v8652 = vpop.f32.mrb[0].mxu0
      %v8653 = vadd.f32 0.0, %v8652
      %v8654 = vpop.f32.mrb[0].mxu0
      %v8655 = vpop.f32.mrb[0].mxu0
      %v8656 = vadd.f32 0.0, %v8655
      %v8657 = vpop.f32.mrb[0].mxu0
      %8658 = vmatprep.mubr.bf16.mxu0 0
      %8659 = vmatmul.mubr.bf16.gmra.mrb[0].mxu0 %v8554
      %v8660 = vpop.f32.mrb[0].mxu0
      %v8661 = vadd.f32 0.0, %v8660
      %v8662 = vpop.f32.mrb[0].mxu0
      %v8663 = vpop.f32.mrb[0].mxu0
      %v8664 = vadd.f32 0.0, %v8663
      %v8665 = vpop.f32.mrb[0].mxu0
      %8666 = vmatprep.mubr.bf16.mxu0 0
      %8667 = vmatmul.mubr.bf16.gmra.mrb[0].mxu0 %v8557
      %v8668 = vpop.f32.mrb[0].mxu0
      %v8669 = vadd.f32 0.0, %v8668
      %v8670 = vpop.f32.mrb[0].mxu0
      %v8671 = vpop.f32.mrb[0].mxu0
      %v8672 = vadd.f32 0.0, %v8671
      %v8673 = vpop.f32.mrb[0].mxu0
      %8674 = vmatprep.mubr.bf16.mxu0 0
      %8675 = vmatmul.mubr.bf16.gmra.mrb[0].mxu0 %v8560
      %v8676 = vpop.f32.mrb[0].mxu0
      %v8677 = vadd.f32 0.0, %v8676
      %v8678 = vpop.f32.mrb[0].mxu0
      %v8679 = vpop.f32.mrb[0].mxu0
      %v8680 = vadd.f32 0.0, %v8679
      %v8681 = vpop.f32.mrb[0].mxu0
      %8682 = vmatprep.mubr.bf16.mxu0 0
      %8683 = vmatmul.mubr.bf16.gmra.mrb[0].mxu0 %v8563
      %v8684 = vpop.f32.mrb[0].mxu0
      %v8685 = vadd.f32 0.0, %v8684
      %v8686 = vpop.f32.mrb[0].mxu0
      %v8687 = vpop.f32.mrb[0].mxu0
      %v8688 = vadd.f32 0.0, %v8687
      %v8689 = vpop.f32.mrb[0].mxu0
      %8690 = vmatprep.mubr.bf16.mxu0 0
      %8691 = vmatmul.mubr.bf16.gmra.mrb[0].mxu0 %v8566
      %v8692 = vpop.f32.mrb[0].mxu0
      %v8693 = vadd.f32 0.0, %v8692
      %v8694 = vpop.f32.mrb[0].mxu0
      %v8695 = vpop.f32.mrb[0].mxu0
      %v8696 = vadd.f32 0.0, %v8695
      %v8697 = vpop.f32.mrb[0].mxu0
      %8698 = vmatprep.mubr.bf16.mxu0 0
      %8699 = vmatmul.mubr.bf16.gmra.mrb[0].mxu0 %v8569
      %v8700 = vpop.f32.mrb[0].mxu0
      %v8701 = vadd.f32 0.0, %v8700
      %v8702 = vpop.f32.mrb[0].mxu0
      %v8703 = vpop.f32.mrb[0].mxu0
      %v8704 = vadd.f32 0.0, %v8703
      %v8705 = vpop.f32.mrb[0].mxu0
      %8706 = vmatprep.mubr.bf16.mxu0 0
      %8707 = vmatmul.mubr.bf16.gmra.mrb[0].mxu0 %v8572
      %v8708 = vpop.f32.mrb[0].mxu0
      %v8709 = vadd.f32 0.0, %v8708
      %v8710 = vpop.f32.mrb[0].mxu0
      %v8711 = vpop.f32.mrb[0].mxu0
      %v8712 = vadd.f32 0.0, %v8711
      %v8713 = vpop.f32.mrb[0].mxu0
      %8714 = vmatprep.mubr.bf16.mxu0 0
      %8715 = vmatmul.mubr.bf16.gmra.mrb[0].mxu0 %v8575
      %v8716 = vpop.f32.mrb[0].mxu0
      %v8717 = vadd.f32 0.0, %v8716
      %v8718 = vpop.f32.mrb[0].mxu0
      %v8719 = vpop.f32.mrb[0].mxu0
      %v8720 = vadd.f32 0.0, %v8719
      %v8721 = vpop.f32.mrb[0].mxu0
      %8722 = vmatprep.mubr.bf16.mxu0 0
      %8723 = vmatmul.mubr.bf16.gmra.mrb[0].mxu0 %v8578
      %v8724 = vpop.f32.mrb[0].mxu0
      %v8725 = vadd.f32 0.0, %v8724
      %v8726 = vpop.f32.mrb[0].mxu0
      %v8727 = vpop.f32.mrb[0].mxu0
      %v8728 = vadd.f32 0.0, %v8727
      %v8729 = vpop.f32.mrb[0].mxu0
      %8730 = vmatprep.mubr.bf16.mxu0 0
      %8731 = vmatmul.mubr.bf16.gmra.mrb[0].mxu0 %v8581
      %v8732 = vpop.f32.mrb[0].mxu0
      %v8733 = vadd.f32 0.0, %v8732
      %v8734 = vpop.f32.mrb[0].mxu0
      %v8735 = vpop.f32.mrb[0].mxu0
      %v8736 = vadd.f32 0.0, %v8735
      %v8737 = vpop.f32.mrb[0].mxu0
      %8738 = vmatprep.mubr.bf16.mxu0 0
      %8739 = vmatmul.mubr.bf16.gmra.mrb[0].mxu0 %v8584
      %v8740 = vpop.f32.mrb[0].mxu0
      %v8741 = vadd.f32 0.0, %v8740
      %v8742 = vpop.f32.mrb[0].mxu0
      %v8743 = vpop.f32.mrb[0].mxu0
      %v8744 = vadd.f32 0.0, %v8743
      %v8745 = vpop.f32.mrb[0].mxu0
      %8746 = vdwg.mxu0
      %v8747 = vadd.f32 %v8440, %v8621
      %v8748 = vadd.f32 %v8441, %v8624
      %v8749 = vadd.f32 %v8442, %v8629
      %v8750 = vadd.f32 %v8443, %v8632
      %v8751 = vadd.f32 %v8444, %v8637
      %v8752 = vadd.f32 %v8445, %v8640
      %v8753 = vadd.f32 %v8446, %v8645
      %v8754 = vadd.f32 %v8447, %v8648
      %v8755 = vadd.f32 %v8448, %v8653
      %v8756 = vadd.f32 %v8449, %v8656
      %v8757 = vadd.f32 %v8450, %v8661
      %v8758 = vadd.f32 %v8451, %v8664
      %v8759 = vadd.f32 %v8452, %v8669
      %v8760 = vadd.f32 %v8453, %v8672
      %v8761 = vadd.f32 %v8454, %v8677
      %v8762 = vadd.f32 %v8455, %v8680
      %v8763 = vadd.f32 %v8456, %v8685
      %v8764 = vadd.f32 %v8457, %v8688
      %v8765 = vadd.f32 %v8458, %v8693
      %v8766 = vadd.f32 %v8459, %v8696
      %v8767 = vadd.f32 %v8460, %v8701
      %v8768 = vadd.f32 %v8461, %v8704
      %v8769 = vadd.f32 %v8462, %v8709
      %v8770 = vadd.f32 %v8463, %v8712
      %v8771 = vadd.f32 %v8464, %v8717
      %v8772 = vadd.f32 %v8465, %v8720
      %v8773 = vadd.f32 %v8466, %v8725
      %v8774 = vadd.f32 %v8467, %v8728
      %v8775 = vadd.f32 %v8468, %v8733
      %v8776 = vadd.f32 %v8469, %v8736
      %v8777 = vadd.f32 %v8470, %v8741
      %v8778 = vadd.f32 %v8471, %v8744
      %v8779 = vld [vmem:[%s8472 + $0x1] sm:$0xff]
      %v8780 = vld [vmem:[%s8472 + $0x9] sm:$0xff]
      %v8781 = vld [vmem:[%s8472 + $0x19] sm:$0xff]
      %v8782 = vld [vmem:[%s8472 + $0x21] sm:$0xff]
      %v8783 = vld [vmem:[%s8472 + $0x31] sm:$0xff]
      %v8784 = vld [vmem:[%s8472 + $0x39] sm:$0xff]
      %v8785 = vld [vmem:[%s8472 + $0x49] sm:$0xff]
      %v8786 = vld [vmem:[%s8472 + $0x51] sm:$0xff]
      %v8787 = vld [vmem:[%s8472 + $0x61] sm:$0xff]
      %v8788 = vld [vmem:[%s8472 + $0x69] sm:$0xff]
      %v8789 = vld [vmem:[%s8472 + $0x79] sm:$0xff]
      %v8790 = vld [vmem:[%s8472 + $0x81] sm:$0xff]
      %v8791 = vld [vmem:[%s8472 + $0x91] sm:$0xff]
      %v8792 = vld [vmem:[%s8472 + $0x99] sm:$0xff]
      %v8793 = vld [vmem:[%s8472 + $0xa9] sm:$0xff]
      %v8794 = vld [vmem:[%s8472 + $0xb1] sm:$0xff]
      %v8795 = vld [vmem:[%s8472 + $0xc1] sm:$0xff]
      %v8796 = vld [vmem:[%s8472 + $0xc9] sm:$0xff]
      %v8797 = vld [vmem:[%s8472 + $0xd9] sm:$0xff]
      %v8798 = vld [vmem:[%s8472 + $0xe1] sm:$0xff]
      %v8799 = vld [vmem:[%s8472 + $0xf1] sm:$0xff]
      %v8800 = vld [vmem:[%s8472 + $0xf9] sm:$0xff]
      %v8801 = vld [vmem:[%s8472 + $0x109] sm:$0xff]
      %v8802 = vld [vmem:[%s8472 + $0x111] sm:$0xff]
      %v8803 = vld [vmem:[%s8472 + $0x121] sm:$0xff]
      %v8804 = vld [vmem:[%s8472 + $0x129] sm:$0xff]
      %v8805 = vld [vmem:[%s8472 + $0x139] sm:$0xff]
      %v8806 = vld [vmem:[%s8472 + $0x141] sm:$0xff]
      %v8807 = vld [vmem:[%s8472 + $0x151] sm:$0xff]
      %v8808 = vld [vmem:[%s8472 + $0x159] sm:$0xff]
      %v8809 = vld [vmem:[%s8472 + $0x169] sm:$0xff]
      %v8810 = vld [vmem:[%s8472 + $0x171] sm:$0xff]
      %v8811 = vpack.c.bf16 %v8780, %v8779
      %v8812 = vpack.c.bf16 %v8782, %v8781
      %v8813 = vpack.c.bf16 %v8784, %v8783
      %v8814 = vpack.c.bf16 %v8786, %v8785
      %v8815 = vpack.c.bf16 %v8788, %v8787
      %v8816 = vpack.c.bf16 %v8790, %v8789
      %v8817 = vpack.c.bf16 %v8792, %v8791
      %v8818 = vpack.c.bf16 %v8794, %v8793
      %v8819 = vpack.c.bf16 %v8796, %v8795
      %v8820 = vpack.c.bf16 %v8798, %v8797
      %v8821 = vpack.c.bf16 %v8800, %v8799
      %v8822 = vpack.c.bf16 %v8802, %v8801
      %v8823 = vpack.c.bf16 %v8804, %v8803
      %v8824 = vpack.c.bf16 %v8806, %v8805
      %v8825 = vpack.c.bf16 %v8808, %v8807
      %v8826 = vpack.c.bf16 %v8810, %v8809
      %s8827 = scalar_lea.vmem %s7, 112
      %v8828 = vld [vmem:[%s8827] sm:$0xf]
      %v8829 = vld [vmem:[%s8827 + $0x4] sm:$0xf]
      %v8830 = vld [vmem:[%s8827 + $0x8] sm:$0xf]
      %v8831 = vld [vmem:[%s8827 + $0xc] sm:$0xf]
      %v8836 = vunpack.c.l.b16 %v8828
      %v8837 = vunpack.c.l.b16 %v8829
      %v8838 = vunpack.c.l.b16 %v8830
      %v8839 = vunpack.c.l.b16 %v8831
      %v8840 = vpack.c.b16 %v8837, %v8836
      %v8841 = vpack.c.b16 %v8839, %v8838
      %v8845 = vsel %vm469, %v8811, 0
      %v8848 = vsel %vm469, %v8812, 0
      %v8851 = vsel %vm469, %v8813, 0
      %v8854 = vsel %vm469, %v8814, 0
      %v8857 = vsel %vm469, %v8815, 0
      %v8860 = vsel %vm469, %v8816, 0
      %v8863 = vsel %vm469, %v8817, 0
      %v8866 = vsel %vm469, %v8818, 0
      %v8869 = vsel %vm469, %v8819, 0
      %v8872 = vsel %vm469, %v8820, 0
      %v8875 = vsel %vm469, %v8821, 0
      %v8878 = vsel %vm469, %v8822, 0
      %v8881 = vsel %vm469, %v8823, 0
      %v8884 = vsel %vm469, %v8824, 0
      %v8887 = vsel %vm469, %v8825, 0
      %v8890 = vsel %vm469, %v8826, 0
      %8892 = vmatprep.subr.bf16.mxu0 0
      %8893 = vmatpush1.bf16.msra.mxu0 %v8840
      %8894 = vmatprep.subr.bf16.mxu0 0
      %8895 = vmatpush1.bf16.msra.mxu0 %v8841
      %8896 = vmatprep.subr.bf16.mxu0 0
      %8897 = vmatpush1.bf16.msra.mxu0 0
      %8898 = vmatprep.subr.bf16.mxu0 0
      %8899 = vmatpush1.bf16.msra.mxu0 0
      %8900 = vmatprep.subr.bf16.mxu0 0
      %8901 = vmatpush1.bf16.msra.mxu0 0
      %8902 = vmatprep.subr.bf16.mxu0 0
      %8903 = vmatpush1.bf16.msra.mxu0 0
      %8904 = vmatprep.subr.bf16.mxu0 0
      %8905 = vmatpush1.bf16.msra.mxu0 0
      %8906 = vmatprep.subr.bf16.mxu0 0
      %8907 = vmatpush1.bf16.msra.mxu0 0
      %8908 = vmatprep.subr.bf16.mxu0 0
      %8909 = vmatpush1.bf16.msra.mxu0 0
      %8910 = vmatprep.subr.bf16.mxu0 0
      %8911 = vmatpush1.bf16.msra.mxu0 0
      %8912 = vmatprep.subr.bf16.mxu0 0
      %8913 = vmatpush1.bf16.msra.mxu0 0
      %8914 = vmatprep.subr.bf16.mxu0 0
      %8915 = vmatpush1.bf16.msra.mxu0 0
      %8916 = vmatprep.subr.bf16.mxu0 0
      %8917 = vmatpush1.bf16.msra.mxu0 0
      %8918 = vmatprep.subr.bf16.mxu0 0
      %8919 = vmatpush1.bf16.msra.mxu0 0
      %8920 = vmatprep.subr.bf16.mxu0 0
      %8921 = vmatpush1.bf16.msra.mxu0 0
      %8922 = vmatprep.subr.bf16.mxu0 0
      %8923 = vmatpush1.bf16.msra.mxu0 0
      %8924 = vmatprep.mubr.bf16.mxu0 0
      %8925 = vmatmul.mubr.bf16.gmra.mrb[0].mxu0 %v8845
      %v8926 = vpop.f32.mrb[0].mxu0
      %v8927 = vadd.f32 0.0, %v8926
      %v8928 = vpop.f32.mrb[0].mxu0
      %v8929 = vpop.f32.mrb[0].mxu0
      %v8930 = vadd.f32 0.0, %v8929
      %v8931 = vpop.f32.mrb[0].mxu0
      %8932 = vmatprep.mubr.bf16.mxu0 0
      %8933 = vmatmul.mubr.bf16.gmra.mrb[0].mxu0 %v8848
      %v8934 = vpop.f32.mrb[0].mxu0
      %v8935 = vadd.f32 0.0, %v8934
      %v8936 = vpop.f32.mrb[0].mxu0
      %v8937 = vpop.f32.mrb[0].mxu0
      %v8938 = vadd.f32 0.0, %v8937
      %v8939 = vpop.f32.mrb[0].mxu0
      %8940 = vmatprep.mubr.bf16.mxu0 0
      %8941 = vmatmul.mubr.bf16.gmra.mrb[0].mxu0 %v8851
      %v8942 = vpop.f32.mrb[0].mxu0
      %v8943 = vadd.f32 0.0, %v8942
      %v8944 = vpop.f32.mrb[0].mxu0
      %v8945 = vpop.f32.mrb[0].mxu0
      %v8946 = vadd.f32 0.0, %v8945
      %v8947 = vpop.f32.mrb[0].mxu0
      %8948 = vmatprep.mubr.bf16.mxu0 0
      %8949 = vmatmul.mubr.bf16.gmra.mrb[0].mxu0 %v8854
      %v8950 = vpop.f32.mrb[0].mxu0
      %v8951 = vadd.f32 0.0, %v8950
      %v8952 = vpop.f32.mrb[0].mxu0
      %v8953 = vpop.f32.mrb[0].mxu0
      %v8954 = vadd.f32 0.0, %v8953
      %v8955 = vpop.f32.mrb[0].mxu0
      %8956 = vmatprep.mubr.bf16.mxu0 0
      %8957 = vmatmul.mubr.bf16.gmra.mrb[0].mxu0 %v8857
      %v8958 = vpop.f32.mrb[0].mxu0
      %v8959 = vadd.f32 0.0, %v8958
      %v8960 = vpop.f32.mrb[0].mxu0
      %v8961 = vpop.f32.mrb[0].mxu0
      %v8962 = vadd.f32 0.0, %v8961
      %v8963 = vpop.f32.mrb[0].mxu0
      %8964 = vmatprep.mubr.bf16.mxu0 0
      %8965 = vmatmul.mubr.bf16.gmra.mrb[0].mxu0 %v8860
      %v8966 = vpop.f32.mrb[0].mxu0
      %v8967 = vadd.f32 0.0, %v8966
      %v8968 = vpop.f32.mrb[0].mxu0
      %v8969 = vpop.f32.mrb[0].mxu0
      %v8970 = vadd.f32 0.0, %v8969
      %v8971 = vpop.f32.mrb[0].mxu0
      %8972 = vmatprep.mubr.bf16.mxu0 0
      %8973 = vmatmul.mubr.bf16.gmra.mrb[0].mxu0 %v8863
      %v8974 = vpop.f32.mrb[0].mxu0
      %v8975 = vadd.f32 0.0, %v8974
      %v8976 = vpop.f32.mrb[0].mxu0
      %v8977 = vpop.f32.mrb[0].mxu0
      %v8978 = vadd.f32 0.0, %v8977
      %v8979 = vpop.f32.mrb[0].mxu0
      %8980 = vmatprep.mubr.bf16.mxu0 0
      %8981 = vmatmul.mubr.bf16.gmra.mrb[0].mxu0 %v8866
      %v8982 = vpop.f32.mrb[0].mxu0
      %v8983 = vadd.f32 0.0, %v8982
      %v8984 = vpop.f32.mrb[0].mxu0
      %v8985 = vpop.f32.mrb[0].mxu0
      %v8986 = vadd.f32 0.0, %v8985
      %v8987 = vpop.f32.mrb[0].mxu0
      %8988 = vmatprep.mubr.bf16.mxu0 0
      %8989 = vmatmul.mubr.bf16.gmra.mrb[0].mxu0 %v8869
      %v8990 = vpop.f32.mrb[0].mxu0
      %v8991 = vadd.f32 0.0, %v8990
      %v8992 = vpop.f32.mrb[0].mxu0
      %v8993 = vpop.f32.mrb[0].mxu0
      %v8994 = vadd.f32 0.0, %v8993
      %v8995 = vpop.f32.mrb[0].mxu0
      %8996 = vmatprep.mubr.bf16.mxu0 0
      %8997 = vmatmul.mubr.bf16.gmra.mrb[0].mxu0 %v8872
      %v8998 = vpop.f32.mrb[0].mxu0
      %v8999 = vadd.f32 0.0, %v8998
      %v9000 = vpop.f32.mrb[0].mxu0
      %v9001 = vpop.f32.mrb[0].mxu0
      %v9002 = vadd.f32 0.0, %v9001
      %v9003 = vpop.f32.mrb[0].mxu0
      %9004 = vmatprep.mubr.bf16.mxu0 0
      %9005 = vmatmul.mubr.bf16.gmra.mrb[0].mxu0 %v8875
      %v9006 = vpop.f32.mrb[0].mxu0
      %v9007 = vadd.f32 0.0, %v9006
      %v9008 = vpop.f32.mrb[0].mxu0
      %v9009 = vpop.f32.mrb[0].mxu0
      %v9010 = vadd.f32 0.0, %v9009
      %v9011 = vpop.f32.mrb[0].mxu0
      %9012 = vmatprep.mubr.bf16.mxu0 0
      %9013 = vmatmul.mubr.bf16.gmra.mrb[0].mxu0 %v8878
      %v9014 = vpop.f32.mrb[0].mxu0
      %v9015 = vadd.f32 0.0, %v9014
      %v9016 = vpop.f32.mrb[0].mxu0
      %v9017 = vpop.f32.mrb[0].mxu0
      %v9018 = vadd.f32 0.0, %v9017
      %v9019 = vpop.f32.mrb[0].mxu0
      %9020 = vmatprep.mubr.bf16.mxu0 0
      %9021 = vmatmul.mubr.bf16.gmra.mrb[0].mxu0 %v8881
      %v9022 = vpop.f32.mrb[0].mxu0
      %v9023 = vadd.f32 0.0, %v9022
      %v9024 = vpop.f32.mrb[0].mxu0
      %v9025 = vpop.f32.mrb[0].mxu0
      %v9026 = vadd.f32 0.0, %v9025
      %v9027 = vpop.f32.mrb[0].mxu0
      %9028 = vmatprep.mubr.bf16.mxu0 0
      %9029 = vmatmul.mubr.bf16.gmra.mrb[0].mxu0 %v8884
      %v9030 = vpop.f32.mrb[0].mxu0
      %v9031 = vadd.f32 0.0, %v9030
      %v9032 = vpop.f32.mrb[0].mxu0
      %v9033 = vpop.f32.mrb[0].mxu0
      %v9034 = vadd.f32 0.0, %v9033
      %v9035 = vpop.f32.mrb[0].mxu0
      %9036 = vmatprep.mubr.bf16.mxu0 0
      %9037 = vmatmul.mubr.bf16.gmra.mrb[0].mxu0 %v8887
      %v9038 = vpop.f32.mrb[0].mxu0
      %v9039 = vadd.f32 0.0, %v9038
      %v9040 = vpop.f32.mrb[0].mxu0
      %v9041 = vpop.f32.mrb[0].mxu0
      %v9042 = vadd.f32 0.0, %v9041
      %v9043 = vpop.f32.mrb[0].mxu0
      %9044 = vmatprep.mubr.bf16.mxu0 0
      %9045 = vmatmul.mubr.bf16.gmra.mrb[0].mxu0 %v8890
      %v9046 = vpop.f32.mrb[0].mxu0
      %v9047 = vadd.f32 0.0, %v9046
      %v9048 = vpop.f32.mrb[0].mxu0
      %v9049 = vpop.f32.mrb[0].mxu0
      %v9050 = vadd.f32 0.0, %v9049
      %v9051 = vpop.f32.mrb[0].mxu0
      %9052 = vdwg.mxu0
      %v9053 = vadd.f32 %v8747, %v8927
      %v9054 = vadd.f32 %v8748, %v8930
      %v9055 = vadd.f32 %v8749, %v8935
      %v9056 = vadd.f32 %v8750, %v8938
      %v9057 = vadd.f32 %v8751, %v8943
      %v9058 = vadd.f32 %v8752, %v8946
      %v9059 = vadd.f32 %v8753, %v8951
      %v9060 = vadd.f32 %v8754, %v8954
      %v9061 = vadd.f32 %v8755, %v8959
      %v9062 = vadd.f32 %v8756, %v8962
      %v9063 = vadd.f32 %v8757, %v8967
      %v9064 = vadd.f32 %v8758, %v8970
      %v9065 = vadd.f32 %v8759, %v8975
      %v9066 = vadd.f32 %v8760, %v8978
      %v9067 = vadd.f32 %v8761, %v8983
      %v9068 = vadd.f32 %v8762, %v8986
      %v9069 = vadd.f32 %v8763, %v8991
      %v9070 = vadd.f32 %v8764, %v8994
      %v9071 = vadd.f32 %v8765, %v8999
      %v9072 = vadd.f32 %v8766, %v9002
      %v9073 = vadd.f32 %v8767, %v9007
      %v9074 = vadd.f32 %v8768, %v9010
      %v9075 = vadd.f32 %v8769, %v9015
      %v9076 = vadd.f32 %v8770, %v9018
      %v9077 = vadd.f32 %v8771, %v9023
      %v9078 = vadd.f32 %v8772, %v9026
      %v9079 = vadd.f32 %v8773, %v9031
      %v9080 = vadd.f32 %v8774, %v9034
      %v9081 = vadd.f32 %v8775, %v9039
      %v9082 = vadd.f32 %v8776, %v9042
      %v9083 = vadd.f32 %v8777, %v9047
      %v9084 = vadd.f32 %v8778, %v9050
      %v9085 = vld [vmem:[%s8472 + $0x2] sm:$0xff]
      %v9086 = vld [vmem:[%s8472 + $0xa] sm:$0xff]
      %v9087 = vld [vmem:[%s8472 + $0x1a] sm:$0xff]
      %v9088 = vld [vmem:[%s8472 + $0x22] sm:$0xff]
      %v9089 = vld [vmem:[%s8472 + $0x32] sm:$0xff]
      %v9090 = vld [vmem:[%s8472 + $0x3a] sm:$0xff]
      %v9091 = vld [vmem:[%s8472 + $0x4a] sm:$0xff]
      %v9092 = vld [vmem:[%s8472 + $0x52] sm:$0xff]
      %v9093 = vld [vmem:[%s8472 + $0x62] sm:$0xff]
      %v9094 = vld [vmem:[%s8472 + $0x6a] sm:$0xff]
      %v9095 = vld [vmem:[%s8472 + $0x7a] sm:$0xff]
      %v9096 = vld [vmem:[%s8472 + $0x82] sm:$0xff]
      %v9097 = vld [vmem:[%s8472 + $0x92] sm:$0xff]
      %v9098 = vld [vmem:[%s8472 + $0x9a] sm:$0xff]
      %v9099 = vld [vmem:[%s8472 + $0xaa] sm:$0xff]
      %v9100 = vld [vmem:[%s8472 + $0xb2] sm:$0xff]
      %v9101 = vld [vmem:[%s8472 + $0xc2] sm:$0xff]
      %v9102 = vld [vmem:[%s8472 + $0xca] sm:$0xff]
      %v9103 = vld [vmem:[%s8472 + $0xda] sm:$0xff]
      %v9104 = vld [vmem:[%s8472 + $0xe2] sm:$0xff]
      %v9105 = vld [vmem:[%s8472 + $0xf2] sm:$0xff]
      %v9106 = vld [vmem:[%s8472 + $0xfa] sm:$0xff]
      %v9107 = vld [vmem:[%s8472 + $0x10a] sm:$0xff]
      %v9108 = vld [vmem:[%s8472 + $0x112] sm:$0xff]
      %v9109 = vld [vmem:[%s8472 + $0x122] sm:$0xff]
      %v9110 = vld [vmem:[%s8472 + $0x12a] sm:$0xff]
      %v9111 = vld [vmem:[%s8472 + $0x13a] sm:$0xff]
      %v9112 = vld [vmem:[%s8472 + $0x142] sm:$0xff]
      %v9113 = vld [vmem:[%s8472 + $0x152] sm:$0xff]
      %v9114 = vld [vmem:[%s8472 + $0x15a] sm:$0xff]
      %v9115 = vld [vmem:[%s8472 + $0x16a] sm:$0xff]
      %v9116 = vld [vmem:[%s8472 + $0x172] sm:$0xff]
      %v9117 = vpack.c.bf16 %v9086, %v9085
      %v9118 = vpack.c.bf16 %v9088, %v9087
      %v9119 = vpack.c.bf16 %v9090, %v9089
      %v9120 = vpack.c.bf16 %v9092, %v9091
      %v9121 = vpack.c.bf16 %v9094, %v9093
      %v9122 = vpack.c.bf16 %v9096, %v9095
      %v9123 = vpack.c.bf16 %v9098, %v9097
      %v9124 = vpack.c.bf16 %v9100, %v9099
      %v9125 = vpack.c.bf16 %v9102, %v9101
      %v9126 = vpack.c.bf16 %v9104, %v9103
      %v9127 = vpack.c.bf16 %v9106, %v9105
      %v9128 = vpack.c.bf16 %v9108, %v9107
      %v9129 = vpack.c.bf16 %v9110, %v9109
      %v9130 = vpack.c.bf16 %v9112, %v9111
      %v9131 = vpack.c.bf16 %v9114, %v9113
      %v9132 = vpack.c.bf16 %v9116, %v9115
      %s9133 = scalar_lea.vmem %s7, 128
      %v9134 = vld [vmem:[%s9133] sm:$0xf]
      %v9135 = vld [vmem:[%s9133 + $0x4] sm:$0xf]
      %v9136 = vld [vmem:[%s9133 + $0x8] sm:$0xf]
      %v9137 = vld [vmem:[%s9133 + $0xc] sm:$0xf]
      %v9142 = vunpack.c.l.b16 %v9134
      %v9143 = vunpack.c.l.b16 %v9135
      %v9144 = vunpack.c.l.b16 %v9136
      %v9145 = vunpack.c.l.b16 %v9137
      %v9146 = vpack.c.b16 %v9143, %v9142
      %v9147 = vpack.c.b16 %v9145, %v9144
      %v9151 = vsel %vm469, %v9117, 0
      %v9154 = vsel %vm469, %v9118, 0
      %v9157 = vsel %vm469, %v9119, 0
      %v9160 = vsel %vm469, %v9120, 0
      %v9163 = vsel %vm469, %v9121, 0
      %v9166 = vsel %vm469, %v9122, 0
      %v9169 = vsel %vm469, %v9123, 0
      %v9172 = vsel %vm469, %v9124, 0
      %v9175 = vsel %vm469, %v9125, 0
      %v9178 = vsel %vm469, %v9126, 0
      %v9181 = vsel %vm469, %v9127, 0
      %v9184 = vsel %vm469, %v9128, 0
      %v9187 = vsel %vm469, %v9129, 0
      %v9190 = vsel %vm469, %v9130, 0
      %v9193 = vsel %vm469, %v9131, 0
      %v9196 = vsel %vm469, %v9132, 0
      %9198 = vmatprep.subr.bf16.mxu0 0
      %9199 = vmatpush1.bf16.msra.mxu0 %v9146
      %9200 = vmatprep.subr.bf16.mxu0 0
      %9201 = vmatpush1.bf16.msra.mxu0 %v9147
      %9202 = vmatprep.subr.bf16.mxu0 0
      %9203 = vmatpush1.bf16.msra.mxu0 0
      %9204 = vmatprep.subr.bf16.mxu0 0
      %9205 = vmatpush1.bf16.msra.mxu0 0
      %9206 = vmatprep.subr.bf16.mxu0 0
      %9207 = vmatpush1.bf16.msra.mxu0 0
      %9208 = vmatprep.subr.bf16.mxu0 0
      %9209 = vmatpush1.bf16.msra.mxu0 0
      %9210 = vmatprep.subr.bf16.mxu0 0
      %9211 = vmatpush1.bf16.msra.mxu0 0
      %9212 = vmatprep.subr.bf16.mxu0 0
      %9213 = vmatpush1.bf16.msra.mxu0 0
      %9214 = vmatprep.subr.bf16.mxu0 0
      %9215 = vmatpush1.bf16.msra.mxu0 0
      %9216 = vmatprep.subr.bf16.mxu0 0
      %9217 = vmatpush1.bf16.msra.mxu0 0
      %9218 = vmatprep.subr.bf16.mxu0 0
      %9219 = vmatpush1.bf16.msra.mxu0 0
      %9220 = vmatprep.subr.bf16.mxu0 0
      %9221 = vmatpush1.bf16.msra.mxu0 0
      %9222 = vmatprep.subr.bf16.mxu0 0
      %9223 = vmatpush1.bf16.msra.mxu0 0
      %9224 = vmatprep.subr.bf16.mxu0 0
      %9225 = vmatpush1.bf16.msra.mxu0 0
      %9226 = vmatprep.subr.bf16.mxu0 0
      %9227 = vmatpush1.bf16.msra.mxu0 0
      %9228 = vmatprep.subr.bf16.mxu0 0
      %9229 = vmatpush1.bf16.msra.mxu0 0
      %9230 = vmatprep.mubr.bf16.mxu0 0
      %9231 = vmatmul.mubr.bf16.gmra.mrb[0].mxu0 %v9151
      %v9232 = vpop.f32.mrb[0].mxu0
      %v9233 = vadd.f32 0.0, %v9232
      %v9234 = vpop.f32.mrb[0].mxu0
      %v9235 = vpop.f32.mrb[0].mxu0
      %v9236 = vadd.f32 0.0, %v9235
      %v9237 = vpop.f32.mrb[0].mxu0
      %9238 = vmatprep.mubr.bf16.mxu0 0
      %9239 = vmatmul.mubr.bf16.gmra.mrb[0].mxu0 %v9154
      %v9240 = vpop.f32.mrb[0].mxu0
      %v9241 = vadd.f32 0.0, %v9240
      %v9242 = vpop.f32.mrb[0].mxu0
      %v9243 = vpop.f32.mrb[0].mxu0
      %v9244 = vadd.f32 0.0, %v9243
      %v9245 = vpop.f32.mrb[0].mxu0
      %9246 = vmatprep.mubr.bf16.mxu0 0
      %9247 = vmatmul.mubr.bf16.gmra.mrb[0].mxu0 %v9157
      %v9248 = vpop.f32.mrb[0].mxu0
      %v9249 = vadd.f32 0.0, %v9248
      %v9250 = vpop.f32.mrb[0].mxu0
      %v9251 = vpop.f32.mrb[0].mxu0
      %v9252 = vadd.f32 0.0, %v9251
      %v9253 = vpop.f32.mrb[0].mxu0
      %9254 = vmatprep.mubr.bf16.mxu0 0
      %9255 = vmatmul.mubr.bf16.gmra.mrb[0].mxu0 %v9160
      %v9256 = vpop.f32.mrb[0].mxu0
      %v9257 = vadd.f32 0.0, %v9256
      %v9258 = vpop.f32.mrb[0].mxu0
      %v9259 = vpop.f32.mrb[0].mxu0
      %v9260 = vadd.f32 0.0, %v9259
      %v9261 = vpop.f32.mrb[0].mxu0
      %9262 = vmatprep.mubr.bf16.mxu0 0
      %9263 = vmatmul.mubr.bf16.gmra.mrb[0].mxu0 %v9163
      %v9264 = vpop.f32.mrb[0].mxu0
      %v9265 = vadd.f32 0.0, %v9264
      %v9266 = vpop.f32.mrb[0].mxu0
      %v9267 = vpop.f32.mrb[0].mxu0
      %v9268 = vadd.f32 0.0, %v9267
      %v9269 = vpop.f32.mrb[0].mxu0
      %9270 = vmatprep.mubr.bf16.mxu0 0
      %9271 = vmatmul.mubr.bf16.gmra.mrb[0].mxu0 %v9166
      %v9272 = vpop.f32.mrb[0].mxu0
      %v9273 = vadd.f32 0.0, %v9272
      %v9274 = vpop.f32.mrb[0].mxu0
      %v9275 = vpop.f32.mrb[0].mxu0
      %v9276 = vadd.f32 0.0, %v9275
      %v9277 = vpop.f32.mrb[0].mxu0
      %9278 = vmatprep.mubr.bf16.mxu0 0
      %9279 = vmatmul.mubr.bf16.gmra.mrb[0].mxu0 %v9169
      %v9280 = vpop.f32.mrb[0].mxu0
      %v9281 = vadd.f32 0.0, %v9280
      %v9282 = vpop.f32.mrb[0].mxu0
      %v9283 = vpop.f32.mrb[0].mxu0
      %v9284 = vadd.f32 0.0, %v9283
      %v9285 = vpop.f32.mrb[0].mxu0
      %9286 = vmatprep.mubr.bf16.mxu0 0
      %9287 = vmatmul.mubr.bf16.gmra.mrb[0].mxu0 %v9172
      %v9288 = vpop.f32.mrb[0].mxu0
      %v9289 = vadd.f32 0.0, %v9288
      %v9290 = vpop.f32.mrb[0].mxu0
      %v9291 = vpop.f32.mrb[0].mxu0
      %v9292 = vadd.f32 0.0, %v9291
      %v9293 = vpop.f32.mrb[0].mxu0
      %9294 = vmatprep.mubr.bf16.mxu0 0
      %9295 = vmatmul.mubr.bf16.gmra.mrb[0].mxu0 %v9175
      %v9296 = vpop.f32.mrb[0].mxu0
      %v9297 = vadd.f32 0.0, %v9296
      %v9298 = vpop.f32.mrb[0].mxu0
      %v9299 = vpop.f32.mrb[0].mxu0
      %v9300 = vadd.f32 0.0, %v9299
      %v9301 = vpop.f32.mrb[0].mxu0
      %9302 = vmatprep.mubr.bf16.mxu0 0
      %9303 = vmatmul.mubr.bf16.gmra.mrb[0].mxu0 %v9178
      %v9304 = vpop.f32.mrb[0].mxu0
      %v9305 = vadd.f32 0.0, %v9304
      %v9306 = vpop.f32.mrb[0].mxu0
      %v9307 = vpop.f32.mrb[0].mxu0
      %v9308 = vadd.f32 0.0, %v9307
      %v9309 = vpop.f32.mrb[0].mxu0
      %9310 = vmatprep.mubr.bf16.mxu0 0
      %9311 = vmatmul.mubr.bf16.gmra.mrb[0].mxu0 %v9181
      %v9312 = vpop.f32.mrb[0].mxu0
      %v9313 = vadd.f32 0.0, %v9312
      %v9314 = vpop.f32.mrb[0].mxu0
      %v9315 = vpop.f32.mrb[0].mxu0
      %v9316 = vadd.f32 0.0, %v9315
      %v9317 = vpop.f32.mrb[0].mxu0
      %9318 = vmatprep.mubr.bf16.mxu0 0
      %9319 = vmatmul.mubr.bf16.gmra.mrb[0].mxu0 %v9184
      %v9320 = vpop.f32.mrb[0].mxu0
      %v9321 = vadd.f32 0.0, %v9320
      %v9322 = vpop.f32.mrb[0].mxu0
      %v9323 = vpop.f32.mrb[0].mxu0
      %v9324 = vadd.f32 0.0, %v9323
      %v9325 = vpop.f32.mrb[0].mxu0
      %9326 = vmatprep.mubr.bf16.mxu0 0
      %9327 = vmatmul.mubr.bf16.gmra.mrb[0].mxu0 %v9187
      %v9328 = vpop.f32.mrb[0].mxu0
      %v9329 = vadd.f32 0.0, %v9328
      %v9330 = vpop.f32.mrb[0].mxu0
      %v9331 = vpop.f32.mrb[0].mxu0
      %v9332 = vadd.f32 0.0, %v9331
      %v9333 = vpop.f32.mrb[0].mxu0
      %9334 = vmatprep.mubr.bf16.mxu0 0
      %9335 = vmatmul.mubr.bf16.gmra.mrb[0].mxu0 %v9190
      %v9336 = vpop.f32.mrb[0].mxu0
      %v9337 = vadd.f32 0.0, %v9336
      %v9338 = vpop.f32.mrb[0].mxu0
      %v9339 = vpop.f32.mrb[0].mxu0
      %v9340 = vadd.f32 0.0, %v9339
      %v9341 = vpop.f32.mrb[0].mxu0
      %9342 = vmatprep.mubr.bf16.mxu0 0
      %9343 = vmatmul.mubr.bf16.gmra.mrb[0].mxu0 %v9193
      %v9344 = vpop.f32.mrb[0].mxu0
      %v9345 = vadd.f32 0.0, %v9344
      %v9346 = vpop.f32.mrb[0].mxu0
      %v9347 = vpop.f32.mrb[0].mxu0
      %v9348 = vadd.f32 0.0, %v9347
      %v9349 = vpop.f32.mrb[0].mxu0
      %9350 = vmatprep.mubr.bf16.mxu0 0
      %9351 = vmatmul.mubr.bf16.gmra.mrb[0].mxu0 %v9196
      %v9352 = vpop.f32.mrb[0].mxu0
      %v9353 = vadd.f32 0.0, %v9352
      %v9354 = vpop.f32.mrb[0].mxu0
      %v9355 = vpop.f32.mrb[0].mxu0
      %v9356 = vadd.f32 0.0, %v9355
      %v9357 = vpop.f32.mrb[0].mxu0
      %9358 = vdwg.mxu0
      %v9359 = vadd.f32 %v9053, %v9233
      %v9360 = vadd.f32 %v9054, %v9236
      %v9361 = vadd.f32 %v9055, %v9241
      %v9362 = vadd.f32 %v9056, %v9244
      %v9363 = vadd.f32 %v9057, %v9249
      %v9364 = vadd.f32 %v9058, %v9252
      %v9365 = vadd.f32 %v9059, %v9257
      %v9366 = vadd.f32 %v9060, %v9260
      %v9367 = vadd.f32 %v9061, %v9265
      %v9368 = vadd.f32 %v9062, %v9268
      %v9369 = vadd.f32 %v9063, %v9273
      %v9370 = vadd.f32 %v9064, %v9276
      %v9371 = vadd.f32 %v9065, %v9281
      %v9372 = vadd.f32 %v9066, %v9284
      %v9373 = vadd.f32 %v9067, %v9289
      %v9374 = vadd.f32 %v9068, %v9292
      %v9375 = vadd.f32 %v9069, %v9297
      %v9376 = vadd.f32 %v9070, %v9300
      %v9377 = vadd.f32 %v9071, %v9305
      %v9378 = vadd.f32 %v9072, %v9308
      %v9379 = vadd.f32 %v9073, %v9313
      %v9380 = vadd.f32 %v9074, %v9316
      %v9381 = vadd.f32 %v9075, %v9321
      %v9382 = vadd.f32 %v9076, %v9324
      %v9383 = vadd.f32 %v9077, %v9329
      %v9384 = vadd.f32 %v9078, %v9332
      %v9385 = vadd.f32 %v9079, %v9337
      %v9386 = vadd.f32 %v9080, %v9340
      %v9387 = vadd.f32 %v9081, %v9345
      %v9388 = vadd.f32 %v9082, %v9348
      %v9389 = vadd.f32 %v9083, %v9353
      %v9390 = vadd.f32 %v9084, %v9356
      %v9391 = vld [vmem:[%s8] sm:$0x1]
      %v9393 = vlaneseq
      %v9394 = vshrl.u32 %v9393, 7
      %v9395 = vsub.s32 0, %v9394
      %v9396 = vrot.slane %v9391, %v9395
      %v9398 = vadd.f32 %v9359, %v9396
      %v9399 = vadd.f32 %v9360, %v9396
      %v9400 = vadd.f32 %v9361, %v9396
      %v9401 = vadd.f32 %v9362, %v9396
      %v9402 = vadd.f32 %v9363, %v9396
      %v9403 = vadd.f32 %v9364, %v9396
      %v9404 = vadd.f32 %v9365, %v9396
      %v9405 = vadd.f32 %v9366, %v9396
      %v9406 = vadd.f32 %v9367, %v9396
      %v9407 = vadd.f32 %v9368, %v9396
      %v9408 = vadd.f32 %v9369, %v9396
      %v9409 = vadd.f32 %v9370, %v9396
      %v9410 = vadd.f32 %v9371, %v9396
      %v9411 = vadd.f32 %v9372, %v9396
      %v9412 = vadd.f32 %v9373, %v9396
      %v9413 = vadd.f32 %v9374, %v9396
      %v9414 = vadd.f32 %v9375, %v9396
      %v9415 = vadd.f32 %v9376, %v9396
      %v9416 = vadd.f32 %v9377, %v9396
      %v9417 = vadd.f32 %v9378, %v9396
      %v9418 = vadd.f32 %v9379, %v9396
      %v9419 = vadd.f32 %v9380, %v9396
      %v9420 = vadd.f32 %v9381, %v9396
      %v9421 = vadd.f32 %v9382, %v9396
      %v9422 = vadd.f32 %v9383, %v9396
      %v9423 = vadd.f32 %v9384, %v9396
      %v9424 = vadd.f32 %v9385, %v9396
      %v9425 = vadd.f32 %v9386, %v9396
      %v9426 = vadd.f32 %v9387, %v9396
      %v9427 = vadd.f32 %v9388, %v9396
      %v9428 = vadd.f32 %v9389, %v9396
      %v9429 = vadd.f32 %v9390, %v9396
      %9430 = vst [vmem:[%s332] sm:$0xff] %v9398
      %9431 = vst [vmem:[%s332 + $0x8] sm:$0xff] %v9399
      %9432 = vst [vmem:[%s332 + $0x10] sm:$0xff] %v9400
      %9433 = vst [vmem:[%s332 + $0x18] sm:$0xff] %v9401
      %9434 = vst [vmem:[%s332 + $0x20] sm:$0xff] %v9402
      %9435 = vst [vmem:[%s332 + $0x28] sm:$0xff] %v9403
      %9436 = vst [vmem:[%s332 + $0x30] sm:$0xff] %v9404
      %9437 = vst [vmem:[%s332 + $0x38] sm:$0xff] %v9405
      %9438 = vst [vmem:[%s332 + $0x40] sm:$0xff] %v9406
      %9439 = vst [vmem:[%s332 + $0x48] sm:$0xff] %v9407
      %9440 = vst [vmem:[%s332 + $0x50] sm:$0xff] %v9408
      %9441 = vst [vmem:[%s332 + $0x58] sm:$0xff] %v9409
      %9442 = vst [vmem:[%s332 + $0x60] sm:$0xff] %v9410
      %9443 = vst [vmem:[%s332 + $0x68] sm:$0xff] %v9411
      %9444 = vst [vmem:[%s332 + $0x70] sm:$0xff] %v9412
      %9445 = vst [vmem:[%s332 + $0x78] sm:$0xff] %v9413
      %9446 = vst [vmem:[%s332 + $0x80] sm:$0xff] %v9414
      %9447 = vst [vmem:[%s332 + $0x88] sm:$0xff] %v9415
      %9448 = vst [vmem:[%s332 + $0x90] sm:$0xff] %v9416
      %9449 = vst [vmem:[%s332 + $0x98] sm:$0xff] %v9417
      %9450 = vst [vmem:[%s332 + $0xa0] sm:$0xff] %v9418
      %9451 = vst [vmem:[%s332 + $0xa8] sm:$0xff] %v9419
      %9452 = vst [vmem:[%s332 + $0xb0] sm:$0xff] %v9420
      %9453 = vst [vmem:[%s332 + $0xb8] sm:$0xff] %v9421
      %9454 = vst [vmem:[%s332 + $0xc0] sm:$0xff] %v9422
      %9455 = vst [vmem:[%s332 + $0xc8] sm:$0xff] %v9423
      %9456 = vst [vmem:[%s332 + $0xd0] sm:$0xff] %v9424
      %9457 = vst [vmem:[%s332 + $0xd8] sm:$0xff] %v9425
      %9458 = vst [vmem:[%s332 + $0xe0] sm:$0xff] %v9426
      %9459 = vst [vmem:[%s332 + $0xe8] sm:$0xff] %v9427
      %9460 = vst [vmem:[%s332 + $0xf0] sm:$0xff] %v9428
      %9461 = vst [vmem:[%s332 + $0xf8] sm:$0xff] %v9429
      %p9462 = scmp.lt.s32.totalorder %s20, 1
      %s9463 = scalar_select %p9462, %s20, 1
      %s9464 = smul.addr %s9463, 32
      %s9465 = smul.addr %s9464, 8
      %s9466 = scalar_lea.vmem %s9, %s9465
      // Predicated region
      $region57: #{super_resolution_forward.1} parent=55 // pred_check
        %p9467 = pneg %p232
      $region58: #{super_resolution_forward.1} parent=55 // pred_check_branch
        %9469 = sbr.rel (%p9467) target = $region60
      $region59: #{super_resolution_forward.1} parent=55 // pred_region
        _
      $region60: #{super_resolution_forward.1} parent=55 // pred_fallthru
        _
    $region56: #{super_resolution_forward.1} parent=5 // pred_fallthru
      _
    %p9470 = scmp.le.s32.totalorder 2, %s15
    // Predicated region
    $region61: #{super_resolution_forward.1} parent=5 // pred_check
      %p9471 = pneg %p9470
    $region62: #{super_resolution_forward.1} parent=5 // pred_check_branch
      %9473 = sbr.rel (%p9471) target = $region64
    $region63: #{super_resolution_forward.1} parent=5 // pred_region
      %s9474 = ssub.s32 %s15, 2
      // Predicated region
      $region65: #{super_resolution_forward.1} parent=63 // pred_check
        %p9475 = pneg %p238
      $region66: #{super_resolution_forward.1} parent=63 // pred_check_branch
        %9477 = sbr.rel (%p9475) target = $region68
      $region67: #{super_resolution_forward.1} parent=63 // pred_region
        %p9478 = scmp.lt.s32.totalorder %s21, 1
        %s9479 = scalar_select %p9478, %s21, 1
        %s9480 = smul.addr %s9479, 32
        %s9481 = smul.addr %s9480, 8
        %s9482 = scalar_lea.vmem %s9, %s9481
      $region68: #{super_resolution_forward.1} parent=63 // pred_fallthru
        _
    $region64: #{super_resolution_forward.1} parent=5 // pred_fallthru
      _
  $region6: #{super_resolution_forward.1} parent=0 // loop_footer
    %s19 = sadd.s32 1, %s15
  $region7: #{super_resolution_forward.1} parent=0 // loop_footer_branch
    %14 = sbr.rel target = $region3
  $region8: #{super_resolution_forward.1} parent=0 // loop_exit
    _

</llo_original>
